<compile_context>
chip_gen: v7x
topology: tpu7x:2x2x1
jax: 0.10.0
libtpu: 0.0.40
codegen_flags: <defaults>
</compile_context>

<pallas_src>
import jax
import jax.numpy as jnp
import numpy as np
from jax import lax
from jax.experimental import pallas as pl
from jax.experimental.pallas import tpu as pltpu

# ----- hyper-parameters (small, consistent with TSMiEncoder.__init__) -----
D_MODEL = 32            # d_model
Q_LEN = 8               # q_len == patch_num
PATCH_LEN = 16          # patch_len
EXPAND = 1
D_INNER = EXPAND * D_MODEL
D_STATE = 16            # Mamba d_state
D_CONV = 4              # Mamba d_conv
DT_RANK = -(-D_MODEL // 16)      # ceil(d_model / 16)
N_LAYERS = 2
BN_EPS = 1e-5
BATCH = 2
N_VARS = 4              # c_in
VEC_W = max(D_INNER, D_MODEL)

# stacked per-layer parameter slabs (leading axis = layer)
STACKED_ORDER = ["w_in", "conv_w", "w_xp", "w_dt", "a_log_t", "w_out", "vecs"]
# vecs rows: 0 conv_b, 1 dt_bias, 2 D, 3 bn_gamma, 4 bn_beta, 5 bn_mean, 6 bn_var, 7 pad


def tsmi_encoder_kernel(x_ref, wp_ref, posb_ref,
                        w_in_ref, conv_w_ref, w_xp_ref, w_dt_ref,
                        a_log_t_ref, w_out_ref, vecs_ref,
                        out_ref):
    bt, L, P = x_ref.shape
    D = wp_ref.shape[1]
    n_layers = w_in_ref.shape[0]
    d_conv = conv_w_ref.shape[1]
    dt_rank = w_dt_ref.shape[1]
    d_inner = w_dt_ref.shape[2]
    d_state = a_log_t_ref.shape[1]

    # ---- patch embedding (W_P) + positional encoding (W_P bias folded into posb) ----
    x2d = x_ref[...].astype(jnp.float32).reshape(bt * L, P)
    u = jnp.dot(x2d, wp_ref[...], preferred_element_type=jnp.float32)        # (bt*L, D)
    src = u.reshape(bt, L, D) + posb_ref[...][None, :, :]                     # (bt, L, D)

    for layer in range(n_layers):                       # fused layer stack (static unroll)
        w_in = w_in_ref[layer]                          # (D, 2*d_inner)
        conv_w = conv_w_ref[layer]                      # (d_conv, d_inner)
        w_xp = w_xp_ref[layer]                          # (d_inner, dt_rank + 2*d_state)
        w_dt = w_dt_ref[layer]                          # (dt_rank, d_inner)
        a_t = -jnp.exp(a_log_t_ref[layer])              # (d_state, d_inner)
        w_out = w_out_ref[layer]                        # (d_inner, D)
        v = vecs_ref[layer]                             # (8, VEC_W) packed small params
        conv_b = v[0:1, :d_inner]                       # (1, d_inner)
        dt_bias = v[1:2, :d_inner]
        d_param = v[2:3, :d_inner]
        bn_g = v[3:4, :D]                               # (1, D)
        bn_b = v[4:5, :D]
        bn_m = v[5:6, :D]
        bn_v = v[6:7, :D]

        # ---- Mamba in_proj (single fused matmul, bias=False), split into x / gate z ----
        xz = jnp.dot(src.reshape(bt * L, D), w_in,
                     preferred_element_type=jnp.float32)                      # (bt*L, 2di)
        xc = xz[:, :d_inner].reshape(bt, L, d_inner)
        z = xz[:, d_inner:]                                                   # (bt*L, di)

        # ---- causal depthwise conv1d along L (pad once, accumulate taps) + SiLU ----
        padded = jnp.concatenate(
            [jnp.zeros((bt, d_conv - 1, d_inner), jnp.float32), xc], axis=1)  # (bt,L+dc-1,di)
        acc = jnp.broadcast_to(conv_b.reshape(1, 1, d_inner), (bt, L, d_inner))
        for k in range(d_conv):                         # output[t] += w[k] * x[t-(dc-1-k)]
            acc = acc + conv_w[k:k + 1, :][None, :, :] * padded[:, k:k + L, :]
        xconv = acc * jax.nn.sigmoid(acc)                                     # (bt, L, di)

        # ---- x_proj (fused dt/B/C matmul, bias=False) + dt_proj + softplus ----
        xdbl = jnp.dot(xconv.reshape(bt * L, d_inner), w_xp,
                       preferred_element_type=jnp.float32)                    # (bt*L, R+2S)
        dt_low = xdbl[:, :dt_rank]
        b_mat = xdbl[:, dt_rank:dt_rank + d_state].reshape(bt, L, d_state)
        c_mat = xdbl[:, dt_rank + d_state:].reshape(bt, L, d_state)
        dt_lin = jnp.dot(dt_low, w_dt, preferred_element_type=jnp.float32) + dt_bias
        dt2d = jnp.where(dt_lin > 20.0, dt_lin,
                         jnp.log(1.0 + jnp.exp(jnp.minimum(dt_lin, 20.0))))   # softplus
        dt = dt2d.reshape(bt, L, d_inner)

        # ---- selective scan: exp / outer products hoisted out of the recurrence ----
        da_all = jnp.exp(dt[:, :, None, :] * a_t[None, None, :, :])           # (bt,L,S,di)
        dbu_all = dt[:, :, None, :] * b_mat[:, :, :, None] * xconv[:, :, None, :]
        h = jnp.zeros((bt, d_state, d_inner), jnp.float32)
        hs = []
        for t in range(L):                              # serial floor: one FMA per step
            h = da_all[:, t] * h + dbu_all[:, t]
            hs.append(h)
        h_all = jnp.stack(hs, axis=1)                                          # (bt,L,S,di)
        y = (jnp.sum(h_all * c_mat[:, :, :, None], axis=2)
             + d_param[None, :, :] * xconv)                                    # (bt, L, di)

        # ---- SiLU(z) gate, out_proj, residual, BatchNorm1d(d_model) eval mode ----
        yg = y.reshape(bt * L, d_inner) * (z * jax.nn.sigmoid(z))
        src2 = jnp.dot(yg, w_out, preferred_element_type=jnp.float32).reshape(bt, L, D)
        res = src + src2                                 # dropout p = 0
        inv_std = lax.rsqrt(bn_v + BN_EPS)               # (1, D)
        scale = (bn_g * inv_std)[None]                   # (1, 1, D)
        shift = (bn_b - bn_m * bn_g * inv_std)[None]     # (1, 1, D)
        src = res * scale + shift                        # folded BN affine FMA

    out_ref[...] = src.astype(out_ref.dtype)


def tsmi_encoder_forward(x, params, *, b_tile=None):
    bs, n_vars, patch_len, patch_num = x.shape
    bn = bs * n_vars
    L = patch_num
    D = params["w_p"].shape[1]
    if b_tile is None:
        b_tile = bn                                   # tiny workload: one grid step
    assert bn % b_tile == 0, "flattened batch must be divisible by b_tile"

    # (bs, n_vars, patch_len, patch_num) -> (bs*n_vars, patch_num, patch_len)
    xf = jnp.transpose(x, (0, 1, 3, 2)).reshape(bn, L, patch_len)
    stacked = [params[name] for name in STACKED_ORDER]

    z = pl.pallas_call(
        tsmi_encoder_kernel,
        out_shape=jax.ShapeDtypeStruct((bn, L, D), x.dtype),
        grid_spec=pltpu.PrefetchScalarGridSpec(
            num_scalar_prefetch=0,
            grid=(bn // b_tile,),
            in_specs=[pl.BlockSpec((b_tile, L, patch_len), lambda b: (b, 0, 0)),
                      pl.BlockSpec(params["w_p"].shape, lambda b: (0, 0)),
                      pl.BlockSpec(params["pos_b"].shape, lambda b: (0, 0))]
                     + [pl.BlockSpec(p.shape, lambda b: (0, 0, 0)) for p in stacked],
            out_specs=pl.BlockSpec((b_tile, L, D), lambda b: (b, 0, 0)),
        ),
        compiler_params=pltpu.CompilerParams(dimension_semantics=("parallel",)),
    )(xf, params["w_p"], params["pos_b"], *stacked)

    # (bs*n_vars, patch_num, d_model) -> (bs, n_vars, d_model, patch_num)
    return jnp.transpose(z.reshape(bs, n_vars, L, D), (0, 1, 3, 2))


# ------------------------- deterministic parameter init -------------------------
def init_params(key):
    k_embed, k_layers = jax.random.split(key)
    ke = jax.random.split(k_embed, 3)
    s = 0.1
    w_p = jax.random.normal(ke[0], (PATCH_LEN, D_MODEL), jnp.float32) * s
    b_p = jax.random.normal(ke[1], (D_MODEL,), jnp.float32) * s
    w_pos = jax.random.uniform(ke[2], (Q_LEN, D_MODEL), jnp.float32, -0.02, 0.02)

    def _row(v):
        return jnp.pad(v, (0, VEC_W - v.shape[0]))

    def one_layer(k):
        ks = jax.random.split(k, 9)
        w_in = jax.random.normal(ks[0], (D_MODEL, 2 * D_INNER), jnp.float32) * s
        conv_w = jax.random.normal(ks[1], (D_CONV, D_INNER), jnp.float32) * s
        w_xp = jax.random.normal(ks[2], (D_INNER, DT_RANK + 2 * D_STATE), jnp.float32) * s
        w_dt = jax.random.normal(ks[3], (DT_RANK, D_INNER), jnp.float32) * s
        w_out = jax.random.normal(ks[4], (D_INNER, D_MODEL), jnp.float32) * s
        # Mamba init: A[c, n] = n (n = 1..d_state); stored transposed (d_state, d_inner)
        a_log_t = (jnp.log(jnp.arange(1, D_STATE + 1, dtype=jnp.float32))[:, None]
                   * jnp.ones((1, D_INNER), jnp.float32))
        conv_b = jax.random.normal(ks[5], (D_INNER,), jnp.float32) * s
        dt_bias = jax.random.normal(ks[6], (D_INNER,), jnp.float32) * s
        bn_g = 1.0 + jax.random.normal(ks[7], (D_MODEL,), jnp.float32) * 0.05
        bn_b = jax.random.normal(ks[8], (D_MODEL,), jnp.float32) * 0.05
        vecs = jnp.stack([_row(conv_b), _row(dt_bias),
                          _row(jnp.ones((D_INNER,), jnp.float32)),
                          _row(bn_g), _row(bn_b),
                          _row(jnp.zeros((D_MODEL,), jnp.float32)),
                          _row(jnp.ones((D_MODEL,), jnp.float32)),
                          jnp.zeros((VEC_W,), jnp.float32)], axis=0)
        return dict(w_in=w_in, conv_w=conv_w, w_xp=w_xp, w_dt=w_dt,
                    a_log_t=a_log_t, w_out=w_out, vecs=vecs)

    layers = [one_layer(k) for k in jax.random.split(k_layers, N_LAYERS)]
    stacked = {name: jnp.stack([lp[name] for lp in layers], axis=0)
               for name in STACKED_ORDER}
    return dict(w_p=w_p, pos_b=w_pos + b_p[None, :], **stacked)


# --------------------------- pure-JAX reference (check) ---------------------------
def reference_forward(x, params):
    hp = lax.Precision.HIGHEST
    bs, n_vars, patch_len, L = x.shape
    D = params["w_p"].shape[1]
    n_layers = params["w_in"].shape[0]
    d_inner = params["w_in"].shape[2] // 2
    d_state = params["a_log_t"].shape[1]
    dt_rank = params["w_dt"].shape[1]
    d_conv = params["conv_w"].shape[1]

    xt = jnp.transpose(x, (0, 1, 3, 2)).reshape(bs * n_vars, L, patch_len)
    src = (jnp.einsum("blp,pd->bld", xt, params["w_p"], precision=hp)
           + params["pos_b"][None])

    for l in range(n_layers):
        v = params["vecs"][l]
        conv_b, dt_bias, d_param = v[0, :d_inner], v[1, :d_inner], v[2, :d_inner]
        bn_g, bn_b, bn_m, bn_v = v[3, :D], v[4, :D], v[5, :D], v[6, :D]

        xz = jnp.einsum("bld,de->ble", src, params["w_in"][l], precision=hp)
        xc, z = xz[..., :d_inner], xz[..., d_inner:]
        padded = jnp.pad(xc, ((0, 0), (d_conv - 1, 0), (0, 0)))
        conv = sum(params["conv_w"][l, k][None, None, :] * padded[:, k:k + L, :]
                   for k in range(d_conv)) + conv_b[None, None, :]
        xconv = conv * jax.nn.sigmoid(conv)

        xdbl = jnp.einsum("bli,ie->ble", xconv, params["w_xp"][l], precision=hp)
        dt_low = xdbl[..., :dt_rank]
        b_mat = xdbl[..., dt_rank:dt_rank + d_state]
        c_mat = xdbl[..., dt_rank + d_state:]
        dt = jax.nn.softplus(
            jnp.einsum("blr,ri->bli", dt_low, params["w_dt"][l], precision=hp) + dt_bias)
        a = -jnp.exp(params["a_log_t"][l])                        # (d_state, d_inner)

        def step(h, inp):
            dt_t, x_t, b_t, c_t = inp
            da = jnp.exp(dt_t[:, None, :] * a[None])
            h = da * h + dt_t[:, None, :] * b_t[:, :, None] * x_t[:, None, :]
            y_t = jnp.sum(h * c_t[:, :, None], axis=1) + d_param[None, :] * x_t
            return h, y_t

        h0 = jnp.zeros((bs * n_vars, d_state, d_inner), jnp.float32)
        _, ys = lax.scan(step, h0, (jnp.swapaxes(dt, 0, 1), jnp.swapaxes(xconv, 0, 1),
                                    jnp.swapaxes(b_mat, 0, 1), jnp.swapaxes(c_mat, 0, 1)))
        y = jnp.swapaxes(ys, 0, 1) * (z * jax.nn.sigmoid(z))
        out = jnp.einsum("bli,id->bld", y, params["w_out"][l], precision=hp)
        res = src + out
        src = ((res - bn_m[None, None, :]) / jnp.sqrt(bn_v + BN_EPS)[None, None, :]
               * bn_g[None, None, :] + bn_b[None, None, :])

    return jnp.transpose(src.reshape(bs, n_vars, L, D), (0, 1, 3, 2))


if __name__ == "__main__":
    key = jax.random.PRNGKey(0)
    k_x, k_p = jax.random.split(key)
    x = jax.random.normal(k_x, (BATCH, N_VARS, PATCH_LEN, Q_LEN), jnp.float32)
    params = init_params(k_p)

    out = jax.block_until_ready(tsmi_encoder_forward(x, params))
    ref = jax.block_until_ready(reference_forward(x, params))

    # Reference runs at HIGHEST matmul precision; the kernel uses default (bf16 MXU
    # passes with f32 accumulation), hence the 2e-2 tolerance.
    np.testing.assert_allclose(np.asarray(out), np.asarray(ref), rtol=2e-2, atol=2e-2)
    print("KERNEL_OK")
</pallas_src>

<mosaic_0001>
module attributes {stable_mosaic.version = 11 : i64} {
  func.func @tsmi_encoder_kernel(%arg0: i32, %arg1: memref<8x8x16xf32, #tpu.memory_space<vmem>>, %arg2: memref<16x32xf32, #tpu.memory_space<vmem>>, %arg3: memref<8x32xf32, #tpu.memory_space<vmem>>, %arg4: memref<2x32x64xf32, #tpu.memory_space<vmem>>, %arg5: memref<2x4x32xf32, #tpu.memory_space<vmem>>, %arg6: memref<2x32x34xf32, #tpu.memory_space<vmem>>, %arg7: memref<2x2x32xf32, #tpu.memory_space<vmem>>, %arg8: memref<2x16x32xf32, #tpu.memory_space<vmem>>, %arg9: memref<2x32x32xf32, #tpu.memory_space<vmem>>, %arg10: memref<2x8x32xf32, #tpu.memory_space<vmem>>, %arg11: memref<8x8x32xf32, #tpu.memory_space<vmem>>) attributes {dimension_semantics = [#tpu.dimension_semantics<parallel>], iteration_bounds = array<i64: 1>, scalar_prefetch = 0 : i64, scratch_operands = 0 : i64, tpu.core_type = #tpu.core_type<tc>, window_params = [{transform_indices = @transform_0, window_bounds = array<i64: 8, 8, 16>}, {pipeline_mode = #tpu.pipeline_mode<synchronous>, transform_indices = @transform_1, window_bounds = array<i64: 16, 32>}, {pipeline_mode = #tpu.pipeline_mode<synchronous>, transform_indices = @transform_2, window_bounds = array<i64: 8, 32>}, {pipeline_mode = #tpu.pipeline_mode<synchronous>, transform_indices = @transform_3, window_bounds = array<i64: 2, 32, 64>}, {pipeline_mode = #tpu.pipeline_mode<synchronous>, transform_indices = @transform_4, window_bounds = array<i64: 2, 4, 32>}, {pipeline_mode = #tpu.pipeline_mode<synchronous>, transform_indices = @transform_5, window_bounds = array<i64: 2, 32, 34>}, {pipeline_mode = #tpu.pipeline_mode<synchronous>, transform_indices = @transform_6, window_bounds = array<i64: 2, 2, 32>}, {pipeline_mode = #tpu.pipeline_mode<synchronous>, transform_indices = @transform_7, window_bounds = array<i64: 2, 16, 32>}, {pipeline_mode = #tpu.pipeline_mode<synchronous>, transform_indices = @transform_8, window_bounds = array<i64: 2, 32, 32>}, {pipeline_mode = #tpu.pipeline_mode<synchronous>, transform_indices = @transform_9, window_bounds = array<i64: 2, 8, 32>}, {transform_indices = @transform_10, window_bounds = array<i64: 8, 8, 32>}]} {
    %c0 = arith.constant 0 : index
    %c0_0 = arith.constant 0 : index
    %c0_1 = arith.constant 0 : index
    %0 = vector.load %arg1[%c0, %c0_0, %c0_1] : memref<8x8x16xf32, #tpu.memory_space<vmem>>, vector<8x8x16xf32>
    %1 = vector.shape_cast %0 : vector<8x8x16xf32> to vector<64x16xf32>
    %c0_2 = arith.constant 0 : index
    %c0_3 = arith.constant 0 : index
    %2 = vector.load %arg2[%c0_2, %c0_3] : memref<16x32xf32, #tpu.memory_space<vmem>>, vector<16x32xf32>
    %cst = arith.constant dense<0.000000e+00> : vector<64x32xf32>
    %3 = tpu.matmul %1, %2, %cst {dimension_numbers = #tpu.dot_dimension_numbers<[1], [0], [0], [1], [0, 0, 1, 1], [], []>} : vector<64x16xf32>, vector<16x32xf32>, vector<64x32xf32> -> vector<64x32xf32>
    %4 = vector.shape_cast %3 : vector<64x32xf32> to vector<8x8x32xf32>
    %c0_4 = arith.constant 0 : index
    %c0_5 = arith.constant 0 : index
    %5 = vector.load %arg3[%c0_4, %c0_5] : memref<8x32xf32, #tpu.memory_space<vmem>>, vector<8x32xf32>
    %6 = vector.shape_cast %5 : vector<8x32xf32> to vector<1x8x32xf32>
    %7 = vector.broadcast %6 : vector<1x8x32xf32> to vector<8x8x32xf32>
    %8 = arith.addf %4, %7 : vector<8x8x32xf32>
    %c0_6 = arith.constant 0 : index
    %c0_7 = arith.constant 0 : index
    %c0_8 = arith.constant 0 : index
    %9 = vector.load %arg4[%c0_6, %c0_7, %c0_8] : memref<2x32x64xf32, #tpu.memory_space<vmem>>, vector<1x32x64xf32>
    %10 = vector.shape_cast %9 : vector<1x32x64xf32> to vector<32x64xf32>
    %c0_9 = arith.constant 0 : index
    %c0_10 = arith.constant 0 : index
    %c0_11 = arith.constant 0 : index
    %11 = vector.load %arg5[%c0_9, %c0_10, %c0_11] : memref<2x4x32xf32, #tpu.memory_space<vmem>>, vector<1x4x32xf32>
    %12 = vector.shape_cast %11 : vector<1x4x32xf32> to vector<4x32xf32>
    %c0_12 = arith.constant 0 : index
    %c0_13 = arith.constant 0 : index
    %c0_14 = arith.constant 0 : index
    %13 = vector.load %arg6[%c0_12, %c0_13, %c0_14] : memref<2x32x34xf32, #tpu.memory_space<vmem>>, vector<1x32x34xf32>
    %14 = vector.shape_cast %13 : vector<1x32x34xf32> to vector<32x34xf32>
    %c0_15 = arith.constant 0 : index
    %c0_16 = arith.constant 0 : index
    %c0_17 = arith.constant 0 : index
    %15 = vector.load %arg7[%c0_15, %c0_16, %c0_17] : memref<2x2x32xf32, #tpu.memory_space<vmem>>, vector<1x2x32xf32>
    %16 = vector.shape_cast %15 : vector<1x2x32xf32> to vector<2x32xf32>
    %c0_18 = arith.constant 0 : index
    %c0_19 = arith.constant 0 : index
    %c0_20 = arith.constant 0 : index
    %17 = vector.load %arg8[%c0_18, %c0_19, %c0_20] : memref<2x16x32xf32, #tpu.memory_space<vmem>>, vector<1x16x32xf32>
    %18 = vector.shape_cast %17 : vector<1x16x32xf32> to vector<16x32xf32>
    %19 = math.exp %18 : vector<16x32xf32>
    %cst_21 = arith.constant 0.000000e+00 : f32
    %20 = vector.broadcast %cst_21 : f32 to vector<16x32xf32>
    %21 = arith.subf %20, %19 : vector<16x32xf32>
    %c0_22 = arith.constant 0 : index
    %c0_23 = arith.constant 0 : index
    %c0_24 = arith.constant 0 : index
    %22 = vector.load %arg9[%c0_22, %c0_23, %c0_24] : memref<2x32x32xf32, #tpu.memory_space<vmem>>, vector<1x32x32xf32>
    %23 = vector.shape_cast %22 : vector<1x32x32xf32> to vector<32x32xf32>
    %c0_25 = arith.constant 0 : index
    %c0_26 = arith.constant 0 : index
    %c0_27 = arith.constant 0 : index
    %24 = vector.load %arg10[%c0_25, %c0_26, %c0_27] : memref<2x8x32xf32, #tpu.memory_space<vmem>>, vector<1x8x32xf32>
    %25 = vector.shape_cast %24 : vector<1x8x32xf32> to vector<8x32xf32>
    %26 = vector.extract_strided_slice %25 {offsets = [0, 0], sizes = [1, 32], strides = [1, 1]} : vector<8x32xf32> to vector<1x32xf32>
    %27 = vector.extract_strided_slice %25 {offsets = [1, 0], sizes = [1, 32], strides = [1, 1]} : vector<8x32xf32> to vector<1x32xf32>
    %28 = vector.extract_strided_slice %25 {offsets = [2, 0], sizes = [1, 32], strides = [1, 1]} : vector<8x32xf32> to vector<1x32xf32>
    %29 = vector.extract_strided_slice %25 {offsets = [3, 0], sizes = [1, 32], strides = [1, 1]} : vector<8x32xf32> to vector<1x32xf32>
    %30 = vector.extract_strided_slice %25 {offsets = [4, 0], sizes = [1, 32], strides = [1, 1]} : vector<8x32xf32> to vector<1x32xf32>
    %31 = vector.extract_strided_slice %25 {offsets = [5, 0], sizes = [1, 32], strides = [1, 1]} : vector<8x32xf32> to vector<1x32xf32>
    %32 = vector.extract_strided_slice %25 {offsets = [6, 0], sizes = [1, 32], strides = [1, 1]} : vector<8x32xf32> to vector<1x32xf32>
    %33 = vector.shape_cast %8 : vector<8x8x32xf32> to vector<64x32xf32>
    %cst_28 = arith.constant dense<0.000000e+00> : vector<64x64xf32>
    %34 = tpu.matmul %33, %10, %cst_28 {dimension_numbers = #tpu.dot_dimension_numbers<[1], [0], [0], [1], [0, 0, 1, 1], [], []>} : vector<64x32xf32>, vector<32x64xf32>, vector<64x64xf32> -> vector<64x64xf32>
    %35 = vector.extract_strided_slice %34 {offsets = [0, 0], sizes = [64, 32], strides = [1, 1]} : vector<64x64xf32> to vector<64x32xf32>
    %36 = vector.shape_cast %35 : vector<64x32xf32> to vector<8x8x32xf32>
    %37 = vector.extract_strided_slice %34 {offsets = [0, 32], sizes = [64, 32], strides = [1, 1]} : vector<64x64xf32> to vector<64x32xf32>
    %cst_29 = arith.constant 0.000000e+00 : f32
    %38 = vector.broadcast %cst_29 : f32 to vector<8x3x32xf32>
    %39 = tpu.concatenate %38, %36 in 1 : vector<8x3x32xf32>, vector<8x8x32xf32> -> vector<8x11x32xf32>
    %40 = vector.shape_cast %26 : vector<1x32xf32> to vector<1x1x32xf32>
    %41 = vector.shape_cast %40 : vector<1x1x32xf32> to vector<1x1x32xf32>
    %42 = vector.broadcast %41 : vector<1x1x32xf32> to vector<8x8x32xf32>
    %43 = vector.extract_strided_slice %12 {offsets = [0, 0], sizes = [1, 32], strides = [1, 1]} : vector<4x32xf32> to vector<1x32xf32>
    %44 = vector.shape_cast %43 : vector<1x32xf32> to vector<1x1x32xf32>
    %45 = vector.extract_strided_slice %39 {offsets = [0, 0, 0], sizes = [8, 8, 32], strides = [1, 1, 1]} : vector<8x11x32xf32> to vector<8x8x32xf32>
    %46 = vector.broadcast %44 : vector<1x1x32xf32> to vector<8x8x32xf32>
    %47 = arith.mulf %46, %45 : vector<8x8x32xf32>
    %48 = arith.addf %42, %47 : vector<8x8x32xf32>
    %49 = vector.extract_strided_slice %12 {offsets = [1, 0], sizes = [1, 32], strides = [1, 1]} : vector<4x32xf32> to vector<1x32xf32>
    %50 = vector.shape_cast %49 : vector<1x32xf32> to vector<1x1x32xf32>
    %51 = vector.extract_strided_slice %39 {offsets = [0, 1, 0], sizes = [8, 8, 32], strides = [1, 1, 1]} : vector<8x11x32xf32> to vector<8x8x32xf32>
    %52 = vector.broadcast %50 : vector<1x1x32xf32> to vector<8x8x32xf32>
    %53 = arith.mulf %52, %51 : vector<8x8x32xf32>
    %54 = arith.addf %48, %53 : vector<8x8x32xf32>
    %55 = vector.extract_strided_slice %12 {offsets = [2, 0], sizes = [1, 32], strides = [1, 1]} : vector<4x32xf32> to vector<1x32xf32>
    %56 = vector.shape_cast %55 : vector<1x32xf32> to vector<1x1x32xf32>
    %57 = vector.extract_strided_slice %39 {offsets = [0, 2, 0], sizes = [8, 8, 32], strides = [1, 1, 1]} : vector<8x11x32xf32> to vector<8x8x32xf32>
    %58 = vector.broadcast %56 : vector<1x1x32xf32> to vector<8x8x32xf32>
    %59 = arith.mulf %58, %57 : vector<8x8x32xf32>
    %60 = arith.addf %54, %59 : vector<8x8x32xf32>
    %61 = vector.extract_strided_slice %12 {offsets = [3, 0], sizes = [1, 32], strides = [1, 1]} : vector<4x32xf32> to vector<1x32xf32>
    %62 = vector.shape_cast %61 : vector<1x32xf32> to vector<1x1x32xf32>
    %63 = vector.extract_strided_slice %39 {offsets = [0, 3, 0], sizes = [8, 8, 32], strides = [1, 1, 1]} : vector<8x11x32xf32> to vector<8x8x32xf32>
    %64 = vector.broadcast %62 : vector<1x1x32xf32> to vector<8x8x32xf32>
    %65 = arith.mulf %64, %63 : vector<8x8x32xf32>
    %66 = arith.addf %60, %65 : vector<8x8x32xf32>
    %67 = arith.negf %66 : vector<8x8x32xf32>
    %68 = math.exp %67 : vector<8x8x32xf32>
    %cst_30 = arith.constant 1.000000e+00 : f32
    %69 = vector.broadcast %cst_30 : f32 to vector<8x8x32xf32>
    %70 = arith.addf %69, %68 : vector<8x8x32xf32>
    %71 = arith.divf %69, %70 : vector<8x8x32xf32>
    %72 = arith.mulf %66, %71 : vector<8x8x32xf32>
    %73 = vector.shape_cast %72 : vector<8x8x32xf32> to vector<64x32xf32>
    %cst_31 = arith.constant dense<0.000000e+00> : vector<64x34xf32>
    %74 = tpu.matmul %73, %14, %cst_31 {dimension_numbers = #tpu.dot_dimension_numbers<[1], [0], [0], [1], [0, 0, 1, 1], [], []>} : vector<64x32xf32>, vector<32x34xf32>, vector<64x34xf32> -> vector<64x34xf32>
    %75 = vector.extract_strided_slice %74 {offsets = [0, 0], sizes = [64, 2], strides = [1, 1]} : vector<64x34xf32> to vector<64x2xf32>
    %76 = vector.extract_strided_slice %74 {offsets = [0, 2], sizes = [64, 16], strides = [1, 1]} : vector<64x34xf32> to vector<64x16xf32>
    %77 = vector.shape_cast %76 : vector<64x16xf32> to vector<8x8x16xf32>
    %78 = vector.extract_strided_slice %74 {offsets = [0, 18], sizes = [64, 16], strides = [1, 1]} : vector<64x34xf32> to vector<64x16xf32>
    %79 = vector.shape_cast %78 : vector<64x16xf32> to vector<8x8x16xf32>
    %cst_32 = arith.constant dense<0.000000e+00> : vector<64x32xf32>
    %80 = tpu.matmul %75, %16, %cst_32 {dimension_numbers = #tpu.dot_dimension_numbers<[1], [0], [0], [1], [0, 0, 1, 1], [], []>} : vector<64x2xf32>, vector<2x32xf32>, vector<64x32xf32> -> vector<64x32xf32>
    %81 = vector.broadcast %27 : vector<1x32xf32> to vector<64x32xf32>
    %82 = arith.addf %80, %81 : vector<64x32xf32>
    %cst_33 = arith.constant 2.000000e+01 : f32
    %83 = vector.broadcast %cst_33 : f32 to vector<64x32xf32>
    %84 = arith.cmpf ogt, %82, %83 : vector<64x32xf32>
    %cst_34 = arith.constant 2.000000e+01 : f32
    %85 = vector.broadcast %cst_34 : f32 to vector<64x32xf32>
    %86 = arith.minimumf %82, %85 : vector<64x32xf32>
    %87 = math.exp %86 : vector<64x32xf32>
    %cst_35 = arith.constant 1.000000e+00 : f32
    %88 = vector.broadcast %cst_35 : f32 to vector<64x32xf32>
    %89 = arith.addf %88, %87 : vector<64x32xf32>
    %90 = math.log %89 : vector<64x32xf32>
    %91 = arith.select %84, %82, %90 : vector<64x32xi1>, vector<64x32xf32>
    %92 = vector.shape_cast %91 : vector<64x32xf32> to vector<8x8x32xf32>
    %93 = vector.shape_cast %92 : vector<8x8x32xf32> to vector<8x8x1x32xf32>
    %94 = vector.shape_cast %21 : vector<16x32xf32> to vector<1x1x16x32xf32>
    %95 = vector.broadcast %93 : vector<8x8x1x32xf32> to vector<8x8x16x32xf32>
    %96 = vector.broadcast %94 : vector<1x1x16x32xf32> to vector<8x8x16x32xf32>
    %97 = arith.mulf %95, %96 : vector<8x8x16x32xf32>
    %98 = math.exp %97 : vector<8x8x16x32xf32>
    %99 = vector.shape_cast %92 : vector<8x8x32xf32> to vector<8x8x1x32xf32>
    %100 = vector.shape_cast %77 : vector<8x8x16xf32> to vector<8x8x16x1xf32>
    %101 = vector.broadcast %99 : vector<8x8x1x32xf32> to vector<8x8x16x32xf32>
    %102 = vector.broadcast %100 : vector<8x8x16x1xf32> to vector<8x8x16x32xf32>
    %103 = arith.mulf %101, %102 : vector<8x8x16x32xf32>
    %104 = vector.shape_cast %72 : vector<8x8x32xf32> to vector<8x8x1x32xf32>
    %105 = vector.broadcast %104 : vector<8x8x1x32xf32> to vector<8x8x16x32xf32>
    %106 = arith.mulf %103, %105 : vector<8x8x16x32xf32>
    %cst_36 = arith.constant 0.000000e+00 : f32
    %107 = vector.broadcast %cst_36 : f32 to vector<8x16x32xf32>
    %108 = vector.extract_strided_slice %98 {offsets = [0, 0, 0, 0], sizes = [8, 1, 16, 32], strides = [1, 1, 1, 1]} : vector<8x8x16x32xf32> to vector<8x1x16x32xf32>
    %109 = vector.shape_cast %108 : vector<8x1x16x32xf32> to vector<8x16x32xf32>
    %110 = arith.mulf %109, %107 : vector<8x16x32xf32>
    %111 = vector.extract_strided_slice %106 {offsets = [0, 0, 0, 0], sizes = [8, 1, 16, 32], strides = [1, 1, 1, 1]} : vector<8x8x16x32xf32> to vector<8x1x16x32xf32>
    %112 = vector.shape_cast %111 : vector<8x1x16x32xf32> to vector<8x16x32xf32>
    %113 = arith.addf %110, %112 : vector<8x16x32xf32>
    %114 = vector.extract_strided_slice %98 {offsets = [0, 1, 0, 0], sizes = [8, 1, 16, 32], strides = [1, 1, 1, 1]} : vector<8x8x16x32xf32> to vector<8x1x16x32xf32>
    %115 = vector.shape_cast %114 : vector<8x1x16x32xf32> to vector<8x16x32xf32>
    %116 = arith.mulf %115, %113 : vector<8x16x32xf32>
    %117 = vector.extract_strided_slice %106 {offsets = [0, 1, 0, 0], sizes = [8, 1, 16, 32], strides = [1, 1, 1, 1]} : vector<8x8x16x32xf32> to vector<8x1x16x32xf32>
    %118 = vector.shape_cast %117 : vector<8x1x16x32xf32> to vector<8x16x32xf32>
    %119 = arith.addf %116, %118 : vector<8x16x32xf32>
    %120 = vector.extract_strided_slice %98 {offsets = [0, 2, 0, 0], sizes = [8, 1, 16, 32], strides = [1, 1, 1, 1]} : vector<8x8x16x32xf32> to vector<8x1x16x32xf32>
    %121 = vector.shape_cast %120 : vector<8x1x16x32xf32> to vector<8x16x32xf32>
    %122 = arith.mulf %121, %119 : vector<8x16x32xf32>
    %123 = vector.extract_strided_slice %106 {offsets = [0, 2, 0, 0], sizes = [8, 1, 16, 32], strides = [1, 1, 1, 1]} : vector<8x8x16x32xf32> to vector<8x1x16x32xf32>
    %124 = vector.shape_cast %123 : vector<8x1x16x32xf32> to vector<8x16x32xf32>
    %125 = arith.addf %122, %124 : vector<8x16x32xf32>
    %126 = vector.extract_strided_slice %98 {offsets = [0, 3, 0, 0], sizes = [8, 1, 16, 32], strides = [1, 1, 1, 1]} : vector<8x8x16x32xf32> to vector<8x1x16x32xf32>
    %127 = vector.shape_cast %126 : vector<8x1x16x32xf32> to vector<8x16x32xf32>
    %128 = arith.mulf %127, %125 : vector<8x16x32xf32>
    %129 = vector.extract_strided_slice %106 {offsets = [0, 3, 0, 0], sizes = [8, 1, 16, 32], strides = [1, 1, 1, 1]} : vector<8x8x16x32xf32> to vector<8x1x16x32xf32>
    %130 = vector.shape_cast %129 : vector<8x1x16x32xf32> to vector<8x16x32xf32>
    %131 = arith.addf %128, %130 : vector<8x16x32xf32>
    %132 = vector.extract_strided_slice %98 {offsets = [0, 4, 0, 0], sizes = [8, 1, 16, 32], strides = [1, 1, 1, 1]} : vector<8x8x16x32xf32> to vector<8x1x16x32xf32>
    %133 = vector.shape_cast %132 : vector<8x1x16x32xf32> to vector<8x16x32xf32>
    %134 = arith.mulf %133, %131 : vector<8x16x32xf32>
    %135 = vector.extract_strided_slice %106 {offsets = [0, 4, 0, 0], sizes = [8, 1, 16, 32], strides = [1, 1, 1, 1]} : vector<8x8x16x32xf32> to vector<8x1x16x32xf32>
    %136 = vector.shape_cast %135 : vector<8x1x16x32xf32> to vector<8x16x32xf32>
    %137 = arith.addf %134, %136 : vector<8x16x32xf32>
    %138 = vector.extract_strided_slice %98 {offsets = [0, 5, 0, 0], sizes = [8, 1, 16, 32], strides = [1, 1, 1, 1]} : vector<8x8x16x32xf32> to vector<8x1x16x32xf32>
    %139 = vector.shape_cast %138 : vector<8x1x16x32xf32> to vector<8x16x32xf32>
    %140 = arith.mulf %139, %137 : vector<8x16x32xf32>
    %141 = vector.extract_strided_slice %106 {offsets = [0, 5, 0, 0], sizes = [8, 1, 16, 32], strides = [1, 1, 1, 1]} : vector<8x8x16x32xf32> to vector<8x1x16x32xf32>
    %142 = vector.shape_cast %141 : vector<8x1x16x32xf32> to vector<8x16x32xf32>
    %143 = arith.addf %140, %142 : vector<8x16x32xf32>
    %144 = vector.extract_strided_slice %98 {offsets = [0, 6, 0, 0], sizes = [8, 1, 16, 32], strides = [1, 1, 1, 1]} : vector<8x8x16x32xf32> to vector<8x1x16x32xf32>
    %145 = vector.shape_cast %144 : vector<8x1x16x32xf32> to vector<8x16x32xf32>
    %146 = arith.mulf %145, %143 : vector<8x16x32xf32>
    %147 = vector.extract_strided_slice %106 {offsets = [0, 6, 0, 0], sizes = [8, 1, 16, 32], strides = [1, 1, 1, 1]} : vector<8x8x16x32xf32> to vector<8x1x16x32xf32>
    %148 = vector.shape_cast %147 : vector<8x1x16x32xf32> to vector<8x16x32xf32>
    %149 = arith.addf %146, %148 : vector<8x16x32xf32>
    %150 = vector.extract_strided_slice %98 {offsets = [0, 7, 0, 0], sizes = [8, 1, 16, 32], strides = [1, 1, 1, 1]} : vector<8x8x16x32xf32> to vector<8x1x16x32xf32>
    %151 = vector.shape_cast %150 : vector<8x1x16x32xf32> to vector<8x16x32xf32>
    %152 = arith.mulf %151, %149 : vector<8x16x32xf32>
    %153 = vector.extract_strided_slice %106 {offsets = [0, 7, 0, 0], sizes = [8, 1, 16, 32], strides = [1, 1, 1, 1]} : vector<8x8x16x32xf32> to vector<8x1x16x32xf32>
    %154 = vector.shape_cast %153 : vector<8x1x16x32xf32> to vector<8x16x32xf32>
    %155 = arith.addf %152, %154 : vector<8x16x32xf32>
    %156 = vector.shape_cast %113 : vector<8x16x32xf32> to vector<8x1x16x32xf32>
    %157 = vector.shape_cast %119 : vector<8x16x32xf32> to vector<8x1x16x32xf32>
    %158 = vector.shape_cast %125 : vector<8x16x32xf32> to vector<8x1x16x32xf32>
    %159 = vector.shape_cast %131 : vector<8x16x32xf32> to vector<8x1x16x32xf32>
    %160 = vector.shape_cast %137 : vector<8x16x32xf32> to vector<8x1x16x32xf32>
    %161 = vector.shape_cast %143 : vector<8x16x32xf32> to vector<8x1x16x32xf32>
    %162 = vector.shape_cast %149 : vector<8x16x32xf32> to vector<8x1x16x32xf32>
    %163 = vector.shape_cast %155 : vector<8x16x32xf32> to vector<8x1x16x32xf32>
    %164 = tpu.concatenate %156, %157, %158, %159, %160, %161, %162, %163 in 1 : vector<8x1x16x32xf32>, vector<8x1x16x32xf32>, vector<8x1x16x32xf32>, vector<8x1x16x32xf32>, vector<8x1x16x32xf32>, vector<8x1x16x32xf32>, vector<8x1x16x32xf32>, vector<8x1x16x32xf32> -> vector<8x8x16x32xf32>
    %165 = vector.shape_cast %79 : vector<8x8x16xf32> to vector<8x8x16x1xf32>
    %166 = vector.broadcast %165 : vector<8x8x16x1xf32> to vector<8x8x16x32xf32>
    %167 = arith.mulf %164, %166 : vector<8x8x16x32xf32>
    %cst_37 = arith.constant dense<0.000000e+00> : vector<8x8x32xf32>
    %168 = vector.multi_reduction <add>, %167, %cst_37 [2] : vector<8x8x16x32xf32> to vector<8x8x32xf32>
    %169 = vector.shape_cast %28 : vector<1x32xf32> to vector<1x1x32xf32>
    %170 = vector.broadcast %169 : vector<1x1x32xf32> to vector<8x8x32xf32>
    %171 = arith.mulf %170, %72 : vector<8x8x32xf32>
    %172 = arith.addf %168, %171 : vector<8x8x32xf32>
    %173 = vector.shape_cast %172 : vector<8x8x32xf32> to vector<64x32xf32>
    %174 = arith.negf %37 : vector<64x32xf32>
    %175 = math.exp %174 : vector<64x32xf32>
    %cst_38 = arith.constant 1.000000e+00 : f32
    %176 = vector.broadcast %cst_38 : f32 to vector<64x32xf32>
    %177 = arith.addf %176, %175 : vector<64x32xf32>
    %178 = arith.divf %176, %177 : vector<64x32xf32>
    %179 = arith.mulf %37, %178 : vector<64x32xf32>
    %180 = arith.mulf %173, %179 : vector<64x32xf32>
    %cst_39 = arith.constant dense<0.000000e+00> : vector<64x32xf32>
    %181 = tpu.matmul %180, %23, %cst_39 {dimension_numbers = #tpu.dot_dimension_numbers<[1], [0], [0], [1], [0, 0, 1, 1], [], []>} : vector<64x32xf32>, vector<32x32xf32>, vector<64x32xf32> -> vector<64x32xf32>
    %182 = vector.shape_cast %181 : vector<64x32xf32> to vector<8x8x32xf32>
    %183 = arith.addf %8, %182 : vector<8x8x32xf32>
    %cst_40 = arith.constant 9.99999974E-6 : f32
    %184 = vector.broadcast %cst_40 : f32 to vector<1x32xf32>
    %185 = arith.addf %32, %184 : vector<1x32xf32>
    %186 = math.rsqrt %185 : vector<1x32xf32>
    %187 = arith.mulf %29, %186 : vector<1x32xf32>
    %188 = vector.shape_cast %187 : vector<1x32xf32> to vector<1x1x32xf32>
    %189 = arith.mulf %31, %29 : vector<1x32xf32>
    %190 = arith.mulf %189, %186 : vector<1x32xf32>
    %191 = arith.subf %30, %190 : vector<1x32xf32>
    %192 = vector.shape_cast %191 : vector<1x32xf32> to vector<1x1x32xf32>
    %193 = vector.broadcast %188 : vector<1x1x32xf32> to vector<8x8x32xf32>
    %194 = arith.mulf %183, %193 : vector<8x8x32xf32>
    %195 = vector.broadcast %192 : vector<1x1x32xf32> to vector<8x8x32xf32>
    %196 = arith.addf %194, %195 : vector<8x8x32xf32>
    %c1 = arith.constant 1 : index
    %c0_41 = arith.constant 0 : index
    %c0_42 = arith.constant 0 : index
    %197 = vector.load %arg4[%c1, %c0_41, %c0_42] : memref<2x32x64xf32, #tpu.memory_space<vmem>>, vector<1x32x64xf32>
    %198 = vector.shape_cast %197 : vector<1x32x64xf32> to vector<32x64xf32>
    %c1_43 = arith.constant 1 : index
    %c0_44 = arith.constant 0 : index
    %c0_45 = arith.constant 0 : index
    %199 = vector.load %arg5[%c1_43, %c0_44, %c0_45] : memref<2x4x32xf32, #tpu.memory_space<vmem>>, vector<1x4x32xf32>
    %200 = vector.shape_cast %199 : vector<1x4x32xf32> to vector<4x32xf32>
    %c1_46 = arith.constant 1 : index
    %c0_47 = arith.constant 0 : index
    %c0_48 = arith.constant 0 : index
    %201 = vector.load %arg6[%c1_46, %c0_47, %c0_48] : memref<2x32x34xf32, #tpu.memory_space<vmem>>, vector<1x32x34xf32>
    %202 = vector.shape_cast %201 : vector<1x32x34xf32> to vector<32x34xf32>
    %c1_49 = arith.constant 1 : index
    %c0_50 = arith.constant 0 : index
    %c0_51 = arith.constant 0 : index
    %203 = vector.load %arg7[%c1_49, %c0_50, %c0_51] : memref<2x2x32xf32, #tpu.memory_space<vmem>>, vector<1x2x32xf32>
    %204 = vector.shape_cast %203 : vector<1x2x32xf32> to vector<2x32xf32>
    %c1_52 = arith.constant 1 : index
    %c0_53 = arith.constant 0 : index
    %c0_54 = arith.constant 0 : index
    %205 = vector.load %arg8[%c1_52, %c0_53, %c0_54] : memref<2x16x32xf32, #tpu.memory_space<vmem>>, vector<1x16x32xf32>
    %206 = vector.shape_cast %205 : vector<1x16x32xf32> to vector<16x32xf32>
    %207 = math.exp %206 : vector<16x32xf32>
    %cst_55 = arith.constant 0.000000e+00 : f32
    %208 = vector.broadcast %cst_55 : f32 to vector<16x32xf32>
    %209 = arith.subf %208, %207 : vector<16x32xf32>
    %c1_56 = arith.constant 1 : index
    %c0_57 = arith.constant 0 : index
    %c0_58 = arith.constant 0 : index
    %210 = vector.load %arg9[%c1_56, %c0_57, %c0_58] : memref<2x32x32xf32, #tpu.memory_space<vmem>>, vector<1x32x32xf32>
    %211 = vector.shape_cast %210 : vector<1x32x32xf32> to vector<32x32xf32>
    %c1_59 = arith.constant 1 : index
    %c0_60 = arith.constant 0 : index
    %c0_61 = arith.constant 0 : index
    %212 = vector.load %arg10[%c1_59, %c0_60, %c0_61] : memref<2x8x32xf32, #tpu.memory_space<vmem>>, vector<1x8x32xf32>
    %213 = vector.shape_cast %212 : vector<1x8x32xf32> to vector<8x32xf32>
    %214 = vector.extract_strided_slice %213 {offsets = [0, 0], sizes = [1, 32], strides = [1, 1]} : vector<8x32xf32> to vector<1x32xf32>
    %215 = vector.extract_strided_slice %213 {offsets = [1, 0], sizes = [1, 32], strides = [1, 1]} : vector<8x32xf32> to vector<1x32xf32>
    %216 = vector.extract_strided_slice %213 {offsets = [2, 0], sizes = [1, 32], strides = [1, 1]} : vector<8x32xf32> to vector<1x32xf32>
    %217 = vector.extract_strided_slice %213 {offsets = [3, 0], sizes = [1, 32], strides = [1, 1]} : vector<8x32xf32> to vector<1x32xf32>
    %218 = vector.extract_strided_slice %213 {offsets = [4, 0], sizes = [1, 32], strides = [1, 1]} : vector<8x32xf32> to vector<1x32xf32>
    %219 = vector.extract_strided_slice %213 {offsets = [5, 0], sizes = [1, 32], strides = [1, 1]} : vector<8x32xf32> to vector<1x32xf32>
    %220 = vector.extract_strided_slice %213 {offsets = [6, 0], sizes = [1, 32], strides = [1, 1]} : vector<8x32xf32> to vector<1x32xf32>
    %221 = vector.shape_cast %196 : vector<8x8x32xf32> to vector<64x32xf32>
    %cst_62 = arith.constant dense<0.000000e+00> : vector<64x64xf32>
    %222 = tpu.matmul %221, %198, %cst_62 {dimension_numbers = #tpu.dot_dimension_numbers<[1], [0], [0], [1], [0, 0, 1, 1], [], []>} : vector<64x32xf32>, vector<32x64xf32>, vector<64x64xf32> -> vector<64x64xf32>
    %223 = vector.extract_strided_slice %222 {offsets = [0, 0], sizes = [64, 32], strides = [1, 1]} : vector<64x64xf32> to vector<64x32xf32>
    %224 = vector.shape_cast %223 : vector<64x32xf32> to vector<8x8x32xf32>
    %225 = vector.extract_strided_slice %222 {offsets = [0, 32], sizes = [64, 32], strides = [1, 1]} : vector<64x64xf32> to vector<64x32xf32>
    %cst_63 = arith.constant 0.000000e+00 : f32
    %226 = vector.broadcast %cst_63 : f32 to vector<8x3x32xf32>
    %227 = tpu.concatenate %226, %224 in 1 : vector<8x3x32xf32>, vector<8x8x32xf32> -> vector<8x11x32xf32>
    %228 = vector.shape_cast %214 : vector<1x32xf32> to vector<1x1x32xf32>
    %229 = vector.shape_cast %228 : vector<1x1x32xf32> to vector<1x1x32xf32>
    %230 = vector.broadcast %229 : vector<1x1x32xf32> to vector<8x8x32xf32>
    %231 = vector.extract_strided_slice %200 {offsets = [0, 0], sizes = [1, 32], strides = [1, 1]} : vector<4x32xf32> to vector<1x32xf32>
    %232 = vector.shape_cast %231 : vector<1x32xf32> to vector<1x1x32xf32>
    %233 = vector.extract_strided_slice %227 {offsets = [0, 0, 0], sizes = [8, 8, 32], strides = [1, 1, 1]} : vector<8x11x32xf32> to vector<8x8x32xf32>
    %234 = vector.broadcast %232 : vector<1x1x32xf32> to vector<8x8x32xf32>
    %235 = arith.mulf %234, %233 : vector<8x8x32xf32>
    %236 = arith.addf %230, %235 : vector<8x8x32xf32>
    %237 = vector.extract_strided_slice %200 {offsets = [1, 0], sizes = [1, 32], strides = [1, 1]} : vector<4x32xf32> to vector<1x32xf32>
    %238 = vector.shape_cast %237 : vector<1x32xf32> to vector<1x1x32xf32>
    %239 = vector.extract_strided_slice %227 {offsets = [0, 1, 0], sizes = [8, 8, 32], strides = [1, 1, 1]} : vector<8x11x32xf32> to vector<8x8x32xf32>
    %240 = vector.broadcast %238 : vector<1x1x32xf32> to vector<8x8x32xf32>
    %241 = arith.mulf %240, %239 : vector<8x8x32xf32>
    %242 = arith.addf %236, %241 : vector<8x8x32xf32>
    %243 = vector.extract_strided_slice %200 {offsets = [2, 0], sizes = [1, 32], strides = [1, 1]} : vector<4x32xf32> to vector<1x32xf32>
    %244 = vector.shape_cast %243 : vector<1x32xf32> to vector<1x1x32xf32>
    %245 = vector.extract_strided_slice %227 {offsets = [0, 2, 0], sizes = [8, 8, 32], strides = [1, 1, 1]} : vector<8x11x32xf32> to vector<8x8x32xf32>
    %246 = vector.broadcast %244 : vector<1x1x32xf32> to vector<8x8x32xf32>
    %247 = arith.mulf %246, %245 : vector<8x8x32xf32>
    %248 = arith.addf %242, %247 : vector<8x8x32xf32>
    %249 = vector.extract_strided_slice %200 {offsets = [3, 0], sizes = [1, 32], strides = [1, 1]} : vector<4x32xf32> to vector<1x32xf32>
    %250 = vector.shape_cast %249 : vector<1x32xf32> to vector<1x1x32xf32>
    %251 = vector.extract_strided_slice %227 {offsets = [0, 3, 0], sizes = [8, 8, 32], strides = [1, 1, 1]} : vector<8x11x32xf32> to vector<8x8x32xf32>
    %252 = vector.broadcast %250 : vector<1x1x32xf32> to vector<8x8x32xf32>
    %253 = arith.mulf %252, %251 : vector<8x8x32xf32>
    %254 = arith.addf %248, %253 : vector<8x8x32xf32>
    %255 = arith.negf %254 : vector<8x8x32xf32>
    %256 = math.exp %255 : vector<8x8x32xf32>
    %cst_64 = arith.constant 1.000000e+00 : f32
    %257 = vector.broadcast %cst_64 : f32 to vector<8x8x32xf32>
    %258 = arith.addf %257, %256 : vector<8x8x32xf32>
    %259 = arith.divf %257, %258 : vector<8x8x32xf32>
    %260 = arith.mulf %254, %259 : vector<8x8x32xf32>
    %261 = vector.shape_cast %260 : vector<8x8x32xf32> to vector<64x32xf32>
    %cst_65 = arith.constant dense<0.000000e+00> : vector<64x34xf32>
    %262 = tpu.matmul %261, %202, %cst_65 {dimension_numbers = #tpu.dot_dimension_numbers<[1], [0], [0], [1], [0, 0, 1, 1], [], []>} : vector<64x32xf32>, vector<32x34xf32>, vector<64x34xf32> -> vector<64x34xf32>
    %263 = vector.extract_strided_slice %262 {offsets = [0, 0], sizes = [64, 2], strides = [1, 1]} : vector<64x34xf32> to vector<64x2xf32>
    %264 = vector.extract_strided_slice %262 {offsets = [0, 2], sizes = [64, 16], strides = [1, 1]} : vector<64x34xf32> to vector<64x16xf32>
    %265 = vector.shape_cast %264 : vector<64x16xf32> to vector<8x8x16xf32>
    %266 = vector.extract_strided_slice %262 {offsets = [0, 18], sizes = [64, 16], strides = [1, 1]} : vector<64x34xf32> to vector<64x16xf32>
    %267 = vector.shape_cast %266 : vector<64x16xf32> to vector<8x8x16xf32>
    %cst_66 = arith.constant dense<0.000000e+00> : vector<64x32xf32>
    %268 = tpu.matmul %263, %204, %cst_66 {dimension_numbers = #tpu.dot_dimension_numbers<[1], [0], [0], [1], [0, 0, 1, 1], [], []>} : vector<64x2xf32>, vector<2x32xf32>, vector<64x32xf32> -> vector<64x32xf32>
    %269 = vector.broadcast %215 : vector<1x32xf32> to vector<64x32xf32>
    %270 = arith.addf %268, %269 : vector<64x32xf32>
    %cst_67 = arith.constant 2.000000e+01 : f32
    %271 = vector.broadcast %cst_67 : f32 to vector<64x32xf32>
    %272 = arith.cmpf ogt, %270, %271 : vector<64x32xf32>
    %cst_68 = arith.constant 2.000000e+01 : f32
    %273 = vector.broadcast %cst_68 : f32 to vector<64x32xf32>
    %274 = arith.minimumf %270, %273 : vector<64x32xf32>
    %275 = math.exp %274 : vector<64x32xf32>
    %cst_69 = arith.constant 1.000000e+00 : f32
    %276 = vector.broadcast %cst_69 : f32 to vector<64x32xf32>
    %277 = arith.addf %276, %275 : vector<64x32xf32>
    %278 = math.log %277 : vector<64x32xf32>
    %279 = arith.select %272, %270, %278 : vector<64x32xi1>, vector<64x32xf32>
    %280 = vector.shape_cast %279 : vector<64x32xf32> to vector<8x8x32xf32>
    %281 = vector.shape_cast %280 : vector<8x8x32xf32> to vector<8x8x1x32xf32>
    %282 = vector.shape_cast %209 : vector<16x32xf32> to vector<1x1x16x32xf32>
    %283 = vector.broadcast %281 : vector<8x8x1x32xf32> to vector<8x8x16x32xf32>
    %284 = vector.broadcast %282 : vector<1x1x16x32xf32> to vector<8x8x16x32xf32>
    %285 = arith.mulf %283, %284 : vector<8x8x16x32xf32>
    %286 = math.exp %285 : vector<8x8x16x32xf32>
    %287 = vector.shape_cast %280 : vector<8x8x32xf32> to vector<8x8x1x32xf32>
    %288 = vector.shape_cast %265 : vector<8x8x16xf32> to vector<8x8x16x1xf32>
    %289 = vector.broadcast %287 : vector<8x8x1x32xf32> to vector<8x8x16x32xf32>
    %290 = vector.broadcast %288 : vector<8x8x16x1xf32> to vector<8x8x16x32xf32>
    %291 = arith.mulf %289, %290 : vector<8x8x16x32xf32>
    %292 = vector.shape_cast %260 : vector<8x8x32xf32> to vector<8x8x1x32xf32>
    %293 = vector.broadcast %292 : vector<8x8x1x32xf32> to vector<8x8x16x32xf32>
    %294 = arith.mulf %291, %293 : vector<8x8x16x32xf32>
    %cst_70 = arith.constant 0.000000e+00 : f32
    %295 = vector.broadcast %cst_70 : f32 to vector<8x16x32xf32>
    %296 = vector.extract_strided_slice %286 {offsets = [0, 0, 0, 0], sizes = [8, 1, 16, 32], strides = [1, 1, 1, 1]} : vector<8x8x16x32xf32> to vector<8x1x16x32xf32>
    %297 = vector.shape_cast %296 : vector<8x1x16x32xf32> to vector<8x16x32xf32>
    %298 = arith.mulf %297, %295 : vector<8x16x32xf32>
    %299 = vector.extract_strided_slice %294 {offsets = [0, 0, 0, 0], sizes = [8, 1, 16, 32], strides = [1, 1, 1, 1]} : vector<8x8x16x32xf32> to vector<8x1x16x32xf32>
    %300 = vector.shape_cast %299 : vector<8x1x16x32xf32> to vector<8x16x32xf32>
    %301 = arith.addf %298, %300 : vector<8x16x32xf32>
    %302 = vector.extract_strided_slice %286 {offsets = [0, 1, 0, 0], sizes = [8, 1, 16, 32], strides = [1, 1, 1, 1]} : vector<8x8x16x32xf32> to vector<8x1x16x32xf32>
    %303 = vector.shape_cast %302 : vector<8x1x16x32xf32> to vector<8x16x32xf32>
    %304 = arith.mulf %303, %301 : vector<8x16x32xf32>
    %305 = vector.extract_strided_slice %294 {offsets = [0, 1, 0, 0], sizes = [8, 1, 16, 32], strides = [1, 1, 1, 1]} : vector<8x8x16x32xf32> to vector<8x1x16x32xf32>
    %306 = vector.shape_cast %305 : vector<8x1x16x32xf32> to vector<8x16x32xf32>
    %307 = arith.addf %304, %306 : vector<8x16x32xf32>
    %308 = vector.extract_strided_slice %286 {offsets = [0, 2, 0, 0], sizes = [8, 1, 16, 32], strides = [1, 1, 1, 1]} : vector<8x8x16x32xf32> to vector<8x1x16x32xf32>
    %309 = vector.shape_cast %308 : vector<8x1x16x32xf32> to vector<8x16x32xf32>
    %310 = arith.mulf %309, %307 : vector<8x16x32xf32>
    %311 = vector.extract_strided_slice %294 {offsets = [0, 2, 0, 0], sizes = [8, 1, 16, 32], strides = [1, 1, 1, 1]} : vector<8x8x16x32xf32> to vector<8x1x16x32xf32>
    %312 = vector.shape_cast %311 : vector<8x1x16x32xf32> to vector<8x16x32xf32>
    %313 = arith.addf %310, %312 : vector<8x16x32xf32>
    %314 = vector.extract_strided_slice %286 {offsets = [0, 3, 0, 0], sizes = [8, 1, 16, 32], strides = [1, 1, 1, 1]} : vector<8x8x16x32xf32> to vector<8x1x16x32xf32>
    %315 = vector.shape_cast %314 : vector<8x1x16x32xf32> to vector<8x16x32xf32>
    %316 = arith.mulf %315, %313 : vector<8x16x32xf32>
    %317 = vector.extract_strided_slice %294 {offsets = [0, 3, 0, 0], sizes = [8, 1, 16, 32], strides = [1, 1, 1, 1]} : vector<8x8x16x32xf32> to vector<8x1x16x32xf32>
    %318 = vector.shape_cast %317 : vector<8x1x16x32xf32> to vector<8x16x32xf32>
    %319 = arith.addf %316, %318 : vector<8x16x32xf32>
    %320 = vector.extract_strided_slice %286 {offsets = [0, 4, 0, 0], sizes = [8, 1, 16, 32], strides = [1, 1, 1, 1]} : vector<8x8x16x32xf32> to vector<8x1x16x32xf32>
    %321 = vector.shape_cast %320 : vector<8x1x16x32xf32> to vector<8x16x32xf32>
    %322 = arith.mulf %321, %319 : vector<8x16x32xf32>
    %323 = vector.extract_strided_slice %294 {offsets = [0, 4, 0, 0], sizes = [8, 1, 16, 32], strides = [1, 1, 1, 1]} : vector<8x8x16x32xf32> to vector<8x1x16x32xf32>
    %324 = vector.shape_cast %323 : vector<8x1x16x32xf32> to vector<8x16x32xf32>
    %325 = arith.addf %322, %324 : vector<8x16x32xf32>
    %326 = vector.extract_strided_slice %286 {offsets = [0, 5, 0, 0], sizes = [8, 1, 16, 32], strides = [1, 1, 1, 1]} : vector<8x8x16x32xf32> to vector<8x1x16x32xf32>
    %327 = vector.shape_cast %326 : vector<8x1x16x32xf32> to vector<8x16x32xf32>
    %328 = arith.mulf %327, %325 : vector<8x16x32xf32>
    %329 = vector.extract_strided_slice %294 {offsets = [0, 5, 0, 0], sizes = [8, 1, 16, 32], strides = [1, 1, 1, 1]} : vector<8x8x16x32xf32> to vector<8x1x16x32xf32>
    %330 = vector.shape_cast %329 : vector<8x1x16x32xf32> to vector<8x16x32xf32>
    %331 = arith.addf %328, %330 : vector<8x16x32xf32>
    %332 = vector.extract_strided_slice %286 {offsets = [0, 6, 0, 0], sizes = [8, 1, 16, 32], strides = [1, 1, 1, 1]} : vector<8x8x16x32xf32> to vector<8x1x16x32xf32>
    %333 = vector.shape_cast %332 : vector<8x1x16x32xf32> to vector<8x16x32xf32>
    %334 = arith.mulf %333, %331 : vector<8x16x32xf32>
    %335 = vector.extract_strided_slice %294 {offsets = [0, 6, 0, 0], sizes = [8, 1, 16, 32], strides = [1, 1, 1, 1]} : vector<8x8x16x32xf32> to vector<8x1x16x32xf32>
    %336 = vector.shape_cast %335 : vector<8x1x16x32xf32> to vector<8x16x32xf32>
    %337 = arith.addf %334, %336 : vector<8x16x32xf32>
    %338 = vector.extract_strided_slice %286 {offsets = [0, 7, 0, 0], sizes = [8, 1, 16, 32], strides = [1, 1, 1, 1]} : vector<8x8x16x32xf32> to vector<8x1x16x32xf32>
    %339 = vector.shape_cast %338 : vector<8x1x16x32xf32> to vector<8x16x32xf32>
    %340 = arith.mulf %339, %337 : vector<8x16x32xf32>
    %341 = vector.extract_strided_slice %294 {offsets = [0, 7, 0, 0], sizes = [8, 1, 16, 32], strides = [1, 1, 1, 1]} : vector<8x8x16x32xf32> to vector<8x1x16x32xf32>
    %342 = vector.shape_cast %341 : vector<8x1x16x32xf32> to vector<8x16x32xf32>
    %343 = arith.addf %340, %342 : vector<8x16x32xf32>
    %344 = vector.shape_cast %301 : vector<8x16x32xf32> to vector<8x1x16x32xf32>
    %345 = vector.shape_cast %307 : vector<8x16x32xf32> to vector<8x1x16x32xf32>
    %346 = vector.shape_cast %313 : vector<8x16x32xf32> to vector<8x1x16x32xf32>
    %347 = vector.shape_cast %319 : vector<8x16x32xf32> to vector<8x1x16x32xf32>
    %348 = vector.shape_cast %325 : vector<8x16x32xf32> to vector<8x1x16x32xf32>
    %349 = vector.shape_cast %331 : vector<8x16x32xf32> to vector<8x1x16x32xf32>
    %350 = vector.shape_cast %337 : vector<8x16x32xf32> to vector<8x1x16x32xf32>
    %351 = vector.shape_cast %343 : vector<8x16x32xf32> to vector<8x1x16x32xf32>
    %352 = tpu.concatenate %344, %345, %346, %347, %348, %349, %350, %351 in 1 : vector<8x1x16x32xf32>, vector<8x1x16x32xf32>, vector<8x1x16x32xf32>, vector<8x1x16x32xf32>, vector<8x1x16x32xf32>, vector<8x1x16x32xf32>, vector<8x1x16x32xf32>, vector<8x1x16x32xf32> -> vector<8x8x16x32xf32>
    %353 = vector.shape_cast %267 : vector<8x8x16xf32> to vector<8x8x16x1xf32>
    %354 = vector.broadcast %353 : vector<8x8x16x1xf32> to vector<8x8x16x32xf32>
    %355 = arith.mulf %352, %354 : vector<8x8x16x32xf32>
    %cst_71 = arith.constant dense<0.000000e+00> : vector<8x8x32xf32>
    %356 = vector.multi_reduction <add>, %355, %cst_71 [2] : vector<8x8x16x32xf32> to vector<8x8x32xf32>
    %357 = vector.shape_cast %216 : vector<1x32xf32> to vector<1x1x32xf32>
    %358 = vector.broadcast %357 : vector<1x1x32xf32> to vector<8x8x32xf32>
    %359 = arith.mulf %358, %260 : vector<8x8x32xf32>
    %360 = arith.addf %356, %359 : vector<8x8x32xf32>
    %361 = vector.shape_cast %360 : vector<8x8x32xf32> to vector<64x32xf32>
    %362 = arith.negf %225 : vector<64x32xf32>
    %363 = math.exp %362 : vector<64x32xf32>
    %cst_72 = arith.constant 1.000000e+00 : f32
    %364 = vector.broadcast %cst_72 : f32 to vector<64x32xf32>
    %365 = arith.addf %364, %363 : vector<64x32xf32>
    %366 = arith.divf %364, %365 : vector<64x32xf32>
    %367 = arith.mulf %225, %366 : vector<64x32xf32>
    %368 = arith.mulf %361, %367 : vector<64x32xf32>
    %cst_73 = arith.constant dense<0.000000e+00> : vector<64x32xf32>
    %369 = tpu.matmul %368, %211, %cst_73 {dimension_numbers = #tpu.dot_dimension_numbers<[1], [0], [0], [1], [0, 0, 1, 1], [], []>} : vector<64x32xf32>, vector<32x32xf32>, vector<64x32xf32> -> vector<64x32xf32>
    %370 = vector.shape_cast %369 : vector<64x32xf32> to vector<8x8x32xf32>
    %371 = arith.addf %196, %370 : vector<8x8x32xf32>
    %cst_74 = arith.constant 9.99999974E-6 : f32
    %372 = vector.broadcast %cst_74 : f32 to vector<1x32xf32>
    %373 = arith.addf %220, %372 : vector<1x32xf32>
    %374 = math.rsqrt %373 : vector<1x32xf32>
    %375 = arith.mulf %217, %374 : vector<1x32xf32>
    %376 = vector.shape_cast %375 : vector<1x32xf32> to vector<1x1x32xf32>
    %377 = arith.mulf %219, %217 : vector<1x32xf32>
    %378 = arith.mulf %377, %374 : vector<1x32xf32>
    %379 = arith.subf %218, %378 : vector<1x32xf32>
    %380 = vector.shape_cast %379 : vector<1x32xf32> to vector<1x1x32xf32>
    %381 = vector.broadcast %376 : vector<1x1x32xf32> to vector<8x8x32xf32>
    %382 = arith.mulf %371, %381 : vector<8x8x32xf32>
    %383 = vector.broadcast %380 : vector<1x1x32xf32> to vector<8x8x32xf32>
    %384 = arith.addf %382, %383 : vector<8x8x32xf32>
    %c0_75 = arith.constant 0 : index
    %c0_76 = arith.constant 0 : index
    %c0_77 = arith.constant 0 : index
    %385 = vector.load %arg11[%c0_75, %c0_76, %c0_77] : memref<8x8x32xf32, #tpu.memory_space<vmem>>, vector<8x8x32xf32>
    tpu.vector_store %arg11[%c0_75, %c0_76, %c0_77], %384 {strides = array<i32>} : memref<8x8x32xf32, #tpu.memory_space<vmem>>, vector<8x8x32xf32>,
    return
  }
  func.func @transform_0(%arg0: i32) -> (i32, i32, i32) {
    %c0_i32 = arith.constant 0 : i32
    %c0_i32_0 = arith.constant 0 : i32
    %c0_i32_1 = arith.constant 0 : i32
    return %arg0, %c0_i32, %c0_i32_0 : i32, i32, i32
  }
  func.func @transform_1(%arg0: i32) -> (i32, i32) {
    %c0_i32 = arith.constant 0 : i32
    %c0_i32_0 = arith.constant 0 : i32
    %c0_i32_1 = arith.constant 0 : i32
    return %c0_i32, %c0_i32_0 : i32, i32
  }
  func.func @transform_2(%arg0: i32) -> (i32, i32) {
    %c0_i32 = arith.constant 0 : i32
    %c0_i32_0 = arith.constant 0 : i32
    %c0_i32_1 = arith.constant 0 : i32
    return %c0_i32, %c0_i32_0 : i32, i32
  }
  func.func @transform_3(%arg0: i32) -> (i32, i32, i32) {
    %c0_i32 = arith.constant 0 : i32
    %c0_i32_0 = arith.constant 0 : i32
    %c0_i32_1 = arith.constant 0 : i32
    %c0_i32_2 = arith.constant 0 : i32
    return %c0_i32, %c0_i32_0, %c0_i32_1 : i32, i32, i32
  }
  func.func @transform_4(%arg0: i32) -> (i32, i32, i32) {
    %c0_i32 = arith.constant 0 : i32
    %c0_i32_0 = arith.constant 0 : i32
    %c0_i32_1 = arith.constant 0 : i32
    %c0_i32_2 = arith.constant 0 : i32
    return %c0_i32, %c0_i32_0, %c0_i32_1 : i32, i32, i32
  }
  func.func @transform_5(%arg0: i32) -> (i32, i32, i32) {
    %c0_i32 = arith.constant 0 : i32
    %c0_i32_0 = arith.constant 0 : i32
    %c0_i32_1 = arith.constant 0 : i32
    %c0_i32_2 = arith.constant 0 : i32
    return %c0_i32, %c0_i32_0, %c0_i32_1 : i32, i32, i32
  }
  func.func @transform_6(%arg0: i32) -> (i32, i32, i32) {
    %c0_i32 = arith.constant 0 : i32
    %c0_i32_0 = arith.constant 0 : i32
    %c0_i32_1 = arith.constant 0 : i32
    %c0_i32_2 = arith.constant 0 : i32
    return %c0_i32, %c0_i32_0, %c0_i32_1 : i32, i32, i32
  }
  func.func @transform_7(%arg0: i32) -> (i32, i32, i32) {
    %c0_i32 = arith.constant 0 : i32
    %c0_i32_0 = arith.constant 0 : i32
    %c0_i32_1 = arith.constant 0 : i32
    %c0_i32_2 = arith.constant 0 : i32
    return %c0_i32, %c0_i32_0, %c0_i32_1 : i32, i32, i32
  }
  func.func @transform_8(%arg0: i32) -> (i32, i32, i32) {
    %c0_i32 = arith.constant 0 : i32
    %c0_i32_0 = arith.constant 0 : i32
    %c0_i32_1 = arith.constant 0 : i32
    %c0_i32_2 = arith.constant 0 : i32
    return %c0_i32, %c0_i32_0, %c0_i32_1 : i32, i32, i32
  }
  func.func @transform_9(%arg0: i32) -> (i32, i32, i32) {
    %c0_i32 = arith.constant 0 : i32
    %c0_i32_0 = arith.constant 0 : i32
    %c0_i32_1 = arith.constant 0 : i32
    %c0_i32_2 = arith.constant 0 : i32
    return %c0_i32, %c0_i32_0, %c0_i32_1 : i32, i32, i32
  }
  func.func @transform_10(%arg0: i32) -> (i32, i32, i32) {
    %c0_i32 = arith.constant 0 : i32
    %c0_i32_0 = arith.constant 0 : i32
    %c0_i32_1 = arith.constant 0 : i32
    return %arg0, %c0_i32, %c0_i32_0 : i32, i32, i32
  }
}

</mosaic_0001>

<llo_original>
// kernel: tpu_custom_call.1
$region0: #{tpu_custom_call.1}
  #allocation0 [shape = 'u32[]', space=smem, size = 0x4, offset = 0x4, fixed_abs, tag = 'smem constant byte address 0x4 - core index']
  #allocation1 [shape = 'u32[144,128]{1,0:T(1,128)}', space=vmem, size = 0x12000, scoped, tag = 'internal scratch']
  %s0 = inlined_call_operand.hbm [shape: f32[8,8,16], index: 0, kind: input, shape index: {}]
  %s1 = inlined_call_operand.hbm [shape: f32[16,32], index: 1, kind: input, shape index: {}]
  %s2 = inlined_call_operand.hbm [shape: f32[8,32], index: 2, kind: input, shape index: {}]
  %s3 = inlined_call_operand.hbm [shape: f32[2,32,64], index: 3, kind: input, shape index: {}]
  %s4 = inlined_call_operand.vmem [shape: f32[2,4,32], index: 4, kind: input, shape index: {}]
  %s5 = inlined_call_operand.hbm [shape: f32[2,32,34], index: 5, kind: input, shape index: {}]
  %s6 = inlined_call_operand.vmem [shape: f32[2,2,32], index: 6, kind: input, shape index: {}]
  %s7 = inlined_call_operand.hbm [shape: f32[2,16,32], index: 7, kind: input, shape index: {}]
  %s8 = inlined_call_operand.hbm [shape: f32[2,32,32], index: 8, kind: input, shape index: {}]
  %s9 = inlined_call_operand.vmem [shape: f32[2,8,32], index: 9, kind: input, shape index: {}]
  %s10 = inlined_call_operand.hbm [shape: f32[8,8,32], index: 10, kind: output, shape index: {}]
  %s11 = sld [smem:[#allocation0]]
  $region78: #{tpu_custom_call.1} parent=0
    _
  %s13 = ssub.s32 1, %s11
  %s14 = scalar_select 0, %s13, %s11
  $region1: #{tpu_custom_call.1} parent=0
    #allocation2 [shape = 'u8[32768]{0}', space=vmem, size = 0x8000, scoped, tag = 'input window, operand 0, single buffered']
    #allocation3 [shape = 's32[1]{0}', space=sflag, size = 0x4, scoped, tag = 'scoped memory for tpu_custom_call.1']
    #allocation4 [shape = 's32[1]{0}', space=sflag, size = 0x4, scoped, tag = 'scoped memory for tpu_custom_call.1']
    #allocation5 [shape = 'u8[8192]{0}', space=vmem, size = 0x2000, scoped, tag = 'input window, operand 1, single buffered']
    #allocation6 [shape = 's32[1]{0}', space=sflag, size = 0x4, scoped, tag = 'scoped memory for tpu_custom_call.1']
    #allocation7 [shape = 'u8[4096]{0}', space=vmem, size = 0x1000, scoped, tag = 'input window, operand 2, single buffered']
    #allocation8 [shape = 'u8[32768]{0}', space=vmem, size = 0x8000, scoped, tag = 'input window, operand 3, single buffered']
    #allocation9 [shape = 's32[1]{0}', space=sflag, size = 0x4, scoped, tag = 'scoped memory for tpu_custom_call.1']
    #allocation10 [shape = 'u8[32768]{0}', space=vmem, size = 0x8000, scoped, tag = 'input window, operand 5, single buffered']
    #allocation11 [shape = 'u8[16384]{0}', space=vmem, size = 0x4000, scoped, tag = 'input window, operand 7, single buffered']
    #allocation12 [shape = 's32[1]{0}', space=sflag, size = 0x4, scoped, tag = 'scoped memory for tpu_custom_call.1']
    #allocation13 [shape = 'u8[32768]{0}', space=vmem, size = 0x8000, scoped, tag = 'input window, operand 8, single buffered']
    #allocation14 [shape = 'u8[32768]{0}', space=vmem, size = 0x8000, scoped, tag = 'output window, operand 0, single buffered']
    %15 = vsyncpa [#allocation3], 0
    %16 = vsyncpa [#allocation6], 0
    %17 = vsyncpa [#allocation9], 0
    %18 = vsyncpa [#allocation12], 0
    %19 = vsyncpa [#allocation4], 0
    // Predicated region
    $region2: #{tpu_custom_call.1} parent=1 // pred_check
      _
    $region3: #{tpu_custom_call.1} parent=1 // pred_check_branch
      %21 = sbr.rel (0) target = $region5
    $region4: #{tpu_custom_call.1} parent=1 // pred_region
      %s23 = ssub.s32 1024, 1024
      %24 = vsyncadd [#allocation3], %s23
      %s25 = sshll.u32 [#allocation2], 4
      %s26 = int_to_ptr.vmem [resolvable:$true] %s25
      %31 = dma.hbm_to_vmem [thread:$0]  %s0, 1024, %s26, [#allocation3], 128, 128, 8
    $region5: #{tpu_custom_call.1} parent=1 // pred_fallthru
      _
    // Predicated region
    $region6: #{tpu_custom_call.1} parent=1 // pred_check
      _
    $region7: #{tpu_custom_call.1} parent=1 // pred_check_branch
      %33 = sbr.rel (0) target = $region9
    $region8: #{tpu_custom_call.1} parent=1 // pred_region
      %s35 = ssub.s32 256, 256
      %36 = vsyncadd [#allocation6], %s35
      %s37 = sshll.u32 [#allocation5], 4
      %s38 = int_to_ptr.vmem [resolvable:$true] %s37
      %43 = dma.hbm_to_vmem [thread:$0]  %s1, 256, %s38, [#allocation6], 128, 128, 8
    $region9: #{tpu_custom_call.1} parent=1 // pred_fallthru
      _
    // Predicated region
    $region10: #{tpu_custom_call.1} parent=1 // pred_check
      _
    $region11: #{tpu_custom_call.1} parent=1 // pred_check_branch
      %45 = sbr.rel (0) target = $region13
    $region12: #{tpu_custom_call.1} parent=1 // pred_region
      %s47 = ssub.s32 128, 128
      %48 = vsyncadd [#allocation6], %s47
      %s50 = sshll.u32 [#allocation7], 4
      %s51 = int_to_ptr.vmem [resolvable:$true] %s50
      %53 = dma.hbm_to_vmem [thread:$0]  %s2, 128, %s51, [#allocation6]
    $region13: #{tpu_custom_call.1} parent=1 // pred_fallthru
      _
    // Predicated region
    $region14: #{tpu_custom_call.1} parent=1 // pred_check
      _
    $region15: #{tpu_custom_call.1} parent=1 // pred_check_branch
      %55 = sbr.rel (0) target = $region17
    $region16: #{tpu_custom_call.1} parent=1 // pred_region
      %s57 = ssub.s32 1024, 1024
      %58 = vsyncadd [#allocation9], %s57
      %s59 = sshll.u32 [#allocation8], 4
      %s60 = int_to_ptr.vmem [resolvable:$true] %s59
      %65 = dma.hbm_to_vmem [thread:$0]  %s3, 1024, %s60, [#allocation9], 128, 128, 8
    $region17: #{tpu_custom_call.1} parent=1 // pred_fallthru
      _
    // Predicated region
    $region18: #{tpu_custom_call.1} parent=1 // pred_check
      _
    $region19: #{tpu_custom_call.1} parent=1 // pred_check_branch
      %67 = sbr.rel (0) target = $region21
    $region20: #{tpu_custom_call.1} parent=1 // pred_region
      _
    $region21: #{tpu_custom_call.1} parent=1 // pred_fallthru
      _
    // Predicated region
    $region22: #{tpu_custom_call.1} parent=1 // pred_check
      _
    $region23: #{tpu_custom_call.1} parent=1 // pred_check_branch
      %69 = sbr.rel (0) target = $region25
    $region24: #{tpu_custom_call.1} parent=1 // pred_region
      %s71 = ssub.s32 1024, 1024
      %72 = vsyncadd [#allocation9], %s71
      %s73 = sshll.u32 [#allocation10], 4
      %s74 = int_to_ptr.vmem [resolvable:$true] %s73
      %79 = dma.hbm_to_vmem [thread:$0]  %s5, 1024, %s74, [#allocation9], 128, 128, 8
    $region25: #{tpu_custom_call.1} parent=1 // pred_fallthru
      _
    // Predicated region
    $region26: #{tpu_custom_call.1} parent=1 // pred_check
      _
    $region27: #{tpu_custom_call.1} parent=1 // pred_check_branch
      %81 = sbr.rel (0) target = $region29
    $region28: #{tpu_custom_call.1} parent=1 // pred_region
      _
    $region29: #{tpu_custom_call.1} parent=1 // pred_fallthru
      _
    // Predicated region
    $region30: #{tpu_custom_call.1} parent=1 // pred_check
      _
    $region31: #{tpu_custom_call.1} parent=1 // pred_check_branch
      %83 = sbr.rel (0) target = $region33
    $region32: #{tpu_custom_call.1} parent=1 // pred_region
      %s85 = ssub.s32 512, 512
      %86 = vsyncadd [#allocation12], %s85
      %s87 = sshll.u32 [#allocation11], 4
      %s88 = int_to_ptr.vmem [resolvable:$true] %s87
      %93 = dma.hbm_to_vmem [thread:$0]  %s7, 512, %s88, [#allocation12], 128, 128, 8
    $region33: #{tpu_custom_call.1} parent=1 // pred_fallthru
      _
    // Predicated region
    $region34: #{tpu_custom_call.1} parent=1 // pred_check
      _
    $region35: #{tpu_custom_call.1} parent=1 // pred_check_branch
      %95 = sbr.rel (0) target = $region37
    $region36: #{tpu_custom_call.1} parent=1 // pred_region
      %s97 = ssub.s32 1024, 1024
      %98 = vsyncadd [#allocation12], %s97
      %s99 = sshll.u32 [#allocation13], 4
      %s100 = int_to_ptr.vmem [resolvable:$true] %s99
      %105 = dma.hbm_to_vmem [thread:$0]  %s8, 1024, %s100, [#allocation12], 128, 128, 8
    $region37: #{tpu_custom_call.1} parent=1 // pred_fallthru
      _
    // Predicated region
    $region38: #{tpu_custom_call.1} parent=1 // pred_check
      _
    $region39: #{tpu_custom_call.1} parent=1 // pred_check_branch
      %107 = sbr.rel (0) target = $region41
    $region40: #{tpu_custom_call.1} parent=1 // pred_region
      _
    $region41: #{tpu_custom_call.1} parent=1 // pred_fallthru
      _
    // Predicated region
    $region42: #{tpu_custom_call.1} parent=1 // pred_check
      _
    $region43: #{tpu_custom_call.1} parent=1 // pred_check_branch
      %109 = sbr.rel (0) target = $region45
    $region44: #{tpu_custom_call.1} parent=1 // pred_region
      %110 = dma.done [#allocation3], 1024
    $region45: #{tpu_custom_call.1} parent=1 // pred_fallthru
      _
    // Predicated region
    $region46: #{tpu_custom_call.1} parent=1 // pred_check
      _
    $region47: #{tpu_custom_call.1} parent=1 // pred_check_branch
      %112 = sbr.rel (0) target = $region49
    $region48: #{tpu_custom_call.1} parent=1 // pred_region
      %113 = dma.done [#allocation6], 256
    $region49: #{tpu_custom_call.1} parent=1 // pred_fallthru
      _
    // Predicated region
    $region50: #{tpu_custom_call.1} parent=1 // pred_check
      _
    $region51: #{tpu_custom_call.1} parent=1 // pred_check_branch
      %115 = sbr.rel (0) target = $region53
    $region52: #{tpu_custom_call.1} parent=1 // pred_region
      %116 = dma.done [#allocation6], 128
    $region53: #{tpu_custom_call.1} parent=1 // pred_fallthru
      _
    // Predicated region
    $region54: #{tpu_custom_call.1} parent=1 // pred_check
      _
    $region55: #{tpu_custom_call.1} parent=1 // pred_check_branch
      %118 = sbr.rel (0) target = $region57
    $region56: #{tpu_custom_call.1} parent=1 // pred_region
      %119 = dma.done [#allocation9], 1024
    $region57: #{tpu_custom_call.1} parent=1 // pred_fallthru
      _
    // Predicated region
    $region58: #{tpu_custom_call.1} parent=1 // pred_check
      _
    $region59: #{tpu_custom_call.1} parent=1 // pred_check_branch
      %121 = sbr.rel (0) target = $region61
    $region60: #{tpu_custom_call.1} parent=1 // pred_region
      %122 = dma.done [#allocation9], 1024
    $region61: #{tpu_custom_call.1} parent=1 // pred_fallthru
      _
    // Predicated region
    $region62: #{tpu_custom_call.1} parent=1 // pred_check
      _
    $region63: #{tpu_custom_call.1} parent=1 // pred_check_branch
      %124 = sbr.rel (0) target = $region65
    $region64: #{tpu_custom_call.1} parent=1 // pred_region
      %125 = dma.done [#allocation12], 512
    $region65: #{tpu_custom_call.1} parent=1 // pred_fallthru
      _
    // Predicated region
    $region66: #{tpu_custom_call.1} parent=1 // pred_check
      _
    $region67: #{tpu_custom_call.1} parent=1 // pred_check_branch
      %127 = sbr.rel (0) target = $region69
    $region68: #{tpu_custom_call.1} parent=1 // pred_region
      %128 = dma.done [#allocation12], 1024
    $region69: #{tpu_custom_call.1} parent=1 // pred_fallthru
      _
    %v129 = vld [vmem:[#allocation2] sm:$0xff]
    %v130 = vld [vmem:[#allocation2 + $0x8] sm:$0xff]
    %v131 = vld [vmem:[#allocation2 + $0x10] sm:$0xff]
    %v132 = vld [vmem:[#allocation2 + $0x18] sm:$0xff]
    %v133 = vld [vmem:[#allocation2 + $0x20] sm:$0xff]
    %v134 = vld [vmem:[#allocation2 + $0x28] sm:$0xff]
    %v135 = vld [vmem:[#allocation2 + $0x30] sm:$0xff]
    %v136 = vld [vmem:[#allocation2 + $0x38] sm:$0xff]
    %v137 = vld [vmem:[#allocation5] sm:$0xff]
    %v138 = vld [vmem:[#allocation5 + $0x8] sm:$0xff]
    %vm139 = vcmask 130048
    %v141 = vsel %vm139, %v129, 0
    %v144 = vsel %vm139, %v130, 0
    %v147 = vsel %vm139, %v131, 0
    %v150 = vsel %vm139, %v132, 0
    %v153 = vsel %vm139, %v133, 0
    %v156 = vsel %vm139, %v134, 0
    %v159 = vsel %vm139, %v135, 0
    %v162 = vsel %vm139, %v136, 0
    %164 = vmatprep.subr.mxu0 0.0
    %165 = vmatpush1.msra.mxu0 %v137
    %166 = vmatprep.subr.mxu0 0.0
    %167 = vmatpush1.msra.mxu0 %v138
    %168 = vmatprep.subr.mxu0 0.0
    %169 = vmatpush1.msra.mxu0 0.0
    %170 = vmatprep.subr.mxu0 0.0
    %171 = vmatpush1.msra.mxu0 0.0
    %172 = vmatprep.subr.mxu0 0.0
    %173 = vmatpush1.msra.mxu0 0.0
    %174 = vmatprep.subr.mxu0 0.0
    %175 = vmatpush1.msra.mxu0 0.0
    %176 = vmatprep.subr.mxu0 0.0
    %177 = vmatpush1.msra.mxu0 0.0
    %178 = vmatprep.subr.mxu0 0.0
    %179 = vmatpush1.msra.mxu0 0.0
    %180 = vmatprep.subr.mxu0 0.0
    %181 = vmatpush1.msra.mxu0 0.0
    %182 = vmatprep.subr.mxu0 0.0
    %183 = vmatpush1.msra.mxu0 0.0
    %184 = vmatprep.subr.mxu0 0.0
    %185 = vmatpush1.msra.mxu0 0.0
    %186 = vmatprep.subr.mxu0 0.0
    %187 = vmatpush1.msra.mxu0 0.0
    %188 = vmatprep.subr.mxu0 0.0
    %189 = vmatpush1.msra.mxu0 0.0
    %190 = vmatprep.subr.mxu0 0.0
    %191 = vmatpush1.msra.mxu0 0.0
    %192 = vmatprep.subr.mxu0 0.0
    %193 = vmatpush1.msra.mxu0 0.0
    %194 = vmatprep.subr.mxu0 0.0
    %195 = vmatpush1.msra.mxu0 0.0
    %196 = vmatprep.subr.mxu0 0.0
    %197 = vmatpush1.msra.mxu0 0.0
    %198 = vmatprep.subr.mxu0 0.0
    %199 = vmatpush1.msra.mxu0 0.0
    %200 = vmatprep.subr.mxu0 0.0
    %201 = vmatpush1.msra.mxu0 0.0
    %202 = vmatprep.subr.mxu0 0.0
    %203 = vmatpush1.msra.mxu0 0.0
    %204 = vmatprep.subr.mxu0 0.0
    %205 = vmatpush1.msra.mxu0 0.0
    %206 = vmatprep.subr.mxu0 0.0
    %207 = vmatpush1.msra.mxu0 0.0
    %208 = vmatprep.subr.mxu0 0.0
    %209 = vmatpush1.msra.mxu0 0.0
    %210 = vmatprep.subr.mxu0 0.0
    %211 = vmatpush1.msra.mxu0 0.0
    %212 = vmatprep.subr.mxu0 0.0
    %213 = vmatpush1.msra.mxu0 0.0
    %214 = vmatprep.subr.mxu0 0.0
    %215 = vmatpush1.msra.mxu0 0.0
    %216 = vmatprep.subr.mxu0 0.0
    %217 = vmatpush1.msra.mxu0 0.0
    %218 = vmatprep.subr.mxu0 0.0
    %219 = vmatpush1.msra.mxu0 0.0
    %220 = vmatprep.subr.mxu0 0.0
    %221 = vmatpush1.msra.mxu0 0.0
    %222 = vmatprep.subr.mxu0 0.0
    %223 = vmatpush1.msra.mxu0 0.0
    %224 = vmatprep.subr.mxu0 0.0
    %225 = vmatpush1.msra.mxu0 0.0
    %226 = vmatprep.subr.mxu0 0.0
    %227 = vmatpush1.msra.mxu0 0.0
    %228 = vmatprep.mubr.f32.mxu0 0.0
    %229 = vmatmul.mubr.f32.gmra.mrb[0].mxu0 %v141
    %v230 = vpop.f32.mrb[0].mxu0
    %v231 = vadd.f32 0.0, %v230
    %v232 = vpop.f32.mrb[0].mxu0
    %233 = vmatprep.mubr.f32.mxu0 0.0
    %234 = vmatmul.mubr.f32.gmra.mrb[0].mxu0 %v144
    %v235 = vpop.f32.mrb[0].mxu0
    %v236 = vadd.f32 0.0, %v235
    %v237 = vpop.f32.mrb[0].mxu0
    %238 = vmatprep.mubr.f32.mxu0 0.0
    %239 = vmatmul.mubr.f32.gmra.mrb[0].mxu0 %v147
    %v240 = vpop.f32.mrb[0].mxu0
    %v241 = vadd.f32 0.0, %v240
    %v242 = vpop.f32.mrb[0].mxu0
    %243 = vmatprep.mubr.f32.mxu0 0.0
    %244 = vmatmul.mubr.f32.gmra.mrb[0].mxu0 %v150
    %v245 = vpop.f32.mrb[0].mxu0
    %v246 = vadd.f32 0.0, %v245
    %v247 = vpop.f32.mrb[0].mxu0
    %248 = vmatprep.mubr.f32.mxu0 0.0
    %249 = vmatmul.mubr.f32.gmra.mrb[0].mxu0 %v153
    %v250 = vpop.f32.mrb[0].mxu0
    %v251 = vadd.f32 0.0, %v250
    %v252 = vpop.f32.mrb[0].mxu0
    %253 = vmatprep.mubr.f32.mxu0 0.0
    %254 = vmatmul.mubr.f32.gmra.mrb[0].mxu0 %v156
    %v255 = vpop.f32.mrb[0].mxu0
    %v256 = vadd.f32 0.0, %v255
    %v257 = vpop.f32.mrb[0].mxu0
    %258 = vmatprep.mubr.f32.mxu0 0.0
    %259 = vmatmul.mubr.f32.gmra.mrb[0].mxu0 %v159
    %v260 = vpop.f32.mrb[0].mxu0
    %v261 = vadd.f32 0.0, %v260
    %v262 = vpop.f32.mrb[0].mxu0
    %263 = vmatprep.mubr.f32.mxu0 0.0
    %264 = vmatmul.mubr.f32.gmra.mrb[0].mxu0 %v162
    %v265 = vpop.f32.mrb[0].mxu0
    %v266 = vadd.f32 0.0, %v265
    %v267 = vpop.f32.mrb[0].mxu0
    %268 = vdwg.mxu0
    %v269 = vld [vmem:[#allocation7] sm:$0xff]
    %v270 = vadd.f32 %v231, %v269
    %v271 = vadd.f32 %v236, %v269
    %v272 = vadd.f32 %v241, %v269
    %v273 = vadd.f32 %v246, %v269
    %v274 = vadd.f32 %v251, %v269
    %v275 = vadd.f32 %v256, %v269
    %v276 = vadd.f32 %v261, %v269
    %v277 = vadd.f32 %v266, %v269
    %v278 = vld [vmem:[#allocation8] sm:$0xff]
    %v279 = vld [vmem:[#allocation8 + $0x8] sm:$0xff]
    %v280 = vld [vmem:[#allocation8 + $0x10] sm:$0xff]
    %v281 = vld [vmem:[#allocation8 + $0x18] sm:$0xff]
    %v282 = vld [vmem:[%s4] sm:$0xf]
    %v283 = vld [vmem:[#allocation10] sm:$0xff]
    %v284 = vld [vmem:[#allocation10 + $0x8] sm:$0xff]
    %v285 = vld [vmem:[#allocation10 + $0x10] sm:$0xff]
    %v286 = vld [vmem:[#allocation10 + $0x18] sm:$0xff]
    %v287 = vld [vmem:[%s6] sm:$0x3]
    %v288 = vld [vmem:[#allocation11] sm:$0xff]
    %v289 = vld [vmem:[#allocation11 + $0x8] sm:$0xff]
    %v290 = vmul.f32 %v288, 1.442695
    %v291 = vpow.pop %v290
    %v292 = vmul.f32 %v289, 1.442695
    %v293 = vpow.pop %v292
    %v294 = vsub.f32 0.0, %v291
    %v295 = vsub.f32 0.0, %v293
    %v296 = vld [vmem:[#allocation13] sm:$0xff]
    %v297 = vld [vmem:[#allocation13 + $0x8] sm:$0xff]
    %v298 = vld [vmem:[#allocation13 + $0x10] sm:$0xff]
    %v299 = vld [vmem:[#allocation13 + $0x18] sm:$0xff]
    %v300 = vld [vmem:[%s9] sm:$0xff]
    %vm301 = vcmask 261120
    %v303 = vsel %vm301, %v270, 0
    %v306 = vsel %vm301, %v271, 0
    %v309 = vsel %vm301, %v272, 0
    %v312 = vsel %vm301, %v273, 0
    %v315 = vsel %vm301, %v274, 0
    %v318 = vsel %vm301, %v275, 0
    %v321 = vsel %vm301, %v276, 0
    %v324 = vsel %vm301, %v277, 0
    %326 = vmatprep.subr.mxu0 0.0
    %327 = vmatpush1.msra.mxu0 %v278
    %328 = vmatprep.subr.mxu0 0.0
    %329 = vmatpush1.msra.mxu0 %v279
    %330 = vmatprep.subr.mxu0 0.0
    %331 = vmatpush1.msra.mxu0 %v280
    %332 = vmatprep.subr.mxu0 0.0
    %333 = vmatpush1.msra.mxu0 %v281
    %334 = vmatprep.subr.mxu0 0.0
    %335 = vmatpush1.msra.mxu0 0.0
    %336 = vmatprep.subr.mxu0 0.0
    %337 = vmatpush1.msra.mxu0 0.0
    %338 = vmatprep.subr.mxu0 0.0
    %339 = vmatpush1.msra.mxu0 0.0
    %340 = vmatprep.subr.mxu0 0.0
    %341 = vmatpush1.msra.mxu0 0.0
    %342 = vmatprep.subr.mxu0 0.0
    %343 = vmatpush1.msra.mxu0 0.0
    %344 = vmatprep.subr.mxu0 0.0
    %345 = vmatpush1.msra.mxu0 0.0
    %346 = vmatprep.subr.mxu0 0.0
    %347 = vmatpush1.msra.mxu0 0.0
    %348 = vmatprep.subr.mxu0 0.0
    %349 = vmatpush1.msra.mxu0 0.0
    %350 = vmatprep.subr.mxu0 0.0
    %351 = vmatpush1.msra.mxu0 0.0
    %352 = vmatprep.subr.mxu0 0.0
    %353 = vmatpush1.msra.mxu0 0.0
    %354 = vmatprep.subr.mxu0 0.0
    %355 = vmatpush1.msra.mxu0 0.0
    %356 = vmatprep.subr.mxu0 0.0
    %357 = vmatpush1.msra.mxu0 0.0
    %358 = vmatprep.subr.mxu0 0.0
    %359 = vmatpush1.msra.mxu0 0.0
    %360 = vmatprep.subr.mxu0 0.0
    %361 = vmatpush1.msra.mxu0 0.0
    %362 = vmatprep.subr.mxu0 0.0
    %363 = vmatpush1.msra.mxu0 0.0
    %364 = vmatprep.subr.mxu0 0.0
    %365 = vmatpush1.msra.mxu0 0.0
    %366 = vmatprep.subr.mxu0 0.0
    %367 = vmatpush1.msra.mxu0 0.0
    %368 = vmatprep.subr.mxu0 0.0
    %369 = vmatpush1.msra.mxu0 0.0
    %370 = vmatprep.subr.mxu0 0.0
    %371 = vmatpush1.msra.mxu0 0.0
    %372 = vmatprep.subr.mxu0 0.0
    %373 = vmatpush1.msra.mxu0 0.0
    %374 = vmatprep.subr.mxu0 0.0
    %375 = vmatpush1.msra.mxu0 0.0
    %376 = vmatprep.subr.mxu0 0.0
    %377 = vmatpush1.msra.mxu0 0.0
    %378 = vmatprep.subr.mxu0 0.0
    %379 = vmatpush1.msra.mxu0 0.0
    %380 = vmatprep.subr.mxu0 0.0
    %381 = vmatpush1.msra.mxu0 0.0
    %382 = vmatprep.subr.mxu0 0.0
    %383 = vmatpush1.msra.mxu0 0.0
    %384 = vmatprep.subr.mxu0 0.0
    %385 = vmatpush1.msra.mxu0 0.0
    %386 = vmatprep.subr.mxu0 0.0
    %387 = vmatpush1.msra.mxu0 0.0
    %388 = vmatprep.subr.mxu0 0.0
    %389 = vmatpush1.msra.mxu0 0.0
    %390 = vmatprep.mubr.f32.mxu0 0.0
    %391 = vmatmul.mubr.f32.gmra.mrb[0].mxu0 %v303
    %v392 = vpop.f32.mrb[0].mxu0
    %v393 = vadd.f32 0.0, %v392
    %v394 = vpop.f32.mrb[0].mxu0
    %395 = vmatprep.mubr.f32.mxu0 0.0
    %396 = vmatmul.mubr.f32.gmra.mrb[0].mxu0 %v306
    %v397 = vpop.f32.mrb[0].mxu0
    %v398 = vadd.f32 0.0, %v397
    %v399 = vpop.f32.mrb[0].mxu0
    %400 = vmatprep.mubr.f32.mxu0 0.0
    %401 = vmatmul.mubr.f32.gmra.mrb[0].mxu0 %v309
    %v402 = vpop.f32.mrb[0].mxu0
    %v403 = vadd.f32 0.0, %v402
    %v404 = vpop.f32.mrb[0].mxu0
    %405 = vmatprep.mubr.f32.mxu0 0.0
    %406 = vmatmul.mubr.f32.gmra.mrb[0].mxu0 %v312
    %v407 = vpop.f32.mrb[0].mxu0
    %v408 = vadd.f32 0.0, %v407
    %v409 = vpop.f32.mrb[0].mxu0
    %410 = vmatprep.mubr.f32.mxu0 0.0
    %411 = vmatmul.mubr.f32.gmra.mrb[0].mxu0 %v315
    %v412 = vpop.f32.mrb[0].mxu0
    %v413 = vadd.f32 0.0, %v412
    %v414 = vpop.f32.mrb[0].mxu0
    %415 = vmatprep.mubr.f32.mxu0 0.0
    %416 = vmatmul.mubr.f32.gmra.mrb[0].mxu0 %v318
    %v417 = vpop.f32.mrb[0].mxu0
    %v418 = vadd.f32 0.0, %v417
    %v419 = vpop.f32.mrb[0].mxu0
    %420 = vmatprep.mubr.f32.mxu0 0.0
    %421 = vmatmul.mubr.f32.gmra.mrb[0].mxu0 %v321
    %v422 = vpop.f32.mrb[0].mxu0
    %v423 = vadd.f32 0.0, %v422
    %v424 = vpop.f32.mrb[0].mxu0
    %425 = vmatprep.mubr.f32.mxu0 0.0
    %426 = vmatmul.mubr.f32.gmra.mrb[0].mxu0 %v324
    %v427 = vpop.f32.mrb[0].mxu0
    %v428 = vadd.f32 0.0, %v427
    %v429 = vpop.f32.mrb[0].mxu0
    %430 = vdwg.mxu0
    %v439 = vrot.slane %v393, 5
    %v440 = vrot.slane %v398, 5
    %v441 = vrot.slane %v403, 5
    %v442 = vrot.slane %v408, 5
    %v443 = vrot.slane %v413, 5
    %v444 = vrot.slane %v418, 5
    %v445 = vrot.slane %v423, 5
    %v446 = vrot.slane %v428, 5
    %vm455 = vcmask 1042432
    %v456 = vsel %vm455, 0.0, %v439
    %v457 = vsel %vm455, 0.0, %v440
    %v458 = vsel %vm455, 0.0, %v441
    %v459 = vsel %vm455, 0.0, %v442
    %v460 = vsel %vm455, 0.0, %v443
    %v461 = vsel %vm455, 0.0, %v444
    %v462 = vsel %vm455, 0.0, %v445
    %v463 = vsel %vm455, 0.0, %v446
    %v464 = vlaneseq
    %v465 = vshrl.u32 %v464, 7
    %v466 = vsub.s32 0, %v465
    %v467 = vrot.slane %v300, %v466
    %v468 = vlaneseq
    %v469 = vshrl.u32 %v468, 7
    %v470 = vsub.s32 0, %v469
    %v471 = vrot.slane %v282, %v470
    %v472 = vmul.f32 %v471, %v456
    %v473 = vmul.f32 %v471, %v457
    %v474 = vmul.f32 %v471, %v458
    %v475 = vmul.f32 %v471, %v459
    %v476 = vmul.f32 %v471, %v460
    %v477 = vmul.f32 %v471, %v461
    %v478 = vmul.f32 %v471, %v462
    %v479 = vmul.f32 %v471, %v463
    %v480 = vadd.f32 %v467, %v472
    %v481 = vadd.f32 %v467, %v473
    %v482 = vadd.f32 %v467, %v474
    %v483 = vadd.f32 %v467, %v475
    %v484 = vadd.f32 %v467, %v476
    %v485 = vadd.f32 %v467, %v477
    %v486 = vadd.f32 %v467, %v478
    %v487 = vadd.f32 %v467, %v479
    %v488 = vlaneseq
    %v489 = vshrl.u32 %v488, 7
    %v490 = vsub.s32 1, %v489
    %v491 = vrot.slane %v282, %v490
    %v492 = vmul.f32 %v491, %v456
    %v493 = vmul.f32 %v491, %v439
    %v494 = vmul.f32 %v491, %v457
    %v495 = vmul.f32 %v491, %v440
    %v496 = vmul.f32 %v491, %v458
    %v497 = vmul.f32 %v491, %v441
    %v498 = vmul.f32 %v491, %v459
    %v499 = vmul.f32 %v491, %v442
    %v500 = vmul.f32 %v491, %v460
    %v501 = vmul.f32 %v491, %v443
    %v502 = vmul.f32 %v491, %v461
    %v503 = vmul.f32 %v491, %v444
    %v504 = vmul.f32 %v491, %v462
    %v505 = vmul.f32 %v491, %v445
    %v506 = vmul.f32 %v491, %v463
    %v507 = vmul.f32 %v491, %v446
    %vm524 = vcmask 1046528
    %v525 = vrot.slane %v492, 1
    %v526 = vrot.slane %v493, 1
    %v527 = vsel %vm524, %v525, %v526
    %v528 = vrot.slane %v494, 1
    %v529 = vrot.slane %v495, 1
    %v530 = vsel %vm524, %v528, %v529
    %v531 = vrot.slane %v496, 1
    %v532 = vrot.slane %v497, 1
    %v533 = vsel %vm524, %v531, %v532
    %v534 = vrot.slane %v498, 1
    %v535 = vrot.slane %v499, 1
    %v536 = vsel %vm524, %v534, %v535
    %v537 = vrot.slane %v500, 1
    %v538 = vrot.slane %v501, 1
    %v539 = vsel %vm524, %v537, %v538
    %v540 = vrot.slane %v502, 1
    %v541 = vrot.slane %v503, 1
    %v542 = vsel %vm524, %v540, %v541
    %v543 = vrot.slane %v504, 1
    %v544 = vrot.slane %v505, 1
    %v545 = vsel %vm524, %v543, %v544
    %v546 = vrot.slane %v506, 1
    %v547 = vrot.slane %v507, 1
    %v548 = vsel %vm524, %v546, %v547
    %v557 = vadd.f32 %v480, %v527
    %v558 = vadd.f32 %v481, %v530
    %v559 = vadd.f32 %v482, %v533
    %v560 = vadd.f32 %v483, %v536
    %v561 = vadd.f32 %v484, %v539
    %v562 = vadd.f32 %v485, %v542
    %v563 = vadd.f32 %v486, %v545
    %v564 = vadd.f32 %v487, %v548
    %v565 = vlaneseq
    %v566 = vshrl.u32 %v565, 7
    %v567 = vsub.s32 2, %v566
    %v568 = vrot.slane %v282, %v567
    %v569 = vmul.f32 %v568, %v456
    %v570 = vmul.f32 %v568, %v439
    %v571 = vmul.f32 %v568, %v457
    %v572 = vmul.f32 %v568, %v440
    %v573 = vmul.f32 %v568, %v458
    %v574 = vmul.f32 %v568, %v441
    %v575 = vmul.f32 %v568, %v459
    %v576 = vmul.f32 %v568, %v442
    %v577 = vmul.f32 %v568, %v460
    %v578 = vmul.f32 %v568, %v443
    %v579 = vmul.f32 %v568, %v461
    %v580 = vmul.f32 %v568, %v444
    %v581 = vmul.f32 %v568, %v462
    %v582 = vmul.f32 %v568, %v445
    %v583 = vmul.f32 %v568, %v463
    %v584 = vmul.f32 %v568, %v446
    %vm601 = vcmask 1045504
    %v602 = vrot.slane %v569, 2
    %v603 = vrot.slane %v570, 2
    %v604 = vsel %vm601, %v602, %v603
    %v605 = vrot.slane %v571, 2
    %v606 = vrot.slane %v572, 2
    %v607 = vsel %vm601, %v605, %v606
    %v608 = vrot.slane %v573, 2
    %v609 = vrot.slane %v574, 2
    %v610 = vsel %vm601, %v608, %v609
    %v611 = vrot.slane %v575, 2
    %v612 = vrot.slane %v576, 2
    %v613 = vsel %vm601, %v611, %v612
    %v614 = vrot.slane %v577, 2
    %v615 = vrot.slane %v578, 2
    %v616 = vsel %vm601, %v614, %v615
    %v617 = vrot.slane %v579, 2
    %v618 = vrot.slane %v580, 2
    %v619 = vsel %vm601, %v617, %v618
    %v620 = vrot.slane %v581, 2
    %v621 = vrot.slane %v582, 2
    %v622 = vsel %vm601, %v620, %v621
    %v623 = vrot.slane %v583, 2
    %v624 = vrot.slane %v584, 2
    %v625 = vsel %vm601, %v623, %v624
    %v634 = vadd.f32 %v557, %v604
    %v635 = vadd.f32 %v558, %v607
    %v636 = vadd.f32 %v559, %v610
    %v637 = vadd.f32 %v560, %v613
    %v638 = vadd.f32 %v561, %v616
    %v639 = vadd.f32 %v562, %v619
    %v640 = vadd.f32 %v563, %v622
    %v641 = vadd.f32 %v564, %v625
    %v642 = vlaneseq
    %v643 = vshrl.u32 %v642, 7
    %v644 = vsub.s32 3, %v643
    %v645 = vrot.slane %v282, %v644
    %v646 = vmul.f32 %v645, %v456
    %v647 = vmul.f32 %v645, %v439
    %v648 = vmul.f32 %v645, %v457
    %v649 = vmul.f32 %v645, %v440
    %v650 = vmul.f32 %v645, %v458
    %v651 = vmul.f32 %v645, %v441
    %v652 = vmul.f32 %v645, %v459
    %v653 = vmul.f32 %v645, %v442
    %v654 = vmul.f32 %v645, %v460
    %v655 = vmul.f32 %v645, %v443
    %v656 = vmul.f32 %v645, %v461
    %v657 = vmul.f32 %v645, %v444
    %v658 = vmul.f32 %v645, %v462
    %v659 = vmul.f32 %v645, %v445
    %v660 = vmul.f32 %v645, %v463
    %v661 = vmul.f32 %v645, %v446
    %vm678 = vcmask 1044480
    %v679 = vrot.slane %v646, 3
    %v680 = vrot.slane %v647, 3
    %v681 = vsel %vm678, %v679, %v680
    %v682 = vrot.slane %v648, 3
    %v683 = vrot.slane %v649, 3
    %v684 = vsel %vm678, %v682, %v683
    %v685 = vrot.slane %v650, 3
    %v686 = vrot.slane %v651, 3
    %v687 = vsel %vm678, %v685, %v686
    %v688 = vrot.slane %v652, 3
    %v689 = vrot.slane %v653, 3
    %v690 = vsel %vm678, %v688, %v689
    %v691 = vrot.slane %v654, 3
    %v692 = vrot.slane %v655, 3
    %v693 = vsel %vm678, %v691, %v692
    %v694 = vrot.slane %v656, 3
    %v695 = vrot.slane %v657, 3
    %v696 = vsel %vm678, %v694, %v695
    %v697 = vrot.slane %v658, 3
    %v698 = vrot.slane %v659, 3
    %v699 = vsel %vm678, %v697, %v698
    %v700 = vrot.slane %v660, 3
    %v701 = vrot.slane %v661, 3
    %v702 = vsel %vm678, %v700, %v701
    %v711 = vadd.f32 %v634, %v681
    %v712 = vadd.f32 %v635, %v684
    %v713 = vadd.f32 %v636, %v687
    %v714 = vadd.f32 %v637, %v690
    %v715 = vadd.f32 %v638, %v693
    %v716 = vadd.f32 %v639, %v696
    %v717 = vadd.f32 %v640, %v699
    %v718 = vadd.f32 %v641, %v702
    %v719 = vxor.u32 %v711, 2147483648
    %v720 = vxor.u32 %v712, 2147483648
    %v721 = vxor.u32 %v713, 2147483648
    %v722 = vxor.u32 %v714, 2147483648
    %v723 = vxor.u32 %v715, 2147483648
    %v724 = vxor.u32 %v716, 2147483648
    %v725 = vxor.u32 %v717, 2147483648
    %v726 = vxor.u32 %v718, 2147483648
    %v727 = vmul.f32 %v719, 1.442695
    %v728 = vpow.pop %v727
    %v729 = vmul.f32 %v720, 1.442695
    %v730 = vpow.pop %v729
    %v731 = vmul.f32 %v721, 1.442695
    %v732 = vpow.pop %v731
    %v733 = vmul.f32 %v722, 1.442695
    %v734 = vpow.pop %v733
    %v735 = vmul.f32 %v723, 1.442695
    %v736 = vpow.pop %v735
    %v737 = vmul.f32 %v724, 1.442695
    %v738 = vpow.pop %v737
    %v739 = vmul.f32 %v725, 1.442695
    %v740 = vpow.pop %v739
    %v741 = vmul.f32 %v726, 1.442695
    %v742 = vpow.pop %v741
    %v743 = vadd.f32 %v728, 1.0
    %v744 = vadd.f32 %v730, 1.0
    %v745 = vadd.f32 %v732, 1.0
    %v746 = vadd.f32 %v734, 1.0
    %v747 = vadd.f32 %v736, 1.0
    %v748 = vadd.f32 %v738, 1.0
    %v749 = vadd.f32 %v740, 1.0
    %v750 = vadd.f32 %v742, 1.0
    %v751 = vrcp.pop %v743
    %v752 = vmul.f32 1.0, %v751
    %v753 = vrcp.pop %v744
    %v754 = vmul.f32 1.0, %v753
    %v755 = vrcp.pop %v745
    %v756 = vmul.f32 1.0, %v755
    %v757 = vrcp.pop %v746
    %v758 = vmul.f32 1.0, %v757
    %v759 = vrcp.pop %v747
    %v760 = vmul.f32 1.0, %v759
    %v761 = vrcp.pop %v748
    %v762 = vmul.f32 1.0, %v761
    %v763 = vrcp.pop %v749
    %v764 = vmul.f32 1.0, %v763
    %v765 = vrcp.pop %v750
    %v766 = vmul.f32 1.0, %v765
    %v767 = vmul.f32 %v711, %v752
    %v768 = vmul.f32 %v712, %v754
    %v769 = vmul.f32 %v713, %v756
    %v770 = vmul.f32 %v714, %v758
    %v771 = vmul.f32 %v715, %v760
    %v772 = vmul.f32 %v716, %v762
    %v773 = vmul.f32 %v717, %v764
    %v774 = vmul.f32 %v718, %v766
    %v776 = vsel %vm301, %v767, 0
    %v779 = vsel %vm301, %v768, 0
    %v782 = vsel %vm301, %v769, 0
    %v785 = vsel %vm301, %v770, 0
    %v788 = vsel %vm301, %v771, 0
    %v791 = vsel %vm301, %v772, 0
    %v794 = vsel %vm301, %v773, 0
    %v797 = vsel %vm301, %v774, 0
    %799 = vmatprep.subr.mxu0 0.0
    %800 = vmatpush1.msra.mxu0 %v283
    %801 = vmatprep.subr.mxu0 0.0
    %802 = vmatpush1.msra.mxu0 %v284
    %803 = vmatprep.subr.mxu0 0.0
    %804 = vmatpush1.msra.mxu0 %v285
    %805 = vmatprep.subr.mxu0 0.0
    %806 = vmatpush1.msra.mxu0 %v286
    %807 = vmatprep.subr.mxu0 0.0
    %808 = vmatpush1.msra.mxu0 0.0
    %809 = vmatprep.subr.mxu0 0.0
    %810 = vmatpush1.msra.mxu0 0.0
    %811 = vmatprep.subr.mxu0 0.0
    %812 = vmatpush1.msra.mxu0 0.0
    %813 = vmatprep.subr.mxu0 0.0
    %814 = vmatpush1.msra.mxu0 0.0
    %815 = vmatprep.subr.mxu0 0.0
    %816 = vmatpush1.msra.mxu0 0.0
    %817 = vmatprep.subr.mxu0 0.0
    %818 = vmatpush1.msra.mxu0 0.0
    %819 = vmatprep.subr.mxu0 0.0
    %820 = vmatpush1.msra.mxu0 0.0
    %821 = vmatprep.subr.mxu0 0.0
    %822 = vmatpush1.msra.mxu0 0.0
    %823 = vmatprep.subr.mxu0 0.0
    %824 = vmatpush1.msra.mxu0 0.0
    %825 = vmatprep.subr.mxu0 0.0
    %826 = vmatpush1.msra.mxu0 0.0
    %827 = vmatprep.subr.mxu0 0.0
    %828 = vmatpush1.msra.mxu0 0.0
    %829 = vmatprep.subr.mxu0 0.0
    %830 = vmatpush1.msra.mxu0 0.0
    %831 = vmatprep.subr.mxu0 0.0
    %832 = vmatpush1.msra.mxu0 0.0
    %833 = vmatprep.subr.mxu0 0.0
    %834 = vmatpush1.msra.mxu0 0.0
    %835 = vmatprep.subr.mxu0 0.0
    %836 = vmatpush1.msra.mxu0 0.0
    %837 = vmatprep.subr.mxu0 0.0
    %838 = vmatpush1.msra.mxu0 0.0
    %839 = vmatprep.subr.mxu0 0.0
    %840 = vmatpush1.msra.mxu0 0.0
    %841 = vmatprep.subr.mxu0 0.0
    %842 = vmatpush1.msra.mxu0 0.0
    %843 = vmatprep.subr.mxu0 0.0
    %844 = vmatpush1.msra.mxu0 0.0
    %845 = vmatprep.subr.mxu0 0.0
    %846 = vmatpush1.msra.mxu0 0.0
    %847 = vmatprep.subr.mxu0 0.0
    %848 = vmatpush1.msra.mxu0 0.0
    %849 = vmatprep.subr.mxu0 0.0
    %850 = vmatpush1.msra.mxu0 0.0
    %851 = vmatprep.subr.mxu0 0.0
    %852 = vmatpush1.msra.mxu0 0.0
    %853 = vmatprep.subr.mxu0 0.0
    %854 = vmatpush1.msra.mxu0 0.0
    %855 = vmatprep.subr.mxu0 0.0
    %856 = vmatpush1.msra.mxu0 0.0
    %857 = vmatprep.subr.mxu0 0.0
    %858 = vmatpush1.msra.mxu0 0.0
    %859 = vmatprep.subr.mxu0 0.0
    %860 = vmatpush1.msra.mxu0 0.0
    %861 = vmatprep.subr.mxu0 0.0
    %862 = vmatpush1.msra.mxu0 0.0
    %863 = vmatprep.mubr.f32.mxu0 0.0
    %864 = vmatmul.mubr.f32.gmra.mrb[0].mxu0 %v776
    %v865 = vpop.f32.mrb[0].mxu0
    %v866 = vadd.f32 0.0, %v865
    %v867 = vpop.f32.mrb[0].mxu0
    %868 = vmatprep.mubr.f32.mxu0 0.0
    %869 = vmatmul.mubr.f32.gmra.mrb[0].mxu0 %v779
    %v870 = vpop.f32.mrb[0].mxu0
    %v871 = vadd.f32 0.0, %v870
    %v872 = vpop.f32.mrb[0].mxu0
    %873 = vmatprep.mubr.f32.mxu0 0.0
    %874 = vmatmul.mubr.f32.gmra.mrb[0].mxu0 %v782
    %v875 = vpop.f32.mrb[0].mxu0
    %v876 = vadd.f32 0.0, %v875
    %v877 = vpop.f32.mrb[0].mxu0
    %878 = vmatprep.mubr.f32.mxu0 0.0
    %879 = vmatmul.mubr.f32.gmra.mrb[0].mxu0 %v785
    %v880 = vpop.f32.mrb[0].mxu0
    %v881 = vadd.f32 0.0, %v880
    %v882 = vpop.f32.mrb[0].mxu0
    %883 = vmatprep.mubr.f32.mxu0 0.0
    %884 = vmatmul.mubr.f32.gmra.mrb[0].mxu0 %v788
    %v885 = vpop.f32.mrb[0].mxu0
    %v886 = vadd.f32 0.0, %v885
    %v887 = vpop.f32.mrb[0].mxu0
    %888 = vmatprep.mubr.f32.mxu0 0.0
    %889 = vmatmul.mubr.f32.gmra.mrb[0].mxu0 %v791
    %v890 = vpop.f32.mrb[0].mxu0
    %v891 = vadd.f32 0.0, %v890
    %v892 = vpop.f32.mrb[0].mxu0
    %893 = vmatprep.mubr.f32.mxu0 0.0
    %894 = vmatmul.mubr.f32.gmra.mrb[0].mxu0 %v794
    %v895 = vpop.f32.mrb[0].mxu0
    %v896 = vadd.f32 0.0, %v895
    %v897 = vpop.f32.mrb[0].mxu0
    %898 = vmatprep.mubr.f32.mxu0 0.0
    %899 = vmatmul.mubr.f32.gmra.mrb[0].mxu0 %v797
    %v900 = vpop.f32.mrb[0].mxu0
    %v901 = vadd.f32 0.0, %v900
    %v902 = vpop.f32.mrb[0].mxu0
    %903 = vdwg.mxu0
    %v904 = vlaneseq
    %v905 = vshrl.u32 %v904, 7
    %v906 = vsub.s32 1, %v905
    %v907 = vrot.slane %v300, %v906
    %vm908 = vcmask 15360
    %v910 = vsel %vm908, %v866, 0
    %v913 = vsel %vm908, %v871, 0
    %v916 = vsel %vm908, %v876, 0
    %v919 = vsel %vm908, %v881, 0
    %v922 = vsel %vm908, %v886, 0
    %v925 = vsel %vm908, %v891, 0
    %v928 = vsel %vm908, %v896, 0
    %v931 = vsel %vm908, %v901, 0
    %vm933 = vcmask 1041408
    %v935 = vsel %vm933, %v287, 0
    %937 = vmatprep.subr.mxu0 0.0
    %938 = vmatpush1.msra.mxu0 %v935
    %939 = vmatprep.subr.mxu0 0.0
    %940 = vmatpush1.msra.mxu0 0.0
    %941 = vmatprep.subr.mxu0 0.0
    %942 = vmatpush1.msra.mxu0 0.0
    %943 = vmatprep.subr.mxu0 0.0
    %944 = vmatpush1.msra.mxu0 0.0
    %945 = vmatprep.subr.mxu0 0.0
    %946 = vmatpush1.msra.mxu0 0.0
    %947 = vmatprep.subr.mxu0 0.0
    %948 = vmatpush1.msra.mxu0 0.0
    %949 = vmatprep.subr.mxu0 0.0
    %950 = vmatpush1.msra.mxu0 0.0
    %951 = vmatprep.subr.mxu0 0.0
    %952 = vmatpush1.msra.mxu0 0.0
    %953 = vmatprep.subr.mxu0 0.0
    %954 = vmatpush1.msra.mxu0 0.0
    %955 = vmatprep.subr.mxu0 0.0
    %956 = vmatpush1.msra.mxu0 0.0
    %957 = vmatprep.subr.mxu0 0.0
    %958 = vmatpush1.msra.mxu0 0.0
    %959 = vmatprep.subr.mxu0 0.0
    %960 = vmatpush1.msra.mxu0 0.0
    %961 = vmatprep.subr.mxu0 0.0
    %962 = vmatpush1.msra.mxu0 0.0
    %963 = vmatprep.subr.mxu0 0.0
    %964 = vmatpush1.msra.mxu0 0.0
    %965 = vmatprep.subr.mxu0 0.0
    %966 = vmatpush1.msra.mxu0 0.0
    %967 = vmatprep.subr.mxu0 0.0
    %968 = vmatpush1.msra.mxu0 0.0
    %969 = vmatprep.subr.mxu0 0.0
    %970 = vmatpush1.msra.mxu0 0.0
    %971 = vmatprep.subr.mxu0 0.0
    %972 = vmatpush1.msra.mxu0 0.0
    %973 = vmatprep.subr.mxu0 0.0
    %974 = vmatpush1.msra.mxu0 0.0
    %975 = vmatprep.subr.mxu0 0.0
    %976 = vmatpush1.msra.mxu0 0.0
    %977 = vmatprep.subr.mxu0 0.0
    %978 = vmatpush1.msra.mxu0 0.0
    %979 = vmatprep.subr.mxu0 0.0
    %980 = vmatpush1.msra.mxu0 0.0
    %981 = vmatprep.subr.mxu0 0.0
    %982 = vmatpush1.msra.mxu0 0.0
    %983 = vmatprep.subr.mxu0 0.0
    %984 = vmatpush1.msra.mxu0 0.0
    %985 = vmatprep.subr.mxu0 0.0
    %986 = vmatpush1.msra.mxu0 0.0
    %987 = vmatprep.subr.mxu0 0.0
    %988 = vmatpush1.msra.mxu0 0.0
    %989 = vmatprep.subr.mxu0 0.0
    %990 = vmatpush1.msra.mxu0 0.0
    %991 = vmatprep.subr.mxu0 0.0
    %992 = vmatpush1.msra.mxu0 0.0
    %993 = vmatprep.subr.mxu0 0.0
    %994 = vmatpush1.msra.mxu0 0.0
    %995 = vmatprep.subr.mxu0 0.0
    %996 = vmatpush1.msra.mxu0 0.0
    %997 = vmatprep.subr.mxu0 0.0
    %998 = vmatpush1.msra.mxu0 0.0
    %999 = vmatprep.subr.mxu0 0.0
    %1000 = vmatpush1.msra.mxu0 0.0
    %1001 = vmatprep.mubr.f32.mxu0 0.0
    %1002 = vmatmul.mubr.f32.gmra.mrb[0].mxu0 %v910
    %v1003 = vpop.f32.mrb[0].mxu0
    %v1004 = vadd.f32 %v907, %v1003
    %v1005 = vpop.f32.mrb[0].mxu0
    %1006 = vmatprep.mubr.f32.mxu0 0.0
    %1007 = vmatmul.mubr.f32.gmra.mrb[0].mxu0 %v913
    %v1008 = vpop.f32.mrb[0].mxu0
    %v1009 = vadd.f32 %v907, %v1008
    %v1010 = vpop.f32.mrb[0].mxu0
    %1011 = vmatprep.mubr.f32.mxu0 0.0
    %1012 = vmatmul.mubr.f32.gmra.mrb[0].mxu0 %v916
    %v1013 = vpop.f32.mrb[0].mxu0
    %v1014 = vadd.f32 %v907, %v1013
    %v1015 = vpop.f32.mrb[0].mxu0
    %1016 = vmatprep.mubr.f32.mxu0 0.0
    %1017 = vmatmul.mubr.f32.gmra.mrb[0].mxu0 %v919
    %v1018 = vpop.f32.mrb[0].mxu0
    %v1019 = vadd.f32 %v907, %v1018
    %v1020 = vpop.f32.mrb[0].mxu0
    %1021 = vmatprep.mubr.f32.mxu0 0.0
    %1022 = vmatmul.mubr.f32.gmra.mrb[0].mxu0 %v922
    %v1023 = vpop.f32.mrb[0].mxu0
    %v1024 = vadd.f32 %v907, %v1023
    %v1025 = vpop.f32.mrb[0].mxu0
    %1026 = vmatprep.mubr.f32.mxu0 0.0
    %1027 = vmatmul.mubr.f32.gmra.mrb[0].mxu0 %v925
    %v1028 = vpop.f32.mrb[0].mxu0
    %v1029 = vadd.f32 %v907, %v1028
    %v1030 = vpop.f32.mrb[0].mxu0
    %1031 = vmatprep.mubr.f32.mxu0 0.0
    %1032 = vmatmul.mubr.f32.gmra.mrb[0].mxu0 %v928
    %v1033 = vpop.f32.mrb[0].mxu0
    %v1034 = vadd.f32 %v907, %v1033
    %v1035 = vpop.f32.mrb[0].mxu0
    %1036 = vmatprep.mubr.f32.mxu0 0.0
    %1037 = vmatmul.mubr.f32.gmra.mrb[0].mxu0 %v931
    %v1038 = vpop.f32.mrb[0].mxu0
    %v1039 = vadd.f32 %v907, %v1038
    %v1040 = vpop.f32.mrb[0].mxu0
    %1041 = vdwg.mxu0
    %vm1042 = vcmp.gt.f32.partialorder %v1004, 20.0
    %vm1043 = vcmp.gt.f32.partialorder %v1009, 20.0
    %vm1044 = vcmp.gt.f32.partialorder %v1014, 20.0
    %vm1045 = vcmp.gt.f32.partialorder %v1019, 20.0
    %vm1046 = vcmp.gt.f32.partialorder %v1024, 20.0
    %vm1047 = vcmp.gt.f32.partialorder %v1029, 20.0
    %vm1048 = vcmp.gt.f32.partialorder %v1034, 20.0
    %vm1049 = vcmp.gt.f32.partialorder %v1039, 20.0
    %v1050 = vmin.f32 %v1004, 20.0
    %v1051 = vmin.f32 %v1009, 20.0
    %v1052 = vmin.f32 %v1014, 20.0
    %v1053 = vmin.f32 %v1019, 20.0
    %v1054 = vmin.f32 %v1024, 20.0
    %v1055 = vmin.f32 %v1029, 20.0
    %v1056 = vmin.f32 %v1034, 20.0
    %v1057 = vmin.f32 %v1039, 20.0
    %v1058 = vmul.f32 %v1050, 1.442695
    %v1059 = vpow.pop %v1058
    %v1060 = vmul.f32 %v1051, 1.442695
    %v1061 = vpow.pop %v1060
    %v1062 = vmul.f32 %v1052, 1.442695
    %v1063 = vpow.pop %v1062
    %v1064 = vmul.f32 %v1053, 1.442695
    %v1065 = vpow.pop %v1064
    %v1066 = vmul.f32 %v1054, 1.442695
    %v1067 = vpow.pop %v1066
    %v1068 = vmul.f32 %v1055, 1.442695
    %v1069 = vpow.pop %v1068
    %v1070 = vmul.f32 %v1056, 1.442695
    %v1071 = vpow.pop %v1070
    %v1072 = vmul.f32 %v1057, 1.442695
    %v1073 = vpow.pop %v1072
    %v1074 = vadd.f32 %v1059, 1.0
    %v1075 = vadd.f32 %v1061, 1.0
    %v1076 = vadd.f32 %v1063, 1.0
    %v1077 = vadd.f32 %v1065, 1.0
    %v1078 = vadd.f32 %v1067, 1.0
    %v1079 = vadd.f32 %v1069, 1.0
    %v1080 = vadd.f32 %v1071, 1.0
    %v1081 = vadd.f32 %v1073, 1.0
    %v1082 = vlog2.pop %v1074
    %v1083 = vmul.f32 %v1082, 0.6931472
    %v1084 = vlog2.pop %v1075
    %v1085 = vmul.f32 %v1084, 0.6931472
    %v1086 = vlog2.pop %v1076
    %v1087 = vmul.f32 %v1086, 0.6931472
    %v1088 = vlog2.pop %v1077
    %v1089 = vmul.f32 %v1088, 0.6931472
    %v1090 = vlog2.pop %v1078
    %v1091 = vmul.f32 %v1090, 0.6931472
    %v1092 = vlog2.pop %v1079
    %v1093 = vmul.f32 %v1092, 0.6931472
    %v1094 = vlog2.pop %v1080
    %v1095 = vmul.f32 %v1094, 0.6931472
    %v1096 = vlog2.pop %v1081
    %v1097 = vmul.f32 %v1096, 0.6931472
    %v1098 = vsel %vm1042, %v1004, %v1083
    %v1099 = vsel %vm1043, %v1009, %v1085
    %v1100 = vsel %vm1044, %v1014, %v1087
    %v1101 = vsel %vm1045, %v1019, %v1089
    %v1102 = vsel %vm1046, %v1024, %v1091
    %v1103 = vsel %vm1047, %v1029, %v1093
    %v1104 = vsel %vm1048, %v1034, %v1095
    %v1105 = vsel %vm1049, %v1039, %v1097
    %v1114 = vcombine.high %v1098, %v1098
    %v1116 = vunpack.c.l.s4 1966171168
    %v1117 = vunpack.c.0.s8 %v1116
    %v1118 = vlaneseq
    %v1119 = vshrl.u32 %v1118, 7
    %v1120 = vsub.s32 %v1117, %v1119
    %v1121 = vrot.slane %v1098, %v1120
    %v1123 = vunpack.c.l.s4 1966171168
    %v1124 = vunpack.c.0.s8 %v1123
    %v1125 = vlaneseq
    %v1126 = vshrl.u32 %v1125, 7
    %v1127 = vsub.s32 %v1124, %v1126
    %v1128 = vrot.slane %v1114, %v1127
    %v1129 = vcombine.high %v1121, %v1121
    %v1130 = vcombine.high %v1128, %v1128
    %v1132 = vunpack.c.l.s4 1966171168
    %v1133 = vunpack.c.0.s8 %v1132
    %v1134 = vlaneseq
    %v1135 = vshrl.u32 %v1134, 7
    %v1136 = vsub.s32 %v1133, %v1135
    %v1137 = vrot.slane %v1121, %v1136
    %v1139 = vunpack.c.l.s4 1966171168
    %v1140 = vunpack.c.0.s8 %v1139
    %v1141 = vlaneseq
    %v1142 = vshrl.u32 %v1141, 7
    %v1143 = vsub.s32 %v1140, %v1142
    %v1144 = vrot.slane %v1128, %v1143
    %v1146 = vunpack.c.l.s4 1966171168
    %v1147 = vunpack.c.0.s8 %v1146
    %v1148 = vlaneseq
    %v1149 = vshrl.u32 %v1148, 7
    %v1150 = vsub.s32 %v1147, %v1149
    %v1151 = vrot.slane %v1129, %v1150
    %v1153 = vunpack.c.l.s4 1966171168
    %v1154 = vunpack.c.0.s8 %v1153
    %v1155 = vlaneseq
    %v1156 = vshrl.u32 %v1155, 7
    %v1157 = vsub.s32 %v1154, %v1156
    %v1158 = vrot.slane %v1130, %v1157
    %v1159 = vcombine.high %v1137, %v1137
    %v1160 = vcombine.high %v1144, %v1144
    %v1161 = vcombine.high %v1151, %v1151
    %v1162 = vcombine.high %v1158, %v1158
    %v1163 = vcombine.high %v1099, %v1099
    %v1165 = vunpack.c.l.s4 1966171168
    %v1166 = vunpack.c.0.s8 %v1165
    %v1167 = vlaneseq
    %v1168 = vshrl.u32 %v1167, 7
    %v1169 = vsub.s32 %v1166, %v1168
    %v1170 = vrot.slane %v1099, %v1169
    %v1172 = vunpack.c.l.s4 1966171168
    %v1173 = vunpack.c.0.s8 %v1172
    %v1174 = vlaneseq
    %v1175 = vshrl.u32 %v1174, 7
    %v1176 = vsub.s32 %v1173, %v1175
    %v1177 = vrot.slane %v1163, %v1176
    %v1178 = vcombine.high %v1170, %v1170
    %v1179 = vcombine.high %v1177, %v1177
    %v1181 = vunpack.c.l.s4 1966171168
    %v1182 = vunpack.c.0.s8 %v1181
    %v1183 = vlaneseq
    %v1184 = vshrl.u32 %v1183, 7
    %v1185 = vsub.s32 %v1182, %v1184
    %v1186 = vrot.slane %v1170, %v1185
    %v1188 = vunpack.c.l.s4 1966171168
    %v1189 = vunpack.c.0.s8 %v1188
    %v1190 = vlaneseq
    %v1191 = vshrl.u32 %v1190, 7
    %v1192 = vsub.s32 %v1189, %v1191
    %v1193 = vrot.slane %v1177, %v1192
    %v1195 = vunpack.c.l.s4 1966171168
    %v1196 = vunpack.c.0.s8 %v1195
    %v1197 = vlaneseq
    %v1198 = vshrl.u32 %v1197, 7
    %v1199 = vsub.s32 %v1196, %v1198
    %v1200 = vrot.slane %v1178, %v1199
    %v1202 = vunpack.c.l.s4 1966171168
    %v1203 = vunpack.c.0.s8 %v1202
    %v1204 = vlaneseq
    %v1205 = vshrl.u32 %v1204, 7
    %v1206 = vsub.s32 %v1203, %v1205
    %v1207 = vrot.slane %v1179, %v1206
    %v1208 = vcombine.high %v1186, %v1186
    %v1209 = vcombine.high %v1193, %v1193
    %v1210 = vcombine.high %v1200, %v1200
    %v1211 = vcombine.high %v1207, %v1207
    %v1212 = vcombine.high %v1100, %v1100
    %v1214 = vunpack.c.l.s4 1966171168
    %v1215 = vunpack.c.0.s8 %v1214
    %v1216 = vlaneseq
    %v1217 = vshrl.u32 %v1216, 7
    %v1218 = vsub.s32 %v1215, %v1217
    %v1219 = vrot.slane %v1100, %v1218
    %v1221 = vunpack.c.l.s4 1966171168
    %v1222 = vunpack.c.0.s8 %v1221
    %v1223 = vlaneseq
    %v1224 = vshrl.u32 %v1223, 7
    %v1225 = vsub.s32 %v1222, %v1224
    %v1226 = vrot.slane %v1212, %v1225
    %v1227 = vcombine.high %v1219, %v1219
    %v1228 = vcombine.high %v1226, %v1226
    %v1230 = vunpack.c.l.s4 1966171168
    %v1231 = vunpack.c.0.s8 %v1230
    %v1232 = vlaneseq
    %v1233 = vshrl.u32 %v1232, 7
    %v1234 = vsub.s32 %v1231, %v1233
    %v1235 = vrot.slane %v1219, %v1234
    %v1237 = vunpack.c.l.s4 1966171168
    %v1238 = vunpack.c.0.s8 %v1237
    %v1239 = vlaneseq
    %v1240 = vshrl.u32 %v1239, 7
    %v1241 = vsub.s32 %v1238, %v1240
    %v1242 = vrot.slane %v1226, %v1241
    %v1244 = vunpack.c.l.s4 1966171168
    %v1245 = vunpack.c.0.s8 %v1244
    %v1246 = vlaneseq
    %v1247 = vshrl.u32 %v1246, 7
    %v1248 = vsub.s32 %v1245, %v1247
    %v1249 = vrot.slane %v1227, %v1248
    %v1251 = vunpack.c.l.s4 1966171168
    %v1252 = vunpack.c.0.s8 %v1251
    %v1253 = vlaneseq
    %v1254 = vshrl.u32 %v1253, 7
    %v1255 = vsub.s32 %v1252, %v1254
    %v1256 = vrot.slane %v1228, %v1255
    %v1257 = vcombine.high %v1235, %v1235
    %v1258 = vcombine.high %v1242, %v1242
    %v1259 = vcombine.high %v1249, %v1249
    %v1260 = vcombine.high %v1256, %v1256
    %v1261 = vcombine.high %v1101, %v1101
    %v1263 = vunpack.c.l.s4 1966171168
    %v1264 = vunpack.c.0.s8 %v1263
    %v1265 = vlaneseq
    %v1266 = vshrl.u32 %v1265, 7
    %v1267 = vsub.s32 %v1264, %v1266
    %v1268 = vrot.slane %v1101, %v1267
    %v1270 = vunpack.c.l.s4 1966171168
    %v1271 = vunpack.c.0.s8 %v1270
    %v1272 = vlaneseq
    %v1273 = vshrl.u32 %v1272, 7
    %v1274 = vsub.s32 %v1271, %v1273
    %v1275 = vrot.slane %v1261, %v1274
    %v1276 = vcombine.high %v1268, %v1268
    %v1277 = vcombine.high %v1275, %v1275
    %v1279 = vunpack.c.l.s4 1966171168
    %v1280 = vunpack.c.0.s8 %v1279
    %v1281 = vlaneseq
    %v1282 = vshrl.u32 %v1281, 7
    %v1283 = vsub.s32 %v1280, %v1282
    %v1284 = vrot.slane %v1268, %v1283
    %v1286 = vunpack.c.l.s4 1966171168
    %v1287 = vunpack.c.0.s8 %v1286
    %v1288 = vlaneseq
    %v1289 = vshrl.u32 %v1288, 7
    %v1290 = vsub.s32 %v1287, %v1289
    %v1291 = vrot.slane %v1275, %v1290
    %v1293 = vunpack.c.l.s4 1966171168
    %v1294 = vunpack.c.0.s8 %v1293
    %v1295 = vlaneseq
    %v1296 = vshrl.u32 %v1295, 7
    %v1297 = vsub.s32 %v1294, %v1296
    %v1298 = vrot.slane %v1276, %v1297
    %v1300 = vunpack.c.l.s4 1966171168
    %v1301 = vunpack.c.0.s8 %v1300
    %v1302 = vlaneseq
    %v1303 = vshrl.u32 %v1302, 7
    %v1304 = vsub.s32 %v1301, %v1303
    %v1305 = vrot.slane %v1277, %v1304
    %v1306 = vcombine.high %v1284, %v1284
    %v1307 = vcombine.high %v1291, %v1291
    %v1308 = vcombine.high %v1298, %v1298
    %v1309 = vcombine.high %v1305, %v1305
    %v1310 = vcombine.high %v1102, %v1102
    %v1312 = vunpack.c.l.s4 1966171168
    %v1313 = vunpack.c.0.s8 %v1312
    %v1314 = vlaneseq
    %v1315 = vshrl.u32 %v1314, 7
    %v1316 = vsub.s32 %v1313, %v1315
    %v1317 = vrot.slane %v1102, %v1316
    %v1319 = vunpack.c.l.s4 1966171168
    %v1320 = vunpack.c.0.s8 %v1319
    %v1321 = vlaneseq
    %v1322 = vshrl.u32 %v1321, 7
    %v1323 = vsub.s32 %v1320, %v1322
    %v1324 = vrot.slane %v1310, %v1323
    %v1325 = vcombine.high %v1317, %v1317
    %v1326 = vcombine.high %v1324, %v1324
    %v1328 = vunpack.c.l.s4 1966171168
    %v1329 = vunpack.c.0.s8 %v1328
    %v1330 = vlaneseq
    %v1331 = vshrl.u32 %v1330, 7
    %v1332 = vsub.s32 %v1329, %v1331
    %v1333 = vrot.slane %v1317, %v1332
    %v1335 = vunpack.c.l.s4 1966171168
    %v1336 = vunpack.c.0.s8 %v1335
    %v1337 = vlaneseq
    %v1338 = vshrl.u32 %v1337, 7
    %v1339 = vsub.s32 %v1336, %v1338
    %v1340 = vrot.slane %v1324, %v1339
    %v1342 = vunpack.c.l.s4 1966171168
    %v1343 = vunpack.c.0.s8 %v1342
    %v1344 = vlaneseq
    %v1345 = vshrl.u32 %v1344, 7
    %v1346 = vsub.s32 %v1343, %v1345
    %v1347 = vrot.slane %v1325, %v1346
    %v1349 = vunpack.c.l.s4 1966171168
    %v1350 = vunpack.c.0.s8 %v1349
    %v1351 = vlaneseq
    %v1352 = vshrl.u32 %v1351, 7
    %v1353 = vsub.s32 %v1350, %v1352
    %v1354 = vrot.slane %v1326, %v1353
    %v1355 = vcombine.high %v1333, %v1333
    %v1356 = vcombine.high %v1340, %v1340
    %v1357 = vcombine.high %v1347, %v1347
    %v1358 = vcombine.high %v1354, %v1354
    %v1359 = vcombine.high %v1103, %v1103
    %v1361 = vunpack.c.l.s4 1966171168
    %v1362 = vunpack.c.0.s8 %v1361
    %v1363 = vlaneseq
    %v1364 = vshrl.u32 %v1363, 7
    %v1365 = vsub.s32 %v1362, %v1364
    %v1366 = vrot.slane %v1103, %v1365
    %v1368 = vunpack.c.l.s4 1966171168
    %v1369 = vunpack.c.0.s8 %v1368
    %v1370 = vlaneseq
    %v1371 = vshrl.u32 %v1370, 7
    %v1372 = vsub.s32 %v1369, %v1371
    %v1373 = vrot.slane %v1359, %v1372
    %v1374 = vcombine.high %v1366, %v1366
    %v1375 = vcombine.high %v1373, %v1373
    %v1377 = vunpack.c.l.s4 1966171168
    %v1378 = vunpack.c.0.s8 %v1377
    %v1379 = vlaneseq
    %v1380 = vshrl.u32 %v1379, 7
    %v1381 = vsub.s32 %v1378, %v1380
    %v1382 = vrot.slane %v1366, %v1381
    %v1384 = vunpack.c.l.s4 1966171168
    %v1385 = vunpack.c.0.s8 %v1384
    %v1386 = vlaneseq
    %v1387 = vshrl.u32 %v1386, 7
    %v1388 = vsub.s32 %v1385, %v1387
    %v1389 = vrot.slane %v1373, %v1388
    %v1391 = vunpack.c.l.s4 1966171168
    %v1392 = vunpack.c.0.s8 %v1391
    %v1393 = vlaneseq
    %v1394 = vshrl.u32 %v1393, 7
    %v1395 = vsub.s32 %v1392, %v1394
    %v1396 = vrot.slane %v1374, %v1395
    %v1398 = vunpack.c.l.s4 1966171168
    %v1399 = vunpack.c.0.s8 %v1398
    %v1400 = vlaneseq
    %v1401 = vshrl.u32 %v1400, 7
    %v1402 = vsub.s32 %v1399, %v1401
    %v1403 = vrot.slane %v1375, %v1402
    %v1404 = vcombine.high %v1382, %v1382
    %v1405 = vcombine.high %v1389, %v1389
    %v1406 = vcombine.high %v1396, %v1396
    %v1407 = vcombine.high %v1403, %v1403
    %v1408 = vcombine.high %v1104, %v1104
    %v1410 = vunpack.c.l.s4 1966171168
    %v1411 = vunpack.c.0.s8 %v1410
    %v1412 = vlaneseq
    %v1413 = vshrl.u32 %v1412, 7
    %v1414 = vsub.s32 %v1411, %v1413
    %v1415 = vrot.slane %v1104, %v1414
    %v1417 = vunpack.c.l.s4 1966171168
    %v1418 = vunpack.c.0.s8 %v1417
    %v1419 = vlaneseq
    %v1420 = vshrl.u32 %v1419, 7
    %v1421 = vsub.s32 %v1418, %v1420
    %v1422 = vrot.slane %v1408, %v1421
    %v1423 = vcombine.high %v1415, %v1415
    %v1424 = vcombine.high %v1422, %v1422
    %v1426 = vunpack.c.l.s4 1966171168
    %v1427 = vunpack.c.0.s8 %v1426
    %v1428 = vlaneseq
    %v1429 = vshrl.u32 %v1428, 7
    %v1430 = vsub.s32 %v1427, %v1429
    %v1431 = vrot.slane %v1415, %v1430
    %v1433 = vunpack.c.l.s4 1966171168
    %v1434 = vunpack.c.0.s8 %v1433
    %v1435 = vlaneseq
    %v1436 = vshrl.u32 %v1435, 7
    %v1437 = vsub.s32 %v1434, %v1436
    %v1438 = vrot.slane %v1422, %v1437
    %v1440 = vunpack.c.l.s4 1966171168
    %v1441 = vunpack.c.0.s8 %v1440
    %v1442 = vlaneseq
    %v1443 = vshrl.u32 %v1442, 7
    %v1444 = vsub.s32 %v1441, %v1443
    %v1445 = vrot.slane %v1423, %v1444
    %v1447 = vunpack.c.l.s4 1966171168
    %v1448 = vunpack.c.0.s8 %v1447
    %v1449 = vlaneseq
    %v1450 = vshrl.u32 %v1449, 7
    %v1451 = vsub.s32 %v1448, %v1450
    %v1452 = vrot.slane %v1424, %v1451
    %v1453 = vcombine.high %v1431, %v1431
    %v1454 = vcombine.high %v1438, %v1438
    %v1455 = vcombine.high %v1445, %v1445
    %v1456 = vcombine.high %v1452, %v1452
    %v1457 = vcombine.high %v1105, %v1105
    %v1459 = vunpack.c.l.s4 1966171168
    %v1460 = vunpack.c.0.s8 %v1459
    %v1461 = vlaneseq
    %v1462 = vshrl.u32 %v1461, 7
    %v1463 = vsub.s32 %v1460, %v1462
    %v1464 = vrot.slane %v1105, %v1463
    %v1466 = vunpack.c.l.s4 1966171168
    %v1467 = vunpack.c.0.s8 %v1466
    %v1468 = vlaneseq
    %v1469 = vshrl.u32 %v1468, 7
    %v1470 = vsub.s32 %v1467, %v1469
    %v1471 = vrot.slane %v1457, %v1470
    %v1472 = vcombine.high %v1464, %v1464
    %v1473 = vcombine.high %v1471, %v1471
    %v1475 = vunpack.c.l.s4 1966171168
    %v1476 = vunpack.c.0.s8 %v1475
    %v1477 = vlaneseq
    %v1478 = vshrl.u32 %v1477, 7
    %v1479 = vsub.s32 %v1476, %v1478
    %v1480 = vrot.slane %v1464, %v1479
    %v1482 = vunpack.c.l.s4 1966171168
    %v1483 = vunpack.c.0.s8 %v1482
    %v1484 = vlaneseq
    %v1485 = vshrl.u32 %v1484, 7
    %v1486 = vsub.s32 %v1483, %v1485
    %v1487 = vrot.slane %v1471, %v1486
    %v1489 = vunpack.c.l.s4 1966171168
    %v1490 = vunpack.c.0.s8 %v1489
    %v1491 = vlaneseq
    %v1492 = vshrl.u32 %v1491, 7
    %v1493 = vsub.s32 %v1490, %v1492
    %v1494 = vrot.slane %v1472, %v1493
    %v1496 = vunpack.c.l.s4 1966171168
    %v1497 = vunpack.c.0.s8 %v1496
    %v1498 = vlaneseq
    %v1499 = vshrl.u32 %v1498, 7
    %v1500 = vsub.s32 %v1497, %v1499
    %v1501 = vrot.slane %v1473, %v1500
    %v1502 = vcombine.high %v1480, %v1480
    %v1503 = vcombine.high %v1487, %v1487
    %v1504 = vcombine.high %v1494, %v1494
    %v1505 = vcombine.high %v1501, %v1501
    %v1506 = vlaneseq
    %v1507 = vshrl.u32 %v1506, 7
    %v1508 = vsub.s32 0, %v1507
    %v1509 = vrot.slane %v1137, %v1508
    %v1510 = vlaneseq
    %v1511 = vshrl.u32 %v1510, 7
    %v1512 = vsub.s32 0, %v1511
    %v1513 = vrot.slane %v1151, %v1512
    %v1514 = vlaneseq
    %v1515 = vshrl.u32 %v1514, 7
    %v1516 = vsub.s32 0, %v1515
    %v1517 = vrot.slane %v1159, %v1516
    %v1518 = vlaneseq
    %v1519 = vshrl.u32 %v1518, 7
    %v1520 = vsub.s32 0, %v1519
    %v1521 = vrot.slane %v1161, %v1520
    %v1522 = vlaneseq
    %v1523 = vshrl.u32 %v1522, 7
    %v1524 = vsub.s32 0, %v1523
    %v1525 = vrot.slane %v1144, %v1524
    %v1526 = vlaneseq
    %v1527 = vshrl.u32 %v1526, 7
    %v1528 = vsub.s32 0, %v1527
    %v1529 = vrot.slane %v1158, %v1528
    %v1530 = vlaneseq
    %v1531 = vshrl.u32 %v1530, 7
    %v1532 = vsub.s32 0, %v1531
    %v1533 = vrot.slane %v1160, %v1532
    %v1534 = vlaneseq
    %v1535 = vshrl.u32 %v1534, 7
    %v1536 = vsub.s32 0, %v1535
    %v1537 = vrot.slane %v1162, %v1536
    %v1538 = vlaneseq
    %v1539 = vshrl.u32 %v1538, 7
    %v1540 = vsub.s32 0, %v1539
    %v1541 = vrot.slane %v1186, %v1540
    %v1542 = vlaneseq
    %v1543 = vshrl.u32 %v1542, 7
    %v1544 = vsub.s32 0, %v1543
    %v1545 = vrot.slane %v1200, %v1544
    %v1546 = vlaneseq
    %v1547 = vshrl.u32 %v1546, 7
    %v1548 = vsub.s32 0, %v1547
    %v1549 = vrot.slane %v1208, %v1548
    %v1550 = vlaneseq
    %v1551 = vshrl.u32 %v1550, 7
    %v1552 = vsub.s32 0, %v1551
    %v1553 = vrot.slane %v1210, %v1552
    %v1554 = vlaneseq
    %v1555 = vshrl.u32 %v1554, 7
    %v1556 = vsub.s32 0, %v1555
    %v1557 = vrot.slane %v1193, %v1556
    %v1558 = vlaneseq
    %v1559 = vshrl.u32 %v1558, 7
    %v1560 = vsub.s32 0, %v1559
    %v1561 = vrot.slane %v1207, %v1560
    %v1562 = vlaneseq
    %v1563 = vshrl.u32 %v1562, 7
    %v1564 = vsub.s32 0, %v1563
    %v1565 = vrot.slane %v1209, %v1564
    %v1566 = vlaneseq
    %v1567 = vshrl.u32 %v1566, 7
    %v1568 = vsub.s32 0, %v1567
    %v1569 = vrot.slane %v1211, %v1568
    %v1570 = vlaneseq
    %v1571 = vshrl.u32 %v1570, 7
    %v1572 = vsub.s32 0, %v1571
    %v1573 = vrot.slane %v1235, %v1572
    %v1574 = vlaneseq
    %v1575 = vshrl.u32 %v1574, 7
    %v1576 = vsub.s32 0, %v1575
    %v1577 = vrot.slane %v1249, %v1576
    %v1578 = vlaneseq
    %v1579 = vshrl.u32 %v1578, 7
    %v1580 = vsub.s32 0, %v1579
    %v1581 = vrot.slane %v1257, %v1580
    %v1582 = vlaneseq
    %v1583 = vshrl.u32 %v1582, 7
    %v1584 = vsub.s32 0, %v1583
    %v1585 = vrot.slane %v1259, %v1584
    %v1586 = vlaneseq
    %v1587 = vshrl.u32 %v1586, 7
    %v1588 = vsub.s32 0, %v1587
    %v1589 = vrot.slane %v1242, %v1588
    %v1590 = vlaneseq
    %v1591 = vshrl.u32 %v1590, 7
    %v1592 = vsub.s32 0, %v1591
    %v1593 = vrot.slane %v1256, %v1592
    %v1594 = vlaneseq
    %v1595 = vshrl.u32 %v1594, 7
    %v1596 = vsub.s32 0, %v1595
    %v1597 = vrot.slane %v1258, %v1596
    %v1598 = vlaneseq
    %v1599 = vshrl.u32 %v1598, 7
    %v1600 = vsub.s32 0, %v1599
    %v1601 = vrot.slane %v1260, %v1600
    %v1602 = vlaneseq
    %v1603 = vshrl.u32 %v1602, 7
    %v1604 = vsub.s32 0, %v1603
    %v1605 = vrot.slane %v1284, %v1604
    %v1606 = vlaneseq
    %v1607 = vshrl.u32 %v1606, 7
    %v1608 = vsub.s32 0, %v1607
    %v1609 = vrot.slane %v1298, %v1608
    %v1610 = vlaneseq
    %v1611 = vshrl.u32 %v1610, 7
    %v1612 = vsub.s32 0, %v1611
    %v1613 = vrot.slane %v1306, %v1612
    %v1614 = vlaneseq
    %v1615 = vshrl.u32 %v1614, 7
    %v1616 = vsub.s32 0, %v1615
    %v1617 = vrot.slane %v1308, %v1616
    %v1618 = vlaneseq
    %v1619 = vshrl.u32 %v1618, 7
    %v1620 = vsub.s32 0, %v1619
    %v1621 = vrot.slane %v1291, %v1620
    %v1622 = vlaneseq
    %v1623 = vshrl.u32 %v1622, 7
    %v1624 = vsub.s32 0, %v1623
    %v1625 = vrot.slane %v1305, %v1624
    %v1626 = vlaneseq
    %v1627 = vshrl.u32 %v1626, 7
    %v1628 = vsub.s32 0, %v1627
    %v1629 = vrot.slane %v1307, %v1628
    %v1630 = vlaneseq
    %v1631 = vshrl.u32 %v1630, 7
    %v1632 = vsub.s32 0, %v1631
    %v1633 = vrot.slane %v1309, %v1632
    %v1634 = vlaneseq
    %v1635 = vshrl.u32 %v1634, 7
    %v1636 = vsub.s32 0, %v1635
    %v1637 = vrot.slane %v1333, %v1636
    %v1638 = vlaneseq
    %v1639 = vshrl.u32 %v1638, 7
    %v1640 = vsub.s32 0, %v1639
    %v1641 = vrot.slane %v1347, %v1640
    %v1642 = vlaneseq
    %v1643 = vshrl.u32 %v1642, 7
    %v1644 = vsub.s32 0, %v1643
    %v1645 = vrot.slane %v1355, %v1644
    %v1646 = vlaneseq
    %v1647 = vshrl.u32 %v1646, 7
    %v1648 = vsub.s32 0, %v1647
    %v1649 = vrot.slane %v1357, %v1648
    %v1650 = vlaneseq
    %v1651 = vshrl.u32 %v1650, 7
    %v1652 = vsub.s32 0, %v1651
    %v1653 = vrot.slane %v1340, %v1652
    %v1654 = vlaneseq
    %v1655 = vshrl.u32 %v1654, 7
    %v1656 = vsub.s32 0, %v1655
    %v1657 = vrot.slane %v1354, %v1656
    %v1658 = vlaneseq
    %v1659 = vshrl.u32 %v1658, 7
    %v1660 = vsub.s32 0, %v1659
    %v1661 = vrot.slane %v1356, %v1660
    %v1662 = vlaneseq
    %v1663 = vshrl.u32 %v1662, 7
    %v1664 = vsub.s32 0, %v1663
    %v1665 = vrot.slane %v1358, %v1664
    %v1666 = vlaneseq
    %v1667 = vshrl.u32 %v1666, 7
    %v1668 = vsub.s32 0, %v1667
    %v1669 = vrot.slane %v1382, %v1668
    %v1670 = vlaneseq
    %v1671 = vshrl.u32 %v1670, 7
    %v1672 = vsub.s32 0, %v1671
    %v1673 = vrot.slane %v1396, %v1672
    %v1674 = vlaneseq
    %v1675 = vshrl.u32 %v1674, 7
    %v1676 = vsub.s32 0, %v1675
    %v1677 = vrot.slane %v1404, %v1676
    %v1678 = vlaneseq
    %v1679 = vshrl.u32 %v1678, 7
    %v1680 = vsub.s32 0, %v1679
    %v1681 = vrot.slane %v1406, %v1680
    %v1682 = vlaneseq
    %v1683 = vshrl.u32 %v1682, 7
    %v1684 = vsub.s32 0, %v1683
    %v1685 = vrot.slane %v1389, %v1684
    %v1686 = vlaneseq
    %v1687 = vshrl.u32 %v1686, 7
    %v1688 = vsub.s32 0, %v1687
    %v1689 = vrot.slane %v1403, %v1688
    %v1690 = vlaneseq
    %v1691 = vshrl.u32 %v1690, 7
    %v1692 = vsub.s32 0, %v1691
    %v1693 = vrot.slane %v1405, %v1692
    %v1694 = vlaneseq
    %v1695 = vshrl.u32 %v1694, 7
    %v1696 = vsub.s32 0, %v1695
    %v1697 = vrot.slane %v1407, %v1696
    %v1698 = vlaneseq
    %v1699 = vshrl.u32 %v1698, 7
    %v1700 = vsub.s32 0, %v1699
    %v1701 = vrot.slane %v1431, %v1700
    %v1702 = vlaneseq
    %v1703 = vshrl.u32 %v1702, 7
    %v1704 = vsub.s32 0, %v1703
    %v1705 = vrot.slane %v1445, %v1704
    %v1706 = vlaneseq
    %v1707 = vshrl.u32 %v1706, 7
    %v1708 = vsub.s32 0, %v1707
    %v1709 = vrot.slane %v1453, %v1708
    %v1710 = vlaneseq
    %v1711 = vshrl.u32 %v1710, 7
    %v1712 = vsub.s32 0, %v1711
    %v1713 = vrot.slane %v1455, %v1712
    %v1714 = vlaneseq
    %v1715 = vshrl.u32 %v1714, 7
    %v1716 = vsub.s32 0, %v1715
    %v1717 = vrot.slane %v1438, %v1716
    %v1718 = vlaneseq
    %v1719 = vshrl.u32 %v1718, 7
    %v1720 = vsub.s32 0, %v1719
    %v1721 = vrot.slane %v1452, %v1720
    %v1722 = vlaneseq
    %v1723 = vshrl.u32 %v1722, 7
    %v1724 = vsub.s32 0, %v1723
    %v1725 = vrot.slane %v1454, %v1724
    %v1726 = vlaneseq
    %v1727 = vshrl.u32 %v1726, 7
    %v1728 = vsub.s32 0, %v1727
    %v1729 = vrot.slane %v1456, %v1728
    %v1730 = vlaneseq
    %v1731 = vshrl.u32 %v1730, 7
    %v1732 = vsub.s32 0, %v1731
    %v1733 = vrot.slane %v1480, %v1732
    %v1734 = vlaneseq
    %v1735 = vshrl.u32 %v1734, 7
    %v1736 = vsub.s32 0, %v1735
    %v1737 = vrot.slane %v1494, %v1736
    %v1738 = vlaneseq
    %v1739 = vshrl.u32 %v1738, 7
    %v1740 = vsub.s32 0, %v1739
    %v1741 = vrot.slane %v1502, %v1740
    %v1742 = vlaneseq
    %v1743 = vshrl.u32 %v1742, 7
    %v1744 = vsub.s32 0, %v1743
    %v1745 = vrot.slane %v1504, %v1744
    %v1746 = vlaneseq
    %v1747 = vshrl.u32 %v1746, 7
    %v1748 = vsub.s32 0, %v1747
    %v1749 = vrot.slane %v1487, %v1748
    %v1750 = vlaneseq
    %v1751 = vshrl.u32 %v1750, 7
    %v1752 = vsub.s32 0, %v1751
    %v1753 = vrot.slane %v1501, %v1752
    %v1754 = vlaneseq
    %v1755 = vshrl.u32 %v1754, 7
    %v1756 = vsub.s32 0, %v1755
    %v1757 = vrot.slane %v1503, %v1756
    %v1758 = vlaneseq
    %v1759 = vshrl.u32 %v1758, 7
    %v1760 = vsub.s32 0, %v1759
    %v1761 = vrot.slane %v1505, %v1760
    %v1826 = vmul.f32 %v1509, %v294
    %v1827 = vmul.f32 %v1509, %v295
    %v1828 = vmul.f32 %v1513, %v294
    %v1829 = vmul.f32 %v1513, %v295
    %v1830 = vmul.f32 %v1517, %v294
    %v1831 = vmul.f32 %v1517, %v295
    %v1832 = vmul.f32 %v1521, %v294
    %v1833 = vmul.f32 %v1521, %v295
    %v1834 = vmul.f32 %v1525, %v294
    %v1835 = vmul.f32 %v1525, %v295
    %v1836 = vmul.f32 %v1529, %v294
    %v1837 = vmul.f32 %v1529, %v295
    %v1838 = vmul.f32 %v1533, %v294
    %v1839 = vmul.f32 %v1533, %v295
    %v1840 = vmul.f32 %v1537, %v294
    %v1841 = vmul.f32 %v1537, %v295
    %v1842 = vmul.f32 %v1541, %v294
    %v1843 = vmul.f32 %v1541, %v295
    %v1844 = vmul.f32 %v1545, %v294
    %v1845 = vmul.f32 %v1545, %v295
    %v1846 = vmul.f32 %v1549, %v294
    %v1847 = vmul.f32 %v1549, %v295
    %v1848 = vmul.f32 %v1553, %v294
    %v1849 = vmul.f32 %v1553, %v295
    %v1850 = vmul.f32 %v1557, %v294
    %v1851 = vmul.f32 %v1557, %v295
    %v1852 = vmul.f32 %v1561, %v294
    %v1853 = vmul.f32 %v1561, %v295
    %v1854 = vmul.f32 %v1565, %v294
    %v1855 = vmul.f32 %v1565, %v295
    %v1856 = vmul.f32 %v1569, %v294
    %v1857 = vmul.f32 %v1569, %v295
    %v1858 = vmul.f32 %v1573, %v294
    %v1859 = vmul.f32 %v1573, %v295
    %v1860 = vmul.f32 %v1577, %v294
    %v1861 = vmul.f32 %v1577, %v295
    %v1862 = vmul.f32 %v1581, %v294
    %v1863 = vmul.f32 %v1581, %v295
    %v1864 = vmul.f32 %v1585, %v294
    %v1865 = vmul.f32 %v1585, %v295
    %v1866 = vmul.f32 %v1589, %v294
    %v1867 = vmul.f32 %v1589, %v295
    %v1868 = vmul.f32 %v1593, %v294
    %v1869 = vmul.f32 %v1593, %v295
    %v1870 = vmul.f32 %v1597, %v294
    %v1871 = vmul.f32 %v1597, %v295
    %v1872 = vmul.f32 %v1601, %v294
    %v1873 = vmul.f32 %v1601, %v295
    %v1874 = vmul.f32 %v1605, %v294
    %v1875 = vmul.f32 %v1605, %v295
    %v1876 = vmul.f32 %v1609, %v294
    %v1877 = vmul.f32 %v1609, %v295
    %v1878 = vmul.f32 %v1613, %v294
    %v1879 = vmul.f32 %v1613, %v295
    %v1880 = vmul.f32 %v1617, %v294
    %v1881 = vmul.f32 %v1617, %v295
    %v1882 = vmul.f32 %v1621, %v294
    %v1883 = vmul.f32 %v1621, %v295
    %v1884 = vmul.f32 %v1625, %v294
    %v1885 = vmul.f32 %v1625, %v295
    %v1886 = vmul.f32 %v1629, %v294
    %v1887 = vmul.f32 %v1629, %v295
    %v1888 = vmul.f32 %v1633, %v294
    %v1889 = vmul.f32 %v1633, %v295
    %v1890 = vmul.f32 %v1637, %v294
    %v1891 = vmul.f32 %v1637, %v295
    %v1892 = vmul.f32 %v1641, %v294
    %v1893 = vmul.f32 %v1641, %v295
    %v1894 = vmul.f32 %v1645, %v294
    %v1895 = vmul.f32 %v1645, %v295
    %v1896 = vmul.f32 %v1649, %v294
    %v1897 = vmul.f32 %v1649, %v295
    %v1898 = vmul.f32 %v1653, %v294
    %v1899 = vmul.f32 %v1653, %v295
    %v1900 = vmul.f32 %v1657, %v294
    %v1901 = vmul.f32 %v1657, %v295
    %v1902 = vmul.f32 %v1661, %v294
    %v1903 = vmul.f32 %v1661, %v295
    %v1904 = vmul.f32 %v1665, %v294
    %v1905 = vmul.f32 %v1665, %v295
    %v1906 = vmul.f32 %v1669, %v294
    %v1907 = vmul.f32 %v1669, %v295
    %v1908 = vmul.f32 %v1673, %v294
    %v1909 = vmul.f32 %v1673, %v295
    %v1910 = vmul.f32 %v1677, %v294
    %v1911 = vmul.f32 %v1677, %v295
    %v1912 = vmul.f32 %v1681, %v294
    %v1913 = vmul.f32 %v1681, %v295
    %v1914 = vmul.f32 %v1685, %v294
    %v1915 = vmul.f32 %v1685, %v295
    %v1916 = vmul.f32 %v1689, %v294
    %v1917 = vmul.f32 %v1689, %v295
    %v1918 = vmul.f32 %v1693, %v294
    %v1919 = vmul.f32 %v1693, %v295
    %v1920 = vmul.f32 %v1697, %v294
    %v1921 = vmul.f32 %v1697, %v295
    %v1922 = vmul.f32 %v1701, %v294
    %v1923 = vmul.f32 %v1701, %v295
    %v1924 = vmul.f32 %v1705, %v294
    %v1925 = vmul.f32 %v1705, %v295
    %v1926 = vmul.f32 %v1709, %v294
    %v1927 = vmul.f32 %v1709, %v295
    %v1928 = vmul.f32 %v1713, %v294
    %v1929 = vmul.f32 %v1713, %v295
    %v1930 = vmul.f32 %v1717, %v294
    %v1931 = vmul.f32 %v1717, %v295
    %v1932 = vmul.f32 %v1721, %v294
    %v1933 = vmul.f32 %v1721, %v295
    %v1934 = vmul.f32 %v1725, %v294
    %v1935 = vmul.f32 %v1725, %v295
    %v1936 = vmul.f32 %v1729, %v294
    %v1937 = vmul.f32 %v1729, %v295
    %v1938 = vmul.f32 %v1733, %v294
    %v1939 = vmul.f32 %v1733, %v295
    %v1940 = vmul.f32 %v1737, %v294
    %v1941 = vmul.f32 %v1737, %v295
    %v1942 = vmul.f32 %v1741, %v294
    %v1943 = vmul.f32 %v1741, %v295
    %v1944 = vmul.f32 %v1745, %v294
    %v1945 = vmul.f32 %v1745, %v295
    %v1946 = vmul.f32 %v1749, %v294
    %v1947 = vmul.f32 %v1749, %v295
    %v1948 = vmul.f32 %v1753, %v294
    %v1949 = vmul.f32 %v1753, %v295
    %v1950 = vmul.f32 %v1757, %v294
    %v1951 = vmul.f32 %v1757, %v295
    %v1952 = vmul.f32 %v1761, %v294
    %v1953 = vmul.f32 %v1761, %v295
    %v1954 = vmul.f32 %v1826, 1.442695
    %v1955 = vpow.pop %v1954
    %v1956 = vmul.f32 %v1827, 1.442695
    %v1957 = vpow.pop %v1956
    %v1958 = vmul.f32 %v1828, 1.442695
    %v1959 = vpow.pop %v1958
    %v1960 = vmul.f32 %v1829, 1.442695
    %v1961 = vpow.pop %v1960
    %v1962 = vmul.f32 %v1830, 1.442695
    %v1963 = vpow.pop %v1962
    %v1964 = vmul.f32 %v1831, 1.442695
    %v1965 = vpow.pop %v1964
    %v1966 = vmul.f32 %v1832, 1.442695
    %v1967 = vpow.pop %v1966
    %v1968 = vmul.f32 %v1833, 1.442695
    %v1969 = vpow.pop %v1968
    %v1970 = vmul.f32 %v1834, 1.442695
    %v1971 = vpow.pop %v1970
    %v1972 = vmul.f32 %v1835, 1.442695
    %v1973 = vpow.pop %v1972
    %v1974 = vmul.f32 %v1836, 1.442695
    %v1975 = vpow.pop %v1974
    %v1976 = vmul.f32 %v1837, 1.442695
    %v1977 = vpow.pop %v1976
    %v1978 = vmul.f32 %v1838, 1.442695
    %v1979 = vpow.pop %v1978
    %v1980 = vmul.f32 %v1839, 1.442695
    %v1981 = vpow.pop %v1980
    %v1982 = vmul.f32 %v1840, 1.442695
    %v1983 = vpow.pop %v1982
    %v1984 = vmul.f32 %v1841, 1.442695
    %v1985 = vpow.pop %v1984
    %v1986 = vmul.f32 %v1842, 1.442695
    %v1987 = vpow.pop %v1986
    %v1988 = vmul.f32 %v1843, 1.442695
    %v1989 = vpow.pop %v1988
    %v1990 = vmul.f32 %v1844, 1.442695
    %v1991 = vpow.pop %v1990
    %v1992 = vmul.f32 %v1845, 1.442695
    %v1993 = vpow.pop %v1992
    %v1994 = vmul.f32 %v1846, 1.442695
    %v1995 = vpow.pop %v1994
    %v1996 = vmul.f32 %v1847, 1.442695
    %v1997 = vpow.pop %v1996
    %v1998 = vmul.f32 %v1848, 1.442695
    %v1999 = vpow.pop %v1998
    %v2000 = vmul.f32 %v1849, 1.442695
    %v2001 = vpow.pop %v2000
    %v2002 = vmul.f32 %v1850, 1.442695
    %v2003 = vpow.pop %v2002
    %v2004 = vmul.f32 %v1851, 1.442695
    %v2005 = vpow.pop %v2004
    %v2006 = vmul.f32 %v1852, 1.442695
    %v2007 = vpow.pop %v2006
    %v2008 = vmul.f32 %v1853, 1.442695
    %v2009 = vpow.pop %v2008
    %v2010 = vmul.f32 %v1854, 1.442695
    %v2011 = vpow.pop %v2010
    %v2012 = vmul.f32 %v1855, 1.442695
    %v2013 = vpow.pop %v2012
    %v2014 = vmul.f32 %v1856, 1.442695
    %v2015 = vpow.pop %v2014
    %v2016 = vmul.f32 %v1857, 1.442695
    %v2017 = vpow.pop %v2016
    %v2018 = vmul.f32 %v1858, 1.442695
    %v2019 = vpow.pop %v2018
    %v2020 = vmul.f32 %v1859, 1.442695
    %v2021 = vpow.pop %v2020
    %v2022 = vmul.f32 %v1860, 1.442695
    %v2023 = vpow.pop %v2022
    %v2024 = vmul.f32 %v1861, 1.442695
    %v2025 = vpow.pop %v2024
    %v2026 = vmul.f32 %v1862, 1.442695
    %v2027 = vpow.pop %v2026
    %v2028 = vmul.f32 %v1863, 1.442695
    %v2029 = vpow.pop %v2028
    %v2030 = vmul.f32 %v1864, 1.442695
    %v2031 = vpow.pop %v2030
    %v2032 = vmul.f32 %v1865, 1.442695
    %v2033 = vpow.pop %v2032
    %v2034 = vmul.f32 %v1866, 1.442695
    %v2035 = vpow.pop %v2034
    %v2036 = vmul.f32 %v1867, 1.442695
    %v2037 = vpow.pop %v2036
    %v2038 = vmul.f32 %v1868, 1.442695
    %v2039 = vpow.pop %v2038
    %v2040 = vmul.f32 %v1869, 1.442695
    %v2041 = vpow.pop %v2040
    %v2042 = vmul.f32 %v1870, 1.442695
    %v2043 = vpow.pop %v2042
    %v2044 = vmul.f32 %v1871, 1.442695
    %v2045 = vpow.pop %v2044
    %v2046 = vmul.f32 %v1872, 1.442695
    %v2047 = vpow.pop %v2046
    %v2048 = vmul.f32 %v1873, 1.442695
    %v2049 = vpow.pop %v2048
    %v2050 = vmul.f32 %v1874, 1.442695
    %v2051 = vpow.pop %v2050
    %v2052 = vmul.f32 %v1875, 1.442695
    %v2053 = vpow.pop %v2052
    %v2054 = vmul.f32 %v1876, 1.442695
    %v2055 = vpow.pop %v2054
    %v2056 = vmul.f32 %v1877, 1.442695
    %v2057 = vpow.pop %v2056
    %v2058 = vmul.f32 %v1878, 1.442695
    %v2059 = vpow.pop %v2058
    %v2060 = vmul.f32 %v1879, 1.442695
    %v2061 = vpow.pop %v2060
    %v2062 = vmul.f32 %v1880, 1.442695
    %v2063 = vpow.pop %v2062
    %v2064 = vmul.f32 %v1881, 1.442695
    %v2065 = vpow.pop %v2064
    %v2066 = vmul.f32 %v1882, 1.442695
    %v2067 = vpow.pop %v2066
    %v2068 = vmul.f32 %v1883, 1.442695
    %v2069 = vpow.pop %v2068
    %v2070 = vmul.f32 %v1884, 1.442695
    %v2071 = vpow.pop %v2070
    %v2072 = vmul.f32 %v1885, 1.442695
    %v2073 = vpow.pop %v2072
    %v2074 = vmul.f32 %v1886, 1.442695
    %v2075 = vpow.pop %v2074
    %v2076 = vmul.f32 %v1887, 1.442695
    %v2077 = vpow.pop %v2076
    %v2078 = vmul.f32 %v1888, 1.442695
    %v2079 = vpow.pop %v2078
    %v2080 = vmul.f32 %v1889, 1.442695
    %v2081 = vpow.pop %v2080
    %v2082 = vmul.f32 %v1890, 1.442695
    %v2083 = vpow.pop %v2082
    %v2084 = vmul.f32 %v1891, 1.442695
    %v2085 = vpow.pop %v2084
    %v2086 = vmul.f32 %v1892, 1.442695
    %v2087 = vpow.pop %v2086
    %v2088 = vmul.f32 %v1893, 1.442695
    %v2089 = vpow.pop %v2088
    %v2090 = vmul.f32 %v1894, 1.442695
    %v2091 = vpow.pop %v2090
    %v2092 = vmul.f32 %v1895, 1.442695
    %v2093 = vpow.pop %v2092
    %v2094 = vmul.f32 %v1896, 1.442695
    %v2095 = vpow.pop %v2094
    %v2096 = vmul.f32 %v1897, 1.442695
    %v2097 = vpow.pop %v2096
    %v2098 = vmul.f32 %v1898, 1.442695
    %v2099 = vpow.pop %v2098
    %v2100 = vmul.f32 %v1899, 1.442695
    %v2101 = vpow.pop %v2100
    %v2102 = vmul.f32 %v1900, 1.442695
    %v2103 = vpow.pop %v2102
    %v2104 = vmul.f32 %v1901, 1.442695
    %v2105 = vpow.pop %v2104
    %v2106 = vmul.f32 %v1902, 1.442695
    %v2107 = vpow.pop %v2106
    %v2108 = vmul.f32 %v1903, 1.442695
    %v2109 = vpow.pop %v2108
    %v2110 = vmul.f32 %v1904, 1.442695
    %v2111 = vpow.pop %v2110
    %v2112 = vmul.f32 %v1905, 1.442695
    %v2113 = vpow.pop %v2112
    %v2114 = vmul.f32 %v1906, 1.442695
    %v2115 = vpow.pop %v2114
    %v2116 = vmul.f32 %v1907, 1.442695
    %v2117 = vpow.pop %v2116
    %v2118 = vmul.f32 %v1908, 1.442695
    %v2119 = vpow.pop %v2118
    %v2120 = vmul.f32 %v1909, 1.442695
    %v2121 = vpow.pop %v2120
    %v2122 = vmul.f32 %v1910, 1.442695
    %v2123 = vpow.pop %v2122
    %v2124 = vmul.f32 %v1911, 1.442695
    %v2125 = vpow.pop %v2124
    %v2126 = vmul.f32 %v1912, 1.442695
    %v2127 = vpow.pop %v2126
    %v2128 = vmul.f32 %v1913, 1.442695
    %v2129 = vpow.pop %v2128
    %v2130 = vmul.f32 %v1914, 1.442695
    %v2131 = vpow.pop %v2130
    %v2132 = vmul.f32 %v1915, 1.442695
    %v2133 = vpow.pop %v2132
    %v2134 = vmul.f32 %v1916, 1.442695
    %v2135 = vpow.pop %v2134
    %v2136 = vmul.f32 %v1917, 1.442695
    %v2137 = vpow.pop %v2136
    %v2138 = vmul.f32 %v1918, 1.442695
    %v2139 = vpow.pop %v2138
    %v2140 = vmul.f32 %v1919, 1.442695
    %v2141 = vpow.pop %v2140
    %v2142 = vmul.f32 %v1920, 1.442695
    %v2143 = vpow.pop %v2142
    %v2144 = vmul.f32 %v1921, 1.442695
    %v2145 = vpow.pop %v2144
    %v2146 = vmul.f32 %v1922, 1.442695
    %v2147 = vpow.pop %v2146
    %v2148 = vmul.f32 %v1923, 1.442695
    %v2149 = vpow.pop %v2148
    %v2150 = vmul.f32 %v1924, 1.442695
    %v2151 = vpow.pop %v2150
    %v2152 = vmul.f32 %v1925, 1.442695
    %v2153 = vpow.pop %v2152
    %v2154 = vmul.f32 %v1926, 1.442695
    %v2155 = vpow.pop %v2154
    %v2156 = vmul.f32 %v1927, 1.442695
    %v2157 = vpow.pop %v2156
    %v2158 = vmul.f32 %v1928, 1.442695
    %v2159 = vpow.pop %v2158
    %v2160 = vmul.f32 %v1929, 1.442695
    %v2161 = vpow.pop %v2160
    %v2162 = vmul.f32 %v1930, 1.442695
    %v2163 = vpow.pop %v2162
    %v2164 = vmul.f32 %v1931, 1.442695
    %v2165 = vpow.pop %v2164
    %v2166 = vmul.f32 %v1932, 1.442695
    %v2167 = vpow.pop %v2166
    %v2168 = vmul.f32 %v1933, 1.442695
    %v2169 = vpow.pop %v2168
    %v2170 = vmul.f32 %v1934, 1.442695
    %v2171 = vpow.pop %v2170
    %v2172 = vmul.f32 %v1935, 1.442695
    %v2173 = vpow.pop %v2172
    %v2174 = vmul.f32 %v1936, 1.442695
    %v2175 = vpow.pop %v2174
    %v2176 = vmul.f32 %v1937, 1.442695
    %v2177 = vpow.pop %v2176
    %v2178 = vmul.f32 %v1938, 1.442695
    %v2179 = vpow.pop %v2178
    %v2180 = vmul.f32 %v1939, 1.442695
    %v2181 = vpow.pop %v2180
    %v2182 = vmul.f32 %v1940, 1.442695
    %v2183 = vpow.pop %v2182
    %v2184 = vmul.f32 %v1941, 1.442695
    %v2185 = vpow.pop %v2184
    %v2186 = vmul.f32 %v1942, 1.442695
    %v2187 = vpow.pop %v2186
    %v2188 = vmul.f32 %v1943, 1.442695
    %v2189 = vpow.pop %v2188
    %v2190 = vmul.f32 %v1944, 1.442695
    %v2191 = vpow.pop %v2190
    %v2192 = vmul.f32 %v1945, 1.442695
    %v2193 = vpow.pop %v2192
    %v2194 = vmul.f32 %v1946, 1.442695
    %v2195 = vpow.pop %v2194
    %v2196 = vmul.f32 %v1947, 1.442695
    %v2197 = vpow.pop %v2196
    %v2198 = vmul.f32 %v1948, 1.442695
    %v2199 = vpow.pop %v2198
    %v2200 = vmul.f32 %v1949, 1.442695
    %v2201 = vpow.pop %v2200
    %v2202 = vmul.f32 %v1950, 1.442695
    %v2203 = vpow.pop %v2202
    %v2204 = vmul.f32 %v1951, 1.442695
    %v2205 = vpow.pop %v2204
    %v2206 = vmul.f32 %v1952, 1.442695
    %v2207 = vpow.pop %v2206
    %v2208 = vmul.f32 %v1953, 1.442695
    %v2209 = vpow.pop %v2208
    %v2210 = vlaneseq
    %v2211 = vshrl.u32 %v2210, 7
    %v2212 = vsub.s32 0, %v2211
    %v2213 = vrot.slane %v866, %v2212
    %s2215 = sor.u32 256, 2
    %2216 = vbcast.lane.b32.xlu0 %v2213, %s2215
    %v2217 = vpop.permute.xlu0 %2216
    %s2219 = sor.u32 256, 10
    %2220 = vbcast.lane.b32.xlu0 %v2213, %s2219
    %v2221 = vpop.permute.xlu0 %2220
    %v2222 = vlaneseq
    %v2223 = vshrl.u32 %v2222, 7
    %v2224 = vsub.s32 1, %v2223
    %v2225 = vrot.slane %v866, %v2224
    %s2227 = sor.u32 256, 2
    %2228 = vbcast.lane.b32.xlu0 %v2225, %s2227
    %v2229 = vpop.permute.xlu0 %2228
    %s2231 = sor.u32 256, 10
    %2232 = vbcast.lane.b32.xlu0 %v2225, %s2231
    %v2233 = vpop.permute.xlu0 %2232
    %v2234 = vlaneseq
    %v2235 = vshrl.u32 %v2234, 7
    %v2236 = vsub.s32 2, %v2235
    %v2237 = vrot.slane %v866, %v2236
    %s2239 = sor.u32 256, 2
    %2240 = vbcast.lane.b32.xlu0 %v2237, %s2239
    %v2241 = vpop.permute.xlu0 %2240
    %s2243 = sor.u32 256, 10
    %2244 = vbcast.lane.b32.xlu0 %v2237, %s2243
    %v2245 = vpop.permute.xlu0 %2244
    %v2246 = vlaneseq
    %v2247 = vshrl.u32 %v2246, 7
    %v2248 = vsub.s32 3, %v2247
    %v2249 = vrot.slane %v866, %v2248
    %s2251 = sor.u32 256, 2
    %2252 = vbcast.lane.b32.xlu0 %v2249, %s2251
    %v2253 = vpop.permute.xlu0 %2252
    %s2255 = sor.u32 256, 10
    %2256 = vbcast.lane.b32.xlu0 %v2249, %s2255
    %v2257 = vpop.permute.xlu0 %2256
    %v2258 = vlaneseq
    %v2259 = vshrl.u32 %v2258, 7
    %v2260 = vsub.s32 4, %v2259
    %v2261 = vrot.slane %v866, %v2260
    %s2263 = sor.u32 256, 2
    %2264 = vbcast.lane.b32.xlu0 %v2261, %s2263
    %v2265 = vpop.permute.xlu0 %2264
    %s2267 = sor.u32 256, 10
    %2268 = vbcast.lane.b32.xlu0 %v2261, %s2267
    %v2269 = vpop.permute.xlu0 %2268
    %v2270 = vlaneseq
    %v2271 = vshrl.u32 %v2270, 7
    %v2272 = vsub.s32 5, %v2271
    %v2273 = vrot.slane %v866, %v2272
    %s2275 = sor.u32 256, 2
    %2276 = vbcast.lane.b32.xlu0 %v2273, %s2275
    %v2277 = vpop.permute.xlu0 %2276
    %s2279 = sor.u32 256, 10
    %2280 = vbcast.lane.b32.xlu0 %v2273, %s2279
    %v2281 = vpop.permute.xlu0 %2280
    %v2282 = vlaneseq
    %v2283 = vshrl.u32 %v2282, 7
    %v2284 = vsub.s32 6, %v2283
    %v2285 = vrot.slane %v866, %v2284
    %s2287 = sor.u32 256, 2
    %2288 = vbcast.lane.b32.xlu0 %v2285, %s2287
    %v2289 = vpop.permute.xlu0 %2288
    %s2291 = sor.u32 256, 10
    %2292 = vbcast.lane.b32.xlu0 %v2285, %s2291
    %v2293 = vpop.permute.xlu0 %2292
    %v2294 = vlaneseq
    %v2295 = vshrl.u32 %v2294, 7
    %v2296 = vsub.s32 7, %v2295
    %v2297 = vrot.slane %v866, %v2296
    %s2299 = sor.u32 256, 2
    %2300 = vbcast.lane.b32.xlu0 %v2297, %s2299
    %v2301 = vpop.permute.xlu0 %2300
    %s2303 = sor.u32 256, 10
    %2304 = vbcast.lane.b32.xlu0 %v2297, %s2303
    %v2305 = vpop.permute.xlu0 %2304
    %v2306 = vlaneseq
    %v2307 = vshrl.u32 %v2306, 7
    %v2308 = vsub.s32 0, %v2307
    %v2309 = vrot.slane %v871, %v2308
    %s2311 = sor.u32 256, 2
    %2312 = vbcast.lane.b32.xlu0 %v2309, %s2311
    %v2313 = vpop.permute.xlu0 %2312
    %s2315 = sor.u32 256, 10
    %2316 = vbcast.lane.b32.xlu0 %v2309, %s2315
    %v2317 = vpop.permute.xlu0 %2316
    %v2318 = vlaneseq
    %v2319 = vshrl.u32 %v2318, 7
    %v2320 = vsub.s32 1, %v2319
    %v2321 = vrot.slane %v871, %v2320
    %s2323 = sor.u32 256, 2
    %2324 = vbcast.lane.b32.xlu0 %v2321, %s2323
    %v2325 = vpop.permute.xlu0 %2324
    %s2327 = sor.u32 256, 10
    %2328 = vbcast.lane.b32.xlu0 %v2321, %s2327
    %v2329 = vpop.permute.xlu0 %2328
    %v2330 = vlaneseq
    %v2331 = vshrl.u32 %v2330, 7
    %v2332 = vsub.s32 2, %v2331
    %v2333 = vrot.slane %v871, %v2332
    %s2335 = sor.u32 256, 2
    %2336 = vbcast.lane.b32.xlu0 %v2333, %s2335
    %v2337 = vpop.permute.xlu0 %2336
    %s2339 = sor.u32 256, 10
    %2340 = vbcast.lane.b32.xlu0 %v2333, %s2339
    %v2341 = vpop.permute.xlu0 %2340
    %v2342 = vlaneseq
    %v2343 = vshrl.u32 %v2342, 7
    %v2344 = vsub.s32 3, %v2343
    %v2345 = vrot.slane %v871, %v2344
    %s2347 = sor.u32 256, 2
    %2348 = vbcast.lane.b32.xlu0 %v2345, %s2347
    %v2349 = vpop.permute.xlu0 %2348
    %s2351 = sor.u32 256, 10
    %2352 = vbcast.lane.b32.xlu0 %v2345, %s2351
    %v2353 = vpop.permute.xlu0 %2352
    %v2354 = vlaneseq
    %v2355 = vshrl.u32 %v2354, 7
    %v2356 = vsub.s32 4, %v2355
    %v2357 = vrot.slane %v871, %v2356
    %s2359 = sor.u32 256, 2
    %2360 = vbcast.lane.b32.xlu0 %v2357, %s2359
    %v2361 = vpop.permute.xlu0 %2360
    %s2363 = sor.u32 256, 10
    %2364 = vbcast.lane.b32.xlu0 %v2357, %s2363
    %v2365 = vpop.permute.xlu0 %2364
    %v2366 = vlaneseq
    %v2367 = vshrl.u32 %v2366, 7
    %v2368 = vsub.s32 5, %v2367
    %v2369 = vrot.slane %v871, %v2368
    %s2371 = sor.u32 256, 2
    %2372 = vbcast.lane.b32.xlu0 %v2369, %s2371
    %v2373 = vpop.permute.xlu0 %2372
    %s2375 = sor.u32 256, 10
    %2376 = vbcast.lane.b32.xlu0 %v2369, %s2375
    %v2377 = vpop.permute.xlu0 %2376
    %v2378 = vlaneseq
    %v2379 = vshrl.u32 %v2378, 7
    %v2380 = vsub.s32 6, %v2379
    %v2381 = vrot.slane %v871, %v2380
    %s2383 = sor.u32 256, 2
    %2384 = vbcast.lane.b32.xlu0 %v2381, %s2383
    %v2385 = vpop.permute.xlu0 %2384
    %s2387 = sor.u32 256, 10
    %2388 = vbcast.lane.b32.xlu0 %v2381, %s2387
    %v2389 = vpop.permute.xlu0 %2388
    %v2390 = vlaneseq
    %v2391 = vshrl.u32 %v2390, 7
    %v2392 = vsub.s32 7, %v2391
    %v2393 = vrot.slane %v871, %v2392
    %s2395 = sor.u32 256, 2
    %2396 = vbcast.lane.b32.xlu0 %v2393, %s2395
    %v2397 = vpop.permute.xlu0 %2396
    %s2399 = sor.u32 256, 10
    %2400 = vbcast.lane.b32.xlu0 %v2393, %s2399
    %v2401 = vpop.permute.xlu0 %2400
    %v2402 = vlaneseq
    %v2403 = vshrl.u32 %v2402, 7
    %v2404 = vsub.s32 0, %v2403
    %v2405 = vrot.slane %v876, %v2404
    %s2407 = sor.u32 256, 2
    %2408 = vbcast.lane.b32.xlu0 %v2405, %s2407
    %v2409 = vpop.permute.xlu0 %2408
    %s2411 = sor.u32 256, 10
    %2412 = vbcast.lane.b32.xlu0 %v2405, %s2411
    %v2413 = vpop.permute.xlu0 %2412
    %v2414 = vlaneseq
    %v2415 = vshrl.u32 %v2414, 7
    %v2416 = vsub.s32 1, %v2415
    %v2417 = vrot.slane %v876, %v2416
    %s2419 = sor.u32 256, 2
    %2420 = vbcast.lane.b32.xlu0 %v2417, %s2419
    %v2421 = vpop.permute.xlu0 %2420
    %s2423 = sor.u32 256, 10
    %2424 = vbcast.lane.b32.xlu0 %v2417, %s2423
    %v2425 = vpop.permute.xlu0 %2424
    %v2426 = vlaneseq
    %v2427 = vshrl.u32 %v2426, 7
    %v2428 = vsub.s32 2, %v2427
    %v2429 = vrot.slane %v876, %v2428
    %s2431 = sor.u32 256, 2
    %2432 = vbcast.lane.b32.xlu0 %v2429, %s2431
    %v2433 = vpop.permute.xlu0 %2432
    %s2435 = sor.u32 256, 10
    %2436 = vbcast.lane.b32.xlu0 %v2429, %s2435
    %v2437 = vpop.permute.xlu0 %2436
    %v2438 = vlaneseq
    %v2439 = vshrl.u32 %v2438, 7
    %v2440 = vsub.s32 3, %v2439
    %v2441 = vrot.slane %v876, %v2440
    %s2443 = sor.u32 256, 2
    %2444 = vbcast.lane.b32.xlu0 %v2441, %s2443
    %v2445 = vpop.permute.xlu0 %2444
    %s2447 = sor.u32 256, 10
    %2448 = vbcast.lane.b32.xlu0 %v2441, %s2447
    %v2449 = vpop.permute.xlu0 %2448
    %v2450 = vlaneseq
    %v2451 = vshrl.u32 %v2450, 7
    %v2452 = vsub.s32 4, %v2451
    %v2453 = vrot.slane %v876, %v2452
    %s2455 = sor.u32 256, 2
    %2456 = vbcast.lane.b32.xlu0 %v2453, %s2455
    %v2457 = vpop.permute.xlu0 %2456
    %s2459 = sor.u32 256, 10
    %2460 = vbcast.lane.b32.xlu0 %v2453, %s2459
    %v2461 = vpop.permute.xlu0 %2460
    %v2462 = vlaneseq
    %v2463 = vshrl.u32 %v2462, 7
    %v2464 = vsub.s32 5, %v2463
    %v2465 = vrot.slane %v876, %v2464
    %s2467 = sor.u32 256, 2
    %2468 = vbcast.lane.b32.xlu0 %v2465, %s2467
    %v2469 = vpop.permute.xlu0 %2468
    %s2471 = sor.u32 256, 10
    %2472 = vbcast.lane.b32.xlu0 %v2465, %s2471
    %v2473 = vpop.permute.xlu0 %2472
    %v2474 = vlaneseq
    %v2475 = vshrl.u32 %v2474, 7
    %v2476 = vsub.s32 6, %v2475
    %v2477 = vrot.slane %v876, %v2476
    %s2479 = sor.u32 256, 2
    %2480 = vbcast.lane.b32.xlu0 %v2477, %s2479
    %v2481 = vpop.permute.xlu0 %2480
    %s2483 = sor.u32 256, 10
    %2484 = vbcast.lane.b32.xlu0 %v2477, %s2483
    %v2485 = vpop.permute.xlu0 %2484
    %v2486 = vlaneseq
    %v2487 = vshrl.u32 %v2486, 7
    %v2488 = vsub.s32 7, %v2487
    %v2489 = vrot.slane %v876, %v2488
    %s2491 = sor.u32 256, 2
    %2492 = vbcast.lane.b32.xlu0 %v2489, %s2491
    %v2493 = vpop.permute.xlu0 %2492
    %s2495 = sor.u32 256, 10
    %2496 = vbcast.lane.b32.xlu0 %v2489, %s2495
    %v2497 = vpop.permute.xlu0 %2496
    %v2498 = vlaneseq
    %v2499 = vshrl.u32 %v2498, 7
    %v2500 = vsub.s32 0, %v2499
    %v2501 = vrot.slane %v881, %v2500
    %s2503 = sor.u32 256, 2
    %2504 = vbcast.lane.b32.xlu0 %v2501, %s2503
    %v2505 = vpop.permute.xlu0 %2504
    %s2507 = sor.u32 256, 10
    %2508 = vbcast.lane.b32.xlu0 %v2501, %s2507
    %v2509 = vpop.permute.xlu0 %2508
    %v2510 = vlaneseq
    %v2511 = vshrl.u32 %v2510, 7
    %v2512 = vsub.s32 1, %v2511
    %v2513 = vrot.slane %v881, %v2512
    %s2515 = sor.u32 256, 2
    %2516 = vbcast.lane.b32.xlu0 %v2513, %s2515
    %v2517 = vpop.permute.xlu0 %2516
    %s2519 = sor.u32 256, 10
    %2520 = vbcast.lane.b32.xlu0 %v2513, %s2519
    %v2521 = vpop.permute.xlu0 %2520
    %v2522 = vlaneseq
    %v2523 = vshrl.u32 %v2522, 7
    %v2524 = vsub.s32 2, %v2523
    %v2525 = vrot.slane %v881, %v2524
    %s2527 = sor.u32 256, 2
    %2528 = vbcast.lane.b32.xlu0 %v2525, %s2527
    %v2529 = vpop.permute.xlu0 %2528
    %s2531 = sor.u32 256, 10
    %2532 = vbcast.lane.b32.xlu0 %v2525, %s2531
    %v2533 = vpop.permute.xlu0 %2532
    %v2534 = vlaneseq
    %v2535 = vshrl.u32 %v2534, 7
    %v2536 = vsub.s32 3, %v2535
    %v2537 = vrot.slane %v881, %v2536
    %s2539 = sor.u32 256, 2
    %2540 = vbcast.lane.b32.xlu0 %v2537, %s2539
    %v2541 = vpop.permute.xlu0 %2540
    %s2543 = sor.u32 256, 10
    %2544 = vbcast.lane.b32.xlu0 %v2537, %s2543
    %v2545 = vpop.permute.xlu0 %2544
    %v2546 = vlaneseq
    %v2547 = vshrl.u32 %v2546, 7
    %v2548 = vsub.s32 4, %v2547
    %v2549 = vrot.slane %v881, %v2548
    %s2551 = sor.u32 256, 2
    %2552 = vbcast.lane.b32.xlu0 %v2549, %s2551
    %v2553 = vpop.permute.xlu0 %2552
    %s2555 = sor.u32 256, 10
    %2556 = vbcast.lane.b32.xlu0 %v2549, %s2555
    %v2557 = vpop.permute.xlu0 %2556
    %v2558 = vlaneseq
    %v2559 = vshrl.u32 %v2558, 7
    %v2560 = vsub.s32 5, %v2559
    %v2561 = vrot.slane %v881, %v2560
    %s2563 = sor.u32 256, 2
    %2564 = vbcast.lane.b32.xlu0 %v2561, %s2563
    %v2565 = vpop.permute.xlu0 %2564
    %s2567 = sor.u32 256, 10
    %2568 = vbcast.lane.b32.xlu0 %v2561, %s2567
    %v2569 = vpop.permute.xlu0 %2568
    %v2570 = vlaneseq
    %v2571 = vshrl.u32 %v2570, 7
    %v2572 = vsub.s32 6, %v2571
    %v2573 = vrot.slane %v881, %v2572
    %s2575 = sor.u32 256, 2
    %2576 = vbcast.lane.b32.xlu0 %v2573, %s2575
    %v2577 = vpop.permute.xlu0 %2576
    %s2579 = sor.u32 256, 10
    %2580 = vbcast.lane.b32.xlu0 %v2573, %s2579
    %v2581 = vpop.permute.xlu0 %2580
    %v2582 = vlaneseq
    %v2583 = vshrl.u32 %v2582, 7
    %v2584 = vsub.s32 7, %v2583
    %v2585 = vrot.slane %v881, %v2584
    %s2587 = sor.u32 256, 2
    %2588 = vbcast.lane.b32.xlu0 %v2585, %s2587
    %v2589 = vpop.permute.xlu0 %2588
    %s2591 = sor.u32 256, 10
    %2592 = vbcast.lane.b32.xlu0 %v2585, %s2591
    %v2593 = vpop.permute.xlu0 %2592
    %v2594 = vlaneseq
    %v2595 = vshrl.u32 %v2594, 7
    %v2596 = vsub.s32 0, %v2595
    %v2597 = vrot.slane %v886, %v2596
    %s2599 = sor.u32 256, 2
    %2600 = vbcast.lane.b32.xlu0 %v2597, %s2599
    %v2601 = vpop.permute.xlu0 %2600
    %s2603 = sor.u32 256, 10
    %2604 = vbcast.lane.b32.xlu0 %v2597, %s2603
    %v2605 = vpop.permute.xlu0 %2604
    %v2606 = vlaneseq
    %v2607 = vshrl.u32 %v2606, 7
    %v2608 = vsub.s32 1, %v2607
    %v2609 = vrot.slane %v886, %v2608
    %s2611 = sor.u32 256, 2
    %2612 = vbcast.lane.b32.xlu0 %v2609, %s2611
    %v2613 = vpop.permute.xlu0 %2612
    %s2615 = sor.u32 256, 10
    %2616 = vbcast.lane.b32.xlu0 %v2609, %s2615
    %v2617 = vpop.permute.xlu0 %2616
    %v2618 = vlaneseq
    %v2619 = vshrl.u32 %v2618, 7
    %v2620 = vsub.s32 2, %v2619
    %v2621 = vrot.slane %v886, %v2620
    %s2623 = sor.u32 256, 2
    %2624 = vbcast.lane.b32.xlu0 %v2621, %s2623
    %v2625 = vpop.permute.xlu0 %2624
    %s2627 = sor.u32 256, 10
    %2628 = vbcast.lane.b32.xlu0 %v2621, %s2627
    %v2629 = vpop.permute.xlu0 %2628
    %v2630 = vlaneseq
    %v2631 = vshrl.u32 %v2630, 7
    %v2632 = vsub.s32 3, %v2631
    %v2633 = vrot.slane %v886, %v2632
    %s2635 = sor.u32 256, 2
    %2636 = vbcast.lane.b32.xlu0 %v2633, %s2635
    %v2637 = vpop.permute.xlu0 %2636
    %s2639 = sor.u32 256, 10
    %2640 = vbcast.lane.b32.xlu0 %v2633, %s2639
    %v2641 = vpop.permute.xlu0 %2640
    %v2642 = vlaneseq
    %v2643 = vshrl.u32 %v2642, 7
    %v2644 = vsub.s32 4, %v2643
    %v2645 = vrot.slane %v886, %v2644
    %s2647 = sor.u32 256, 2
    %2648 = vbcast.lane.b32.xlu0 %v2645, %s2647
    %v2649 = vpop.permute.xlu0 %2648
    %s2651 = sor.u32 256, 10
    %2652 = vbcast.lane.b32.xlu0 %v2645, %s2651
    %v2653 = vpop.permute.xlu0 %2652
    %v2654 = vlaneseq
    %v2655 = vshrl.u32 %v2654, 7
    %v2656 = vsub.s32 5, %v2655
    %v2657 = vrot.slane %v886, %v2656
    %s2659 = sor.u32 256, 2
    %2660 = vbcast.lane.b32.xlu0 %v2657, %s2659
    %v2661 = vpop.permute.xlu0 %2660
    %s2663 = sor.u32 256, 10
    %2664 = vbcast.lane.b32.xlu0 %v2657, %s2663
    %v2665 = vpop.permute.xlu0 %2664
    %v2666 = vlaneseq
    %v2667 = vshrl.u32 %v2666, 7
    %v2668 = vsub.s32 6, %v2667
    %v2669 = vrot.slane %v886, %v2668
    %s2671 = sor.u32 256, 2
    %2672 = vbcast.lane.b32.xlu0 %v2669, %s2671
    %v2673 = vpop.permute.xlu0 %2672
    %s2675 = sor.u32 256, 10
    %2676 = vbcast.lane.b32.xlu0 %v2669, %s2675
    %v2677 = vpop.permute.xlu0 %2676
    %v2678 = vlaneseq
    %v2679 = vshrl.u32 %v2678, 7
    %v2680 = vsub.s32 7, %v2679
    %v2681 = vrot.slane %v886, %v2680
    %s2683 = sor.u32 256, 2
    %2684 = vbcast.lane.b32.xlu0 %v2681, %s2683
    %v2685 = vpop.permute.xlu0 %2684
    %s2687 = sor.u32 256, 10
    %2688 = vbcast.lane.b32.xlu0 %v2681, %s2687
    %v2689 = vpop.permute.xlu0 %2688
    %v2690 = vlaneseq
    %v2691 = vshrl.u32 %v2690, 7
    %v2692 = vsub.s32 0, %v2691
    %v2693 = vrot.slane %v891, %v2692
    %s2695 = sor.u32 256, 2
    %2696 = vbcast.lane.b32.xlu0 %v2693, %s2695
    %v2697 = vpop.permute.xlu0 %2696
    %s2699 = sor.u32 256, 10
    %2700 = vbcast.lane.b32.xlu0 %v2693, %s2699
    %v2701 = vpop.permute.xlu0 %2700
    %v2702 = vlaneseq
    %v2703 = vshrl.u32 %v2702, 7
    %v2704 = vsub.s32 1, %v2703
    %v2705 = vrot.slane %v891, %v2704
    %s2707 = sor.u32 256, 2
    %2708 = vbcast.lane.b32.xlu0 %v2705, %s2707
    %v2709 = vpop.permute.xlu0 %2708
    %s2711 = sor.u32 256, 10
    %2712 = vbcast.lane.b32.xlu0 %v2705, %s2711
    %v2713 = vpop.permute.xlu0 %2712
    %v2714 = vlaneseq
    %v2715 = vshrl.u32 %v2714, 7
    %v2716 = vsub.s32 2, %v2715
    %v2717 = vrot.slane %v891, %v2716
    %s2719 = sor.u32 256, 2
    %2720 = vbcast.lane.b32.xlu0 %v2717, %s2719
    %v2721 = vpop.permute.xlu0 %2720
    %s2723 = sor.u32 256, 10
    %2724 = vbcast.lane.b32.xlu0 %v2717, %s2723
    %v2725 = vpop.permute.xlu0 %2724
    %v2726 = vlaneseq
    %v2727 = vshrl.u32 %v2726, 7
    %v2728 = vsub.s32 3, %v2727
    %v2729 = vrot.slane %v891, %v2728
    %s2731 = sor.u32 256, 2
    %2732 = vbcast.lane.b32.xlu0 %v2729, %s2731
    %v2733 = vpop.permute.xlu0 %2732
    %s2735 = sor.u32 256, 10
    %2736 = vbcast.lane.b32.xlu0 %v2729, %s2735
    %v2737 = vpop.permute.xlu0 %2736
    %v2738 = vlaneseq
    %v2739 = vshrl.u32 %v2738, 7
    %v2740 = vsub.s32 4, %v2739
    %v2741 = vrot.slane %v891, %v2740
    %s2743 = sor.u32 256, 2
    %2744 = vbcast.lane.b32.xlu0 %v2741, %s2743
    %v2745 = vpop.permute.xlu0 %2744
    %s2747 = sor.u32 256, 10
    %2748 = vbcast.lane.b32.xlu0 %v2741, %s2747
    %v2749 = vpop.permute.xlu0 %2748
    %v2750 = vlaneseq
    %v2751 = vshrl.u32 %v2750, 7
    %v2752 = vsub.s32 5, %v2751
    %v2753 = vrot.slane %v891, %v2752
    %s2755 = sor.u32 256, 2
    %2756 = vbcast.lane.b32.xlu0 %v2753, %s2755
    %v2757 = vpop.permute.xlu0 %2756
    %s2759 = sor.u32 256, 10
    %2760 = vbcast.lane.b32.xlu0 %v2753, %s2759
    %v2761 = vpop.permute.xlu0 %2760
    %v2762 = vlaneseq
    %v2763 = vshrl.u32 %v2762, 7
    %v2764 = vsub.s32 6, %v2763
    %v2765 = vrot.slane %v891, %v2764
    %s2767 = sor.u32 256, 2
    %2768 = vbcast.lane.b32.xlu0 %v2765, %s2767
    %v2769 = vpop.permute.xlu0 %2768
    %s2771 = sor.u32 256, 10
    %2772 = vbcast.lane.b32.xlu0 %v2765, %s2771
    %v2773 = vpop.permute.xlu0 %2772
    %v2774 = vlaneseq
    %v2775 = vshrl.u32 %v2774, 7
    %v2776 = vsub.s32 7, %v2775
    %v2777 = vrot.slane %v891, %v2776
    %s2779 = sor.u32 256, 2
    %2780 = vbcast.lane.b32.xlu0 %v2777, %s2779
    %v2781 = vpop.permute.xlu0 %2780
    %s2783 = sor.u32 256, 10
    %2784 = vbcast.lane.b32.xlu0 %v2777, %s2783
    %v2785 = vpop.permute.xlu0 %2784
    %v2786 = vlaneseq
    %v2787 = vshrl.u32 %v2786, 7
    %v2788 = vsub.s32 0, %v2787
    %v2789 = vrot.slane %v896, %v2788
    %s2791 = sor.u32 256, 2
    %2792 = vbcast.lane.b32.xlu0 %v2789, %s2791
    %v2793 = vpop.permute.xlu0 %2792
    %s2795 = sor.u32 256, 10
    %2796 = vbcast.lane.b32.xlu0 %v2789, %s2795
    %v2797 = vpop.permute.xlu0 %2796
    %v2798 = vlaneseq
    %v2799 = vshrl.u32 %v2798, 7
    %v2800 = vsub.s32 1, %v2799
    %v2801 = vrot.slane %v896, %v2800
    %s2803 = sor.u32 256, 2
    %2804 = vbcast.lane.b32.xlu0 %v2801, %s2803
    %v2805 = vpop.permute.xlu0 %2804
    %s2807 = sor.u32 256, 10
    %2808 = vbcast.lane.b32.xlu0 %v2801, %s2807
    %v2809 = vpop.permute.xlu0 %2808
    %v2810 = vlaneseq
    %v2811 = vshrl.u32 %v2810, 7
    %v2812 = vsub.s32 2, %v2811
    %v2813 = vrot.slane %v896, %v2812
    %s2815 = sor.u32 256, 2
    %2816 = vbcast.lane.b32.xlu0 %v2813, %s2815
    %v2817 = vpop.permute.xlu0 %2816
    %s2819 = sor.u32 256, 10
    %2820 = vbcast.lane.b32.xlu0 %v2813, %s2819
    %v2821 = vpop.permute.xlu0 %2820
    %v2822 = vlaneseq
    %v2823 = vshrl.u32 %v2822, 7
    %v2824 = vsub.s32 3, %v2823
    %v2825 = vrot.slane %v896, %v2824
    %s2827 = sor.u32 256, 2
    %2828 = vbcast.lane.b32.xlu0 %v2825, %s2827
    %v2829 = vpop.permute.xlu0 %2828
    %s2831 = sor.u32 256, 10
    %2832 = vbcast.lane.b32.xlu0 %v2825, %s2831
    %v2833 = vpop.permute.xlu0 %2832
    %v2834 = vlaneseq
    %v2835 = vshrl.u32 %v2834, 7
    %v2836 = vsub.s32 4, %v2835
    %v2837 = vrot.slane %v896, %v2836
    %s2839 = sor.u32 256, 2
    %2840 = vbcast.lane.b32.xlu0 %v2837, %s2839
    %v2841 = vpop.permute.xlu0 %2840
    %s2843 = sor.u32 256, 10
    %2844 = vbcast.lane.b32.xlu0 %v2837, %s2843
    %v2845 = vpop.permute.xlu0 %2844
    %v2846 = vlaneseq
    %v2847 = vshrl.u32 %v2846, 7
    %v2848 = vsub.s32 5, %v2847
    %v2849 = vrot.slane %v896, %v2848
    %s2851 = sor.u32 256, 2
    %2852 = vbcast.lane.b32.xlu0 %v2849, %s2851
    %v2853 = vpop.permute.xlu0 %2852
    %s2855 = sor.u32 256, 10
    %2856 = vbcast.lane.b32.xlu0 %v2849, %s2855
    %v2857 = vpop.permute.xlu0 %2856
    %v2858 = vlaneseq
    %v2859 = vshrl.u32 %v2858, 7
    %v2860 = vsub.s32 6, %v2859
    %v2861 = vrot.slane %v896, %v2860
    %s2863 = sor.u32 256, 2
    %2864 = vbcast.lane.b32.xlu0 %v2861, %s2863
    %v2865 = vpop.permute.xlu0 %2864
    %s2867 = sor.u32 256, 10
    %2868 = vbcast.lane.b32.xlu0 %v2861, %s2867
    %v2869 = vpop.permute.xlu0 %2868
    %v2870 = vlaneseq
    %v2871 = vshrl.u32 %v2870, 7
    %v2872 = vsub.s32 7, %v2871
    %v2873 = vrot.slane %v896, %v2872
    %s2875 = sor.u32 256, 2
    %2876 = vbcast.lane.b32.xlu0 %v2873, %s2875
    %v2877 = vpop.permute.xlu0 %2876
    %s2879 = sor.u32 256, 10
    %2880 = vbcast.lane.b32.xlu0 %v2873, %s2879
    %v2881 = vpop.permute.xlu0 %2880
    %v2882 = vlaneseq
    %v2883 = vshrl.u32 %v2882, 7
    %v2884 = vsub.s32 0, %v2883
    %v2885 = vrot.slane %v901, %v2884
    %s2887 = sor.u32 256, 2
    %2888 = vbcast.lane.b32.xlu0 %v2885, %s2887
    %v2889 = vpop.permute.xlu0 %2888
    %s2891 = sor.u32 256, 10
    %2892 = vbcast.lane.b32.xlu0 %v2885, %s2891
    %v2893 = vpop.permute.xlu0 %2892
    %v2894 = vlaneseq
    %v2895 = vshrl.u32 %v2894, 7
    %v2896 = vsub.s32 1, %v2895
    %v2897 = vrot.slane %v901, %v2896
    %s2899 = sor.u32 256, 2
    %2900 = vbcast.lane.b32.xlu0 %v2897, %s2899
    %v2901 = vpop.permute.xlu0 %2900
    %s2903 = sor.u32 256, 10
    %2904 = vbcast.lane.b32.xlu0 %v2897, %s2903
    %v2905 = vpop.permute.xlu0 %2904
    %v2906 = vlaneseq
    %v2907 = vshrl.u32 %v2906, 7
    %v2908 = vsub.s32 2, %v2907
    %v2909 = vrot.slane %v901, %v2908
    %s2911 = sor.u32 256, 2
    %2912 = vbcast.lane.b32.xlu0 %v2909, %s2911
    %v2913 = vpop.permute.xlu0 %2912
    %s2915 = sor.u32 256, 10
    %2916 = vbcast.lane.b32.xlu0 %v2909, %s2915
    %v2917 = vpop.permute.xlu0 %2916
    %v2918 = vlaneseq
    %v2919 = vshrl.u32 %v2918, 7
    %v2920 = vsub.s32 3, %v2919
    %v2921 = vrot.slane %v901, %v2920
    %s2923 = sor.u32 256, 2
    %2924 = vbcast.lane.b32.xlu0 %v2921, %s2923
    %v2925 = vpop.permute.xlu0 %2924
    %s2927 = sor.u32 256, 10
    %2928 = vbcast.lane.b32.xlu0 %v2921, %s2927
    %v2929 = vpop.permute.xlu0 %2928
    %v2930 = vlaneseq
    %v2931 = vshrl.u32 %v2930, 7
    %v2932 = vsub.s32 4, %v2931
    %v2933 = vrot.slane %v901, %v2932
    %s2935 = sor.u32 256, 2
    %2936 = vbcast.lane.b32.xlu0 %v2933, %s2935
    %v2937 = vpop.permute.xlu0 %2936
    %s2939 = sor.u32 256, 10
    %2940 = vbcast.lane.b32.xlu0 %v2933, %s2939
    %v2941 = vpop.permute.xlu0 %2940
    %v2942 = vlaneseq
    %v2943 = vshrl.u32 %v2942, 7
    %v2944 = vsub.s32 5, %v2943
    %v2945 = vrot.slane %v901, %v2944
    %s2947 = sor.u32 256, 2
    %2948 = vbcast.lane.b32.xlu0 %v2945, %s2947
    %v2949 = vpop.permute.xlu0 %2948
    %s2951 = sor.u32 256, 10
    %2952 = vbcast.lane.b32.xlu0 %v2945, %s2951
    %v2953 = vpop.permute.xlu0 %2952
    %v2954 = vlaneseq
    %v2955 = vshrl.u32 %v2954, 7
    %v2956 = vsub.s32 6, %v2955
    %v2957 = vrot.slane %v901, %v2956
    %s2959 = sor.u32 256, 2
    %2960 = vbcast.lane.b32.xlu0 %v2957, %s2959
    %v2961 = vpop.permute.xlu0 %2960
    %s2963 = sor.u32 256, 10
    %2964 = vbcast.lane.b32.xlu0 %v2957, %s2963
    %v2965 = vpop.permute.xlu0 %2964
    %v2966 = vlaneseq
    %v2967 = vshrl.u32 %v2966, 7
    %v2968 = vsub.s32 7, %v2967
    %v2969 = vrot.slane %v901, %v2968
    %s2971 = sor.u32 256, 2
    %2972 = vbcast.lane.b32.xlu0 %v2969, %s2971
    %v2973 = vpop.permute.xlu0 %2972
    %s2975 = sor.u32 256, 10
    %2976 = vbcast.lane.b32.xlu0 %v2969, %s2975
    %v2977 = vpop.permute.xlu0 %2976
    %v2978 = vmul.f32 %v1509, %v2217
    %v2979 = vmul.f32 %v1509, %v2221
    %v2980 = vmul.f32 %v1513, %v2229
    %v2981 = vmul.f32 %v1513, %v2233
    %v2982 = vmul.f32 %v1517, %v2241
    %v2983 = vmul.f32 %v1517, %v2245
    %v2984 = vmul.f32 %v1521, %v2253
    %v2985 = vmul.f32 %v1521, %v2257
    %v2986 = vmul.f32 %v1525, %v2265
    %v2987 = vmul.f32 %v1525, %v2269
    %v2988 = vmul.f32 %v1529, %v2277
    %v2989 = vmul.f32 %v1529, %v2281
    %v2990 = vmul.f32 %v1533, %v2289
    %v2991 = vmul.f32 %v1533, %v2293
    %v2992 = vmul.f32 %v1537, %v2301
    %v2993 = vmul.f32 %v1537, %v2305
    %v2994 = vmul.f32 %v1541, %v2313
    %v2995 = vmul.f32 %v1541, %v2317
    %v2996 = vmul.f32 %v1545, %v2325
    %v2997 = vmul.f32 %v1545, %v2329
    %v2998 = vmul.f32 %v1549, %v2337
    %v2999 = vmul.f32 %v1549, %v2341
    %v3000 = vmul.f32 %v1553, %v2349
    %v3001 = vmul.f32 %v1553, %v2353
    %v3002 = vmul.f32 %v1557, %v2361
    %v3003 = vmul.f32 %v1557, %v2365
    %v3004 = vmul.f32 %v1561, %v2373
    %v3005 = vmul.f32 %v1561, %v2377
    %v3006 = vmul.f32 %v1565, %v2385
    %v3007 = vmul.f32 %v1565, %v2389
    %v3008 = vmul.f32 %v1569, %v2397
    %v3009 = vmul.f32 %v1569, %v2401
    %v3010 = vmul.f32 %v1573, %v2409
    %v3011 = vmul.f32 %v1573, %v2413
    %v3012 = vmul.f32 %v1577, %v2421
    %v3013 = vmul.f32 %v1577, %v2425
    %v3014 = vmul.f32 %v1581, %v2433
    %v3015 = vmul.f32 %v1581, %v2437
    %v3016 = vmul.f32 %v1585, %v2445
    %v3017 = vmul.f32 %v1585, %v2449
    %v3018 = vmul.f32 %v1589, %v2457
    %v3019 = vmul.f32 %v1589, %v2461
    %v3020 = vmul.f32 %v1593, %v2469
    %v3021 = vmul.f32 %v1593, %v2473
    %v3022 = vmul.f32 %v1597, %v2481
    %v3023 = vmul.f32 %v1597, %v2485
    %v3024 = vmul.f32 %v1601, %v2493
    %v3025 = vmul.f32 %v1601, %v2497
    %v3026 = vmul.f32 %v1605, %v2505
    %v3027 = vmul.f32 %v1605, %v2509
    %v3028 = vmul.f32 %v1609, %v2517
    %v3029 = vmul.f32 %v1609, %v2521
    %v3030 = vmul.f32 %v1613, %v2529
    %v3031 = vmul.f32 %v1613, %v2533
    %v3032 = vmul.f32 %v1617, %v2541
    %v3033 = vmul.f32 %v1617, %v2545
    %v3034 = vmul.f32 %v1621, %v2553
    %v3035 = vmul.f32 %v1621, %v2557
    %v3036 = vmul.f32 %v1625, %v2565
    %v3037 = vmul.f32 %v1625, %v2569
    %v3038 = vmul.f32 %v1629, %v2577
    %v3039 = vmul.f32 %v1629, %v2581
    %v3040 = vmul.f32 %v1633, %v2589
    %v3041 = vmul.f32 %v1633, %v2593
    %v3042 = vmul.f32 %v1637, %v2601
    %v3043 = vmul.f32 %v1637, %v2605
    %v3044 = vmul.f32 %v1641, %v2613
    %v3045 = vmul.f32 %v1641, %v2617
    %v3046 = vmul.f32 %v1645, %v2625
    %v3047 = vmul.f32 %v1645, %v2629
    %v3048 = vmul.f32 %v1649, %v2637
    %v3049 = vmul.f32 %v1649, %v2641
    %v3050 = vmul.f32 %v1653, %v2649
    %v3051 = vmul.f32 %v1653, %v2653
    %v3052 = vmul.f32 %v1657, %v2661
    %v3053 = vmul.f32 %v1657, %v2665
    %v3054 = vmul.f32 %v1661, %v2673
    %v3055 = vmul.f32 %v1661, %v2677
    %v3056 = vmul.f32 %v1665, %v2685
    %v3057 = vmul.f32 %v1665, %v2689
    %v3058 = vmul.f32 %v1669, %v2697
    %v3059 = vmul.f32 %v1669, %v2701
    %v3060 = vmul.f32 %v1673, %v2709
    %v3061 = vmul.f32 %v1673, %v2713
    %v3062 = vmul.f32 %v1677, %v2721
    %v3063 = vmul.f32 %v1677, %v2725
    %v3064 = vmul.f32 %v1681, %v2733
    %v3065 = vmul.f32 %v1681, %v2737
    %v3066 = vmul.f32 %v1685, %v2745
    %v3067 = vmul.f32 %v1685, %v2749
    %v3068 = vmul.f32 %v1689, %v2757
    %v3069 = vmul.f32 %v1689, %v2761
    %v3070 = vmul.f32 %v1693, %v2769
    %v3071 = vmul.f32 %v1693, %v2773
    %v3072 = vmul.f32 %v1697, %v2781
    %v3073 = vmul.f32 %v1697, %v2785
    %v3074 = vmul.f32 %v1701, %v2793
    %v3075 = vmul.f32 %v1701, %v2797
    %v3076 = vmul.f32 %v1705, %v2805
    %v3077 = vmul.f32 %v1705, %v2809
    %v3078 = vmul.f32 %v1709, %v2817
    %v3079 = vmul.f32 %v1709, %v2821
    %v3080 = vmul.f32 %v1713, %v2829
    %v3081 = vmul.f32 %v1713, %v2833
    %v3082 = vmul.f32 %v1717, %v2841
    %v3083 = vmul.f32 %v1717, %v2845
    %v3084 = vmul.f32 %v1721, %v2853
    %v3085 = vmul.f32 %v1721, %v2857
    %v3086 = vmul.f32 %v1725, %v2865
    %v3087 = vmul.f32 %v1725, %v2869
    %v3088 = vmul.f32 %v1729, %v2877
    %v3089 = vmul.f32 %v1729, %v2881
    %v3090 = vmul.f32 %v1733, %v2889
    %v3091 = vmul.f32 %v1733, %v2893
    %v3092 = vmul.f32 %v1737, %v2901
    %v3093 = vmul.f32 %v1737, %v2905
    %v3094 = vmul.f32 %v1741, %v2913
    %v3095 = vmul.f32 %v1741, %v2917
    %v3096 = vmul.f32 %v1745, %v2925
    %v3097 = vmul.f32 %v1745, %v2929
    %v3098 = vmul.f32 %v1749, %v2937
    %v3099 = vmul.f32 %v1749, %v2941
    %v3100 = vmul.f32 %v1753, %v2949
    %v3101 = vmul.f32 %v1753, %v2953
    %v3102 = vmul.f32 %v1757, %v2961
    %v3103 = vmul.f32 %v1757, %v2965
    %v3104 = vmul.f32 %v1761, %v2973
    %v3105 = vmul.f32 %v1761, %v2977
    %v3106 = vcombine.high %v767, %v767
    %v3108 = vunpack.c.l.s4 1966171168
    %v3109 = vunpack.c.0.s8 %v3108
    %v3110 = vlaneseq
    %v3111 = vshrl.u32 %v3110, 7
    %v3112 = vsub.s32 %v3109, %v3111
    %v3113 = vrot.slane %v767, %v3112
    %v3115 = vunpack.c.l.s4 1966171168
    %v3116 = vunpack.c.0.s8 %v3115
    %v3117 = vlaneseq
    %v3118 = vshrl.u32 %v3117, 7
    %v3119 = vsub.s32 %v3116, %v3118
    %v3120 = vrot.slane %v3106, %v3119
    %v3121 = vcombine.high %v3113, %v3113
    %v3122 = vcombine.high %v3120, %v3120
    %v3124 = vunpack.c.l.s4 1966171168
    %v3125 = vunpack.c.0.s8 %v3124
    %v3126 = vlaneseq
    %v3127 = vshrl.u32 %v3126, 7
    %v3128 = vsub.s32 %v3125, %v3127
    %v3129 = vrot.slane %v3113, %v3128
    %v3131 = vunpack.c.l.s4 1966171168
    %v3132 = vunpack.c.0.s8 %v3131
    %v3133 = vlaneseq
    %v3134 = vshrl.u32 %v3133, 7
    %v3135 = vsub.s32 %v3132, %v3134
    %v3136 = vrot.slane %v3120, %v3135
    %v3138 = vunpack.c.l.s4 1966171168
    %v3139 = vunpack.c.0.s8 %v3138
    %v3140 = vlaneseq
    %v3141 = vshrl.u32 %v3140, 7
    %v3142 = vsub.s32 %v3139, %v3141
    %v3143 = vrot.slane %v3121, %v3142
    %v3145 = vunpack.c.l.s4 1966171168
    %v3146 = vunpack.c.0.s8 %v3145
    %v3147 = vlaneseq
    %v3148 = vshrl.u32 %v3147, 7
    %v3149 = vsub.s32 %v3146, %v3148
    %v3150 = vrot.slane %v3122, %v3149
    %v3151 = vcombine.high %v3129, %v3129
    %v3152 = vcombine.high %v3136, %v3136
    %v3153 = vcombine.high %v3143, %v3143
    %v3154 = vcombine.high %v3150, %v3150
    %v3155 = vcombine.high %v768, %v768
    %v3157 = vunpack.c.l.s4 1966171168
    %v3158 = vunpack.c.0.s8 %v3157
    %v3159 = vlaneseq
    %v3160 = vshrl.u32 %v3159, 7
    %v3161 = vsub.s32 %v3158, %v3160
    %v3162 = vrot.slane %v768, %v3161
    %v3164 = vunpack.c.l.s4 1966171168
    %v3165 = vunpack.c.0.s8 %v3164
    %v3166 = vlaneseq
    %v3167 = vshrl.u32 %v3166, 7
    %v3168 = vsub.s32 %v3165, %v3167
    %v3169 = vrot.slane %v3155, %v3168
    %v3170 = vcombine.high %v3162, %v3162
    %v3171 = vcombine.high %v3169, %v3169
    %v3173 = vunpack.c.l.s4 1966171168
    %v3174 = vunpack.c.0.s8 %v3173
    %v3175 = vlaneseq
    %v3176 = vshrl.u32 %v3175, 7
    %v3177 = vsub.s32 %v3174, %v3176
    %v3178 = vrot.slane %v3162, %v3177
    %v3180 = vunpack.c.l.s4 1966171168
    %v3181 = vunpack.c.0.s8 %v3180
    %v3182 = vlaneseq
    %v3183 = vshrl.u32 %v3182, 7
    %v3184 = vsub.s32 %v3181, %v3183
    %v3185 = vrot.slane %v3169, %v3184
    %v3187 = vunpack.c.l.s4 1966171168
    %v3188 = vunpack.c.0.s8 %v3187
    %v3189 = vlaneseq
    %v3190 = vshrl.u32 %v3189, 7
    %v3191 = vsub.s32 %v3188, %v3190
    %v3192 = vrot.slane %v3170, %v3191
    %v3194 = vunpack.c.l.s4 1966171168
    %v3195 = vunpack.c.0.s8 %v3194
    %v3196 = vlaneseq
    %v3197 = vshrl.u32 %v3196, 7
    %v3198 = vsub.s32 %v3195, %v3197
    %v3199 = vrot.slane %v3171, %v3198
    %v3200 = vcombine.high %v3178, %v3178
    %v3201 = vcombine.high %v3185, %v3185
    %v3202 = vcombine.high %v3192, %v3192
    %v3203 = vcombine.high %v3199, %v3199
    %v3204 = vcombine.high %v769, %v769
    %v3206 = vunpack.c.l.s4 1966171168
    %v3207 = vunpack.c.0.s8 %v3206
    %v3208 = vlaneseq
    %v3209 = vshrl.u32 %v3208, 7
    %v3210 = vsub.s32 %v3207, %v3209
    %v3211 = vrot.slane %v769, %v3210
    %v3213 = vunpack.c.l.s4 1966171168
    %v3214 = vunpack.c.0.s8 %v3213
    %v3215 = vlaneseq
    %v3216 = vshrl.u32 %v3215, 7
    %v3217 = vsub.s32 %v3214, %v3216
    %v3218 = vrot.slane %v3204, %v3217
    %v3219 = vcombine.high %v3211, %v3211
    %v3220 = vcombine.high %v3218, %v3218
    %v3222 = vunpack.c.l.s4 1966171168
    %v3223 = vunpack.c.0.s8 %v3222
    %v3224 = vlaneseq
    %v3225 = vshrl.u32 %v3224, 7
    %v3226 = vsub.s32 %v3223, %v3225
    %v3227 = vrot.slane %v3211, %v3226
    %v3229 = vunpack.c.l.s4 1966171168
    %v3230 = vunpack.c.0.s8 %v3229
    %v3231 = vlaneseq
    %v3232 = vshrl.u32 %v3231, 7
    %v3233 = vsub.s32 %v3230, %v3232
    %v3234 = vrot.slane %v3218, %v3233
    %v3236 = vunpack.c.l.s4 1966171168
    %v3237 = vunpack.c.0.s8 %v3236
    %v3238 = vlaneseq
    %v3239 = vshrl.u32 %v3238, 7
    %v3240 = vsub.s32 %v3237, %v3239
    %v3241 = vrot.slane %v3219, %v3240
    %v3243 = vunpack.c.l.s4 1966171168
    %v3244 = vunpack.c.0.s8 %v3243
    %v3245 = vlaneseq
    %v3246 = vshrl.u32 %v3245, 7
    %v3247 = vsub.s32 %v3244, %v3246
    %v3248 = vrot.slane %v3220, %v3247
    %v3249 = vcombine.high %v3227, %v3227
    %v3250 = vcombine.high %v3234, %v3234
    %v3251 = vcombine.high %v3241, %v3241
    %v3252 = vcombine.high %v3248, %v3248
    %v3253 = vcombine.high %v770, %v770
    %v3255 = vunpack.c.l.s4 1966171168
    %v3256 = vunpack.c.0.s8 %v3255
    %v3257 = vlaneseq
    %v3258 = vshrl.u32 %v3257, 7
    %v3259 = vsub.s32 %v3256, %v3258
    %v3260 = vrot.slane %v770, %v3259
    %v3262 = vunpack.c.l.s4 1966171168
    %v3263 = vunpack.c.0.s8 %v3262
    %v3264 = vlaneseq
    %v3265 = vshrl.u32 %v3264, 7
    %v3266 = vsub.s32 %v3263, %v3265
    %v3267 = vrot.slane %v3253, %v3266
    %v3268 = vcombine.high %v3260, %v3260
    %v3269 = vcombine.high %v3267, %v3267
    %v3271 = vunpack.c.l.s4 1966171168
    %v3272 = vunpack.c.0.s8 %v3271
    %v3273 = vlaneseq
    %v3274 = vshrl.u32 %v3273, 7
    %v3275 = vsub.s32 %v3272, %v3274
    %v3276 = vrot.slane %v3260, %v3275
    %v3278 = vunpack.c.l.s4 1966171168
    %v3279 = vunpack.c.0.s8 %v3278
    %v3280 = vlaneseq
    %v3281 = vshrl.u32 %v3280, 7
    %v3282 = vsub.s32 %v3279, %v3281
    %v3283 = vrot.slane %v3267, %v3282
    %v3285 = vunpack.c.l.s4 1966171168
    %v3286 = vunpack.c.0.s8 %v3285
    %v3287 = vlaneseq
    %v3288 = vshrl.u32 %v3287, 7
    %v3289 = vsub.s32 %v3286, %v3288
    %v3290 = vrot.slane %v3268, %v3289
    %v3292 = vunpack.c.l.s4 1966171168
    %v3293 = vunpack.c.0.s8 %v3292
    %v3294 = vlaneseq
    %v3295 = vshrl.u32 %v3294, 7
    %v3296 = vsub.s32 %v3293, %v3295
    %v3297 = vrot.slane %v3269, %v3296
    %v3298 = vcombine.high %v3276, %v3276
    %v3299 = vcombine.high %v3283, %v3283
    %v3300 = vcombine.high %v3290, %v3290
    %v3301 = vcombine.high %v3297, %v3297
    %v3302 = vcombine.high %v771, %v771
    %v3304 = vunpack.c.l.s4 1966171168
    %v3305 = vunpack.c.0.s8 %v3304
    %v3306 = vlaneseq
    %v3307 = vshrl.u32 %v3306, 7
    %v3308 = vsub.s32 %v3305, %v3307
    %v3309 = vrot.slane %v771, %v3308
    %v3311 = vunpack.c.l.s4 1966171168
    %v3312 = vunpack.c.0.s8 %v3311
    %v3313 = vlaneseq
    %v3314 = vshrl.u32 %v3313, 7
    %v3315 = vsub.s32 %v3312, %v3314
    %v3316 = vrot.slane %v3302, %v3315
    %v3317 = vcombine.high %v3309, %v3309
    %v3318 = vcombine.high %v3316, %v3316
    %v3320 = vunpack.c.l.s4 1966171168
    %v3321 = vunpack.c.0.s8 %v3320
    %v3322 = vlaneseq
    %v3323 = vshrl.u32 %v3322, 7
    %v3324 = vsub.s32 %v3321, %v3323
    %v3325 = vrot.slane %v3309, %v3324
    %v3327 = vunpack.c.l.s4 1966171168
    %v3328 = vunpack.c.0.s8 %v3327
    %v3329 = vlaneseq
    %v3330 = vshrl.u32 %v3329, 7
    %v3331 = vsub.s32 %v3328, %v3330
    %v3332 = vrot.slane %v3316, %v3331
    %v3334 = vunpack.c.l.s4 1966171168
    %v3335 = vunpack.c.0.s8 %v3334
    %v3336 = vlaneseq
    %v3337 = vshrl.u32 %v3336, 7
    %v3338 = vsub.s32 %v3335, %v3337
    %v3339 = vrot.slane %v3317, %v3338
    %v3341 = vunpack.c.l.s4 1966171168
    %v3342 = vunpack.c.0.s8 %v3341
    %v3343 = vlaneseq
    %v3344 = vshrl.u32 %v3343, 7
    %v3345 = vsub.s32 %v3342, %v3344
    %v3346 = vrot.slane %v3318, %v3345
    %v3347 = vcombine.high %v3325, %v3325
    %v3348 = vcombine.high %v3332, %v3332
    %v3349 = vcombine.high %v3339, %v3339
    %v3350 = vcombine.high %v3346, %v3346
    %v3351 = vcombine.high %v772, %v772
    %v3353 = vunpack.c.l.s4 1966171168
    %v3354 = vunpack.c.0.s8 %v3353
    %v3355 = vlaneseq
    %v3356 = vshrl.u32 %v3355, 7
    %v3357 = vsub.s32 %v3354, %v3356
    %v3358 = vrot.slane %v772, %v3357
    %v3360 = vunpack.c.l.s4 1966171168
    %v3361 = vunpack.c.0.s8 %v3360
    %v3362 = vlaneseq
    %v3363 = vshrl.u32 %v3362, 7
    %v3364 = vsub.s32 %v3361, %v3363
    %v3365 = vrot.slane %v3351, %v3364
    %v3366 = vcombine.high %v3358, %v3358
    %v3367 = vcombine.high %v3365, %v3365
    %v3369 = vunpack.c.l.s4 1966171168
    %v3370 = vunpack.c.0.s8 %v3369
    %v3371 = vlaneseq
    %v3372 = vshrl.u32 %v3371, 7
    %v3373 = vsub.s32 %v3370, %v3372
    %v3374 = vrot.slane %v3358, %v3373
    %v3376 = vunpack.c.l.s4 1966171168
    %v3377 = vunpack.c.0.s8 %v3376
    %v3378 = vlaneseq
    %v3379 = vshrl.u32 %v3378, 7
    %v3380 = vsub.s32 %v3377, %v3379
    %v3381 = vrot.slane %v3365, %v3380
    %v3383 = vunpack.c.l.s4 1966171168
    %v3384 = vunpack.c.0.s8 %v3383
    %v3385 = vlaneseq
    %v3386 = vshrl.u32 %v3385, 7
    %v3387 = vsub.s32 %v3384, %v3386
    %v3388 = vrot.slane %v3366, %v3387
    %v3390 = vunpack.c.l.s4 1966171168
    %v3391 = vunpack.c.0.s8 %v3390
    %v3392 = vlaneseq
    %v3393 = vshrl.u32 %v3392, 7
    %v3394 = vsub.s32 %v3391, %v3393
    %v3395 = vrot.slane %v3367, %v3394
    %v3396 = vcombine.high %v3374, %v3374
    %v3397 = vcombine.high %v3381, %v3381
    %v3398 = vcombine.high %v3388, %v3388
    %v3399 = vcombine.high %v3395, %v3395
    %v3400 = vcombine.high %v773, %v773
    %v3402 = vunpack.c.l.s4 1966171168
    %v3403 = vunpack.c.0.s8 %v3402
    %v3404 = vlaneseq
    %v3405 = vshrl.u32 %v3404, 7
    %v3406 = vsub.s32 %v3403, %v3405
    %v3407 = vrot.slane %v773, %v3406
    %v3409 = vunpack.c.l.s4 1966171168
    %v3410 = vunpack.c.0.s8 %v3409
    %v3411 = vlaneseq
    %v3412 = vshrl.u32 %v3411, 7
    %v3413 = vsub.s32 %v3410, %v3412
    %v3414 = vrot.slane %v3400, %v3413
    %v3415 = vcombine.high %v3407, %v3407
    %v3416 = vcombine.high %v3414, %v3414
    %v3418 = vunpack.c.l.s4 1966171168
    %v3419 = vunpack.c.0.s8 %v3418
    %v3420 = vlaneseq
    %v3421 = vshrl.u32 %v3420, 7
    %v3422 = vsub.s32 %v3419, %v3421
    %v3423 = vrot.slane %v3407, %v3422
    %v3425 = vunpack.c.l.s4 1966171168
    %v3426 = vunpack.c.0.s8 %v3425
    %v3427 = vlaneseq
    %v3428 = vshrl.u32 %v3427, 7
    %v3429 = vsub.s32 %v3426, %v3428
    %v3430 = vrot.slane %v3414, %v3429
    %v3432 = vunpack.c.l.s4 1966171168
    %v3433 = vunpack.c.0.s8 %v3432
    %v3434 = vlaneseq
    %v3435 = vshrl.u32 %v3434, 7
    %v3436 = vsub.s32 %v3433, %v3435
    %v3437 = vrot.slane %v3415, %v3436
    %v3439 = vunpack.c.l.s4 1966171168
    %v3440 = vunpack.c.0.s8 %v3439
    %v3441 = vlaneseq
    %v3442 = vshrl.u32 %v3441, 7
    %v3443 = vsub.s32 %v3440, %v3442
    %v3444 = vrot.slane %v3416, %v3443
    %v3445 = vcombine.high %v3423, %v3423
    %v3446 = vcombine.high %v3430, %v3430
    %v3447 = vcombine.high %v3437, %v3437
    %v3448 = vcombine.high %v3444, %v3444
    %v3449 = vcombine.high %v774, %v774
    %v3451 = vunpack.c.l.s4 1966171168
    %v3452 = vunpack.c.0.s8 %v3451
    %v3453 = vlaneseq
    %v3454 = vshrl.u32 %v3453, 7
    %v3455 = vsub.s32 %v3452, %v3454
    %v3456 = vrot.slane %v774, %v3455
    %v3458 = vunpack.c.l.s4 1966171168
    %v3459 = vunpack.c.0.s8 %v3458
    %v3460 = vlaneseq
    %v3461 = vshrl.u32 %v3460, 7
    %v3462 = vsub.s32 %v3459, %v3461
    %v3463 = vrot.slane %v3449, %v3462
    %v3464 = vcombine.high %v3456, %v3456
    %v3465 = vcombine.high %v3463, %v3463
    %v3467 = vunpack.c.l.s4 1966171168
    %v3468 = vunpack.c.0.s8 %v3467
    %v3469 = vlaneseq
    %v3470 = vshrl.u32 %v3469, 7
    %v3471 = vsub.s32 %v3468, %v3470
    %v3472 = vrot.slane %v3456, %v3471
    %v3474 = vunpack.c.l.s4 1966171168
    %v3475 = vunpack.c.0.s8 %v3474
    %v3476 = vlaneseq
    %v3477 = vshrl.u32 %v3476, 7
    %v3478 = vsub.s32 %v3475, %v3477
    %v3479 = vrot.slane %v3463, %v3478
    %v3481 = vunpack.c.l.s4 1966171168
    %v3482 = vunpack.c.0.s8 %v3481
    %v3483 = vlaneseq
    %v3484 = vshrl.u32 %v3483, 7
    %v3485 = vsub.s32 %v3482, %v3484
    %v3486 = vrot.slane %v3464, %v3485
    %v3488 = vunpack.c.l.s4 1966171168
    %v3489 = vunpack.c.0.s8 %v3488
    %v3490 = vlaneseq
    %v3491 = vshrl.u32 %v3490, 7
    %v3492 = vsub.s32 %v3489, %v3491
    %v3493 = vrot.slane %v3465, %v3492
    %v3494 = vcombine.high %v3472, %v3472
    %v3495 = vcombine.high %v3479, %v3479
    %v3496 = vcombine.high %v3486, %v3486
    %v3497 = vcombine.high %v3493, %v3493
    %v3498 = vlaneseq
    %v3499 = vshrl.u32 %v3498, 7
    %v3500 = vsub.s32 0, %v3499
    %v3501 = vrot.slane %v3129, %v3500
    %v3502 = vlaneseq
    %v3503 = vshrl.u32 %v3502, 7
    %v3504 = vsub.s32 0, %v3503
    %v3505 = vrot.slane %v3143, %v3504
    %v3506 = vlaneseq
    %v3507 = vshrl.u32 %v3506, 7
    %v3508 = vsub.s32 0, %v3507
    %v3509 = vrot.slane %v3151, %v3508
    %v3510 = vlaneseq
    %v3511 = vshrl.u32 %v3510, 7
    %v3512 = vsub.s32 0, %v3511
    %v3513 = vrot.slane %v3153, %v3512
    %v3514 = vlaneseq
    %v3515 = vshrl.u32 %v3514, 7
    %v3516 = vsub.s32 0, %v3515
    %v3517 = vrot.slane %v3136, %v3516
    %v3518 = vlaneseq
    %v3519 = vshrl.u32 %v3518, 7
    %v3520 = vsub.s32 0, %v3519
    %v3521 = vrot.slane %v3150, %v3520
    %v3522 = vlaneseq
    %v3523 = vshrl.u32 %v3522, 7
    %v3524 = vsub.s32 0, %v3523
    %v3525 = vrot.slane %v3152, %v3524
    %v3526 = vlaneseq
    %v3527 = vshrl.u32 %v3526, 7
    %v3528 = vsub.s32 0, %v3527
    %v3529 = vrot.slane %v3154, %v3528
    %v3530 = vlaneseq
    %v3531 = vshrl.u32 %v3530, 7
    %v3532 = vsub.s32 0, %v3531
    %v3533 = vrot.slane %v3178, %v3532
    %v3534 = vlaneseq
    %v3535 = vshrl.u32 %v3534, 7
    %v3536 = vsub.s32 0, %v3535
    %v3537 = vrot.slane %v3192, %v3536
    %v3538 = vlaneseq
    %v3539 = vshrl.u32 %v3538, 7
    %v3540 = vsub.s32 0, %v3539
    %v3541 = vrot.slane %v3200, %v3540
    %v3542 = vlaneseq
    %v3543 = vshrl.u32 %v3542, 7
    %v3544 = vsub.s32 0, %v3543
    %v3545 = vrot.slane %v3202, %v3544
    %v3546 = vlaneseq
    %v3547 = vshrl.u32 %v3546, 7
    %v3548 = vsub.s32 0, %v3547
    %v3549 = vrot.slane %v3185, %v3548
    %v3550 = vlaneseq
    %v3551 = vshrl.u32 %v3550, 7
    %v3552 = vsub.s32 0, %v3551
    %v3553 = vrot.slane %v3199, %v3552
    %v3554 = vlaneseq
    %v3555 = vshrl.u32 %v3554, 7
    %v3556 = vsub.s32 0, %v3555
    %v3557 = vrot.slane %v3201, %v3556
    %v3558 = vlaneseq
    %v3559 = vshrl.u32 %v3558, 7
    %v3560 = vsub.s32 0, %v3559
    %v3561 = vrot.slane %v3203, %v3560
    %v3562 = vlaneseq
    %v3563 = vshrl.u32 %v3562, 7
    %v3564 = vsub.s32 0, %v3563
    %v3565 = vrot.slane %v3227, %v3564
    %v3566 = vlaneseq
    %v3567 = vshrl.u32 %v3566, 7
    %v3568 = vsub.s32 0, %v3567
    %v3569 = vrot.slane %v3241, %v3568
    %v3570 = vlaneseq
    %v3571 = vshrl.u32 %v3570, 7
    %v3572 = vsub.s32 0, %v3571
    %v3573 = vrot.slane %v3249, %v3572
    %v3574 = vlaneseq
    %v3575 = vshrl.u32 %v3574, 7
    %v3576 = vsub.s32 0, %v3575
    %v3577 = vrot.slane %v3251, %v3576
    %v3578 = vlaneseq
    %v3579 = vshrl.u32 %v3578, 7
    %v3580 = vsub.s32 0, %v3579
    %v3581 = vrot.slane %v3234, %v3580
    %v3582 = vlaneseq
    %v3583 = vshrl.u32 %v3582, 7
    %v3584 = vsub.s32 0, %v3583
    %v3585 = vrot.slane %v3248, %v3584
    %v3586 = vlaneseq
    %v3587 = vshrl.u32 %v3586, 7
    %v3588 = vsub.s32 0, %v3587
    %v3589 = vrot.slane %v3250, %v3588
    %v3590 = vlaneseq
    %v3591 = vshrl.u32 %v3590, 7
    %v3592 = vsub.s32 0, %v3591
    %v3593 = vrot.slane %v3252, %v3592
    %v3594 = vlaneseq
    %v3595 = vshrl.u32 %v3594, 7
    %v3596 = vsub.s32 0, %v3595
    %v3597 = vrot.slane %v3276, %v3596
    %v3598 = vlaneseq
    %v3599 = vshrl.u32 %v3598, 7
    %v3600 = vsub.s32 0, %v3599
    %v3601 = vrot.slane %v3290, %v3600
    %v3602 = vlaneseq
    %v3603 = vshrl.u32 %v3602, 7
    %v3604 = vsub.s32 0, %v3603
    %v3605 = vrot.slane %v3298, %v3604
    %v3606 = vlaneseq
    %v3607 = vshrl.u32 %v3606, 7
    %v3608 = vsub.s32 0, %v3607
    %v3609 = vrot.slane %v3300, %v3608
    %v3610 = vlaneseq
    %v3611 = vshrl.u32 %v3610, 7
    %v3612 = vsub.s32 0, %v3611
    %v3613 = vrot.slane %v3283, %v3612
    %v3614 = vlaneseq
    %v3615 = vshrl.u32 %v3614, 7
    %v3616 = vsub.s32 0, %v3615
    %v3617 = vrot.slane %v3297, %v3616
    %v3618 = vlaneseq
    %v3619 = vshrl.u32 %v3618, 7
    %v3620 = vsub.s32 0, %v3619
    %v3621 = vrot.slane %v3299, %v3620
    %v3622 = vlaneseq
    %v3623 = vshrl.u32 %v3622, 7
    %v3624 = vsub.s32 0, %v3623
    %v3625 = vrot.slane %v3301, %v3624
    %v3626 = vlaneseq
    %v3627 = vshrl.u32 %v3626, 7
    %v3628 = vsub.s32 0, %v3627
    %v3629 = vrot.slane %v3325, %v3628
    %v3630 = vlaneseq
    %v3631 = vshrl.u32 %v3630, 7
    %v3632 = vsub.s32 0, %v3631
    %v3633 = vrot.slane %v3339, %v3632
    %v3634 = vlaneseq
    %v3635 = vshrl.u32 %v3634, 7
    %v3636 = vsub.s32 0, %v3635
    %v3637 = vrot.slane %v3347, %v3636
    %v3638 = vlaneseq
    %v3639 = vshrl.u32 %v3638, 7
    %v3640 = vsub.s32 0, %v3639
    %v3641 = vrot.slane %v3349, %v3640
    %v3642 = vlaneseq
    %v3643 = vshrl.u32 %v3642, 7
    %v3644 = vsub.s32 0, %v3643
    %v3645 = vrot.slane %v3332, %v3644
    %v3646 = vlaneseq
    %v3647 = vshrl.u32 %v3646, 7
    %v3648 = vsub.s32 0, %v3647
    %v3649 = vrot.slane %v3346, %v3648
    %v3650 = vlaneseq
    %v3651 = vshrl.u32 %v3650, 7
    %v3652 = vsub.s32 0, %v3651
    %v3653 = vrot.slane %v3348, %v3652
    %v3654 = vlaneseq
    %v3655 = vshrl.u32 %v3654, 7
    %v3656 = vsub.s32 0, %v3655
    %v3657 = vrot.slane %v3350, %v3656
    %v3658 = vlaneseq
    %v3659 = vshrl.u32 %v3658, 7
    %v3660 = vsub.s32 0, %v3659
    %v3661 = vrot.slane %v3374, %v3660
    %v3662 = vlaneseq
    %v3663 = vshrl.u32 %v3662, 7
    %v3664 = vsub.s32 0, %v3663
    %v3665 = vrot.slane %v3388, %v3664
    %v3666 = vlaneseq
    %v3667 = vshrl.u32 %v3666, 7
    %v3668 = vsub.s32 0, %v3667
    %v3669 = vrot.slane %v3396, %v3668
    %v3670 = vlaneseq
    %v3671 = vshrl.u32 %v3670, 7
    %v3672 = vsub.s32 0, %v3671
    %v3673 = vrot.slane %v3398, %v3672
    %v3674 = vlaneseq
    %v3675 = vshrl.u32 %v3674, 7
    %v3676 = vsub.s32 0, %v3675
    %v3677 = vrot.slane %v3381, %v3676
    %v3678 = vlaneseq
    %v3679 = vshrl.u32 %v3678, 7
    %v3680 = vsub.s32 0, %v3679
    %v3681 = vrot.slane %v3395, %v3680
    %v3682 = vlaneseq
    %v3683 = vshrl.u32 %v3682, 7
    %v3684 = vsub.s32 0, %v3683
    %v3685 = vrot.slane %v3397, %v3684
    %v3686 = vlaneseq
    %v3687 = vshrl.u32 %v3686, 7
    %v3688 = vsub.s32 0, %v3687
    %v3689 = vrot.slane %v3399, %v3688
    %v3690 = vlaneseq
    %v3691 = vshrl.u32 %v3690, 7
    %v3692 = vsub.s32 0, %v3691
    %v3693 = vrot.slane %v3423, %v3692
    %v3694 = vlaneseq
    %v3695 = vshrl.u32 %v3694, 7
    %v3696 = vsub.s32 0, %v3695
    %v3697 = vrot.slane %v3437, %v3696
    %v3698 = vlaneseq
    %v3699 = vshrl.u32 %v3698, 7
    %v3700 = vsub.s32 0, %v3699
    %v3701 = vrot.slane %v3445, %v3700
    %v3702 = vlaneseq
    %v3703 = vshrl.u32 %v3702, 7
    %v3704 = vsub.s32 0, %v3703
    %v3705 = vrot.slane %v3447, %v3704
    %v3706 = vlaneseq
    %v3707 = vshrl.u32 %v3706, 7
    %v3708 = vsub.s32 0, %v3707
    %v3709 = vrot.slane %v3430, %v3708
    %v3710 = vlaneseq
    %v3711 = vshrl.u32 %v3710, 7
    %v3712 = vsub.s32 0, %v3711
    %v3713 = vrot.slane %v3444, %v3712
    %v3714 = vlaneseq
    %v3715 = vshrl.u32 %v3714, 7
    %v3716 = vsub.s32 0, %v3715
    %v3717 = vrot.slane %v3446, %v3716
    %v3718 = vlaneseq
    %v3719 = vshrl.u32 %v3718, 7
    %v3720 = vsub.s32 0, %v3719
    %v3721 = vrot.slane %v3448, %v3720
    %v3722 = vlaneseq
    %v3723 = vshrl.u32 %v3722, 7
    %v3724 = vsub.s32 0, %v3723
    %v3725 = vrot.slane %v3472, %v3724
    %v3726 = vlaneseq
    %v3727 = vshrl.u32 %v3726, 7
    %v3728 = vsub.s32 0, %v3727
    %v3729 = vrot.slane %v3486, %v3728
    %v3730 = vlaneseq
    %v3731 = vshrl.u32 %v3730, 7
    %v3732 = vsub.s32 0, %v3731
    %v3733 = vrot.slane %v3494, %v3732
    %v3734 = vlaneseq
    %v3735 = vshrl.u32 %v3734, 7
    %v3736 = vsub.s32 0, %v3735
    %v3737 = vrot.slane %v3496, %v3736
    %v3738 = vlaneseq
    %v3739 = vshrl.u32 %v3738, 7
    %v3740 = vsub.s32 0, %v3739
    %v3741 = vrot.slane %v3479, %v3740
    %v3742 = vlaneseq
    %v3743 = vshrl.u32 %v3742, 7
    %v3744 = vsub.s32 0, %v3743
    %v3745 = vrot.slane %v3493, %v3744
    %v3746 = vlaneseq
    %v3747 = vshrl.u32 %v3746, 7
    %v3748 = vsub.s32 0, %v3747
    %v3749 = vrot.slane %v3495, %v3748
    %v3750 = vlaneseq
    %v3751 = vshrl.u32 %v3750, 7
    %v3752 = vsub.s32 0, %v3751
    %v3753 = vrot.slane %v3497, %v3752
    %v3818 = vmul.f32 %v2978, %v3501
    %v3819 = vmul.f32 %v2979, %v3501
    %v3820 = vmul.f32 %v2980, %v3505
    %v3821 = vmul.f32 %v2981, %v3505
    %v3822 = vmul.f32 %v2982, %v3509
    %v3823 = vmul.f32 %v2983, %v3509
    %v3824 = vmul.f32 %v2984, %v3513
    %v3825 = vmul.f32 %v2985, %v3513
    %v3826 = vmul.f32 %v2986, %v3517
    %v3827 = vmul.f32 %v2987, %v3517
    %v3828 = vmul.f32 %v2988, %v3521
    %v3829 = vmul.f32 %v2989, %v3521
    %v3830 = vmul.f32 %v2990, %v3525
    %v3831 = vmul.f32 %v2991, %v3525
    %v3832 = vmul.f32 %v2992, %v3529
    %v3833 = vmul.f32 %v2993, %v3529
    %v3834 = vmul.f32 %v2994, %v3533
    %v3835 = vmul.f32 %v2995, %v3533
    %v3836 = vmul.f32 %v2996, %v3537
    %v3837 = vmul.f32 %v2997, %v3537
    %v3838 = vmul.f32 %v2998, %v3541
    %v3839 = vmul.f32 %v2999, %v3541
    %v3840 = vmul.f32 %v3000, %v3545
    %v3841 = vmul.f32 %v3001, %v3545
    %v3842 = vmul.f32 %v3002, %v3549
    %v3843 = vmul.f32 %v3003, %v3549
    %v3844 = vmul.f32 %v3004, %v3553
    %v3845 = vmul.f32 %v3005, %v3553
    %v3846 = vmul.f32 %v3006, %v3557
    %v3847 = vmul.f32 %v3007, %v3557
    %v3848 = vmul.f32 %v3008, %v3561
    %v3849 = vmul.f32 %v3009, %v3561
    %v3850 = vmul.f32 %v3010, %v3565
    %v3851 = vmul.f32 %v3011, %v3565
    %v3852 = vmul.f32 %v3012, %v3569
    %v3853 = vmul.f32 %v3013, %v3569
    %v3854 = vmul.f32 %v3014, %v3573
    %v3855 = vmul.f32 %v3015, %v3573
    %v3856 = vmul.f32 %v3016, %v3577
    %v3857 = vmul.f32 %v3017, %v3577
    %v3858 = vmul.f32 %v3018, %v3581
    %v3859 = vmul.f32 %v3019, %v3581
    %v3860 = vmul.f32 %v3020, %v3585
    %v3861 = vmul.f32 %v3021, %v3585
    %v3862 = vmul.f32 %v3022, %v3589
    %v3863 = vmul.f32 %v3023, %v3589
    %v3864 = vmul.f32 %v3024, %v3593
    %v3865 = vmul.f32 %v3025, %v3593
    %v3866 = vmul.f32 %v3026, %v3597
    %v3867 = vmul.f32 %v3027, %v3597
    %v3868 = vmul.f32 %v3028, %v3601
    %v3869 = vmul.f32 %v3029, %v3601
    %v3870 = vmul.f32 %v3030, %v3605
    %v3871 = vmul.f32 %v3031, %v3605
    %v3872 = vmul.f32 %v3032, %v3609
    %v3873 = vmul.f32 %v3033, %v3609
    %v3874 = vmul.f32 %v3034, %v3613
    %v3875 = vmul.f32 %v3035, %v3613
    %v3876 = vmul.f32 %v3036, %v3617
    %v3877 = vmul.f32 %v3037, %v3617
    %v3878 = vmul.f32 %v3038, %v3621
    %v3879 = vmul.f32 %v3039, %v3621
    %v3880 = vmul.f32 %v3040, %v3625
    %v3881 = vmul.f32 %v3041, %v3625
    %v3882 = vmul.f32 %v3042, %v3629
    %v3883 = vmul.f32 %v3043, %v3629
    %v3884 = vmul.f32 %v3044, %v3633
    %v3885 = vmul.f32 %v3045, %v3633
    %v3886 = vmul.f32 %v3046, %v3637
    %v3887 = vmul.f32 %v3047, %v3637
    %v3888 = vmul.f32 %v3048, %v3641
    %v3889 = vmul.f32 %v3049, %v3641
    %v3890 = vmul.f32 %v3050, %v3645
    %v3891 = vmul.f32 %v3051, %v3645
    %v3892 = vmul.f32 %v3052, %v3649
    %v3893 = vmul.f32 %v3053, %v3649
    %v3894 = vmul.f32 %v3054, %v3653
    %v3895 = vmul.f32 %v3055, %v3653
    %v3896 = vmul.f32 %v3056, %v3657
    %v3897 = vmul.f32 %v3057, %v3657
    %v3898 = vmul.f32 %v3058, %v3661
    %v3899 = vmul.f32 %v3059, %v3661
    %v3900 = vmul.f32 %v3060, %v3665
    %v3901 = vmul.f32 %v3061, %v3665
    %v3902 = vmul.f32 %v3062, %v3669
    %v3903 = vmul.f32 %v3063, %v3669
    %v3904 = vmul.f32 %v3064, %v3673
    %v3905 = vmul.f32 %v3065, %v3673
    %v3906 = vmul.f32 %v3066, %v3677
    %v3907 = vmul.f32 %v3067, %v3677
    %v3908 = vmul.f32 %v3068, %v3681
    %v3909 = vmul.f32 %v3069, %v3681
    %v3910 = vmul.f32 %v3070, %v3685
    %v3911 = vmul.f32 %v3071, %v3685
    %v3912 = vmul.f32 %v3072, %v3689
    %v3913 = vmul.f32 %v3073, %v3689
    %v3914 = vmul.f32 %v3074, %v3693
    %v3915 = vmul.f32 %v3075, %v3693
    %v3916 = vmul.f32 %v3076, %v3697
    %v3917 = vmul.f32 %v3077, %v3697
    %v3918 = vmul.f32 %v3078, %v3701
    %v3919 = vmul.f32 %v3079, %v3701
    %v3920 = vmul.f32 %v3080, %v3705
    %v3921 = vmul.f32 %v3081, %v3705
    %v3922 = vmul.f32 %v3082, %v3709
    %v3923 = vmul.f32 %v3083, %v3709
    %v3924 = vmul.f32 %v3084, %v3713
    %v3925 = vmul.f32 %v3085, %v3713
    %v3926 = vmul.f32 %v3086, %v3717
    %v3927 = vmul.f32 %v3087, %v3717
    %v3928 = vmul.f32 %v3088, %v3721
    %v3929 = vmul.f32 %v3089, %v3721
    %v3930 = vmul.f32 %v3090, %v3725
    %v3931 = vmul.f32 %v3091, %v3725
    %v3932 = vmul.f32 %v3092, %v3729
    %v3933 = vmul.f32 %v3093, %v3729
    %v3934 = vmul.f32 %v3094, %v3733
    %v3935 = vmul.f32 %v3095, %v3733
    %v3936 = vmul.f32 %v3096, %v3737
    %v3937 = vmul.f32 %v3097, %v3737
    %v3938 = vmul.f32 %v3098, %v3741
    %v3939 = vmul.f32 %v3099, %v3741
    %v3940 = vmul.f32 %v3100, %v3745
    %v3941 = vmul.f32 %v3101, %v3745
    %v3942 = vmul.f32 %v3102, %v3749
    %v3943 = vmul.f32 %v3103, %v3749
    %v3944 = vmul.f32 %v3104, %v3753
    %v3945 = vmul.f32 %v3105, %v3753
    %v3946 = vmul.f32 %v1955, 0.0
    %v3947 = vmul.f32 %v1957, 0.0
    %v3948 = vmul.f32 %v1987, 0.0
    %v3949 = vmul.f32 %v1989, 0.0
    %v3950 = vmul.f32 %v2019, 0.0
    %v3951 = vmul.f32 %v2021, 0.0
    %v3952 = vmul.f32 %v2051, 0.0
    %v3953 = vmul.f32 %v2053, 0.0
    %v3954 = vmul.f32 %v2083, 0.0
    %v3955 = vmul.f32 %v2085, 0.0
    %v3956 = vmul.f32 %v2115, 0.0
    %v3957 = vmul.f32 %v2117, 0.0
    %v3958 = vmul.f32 %v2147, 0.0
    %v3959 = vmul.f32 %v2149, 0.0
    %v3960 = vmul.f32 %v2179, 0.0
    %v3961 = vmul.f32 %v2181, 0.0
    %v3962 = vadd.f32 %v3946, %v3818
    %v3963 = vadd.f32 %v3947, %v3819
    %v3964 = vadd.f32 %v3948, %v3834
    %v3965 = vadd.f32 %v3949, %v3835
    %v3966 = vadd.f32 %v3950, %v3850
    %v3967 = vadd.f32 %v3951, %v3851
    %v3968 = vadd.f32 %v3952, %v3866
    %v3969 = vadd.f32 %v3953, %v3867
    %v3970 = vadd.f32 %v3954, %v3882
    %v3971 = vadd.f32 %v3955, %v3883
    %v3972 = vadd.f32 %v3956, %v3898
    %v3973 = vadd.f32 %v3957, %v3899
    %v3974 = vadd.f32 %v3958, %v3914
    %v3975 = vadd.f32 %v3959, %v3915
    %v3976 = vadd.f32 %v3960, %v3930
    %v3977 = vadd.f32 %v3961, %v3931
    %v3978 = vmul.f32 %v1959, %v3962
    %v3979 = vmul.f32 %v1961, %v3963
    %v3980 = vmul.f32 %v1991, %v3964
    %v3981 = vmul.f32 %v1993, %v3965
    %v3982 = vmul.f32 %v2023, %v3966
    %v3983 = vmul.f32 %v2025, %v3967
    %v3984 = vmul.f32 %v2055, %v3968
    %v3985 = vmul.f32 %v2057, %v3969
    %v3986 = vmul.f32 %v2087, %v3970
    %v3987 = vmul.f32 %v2089, %v3971
    %v3988 = vmul.f32 %v2119, %v3972
    %v3989 = vmul.f32 %v2121, %v3973
    %v3990 = vmul.f32 %v2151, %v3974
    %v3991 = vmul.f32 %v2153, %v3975
    %v3992 = vmul.f32 %v2183, %v3976
    %v3993 = vmul.f32 %v2185, %v3977
    %v3994 = vadd.f32 %v3978, %v3820
    %v3995 = vadd.f32 %v3979, %v3821
    %v3996 = vadd.f32 %v3980, %v3836
    %v3997 = vadd.f32 %v3981, %v3837
    %v3998 = vadd.f32 %v3982, %v3852
    %v3999 = vadd.f32 %v3983, %v3853
    %v4000 = vadd.f32 %v3984, %v3868
    %v4001 = vadd.f32 %v3985, %v3869
    %v4002 = vadd.f32 %v3986, %v3884
    %v4003 = vadd.f32 %v3987, %v3885
    %v4004 = vadd.f32 %v3988, %v3900
    %v4005 = vadd.f32 %v3989, %v3901
    %v4006 = vadd.f32 %v3990, %v3916
    %v4007 = vadd.f32 %v3991, %v3917
    %v4008 = vadd.f32 %v3992, %v3932
    %v4009 = vadd.f32 %v3993, %v3933
    %v4010 = vmul.f32 %v1963, %v3994
    %v4011 = vmul.f32 %v1965, %v3995
    %v4012 = vmul.f32 %v1995, %v3996
    %v4013 = vmul.f32 %v1997, %v3997
    %v4014 = vmul.f32 %v2027, %v3998
    %v4015 = vmul.f32 %v2029, %v3999
    %v4016 = vmul.f32 %v2059, %v4000
    %v4017 = vmul.f32 %v2061, %v4001
    %v4018 = vmul.f32 %v2091, %v4002
    %v4019 = vmul.f32 %v2093, %v4003
    %v4020 = vmul.f32 %v2123, %v4004
    %v4021 = vmul.f32 %v2125, %v4005
    %v4022 = vmul.f32 %v2155, %v4006
    %v4023 = vmul.f32 %v2157, %v4007
    %v4024 = vmul.f32 %v2187, %v4008
    %v4025 = vmul.f32 %v2189, %v4009
    %v4026 = vadd.f32 %v4010, %v3822
    %v4027 = vadd.f32 %v4011, %v3823
    %v4028 = vadd.f32 %v4012, %v3838
    %v4029 = vadd.f32 %v4013, %v3839
    %v4030 = vadd.f32 %v4014, %v3854
    %v4031 = vadd.f32 %v4015, %v3855
    %v4032 = vadd.f32 %v4016, %v3870
    %v4033 = vadd.f32 %v4017, %v3871
    %v4034 = vadd.f32 %v4018, %v3886
    %v4035 = vadd.f32 %v4019, %v3887
    %v4036 = vadd.f32 %v4020, %v3902
    %v4037 = vadd.f32 %v4021, %v3903
    %v4038 = vadd.f32 %v4022, %v3918
    %v4039 = vadd.f32 %v4023, %v3919
    %v4040 = vadd.f32 %v4024, %v3934
    %v4041 = vadd.f32 %v4025, %v3935
    %v4042 = vmul.f32 %v1967, %v4026
    %v4043 = vmul.f32 %v1969, %v4027
    %v4044 = vmul.f32 %v1999, %v4028
    %v4045 = vmul.f32 %v2001, %v4029
    %v4046 = vmul.f32 %v2031, %v4030
    %v4047 = vmul.f32 %v2033, %v4031
    %v4048 = vmul.f32 %v2063, %v4032
    %v4049 = vmul.f32 %v2065, %v4033
    %v4050 = vmul.f32 %v2095, %v4034
    %v4051 = vmul.f32 %v2097, %v4035
    %v4052 = vmul.f32 %v2127, %v4036
    %v4053 = vmul.f32 %v2129, %v4037
    %v4054 = vmul.f32 %v2159, %v4038
    %v4055 = vmul.f32 %v2161, %v4039
    %v4056 = vmul.f32 %v2191, %v4040
    %v4057 = vmul.f32 %v2193, %v4041
    %v4058 = vadd.f32 %v4042, %v3824
    %v4059 = vadd.f32 %v4043, %v3825
    %v4060 = vadd.f32 %v4044, %v3840
    %v4061 = vadd.f32 %v4045, %v3841
    %v4062 = vadd.f32 %v4046, %v3856
    %v4063 = vadd.f32 %v4047, %v3857
    %v4064 = vadd.f32 %v4048, %v3872
    %v4065 = vadd.f32 %v4049, %v3873
    %v4066 = vadd.f32 %v4050, %v3888
    %v4067 = vadd.f32 %v4051, %v3889
    %v4068 = vadd.f32 %v4052, %v3904
    %v4069 = vadd.f32 %v4053, %v3905
    %v4070 = vadd.f32 %v4054, %v3920
    %v4071 = vadd.f32 %v4055, %v3921
    %v4072 = vadd.f32 %v4056, %v3936
    %v4073 = vadd.f32 %v4057, %v3937
    %v4074 = vmul.f32 %v1971, %v4058
    %v4075 = vmul.f32 %v1973, %v4059
    %v4076 = vmul.f32 %v2003, %v4060
    %v4077 = vmul.f32 %v2005, %v4061
    %v4078 = vmul.f32 %v2035, %v4062
    %v4079 = vmul.f32 %v2037, %v4063
    %v4080 = vmul.f32 %v2067, %v4064
    %v4081 = vmul.f32 %v2069, %v4065
    %v4082 = vmul.f32 %v2099, %v4066
    %v4083 = vmul.f32 %v2101, %v4067
    %v4084 = vmul.f32 %v2131, %v4068
    %v4085 = vmul.f32 %v2133, %v4069
    %v4086 = vmul.f32 %v2163, %v4070
    %v4087 = vmul.f32 %v2165, %v4071
    %v4088 = vmul.f32 %v2195, %v4072
    %v4089 = vmul.f32 %v2197, %v4073
    %v4090 = vadd.f32 %v4074, %v3826
    %v4091 = vadd.f32 %v4075, %v3827
    %v4092 = vadd.f32 %v4076, %v3842
    %v4093 = vadd.f32 %v4077, %v3843
    %v4094 = vadd.f32 %v4078, %v3858
    %v4095 = vadd.f32 %v4079, %v3859
    %v4096 = vadd.f32 %v4080, %v3874
    %v4097 = vadd.f32 %v4081, %v3875
    %v4098 = vadd.f32 %v4082, %v3890
    %v4099 = vadd.f32 %v4083, %v3891
    %v4100 = vadd.f32 %v4084, %v3906
    %v4101 = vadd.f32 %v4085, %v3907
    %v4102 = vadd.f32 %v4086, %v3922
    %v4103 = vadd.f32 %v4087, %v3923
    %v4104 = vadd.f32 %v4088, %v3938
    %v4105 = vadd.f32 %v4089, %v3939
    %v4106 = vmul.f32 %v1975, %v4090
    %v4107 = vmul.f32 %v1977, %v4091
    %v4108 = vmul.f32 %v2007, %v4092
    %v4109 = vmul.f32 %v2009, %v4093
    %v4110 = vmul.f32 %v2039, %v4094
    %v4111 = vmul.f32 %v2041, %v4095
    %v4112 = vmul.f32 %v2071, %v4096
    %v4113 = vmul.f32 %v2073, %v4097
    %v4114 = vmul.f32 %v2103, %v4098
    %v4115 = vmul.f32 %v2105, %v4099
    %v4116 = vmul.f32 %v2135, %v4100
    %v4117 = vmul.f32 %v2137, %v4101
    %v4118 = vmul.f32 %v2167, %v4102
    %v4119 = vmul.f32 %v2169, %v4103
    %v4120 = vmul.f32 %v2199, %v4104
    %v4121 = vmul.f32 %v2201, %v4105
    %v4122 = vadd.f32 %v4106, %v3828
    %v4123 = vadd.f32 %v4107, %v3829
    %v4124 = vadd.f32 %v4108, %v3844
    %v4125 = vadd.f32 %v4109, %v3845
    %v4126 = vadd.f32 %v4110, %v3860
    %v4127 = vadd.f32 %v4111, %v3861
    %v4128 = vadd.f32 %v4112, %v3876
    %v4129 = vadd.f32 %v4113, %v3877
    %v4130 = vadd.f32 %v4114, %v3892
    %v4131 = vadd.f32 %v4115, %v3893
    %v4132 = vadd.f32 %v4116, %v3908
    %v4133 = vadd.f32 %v4117, %v3909
    %v4134 = vadd.f32 %v4118, %v3924
    %v4135 = vadd.f32 %v4119, %v3925
    %v4136 = vadd.f32 %v4120, %v3940
    %v4137 = vadd.f32 %v4121, %v3941
    %v4138 = vmul.f32 %v1979, %v4122
    %v4139 = vmul.f32 %v1981, %v4123
    %v4140 = vmul.f32 %v2011, %v4124
    %v4141 = vmul.f32 %v2013, %v4125
    %v4142 = vmul.f32 %v2043, %v4126
    %v4143 = vmul.f32 %v2045, %v4127
    %v4144 = vmul.f32 %v2075, %v4128
    %v4145 = vmul.f32 %v2077, %v4129
    %v4146 = vmul.f32 %v2107, %v4130
    %v4147 = vmul.f32 %v2109, %v4131
    %v4148 = vmul.f32 %v2139, %v4132
    %v4149 = vmul.f32 %v2141, %v4133
    %v4150 = vmul.f32 %v2171, %v4134
    %v4151 = vmul.f32 %v2173, %v4135
    %v4152 = vmul.f32 %v2203, %v4136
    %v4153 = vmul.f32 %v2205, %v4137
    %v4154 = vadd.f32 %v4138, %v3830
    %v4155 = vadd.f32 %v4139, %v3831
    %v4156 = vadd.f32 %v4140, %v3846
    %v4157 = vadd.f32 %v4141, %v3847
    %v4158 = vadd.f32 %v4142, %v3862
    %v4159 = vadd.f32 %v4143, %v3863
    %v4160 = vadd.f32 %v4144, %v3878
    %v4161 = vadd.f32 %v4145, %v3879
    %v4162 = vadd.f32 %v4146, %v3894
    %v4163 = vadd.f32 %v4147, %v3895
    %v4164 = vadd.f32 %v4148, %v3910
    %v4165 = vadd.f32 %v4149, %v3911
    %v4166 = vadd.f32 %v4150, %v3926
    %v4167 = vadd.f32 %v4151, %v3927
    %v4168 = vadd.f32 %v4152, %v3942
    %v4169 = vadd.f32 %v4153, %v3943
    %v4170 = vmul.f32 %v1983, %v4154
    %v4171 = vmul.f32 %v1985, %v4155
    %v4172 = vmul.f32 %v2015, %v4156
    %v4173 = vmul.f32 %v2017, %v4157
    %v4174 = vmul.f32 %v2047, %v4158
    %v4175 = vmul.f32 %v2049, %v4159
    %v4176 = vmul.f32 %v2079, %v4160
    %v4177 = vmul.f32 %v2081, %v4161
    %v4178 = vmul.f32 %v2111, %v4162
    %v4179 = vmul.f32 %v2113, %v4163
    %v4180 = vmul.f32 %v2143, %v4164
    %v4181 = vmul.f32 %v2145, %v4165
    %v4182 = vmul.f32 %v2175, %v4166
    %v4183 = vmul.f32 %v2177, %v4167
    %v4184 = vmul.f32 %v2207, %v4168
    %v4185 = vmul.f32 %v2209, %v4169
    %v4186 = vadd.f32 %v4170, %v3832
    %v4187 = vadd.f32 %v4171, %v3833
    %v4188 = vadd.f32 %v4172, %v3848
    %v4189 = vadd.f32 %v4173, %v3849
    %v4190 = vadd.f32 %v4174, %v3864
    %v4191 = vadd.f32 %v4175, %v3865
    %v4192 = vadd.f32 %v4176, %v3880
    %v4193 = vadd.f32 %v4177, %v3881
    %v4194 = vadd.f32 %v4178, %v3896
    %v4195 = vadd.f32 %v4179, %v3897
    %v4196 = vadd.f32 %v4180, %v3912
    %v4197 = vadd.f32 %v4181, %v3913
    %v4198 = vadd.f32 %v4182, %v3928
    %v4199 = vadd.f32 %v4183, %v3929
    %v4200 = vadd.f32 %v4184, %v3944
    %v4201 = vadd.f32 %v4185, %v3945
    %s4203 = sor.u32 256, 18
    %4204 = vbcast.lane.b32.xlu0 %v2213, %s4203
    %v4205 = vpop.permute.xlu0 %4204
    %s4207 = sor.u32 256, 26
    %4208 = vbcast.lane.b32.xlu0 %v2213, %s4207
    %v4209 = vpop.permute.xlu0 %4208
    %s4211 = sor.u32 256, 18
    %4212 = vbcast.lane.b32.xlu0 %v2225, %s4211
    %v4213 = vpop.permute.xlu0 %4212
    %s4215 = sor.u32 256, 26
    %4216 = vbcast.lane.b32.xlu0 %v2225, %s4215
    %v4217 = vpop.permute.xlu0 %4216
    %s4219 = sor.u32 256, 18
    %4220 = vbcast.lane.b32.xlu0 %v2237, %s4219
    %v4221 = vpop.permute.xlu0 %4220
    %s4223 = sor.u32 256, 26
    %4224 = vbcast.lane.b32.xlu0 %v2237, %s4223
    %v4225 = vpop.permute.xlu0 %4224
    %s4227 = sor.u32 256, 18
    %4228 = vbcast.lane.b32.xlu0 %v2249, %s4227
    %v4229 = vpop.permute.xlu0 %4228
    %s4231 = sor.u32 256, 26
    %4232 = vbcast.lane.b32.xlu0 %v2249, %s4231
    %v4233 = vpop.permute.xlu0 %4232
    %s4235 = sor.u32 256, 18
    %4236 = vbcast.lane.b32.xlu0 %v2261, %s4235
    %v4237 = vpop.permute.xlu0 %4236
    %s4239 = sor.u32 256, 26
    %4240 = vbcast.lane.b32.xlu0 %v2261, %s4239
    %v4241 = vpop.permute.xlu0 %4240
    %s4243 = sor.u32 256, 18
    %4244 = vbcast.lane.b32.xlu0 %v2273, %s4243
    %v4245 = vpop.permute.xlu0 %4244
    %s4247 = sor.u32 256, 26
    %4248 = vbcast.lane.b32.xlu0 %v2273, %s4247
    %v4249 = vpop.permute.xlu0 %4248
    %s4251 = sor.u32 256, 18
    %4252 = vbcast.lane.b32.xlu0 %v2285, %s4251
    %v4253 = vpop.permute.xlu0 %4252
    %s4255 = sor.u32 256, 26
    %4256 = vbcast.lane.b32.xlu0 %v2285, %s4255
    %v4257 = vpop.permute.xlu0 %4256
    %s4259 = sor.u32 256, 18
    %4260 = vbcast.lane.b32.xlu0 %v2297, %s4259
    %v4261 = vpop.permute.xlu0 %4260
    %s4263 = sor.u32 256, 26
    %4264 = vbcast.lane.b32.xlu0 %v2297, %s4263
    %v4265 = vpop.permute.xlu0 %4264
    %s4267 = sor.u32 256, 18
    %4268 = vbcast.lane.b32.xlu0 %v2309, %s4267
    %v4269 = vpop.permute.xlu0 %4268
    %s4271 = sor.u32 256, 26
    %4272 = vbcast.lane.b32.xlu0 %v2309, %s4271
    %v4273 = vpop.permute.xlu0 %4272
    %s4275 = sor.u32 256, 18
    %4276 = vbcast.lane.b32.xlu0 %v2321, %s4275
    %v4277 = vpop.permute.xlu0 %4276
    %s4279 = sor.u32 256, 26
    %4280 = vbcast.lane.b32.xlu0 %v2321, %s4279
    %v4281 = vpop.permute.xlu0 %4280
    %s4283 = sor.u32 256, 18
    %4284 = vbcast.lane.b32.xlu0 %v2333, %s4283
    %v4285 = vpop.permute.xlu0 %4284
    %s4287 = sor.u32 256, 26
    %4288 = vbcast.lane.b32.xlu0 %v2333, %s4287
    %v4289 = vpop.permute.xlu0 %4288
    %s4291 = sor.u32 256, 18
    %4292 = vbcast.lane.b32.xlu0 %v2345, %s4291
    %v4293 = vpop.permute.xlu0 %4292
    %s4295 = sor.u32 256, 26
    %4296 = vbcast.lane.b32.xlu0 %v2345, %s4295
    %v4297 = vpop.permute.xlu0 %4296
    %s4299 = sor.u32 256, 18
    %4300 = vbcast.lane.b32.xlu0 %v2357, %s4299
    %v4301 = vpop.permute.xlu0 %4300
    %s4303 = sor.u32 256, 26
    %4304 = vbcast.lane.b32.xlu0 %v2357, %s4303
    %v4305 = vpop.permute.xlu0 %4304
    %s4307 = sor.u32 256, 18
    %4308 = vbcast.lane.b32.xlu0 %v2369, %s4307
    %v4309 = vpop.permute.xlu0 %4308
    %s4311 = sor.u32 256, 26
    %4312 = vbcast.lane.b32.xlu0 %v2369, %s4311
    %v4313 = vpop.permute.xlu0 %4312
    %s4315 = sor.u32 256, 18
    %4316 = vbcast.lane.b32.xlu0 %v2381, %s4315
    %v4317 = vpop.permute.xlu0 %4316
    %s4319 = sor.u32 256, 26
    %4320 = vbcast.lane.b32.xlu0 %v2381, %s4319
    %v4321 = vpop.permute.xlu0 %4320
    %s4323 = sor.u32 256, 18
    %4324 = vbcast.lane.b32.xlu0 %v2393, %s4323
    %v4325 = vpop.permute.xlu0 %4324
    %s4327 = sor.u32 256, 26
    %4328 = vbcast.lane.b32.xlu0 %v2393, %s4327
    %v4329 = vpop.permute.xlu0 %4328
    %s4331 = sor.u32 256, 18
    %4332 = vbcast.lane.b32.xlu0 %v2405, %s4331
    %v4333 = vpop.permute.xlu0 %4332
    %s4335 = sor.u32 256, 26
    %4336 = vbcast.lane.b32.xlu0 %v2405, %s4335
    %v4337 = vpop.permute.xlu0 %4336
    %s4339 = sor.u32 256, 18
    %4340 = vbcast.lane.b32.xlu0 %v2417, %s4339
    %v4341 = vpop.permute.xlu0 %4340
    %s4343 = sor.u32 256, 26
    %4344 = vbcast.lane.b32.xlu0 %v2417, %s4343
    %v4345 = vpop.permute.xlu0 %4344
    %s4347 = sor.u32 256, 18
    %4348 = vbcast.lane.b32.xlu0 %v2429, %s4347
    %v4349 = vpop.permute.xlu0 %4348
    %s4351 = sor.u32 256, 26
    %4352 = vbcast.lane.b32.xlu0 %v2429, %s4351
    %v4353 = vpop.permute.xlu0 %4352
    %s4355 = sor.u32 256, 18
    %4356 = vbcast.lane.b32.xlu0 %v2441, %s4355
    %v4357 = vpop.permute.xlu0 %4356
    %s4359 = sor.u32 256, 26
    %4360 = vbcast.lane.b32.xlu0 %v2441, %s4359
    %v4361 = vpop.permute.xlu0 %4360
    %s4363 = sor.u32 256, 18
    %4364 = vbcast.lane.b32.xlu0 %v2453, %s4363
    %v4365 = vpop.permute.xlu0 %4364
    %s4367 = sor.u32 256, 26
    %4368 = vbcast.lane.b32.xlu0 %v2453, %s4367
    %v4369 = vpop.permute.xlu0 %4368
    %s4371 = sor.u32 256, 18
    %4372 = vbcast.lane.b32.xlu0 %v2465, %s4371
    %v4373 = vpop.permute.xlu0 %4372
    %s4375 = sor.u32 256, 26
    %4376 = vbcast.lane.b32.xlu0 %v2465, %s4375
    %v4377 = vpop.permute.xlu0 %4376
    %s4379 = sor.u32 256, 18
    %4380 = vbcast.lane.b32.xlu0 %v2477, %s4379
    %v4381 = vpop.permute.xlu0 %4380
    %s4383 = sor.u32 256, 26
    %4384 = vbcast.lane.b32.xlu0 %v2477, %s4383
    %v4385 = vpop.permute.xlu0 %4384
    %s4387 = sor.u32 256, 18
    %4388 = vbcast.lane.b32.xlu0 %v2489, %s4387
    %v4389 = vpop.permute.xlu0 %4388
    %s4391 = sor.u32 256, 26
    %4392 = vbcast.lane.b32.xlu0 %v2489, %s4391
    %v4393 = vpop.permute.xlu0 %4392
    %s4395 = sor.u32 256, 18
    %4396 = vbcast.lane.b32.xlu0 %v2501, %s4395
    %v4397 = vpop.permute.xlu0 %4396
    %s4399 = sor.u32 256, 26
    %4400 = vbcast.lane.b32.xlu0 %v2501, %s4399
    %v4401 = vpop.permute.xlu0 %4400
    %s4403 = sor.u32 256, 18
    %4404 = vbcast.lane.b32.xlu0 %v2513, %s4403
    %v4405 = vpop.permute.xlu0 %4404
    %s4407 = sor.u32 256, 26
    %4408 = vbcast.lane.b32.xlu0 %v2513, %s4407
    %v4409 = vpop.permute.xlu0 %4408
    %s4411 = sor.u32 256, 18
    %4412 = vbcast.lane.b32.xlu0 %v2525, %s4411
    %v4413 = vpop.permute.xlu0 %4412
    %s4415 = sor.u32 256, 26
    %4416 = vbcast.lane.b32.xlu0 %v2525, %s4415
    %v4417 = vpop.permute.xlu0 %4416
    %s4419 = sor.u32 256, 18
    %4420 = vbcast.lane.b32.xlu0 %v2537, %s4419
    %v4421 = vpop.permute.xlu0 %4420
    %s4423 = sor.u32 256, 26
    %4424 = vbcast.lane.b32.xlu0 %v2537, %s4423
    %v4425 = vpop.permute.xlu0 %4424
    %s4427 = sor.u32 256, 18
    %4428 = vbcast.lane.b32.xlu0 %v2549, %s4427
    %v4429 = vpop.permute.xlu0 %4428
    %s4431 = sor.u32 256, 26
    %4432 = vbcast.lane.b32.xlu0 %v2549, %s4431
    %v4433 = vpop.permute.xlu0 %4432
    %s4435 = sor.u32 256, 18
    %4436 = vbcast.lane.b32.xlu0 %v2561, %s4435
    %v4437 = vpop.permute.xlu0 %4436
    %s4439 = sor.u32 256, 26
    %4440 = vbcast.lane.b32.xlu0 %v2561, %s4439
    %v4441 = vpop.permute.xlu0 %4440
    %s4443 = sor.u32 256, 18
    %4444 = vbcast.lane.b32.xlu0 %v2573, %s4443
    %v4445 = vpop.permute.xlu0 %4444
    %s4447 = sor.u32 256, 26
    %4448 = vbcast.lane.b32.xlu0 %v2573, %s4447
    %v4449 = vpop.permute.xlu0 %4448
    %s4451 = sor.u32 256, 18
    %4452 = vbcast.lane.b32.xlu0 %v2585, %s4451
    %v4453 = vpop.permute.xlu0 %4452
    %s4455 = sor.u32 256, 26
    %4456 = vbcast.lane.b32.xlu0 %v2585, %s4455
    %v4457 = vpop.permute.xlu0 %4456
    %s4459 = sor.u32 256, 18
    %4460 = vbcast.lane.b32.xlu0 %v2597, %s4459
    %v4461 = vpop.permute.xlu0 %4460
    %s4463 = sor.u32 256, 26
    %4464 = vbcast.lane.b32.xlu0 %v2597, %s4463
    %v4465 = vpop.permute.xlu0 %4464
    %s4467 = sor.u32 256, 18
    %4468 = vbcast.lane.b32.xlu0 %v2609, %s4467
    %v4469 = vpop.permute.xlu0 %4468
    %s4471 = sor.u32 256, 26
    %4472 = vbcast.lane.b32.xlu0 %v2609, %s4471
    %v4473 = vpop.permute.xlu0 %4472
    %s4475 = sor.u32 256, 18
    %4476 = vbcast.lane.b32.xlu0 %v2621, %s4475
    %v4477 = vpop.permute.xlu0 %4476
    %s4479 = sor.u32 256, 26
    %4480 = vbcast.lane.b32.xlu0 %v2621, %s4479
    %v4481 = vpop.permute.xlu0 %4480
    %s4483 = sor.u32 256, 18
    %4484 = vbcast.lane.b32.xlu0 %v2633, %s4483
    %v4485 = vpop.permute.xlu0 %4484
    %s4487 = sor.u32 256, 26
    %4488 = vbcast.lane.b32.xlu0 %v2633, %s4487
    %v4489 = vpop.permute.xlu0 %4488
    %s4491 = sor.u32 256, 18
    %4492 = vbcast.lane.b32.xlu0 %v2645, %s4491
    %v4493 = vpop.permute.xlu0 %4492
    %s4495 = sor.u32 256, 26
    %4496 = vbcast.lane.b32.xlu0 %v2645, %s4495
    %v4497 = vpop.permute.xlu0 %4496
    %s4499 = sor.u32 256, 18
    %4500 = vbcast.lane.b32.xlu0 %v2657, %s4499
    %v4501 = vpop.permute.xlu0 %4500
    %s4503 = sor.u32 256, 26
    %4504 = vbcast.lane.b32.xlu0 %v2657, %s4503
    %v4505 = vpop.permute.xlu0 %4504
    %s4507 = sor.u32 256, 18
    %4508 = vbcast.lane.b32.xlu0 %v2669, %s4507
    %v4509 = vpop.permute.xlu0 %4508
    %s4511 = sor.u32 256, 26
    %4512 = vbcast.lane.b32.xlu0 %v2669, %s4511
    %v4513 = vpop.permute.xlu0 %4512
    %s4515 = sor.u32 256, 18
    %4516 = vbcast.lane.b32.xlu0 %v2681, %s4515
    %v4517 = vpop.permute.xlu0 %4516
    %s4519 = sor.u32 256, 26
    %4520 = vbcast.lane.b32.xlu0 %v2681, %s4519
    %v4521 = vpop.permute.xlu0 %4520
    %s4523 = sor.u32 256, 18
    %4524 = vbcast.lane.b32.xlu0 %v2693, %s4523
    %v4525 = vpop.permute.xlu0 %4524
    %s4527 = sor.u32 256, 26
    %4528 = vbcast.lane.b32.xlu0 %v2693, %s4527
    %v4529 = vpop.permute.xlu0 %4528
    %s4531 = sor.u32 256, 18
    %4532 = vbcast.lane.b32.xlu0 %v2705, %s4531
    %v4533 = vpop.permute.xlu0 %4532
    %s4535 = sor.u32 256, 26
    %4536 = vbcast.lane.b32.xlu0 %v2705, %s4535
    %v4537 = vpop.permute.xlu0 %4536
    %s4539 = sor.u32 256, 18
    %4540 = vbcast.lane.b32.xlu0 %v2717, %s4539
    %v4541 = vpop.permute.xlu0 %4540
    %s4543 = sor.u32 256, 26
    %4544 = vbcast.lane.b32.xlu0 %v2717, %s4543
    %v4545 = vpop.permute.xlu0 %4544
    %s4547 = sor.u32 256, 18
    %4548 = vbcast.lane.b32.xlu0 %v2729, %s4547
    %v4549 = vpop.permute.xlu0 %4548
    %s4551 = sor.u32 256, 26
    %4552 = vbcast.lane.b32.xlu0 %v2729, %s4551
    %v4553 = vpop.permute.xlu0 %4552
    %s4555 = sor.u32 256, 18
    %4556 = vbcast.lane.b32.xlu0 %v2741, %s4555
    %v4557 = vpop.permute.xlu0 %4556
    %s4559 = sor.u32 256, 26
    %4560 = vbcast.lane.b32.xlu0 %v2741, %s4559
    %v4561 = vpop.permute.xlu0 %4560
    %s4563 = sor.u32 256, 18
    %4564 = vbcast.lane.b32.xlu0 %v2753, %s4563
    %v4565 = vpop.permute.xlu0 %4564
    %s4567 = sor.u32 256, 26
    %4568 = vbcast.lane.b32.xlu0 %v2753, %s4567
    %v4569 = vpop.permute.xlu0 %4568
    %s4571 = sor.u32 256, 18
    %4572 = vbcast.lane.b32.xlu0 %v2765, %s4571
    %v4573 = vpop.permute.xlu0 %4572
    %s4575 = sor.u32 256, 26
    %4576 = vbcast.lane.b32.xlu0 %v2765, %s4575
    %v4577 = vpop.permute.xlu0 %4576
    %s4579 = sor.u32 256, 18
    %4580 = vbcast.lane.b32.xlu0 %v2777, %s4579
    %v4581 = vpop.permute.xlu0 %4580
    %s4583 = sor.u32 256, 26
    %4584 = vbcast.lane.b32.xlu0 %v2777, %s4583
    %v4585 = vpop.permute.xlu0 %4584
    %s4587 = sor.u32 256, 18
    %4588 = vbcast.lane.b32.xlu0 %v2789, %s4587
    %v4589 = vpop.permute.xlu0 %4588
    %s4591 = sor.u32 256, 26
    %4592 = vbcast.lane.b32.xlu0 %v2789, %s4591
    %v4593 = vpop.permute.xlu0 %4592
    %s4595 = sor.u32 256, 18
    %4596 = vbcast.lane.b32.xlu0 %v2801, %s4595
    %v4597 = vpop.permute.xlu0 %4596
    %s4599 = sor.u32 256, 26
    %4600 = vbcast.lane.b32.xlu0 %v2801, %s4599
    %v4601 = vpop.permute.xlu0 %4600
    %s4603 = sor.u32 256, 18
    %4604 = vbcast.lane.b32.xlu0 %v2813, %s4603
    %v4605 = vpop.permute.xlu0 %4604
    %s4607 = sor.u32 256, 26
    %4608 = vbcast.lane.b32.xlu0 %v2813, %s4607
    %v4609 = vpop.permute.xlu0 %4608
    %s4611 = sor.u32 256, 18
    %4612 = vbcast.lane.b32.xlu0 %v2825, %s4611
    %v4613 = vpop.permute.xlu0 %4612
    %s4615 = sor.u32 256, 26
    %4616 = vbcast.lane.b32.xlu0 %v2825, %s4615
    %v4617 = vpop.permute.xlu0 %4616
    %s4619 = sor.u32 256, 18
    %4620 = vbcast.lane.b32.xlu0 %v2837, %s4619
    %v4621 = vpop.permute.xlu0 %4620
    %s4623 = sor.u32 256, 26
    %4624 = vbcast.lane.b32.xlu0 %v2837, %s4623
    %v4625 = vpop.permute.xlu0 %4624
    %s4627 = sor.u32 256, 18
    %4628 = vbcast.lane.b32.xlu0 %v2849, %s4627
    %v4629 = vpop.permute.xlu0 %4628
    %s4631 = sor.u32 256, 26
    %4632 = vbcast.lane.b32.xlu0 %v2849, %s4631
    %v4633 = vpop.permute.xlu0 %4632
    %s4635 = sor.u32 256, 18
    %4636 = vbcast.lane.b32.xlu0 %v2861, %s4635
    %v4637 = vpop.permute.xlu0 %4636
    %s4639 = sor.u32 256, 26
    %4640 = vbcast.lane.b32.xlu0 %v2861, %s4639
    %v4641 = vpop.permute.xlu0 %4640
    %s4643 = sor.u32 256, 18
    %4644 = vbcast.lane.b32.xlu0 %v2873, %s4643
    %v4645 = vpop.permute.xlu0 %4644
    %s4647 = sor.u32 256, 26
    %4648 = vbcast.lane.b32.xlu0 %v2873, %s4647
    %v4649 = vpop.permute.xlu0 %4648
    %s4651 = sor.u32 256, 18
    %4652 = vbcast.lane.b32.xlu0 %v2885, %s4651
    %v4653 = vpop.permute.xlu0 %4652
    %s4655 = sor.u32 256, 26
    %4656 = vbcast.lane.b32.xlu0 %v2885, %s4655
    %v4657 = vpop.permute.xlu0 %4656
    %s4659 = sor.u32 256, 18
    %4660 = vbcast.lane.b32.xlu0 %v2897, %s4659
    %v4661 = vpop.permute.xlu0 %4660
    %s4663 = sor.u32 256, 26
    %4664 = vbcast.lane.b32.xlu0 %v2897, %s4663
    %v4665 = vpop.permute.xlu0 %4664
    %s4667 = sor.u32 256, 18
    %4668 = vbcast.lane.b32.xlu0 %v2909, %s4667
    %v4669 = vpop.permute.xlu0 %4668
    %s4671 = sor.u32 256, 26
    %4672 = vbcast.lane.b32.xlu0 %v2909, %s4671
    %v4673 = vpop.permute.xlu0 %4672
    %s4675 = sor.u32 256, 18
    %4676 = vbcast.lane.b32.xlu0 %v2921, %s4675
    %v4677 = vpop.permute.xlu0 %4676
    %s4679 = sor.u32 256, 26
    %4680 = vbcast.lane.b32.xlu0 %v2921, %s4679
    %v4681 = vpop.permute.xlu0 %4680
    %s4683 = sor.u32 256, 18
    %4684 = vbcast.lane.b32.xlu0 %v2933, %s4683
    %v4685 = vpop.permute.xlu0 %4684
    %s4687 = sor.u32 256, 26
    %4688 = vbcast.lane.b32.xlu0 %v2933, %s4687
    %v4689 = vpop.permute.xlu0 %4688
    %s4691 = sor.u32 256, 18
    %4692 = vbcast.lane.b32.xlu0 %v2945, %s4691
    %v4693 = vpop.permute.xlu0 %4692
    %s4695 = sor.u32 256, 26
    %4696 = vbcast.lane.b32.xlu0 %v2945, %s4695
    %v4697 = vpop.permute.xlu0 %4696
    %s4699 = sor.u32 256, 18
    %4700 = vbcast.lane.b32.xlu0 %v2957, %s4699
    %v4701 = vpop.permute.xlu0 %4700
    %s4703 = sor.u32 256, 26
    %4704 = vbcast.lane.b32.xlu0 %v2957, %s4703
    %v4705 = vpop.permute.xlu0 %4704
    %s4707 = sor.u32 256, 18
    %4708 = vbcast.lane.b32.xlu0 %v2969, %s4707
    %v4709 = vpop.permute.xlu0 %4708
    %s4711 = sor.u32 256, 26
    %4712 = vbcast.lane.b32.xlu0 %v2969, %s4711
    %v4713 = vpop.permute.xlu0 %4712
    %v4714 = vmul.f32 %v3962, %v4205
    %v4715 = vmul.f32 %v3963, %v4209
    %v4716 = vmul.f32 %v3994, %v4213
    %v4717 = vmul.f32 %v3995, %v4217
    %v4718 = vmul.f32 %v4026, %v4221
    %v4719 = vmul.f32 %v4027, %v4225
    %v4720 = vmul.f32 %v4058, %v4229
    %v4721 = vmul.f32 %v4059, %v4233
    %v4722 = vmul.f32 %v4090, %v4237
    %v4723 = vmul.f32 %v4091, %v4241
    %v4724 = vmul.f32 %v4122, %v4245
    %v4725 = vmul.f32 %v4123, %v4249
    %v4726 = vmul.f32 %v4154, %v4253
    %v4727 = vmul.f32 %v4155, %v4257
    %v4728 = vmul.f32 %v4186, %v4261
    %v4729 = vmul.f32 %v4187, %v4265
    %v4730 = vmul.f32 %v3964, %v4269
    %v4731 = vmul.f32 %v3965, %v4273
    %v4732 = vmul.f32 %v3996, %v4277
    %v4733 = vmul.f32 %v3997, %v4281
    %v4734 = vmul.f32 %v4028, %v4285
    %v4735 = vmul.f32 %v4029, %v4289
    %v4736 = vmul.f32 %v4060, %v4293
    %v4737 = vmul.f32 %v4061, %v4297
    %v4738 = vmul.f32 %v4092, %v4301
    %v4739 = vmul.f32 %v4093, %v4305
    %v4740 = vmul.f32 %v4124, %v4309
    %v4741 = vmul.f32 %v4125, %v4313
    %v4742 = vmul.f32 %v4156, %v4317
    %v4743 = vmul.f32 %v4157, %v4321
    %v4744 = vmul.f32 %v4188, %v4325
    %v4745 = vmul.f32 %v4189, %v4329
    %v4746 = vmul.f32 %v3966, %v4333
    %v4747 = vmul.f32 %v3967, %v4337
    %v4748 = vmul.f32 %v3998, %v4341
    %v4749 = vmul.f32 %v3999, %v4345
    %v4750 = vmul.f32 %v4030, %v4349
    %v4751 = vmul.f32 %v4031, %v4353
    %v4752 = vmul.f32 %v4062, %v4357
    %v4753 = vmul.f32 %v4063, %v4361
    %v4754 = vmul.f32 %v4094, %v4365
    %v4755 = vmul.f32 %v4095, %v4369
    %v4756 = vmul.f32 %v4126, %v4373
    %v4757 = vmul.f32 %v4127, %v4377
    %v4758 = vmul.f32 %v4158, %v4381
    %v4759 = vmul.f32 %v4159, %v4385
    %v4760 = vmul.f32 %v4190, %v4389
    %v4761 = vmul.f32 %v4191, %v4393
    %v4762 = vmul.f32 %v3968, %v4397
    %v4763 = vmul.f32 %v3969, %v4401
    %v4764 = vmul.f32 %v4000, %v4405
    %v4765 = vmul.f32 %v4001, %v4409
    %v4766 = vmul.f32 %v4032, %v4413
    %v4767 = vmul.f32 %v4033, %v4417
    %v4768 = vmul.f32 %v4064, %v4421
    %v4769 = vmul.f32 %v4065, %v4425
    %v4770 = vmul.f32 %v4096, %v4429
    %v4771 = vmul.f32 %v4097, %v4433
    %v4772 = vmul.f32 %v4128, %v4437
    %v4773 = vmul.f32 %v4129, %v4441
    %v4774 = vmul.f32 %v4160, %v4445
    %v4775 = vmul.f32 %v4161, %v4449
    %v4776 = vmul.f32 %v4192, %v4453
    %v4777 = vmul.f32 %v4193, %v4457
    %v4778 = vmul.f32 %v3970, %v4461
    %v4779 = vmul.f32 %v3971, %v4465
    %v4780 = vmul.f32 %v4002, %v4469
    %v4781 = vmul.f32 %v4003, %v4473
    %v4782 = vmul.f32 %v4034, %v4477
    %v4783 = vmul.f32 %v4035, %v4481
    %v4784 = vmul.f32 %v4066, %v4485
    %v4785 = vmul.f32 %v4067, %v4489
    %v4786 = vmul.f32 %v4098, %v4493
    %v4787 = vmul.f32 %v4099, %v4497
    %v4788 = vmul.f32 %v4130, %v4501
    %v4789 = vmul.f32 %v4131, %v4505
    %v4790 = vmul.f32 %v4162, %v4509
    %v4791 = vmul.f32 %v4163, %v4513
    %v4792 = vmul.f32 %v4194, %v4517
    %v4793 = vmul.f32 %v4195, %v4521
    %v4794 = vmul.f32 %v3972, %v4525
    %v4795 = vmul.f32 %v3973, %v4529
    %v4796 = vmul.f32 %v4004, %v4533
    %v4797 = vmul.f32 %v4005, %v4537
    %v4798 = vmul.f32 %v4036, %v4541
    %v4799 = vmul.f32 %v4037, %v4545
    %v4800 = vmul.f32 %v4068, %v4549
    %v4801 = vmul.f32 %v4069, %v4553
    %v4802 = vmul.f32 %v4100, %v4557
    %v4803 = vmul.f32 %v4101, %v4561
    %v4804 = vmul.f32 %v4132, %v4565
    %v4805 = vmul.f32 %v4133, %v4569
    %v4806 = vmul.f32 %v4164, %v4573
    %v4807 = vmul.f32 %v4165, %v4577
    %v4808 = vmul.f32 %v4196, %v4581
    %v4809 = vmul.f32 %v4197, %v4585
    %v4810 = vmul.f32 %v3974, %v4589
    %v4811 = vmul.f32 %v3975, %v4593
    %v4812 = vmul.f32 %v4006, %v4597
    %v4813 = vmul.f32 %v4007, %v4601
    %v4814 = vmul.f32 %v4038, %v4605
    %v4815 = vmul.f32 %v4039, %v4609
    %v4816 = vmul.f32 %v4070, %v4613
    %v4817 = vmul.f32 %v4071, %v4617
    %v4818 = vmul.f32 %v4102, %v4621
    %v4819 = vmul.f32 %v4103, %v4625
    %v4820 = vmul.f32 %v4134, %v4629
    %v4821 = vmul.f32 %v4135, %v4633
    %v4822 = vmul.f32 %v4166, %v4637
    %v4823 = vmul.f32 %v4167, %v4641
    %v4824 = vmul.f32 %v4198, %v4645
    %v4825 = vmul.f32 %v4199, %v4649
    %v4826 = vmul.f32 %v3976, %v4653
    %v4827 = vmul.f32 %v3977, %v4657
    %v4828 = vmul.f32 %v4008, %v4661
    %v4829 = vmul.f32 %v4009, %v4665
    %v4830 = vmul.f32 %v4040, %v4669
    %v4831 = vmul.f32 %v4041, %v4673
    %v4832 = vmul.f32 %v4072, %v4677
    %v4833 = vmul.f32 %v4073, %v4681
    %v4834 = vmul.f32 %v4104, %v4685
    %v4835 = vmul.f32 %v4105, %v4689
    %v4836 = vmul.f32 %v4136, %v4693
    %v4837 = vmul.f32 %v4137, %v4697
    %v4838 = vmul.f32 %v4168, %v4701
    %v4839 = vmul.f32 %v4169, %v4705
    %v4840 = vmul.f32 %v4200, %v4709
    %v4841 = vmul.f32 %v4201, %v4713
    %v4842 = vsel %vm301, %v4714, 0.0
    %v4843 = vsel %vm301, %v4715, 0.0
    %v4844 = vadd.f32 %v4842, %v4843
    %v4845 = vrot.slane %v4844, 4
    %v4846 = vadd.f32 %v4844, %v4845
    %v4847 = vrot.slane %v4846, 2
    %v4848 = vadd.f32 %v4846, %v4847
    %v4849 = vrot.slane %v4848, 1
    %v4850 = vadd.f32 %v4848, %v4849
    %v4851 = vsel %vm301, %v4716, 0.0
    %v4852 = vsel %vm301, %v4717, 0.0
    %v4853 = vadd.f32 %v4851, %v4852
    %v4854 = vrot.slane %v4853, 4
    %v4855 = vadd.f32 %v4853, %v4854
    %v4856 = vrot.slane %v4855, 2
    %v4857 = vadd.f32 %v4855, %v4856
    %v4858 = vrot.slane %v4857, 1
    %v4859 = vadd.f32 %v4857, %v4858
    %v4860 = vsel %vm301, %v4718, 0.0
    %v4861 = vsel %vm301, %v4719, 0.0
    %v4862 = vadd.f32 %v4860, %v4861
    %v4863 = vrot.slane %v4862, 4
    %v4864 = vadd.f32 %v4862, %v4863
    %v4865 = vrot.slane %v4864, 2
    %v4866 = vadd.f32 %v4864, %v4865
    %v4867 = vrot.slane %v4866, 1
    %v4868 = vadd.f32 %v4866, %v4867
    %v4869 = vsel %vm301, %v4720, 0.0
    %v4870 = vsel %vm301, %v4721, 0.0
    %v4871 = vadd.f32 %v4869, %v4870
    %v4872 = vrot.slane %v4871, 4
    %v4873 = vadd.f32 %v4871, %v4872
    %v4874 = vrot.slane %v4873, 2
    %v4875 = vadd.f32 %v4873, %v4874
    %v4876 = vrot.slane %v4875, 1
    %v4877 = vadd.f32 %v4875, %v4876
    %v4878 = vsel %vm301, %v4722, 0.0
    %v4879 = vsel %vm301, %v4723, 0.0
    %v4880 = vadd.f32 %v4878, %v4879
    %v4881 = vrot.slane %v4880, 4
    %v4882 = vadd.f32 %v4880, %v4881
    %v4883 = vrot.slane %v4882, 2
    %v4884 = vadd.f32 %v4882, %v4883
    %v4885 = vrot.slane %v4884, 1
    %v4886 = vadd.f32 %v4884, %v4885
    %v4887 = vsel %vm301, %v4724, 0.0
    %v4888 = vsel %vm301, %v4725, 0.0
    %v4889 = vadd.f32 %v4887, %v4888
    %v4890 = vrot.slane %v4889, 4
    %v4891 = vadd.f32 %v4889, %v4890
    %v4892 = vrot.slane %v4891, 2
    %v4893 = vadd.f32 %v4891, %v4892
    %v4894 = vrot.slane %v4893, 1
    %v4895 = vadd.f32 %v4893, %v4894
    %v4896 = vsel %vm301, %v4726, 0.0
    %v4897 = vsel %vm301, %v4727, 0.0
    %v4898 = vadd.f32 %v4896, %v4897
    %v4899 = vrot.slane %v4898, 4
    %v4900 = vadd.f32 %v4898, %v4899
    %v4901 = vrot.slane %v4900, 2
    %v4902 = vadd.f32 %v4900, %v4901
    %v4903 = vrot.slane %v4902, 1
    %v4904 = vadd.f32 %v4902, %v4903
    %v4905 = vsel %vm301, %v4728, 0.0
    %v4906 = vsel %vm301, %v4729, 0.0
    %v4907 = vadd.f32 %v4905, %v4906
    %v4908 = vrot.slane %v4907, 4
    %v4909 = vadd.f32 %v4907, %v4908
    %v4910 = vrot.slane %v4909, 2
    %v4911 = vadd.f32 %v4909, %v4910
    %v4912 = vrot.slane %v4911, 1
    %v4913 = vadd.f32 %v4911, %v4912
    %v4914 = vsel %vm301, %v4730, 0.0
    %v4915 = vsel %vm301, %v4731, 0.0
    %v4916 = vadd.f32 %v4914, %v4915
    %v4917 = vrot.slane %v4916, 4
    %v4918 = vadd.f32 %v4916, %v4917
    %v4919 = vrot.slane %v4918, 2
    %v4920 = vadd.f32 %v4918, %v4919
    %v4921 = vrot.slane %v4920, 1
    %v4922 = vadd.f32 %v4920, %v4921
    %v4923 = vsel %vm301, %v4732, 0.0
    %v4924 = vsel %vm301, %v4733, 0.0
    %v4925 = vadd.f32 %v4923, %v4924
    %v4926 = vrot.slane %v4925, 4
    %v4927 = vadd.f32 %v4925, %v4926
    %v4928 = vrot.slane %v4927, 2
    %v4929 = vadd.f32 %v4927, %v4928
    %v4930 = vrot.slane %v4929, 1
    %v4931 = vadd.f32 %v4929, %v4930
    %v4932 = vsel %vm301, %v4734, 0.0
    %v4933 = vsel %vm301, %v4735, 0.0
    %v4934 = vadd.f32 %v4932, %v4933
    %v4935 = vrot.slane %v4934, 4
    %v4936 = vadd.f32 %v4934, %v4935
    %v4937 = vrot.slane %v4936, 2
    %v4938 = vadd.f32 %v4936, %v4937
    %v4939 = vrot.slane %v4938, 1
    %v4940 = vadd.f32 %v4938, %v4939
    %v4941 = vsel %vm301, %v4736, 0.0
    %v4942 = vsel %vm301, %v4737, 0.0
    %v4943 = vadd.f32 %v4941, %v4942
    %v4944 = vrot.slane %v4943, 4
    %v4945 = vadd.f32 %v4943, %v4944
    %v4946 = vrot.slane %v4945, 2
    %v4947 = vadd.f32 %v4945, %v4946
    %v4948 = vrot.slane %v4947, 1
    %v4949 = vadd.f32 %v4947, %v4948
    %v4950 = vsel %vm301, %v4738, 0.0
    %v4951 = vsel %vm301, %v4739, 0.0
    %v4952 = vadd.f32 %v4950, %v4951
    %v4953 = vrot.slane %v4952, 4
    %v4954 = vadd.f32 %v4952, %v4953
    %v4955 = vrot.slane %v4954, 2
    %v4956 = vadd.f32 %v4954, %v4955
    %v4957 = vrot.slane %v4956, 1
    %v4958 = vadd.f32 %v4956, %v4957
    %v4959 = vsel %vm301, %v4740, 0.0
    %v4960 = vsel %vm301, %v4741, 0.0
    %v4961 = vadd.f32 %v4959, %v4960
    %v4962 = vrot.slane %v4961, 4
    %v4963 = vadd.f32 %v4961, %v4962
    %v4964 = vrot.slane %v4963, 2
    %v4965 = vadd.f32 %v4963, %v4964
    %v4966 = vrot.slane %v4965, 1
    %v4967 = vadd.f32 %v4965, %v4966
    %v4968 = vsel %vm301, %v4742, 0.0
    %v4969 = vsel %vm301, %v4743, 0.0
    %v4970 = vadd.f32 %v4968, %v4969
    %v4971 = vrot.slane %v4970, 4
    %v4972 = vadd.f32 %v4970, %v4971
    %v4973 = vrot.slane %v4972, 2
    %v4974 = vadd.f32 %v4972, %v4973
    %v4975 = vrot.slane %v4974, 1
    %v4976 = vadd.f32 %v4974, %v4975
    %v4977 = vsel %vm301, %v4744, 0.0
    %v4978 = vsel %vm301, %v4745, 0.0
    %v4979 = vadd.f32 %v4977, %v4978
    %v4980 = vrot.slane %v4979, 4
    %v4981 = vadd.f32 %v4979, %v4980
    %v4982 = vrot.slane %v4981, 2
    %v4983 = vadd.f32 %v4981, %v4982
    %v4984 = vrot.slane %v4983, 1
    %v4985 = vadd.f32 %v4983, %v4984
    %v4986 = vsel %vm301, %v4746, 0.0
    %v4987 = vsel %vm301, %v4747, 0.0
    %v4988 = vadd.f32 %v4986, %v4987
    %v4989 = vrot.slane %v4988, 4
    %v4990 = vadd.f32 %v4988, %v4989
    %v4991 = vrot.slane %v4990, 2
    %v4992 = vadd.f32 %v4990, %v4991
    %v4993 = vrot.slane %v4992, 1
    %v4994 = vadd.f32 %v4992, %v4993
    %v4995 = vsel %vm301, %v4748, 0.0
    %v4996 = vsel %vm301, %v4749, 0.0
    %v4997 = vadd.f32 %v4995, %v4996
    %v4998 = vrot.slane %v4997, 4
    %v4999 = vadd.f32 %v4997, %v4998
    %v5000 = vrot.slane %v4999, 2
    %v5001 = vadd.f32 %v4999, %v5000
    %v5002 = vrot.slane %v5001, 1
    %v5003 = vadd.f32 %v5001, %v5002
    %v5004 = vsel %vm301, %v4750, 0.0
    %v5005 = vsel %vm301, %v4751, 0.0
    %v5006 = vadd.f32 %v5004, %v5005
    %v5007 = vrot.slane %v5006, 4
    %v5008 = vadd.f32 %v5006, %v5007
    %v5009 = vrot.slane %v5008, 2
    %v5010 = vadd.f32 %v5008, %v5009
    %v5011 = vrot.slane %v5010, 1
    %v5012 = vadd.f32 %v5010, %v5011
    %v5013 = vsel %vm301, %v4752, 0.0
    %v5014 = vsel %vm301, %v4753, 0.0
    %v5015 = vadd.f32 %v5013, %v5014
    %v5016 = vrot.slane %v5015, 4
    %v5017 = vadd.f32 %v5015, %v5016
    %v5018 = vrot.slane %v5017, 2
    %v5019 = vadd.f32 %v5017, %v5018
    %v5020 = vrot.slane %v5019, 1
    %v5021 = vadd.f32 %v5019, %v5020
    %v5022 = vsel %vm301, %v4754, 0.0
    %v5023 = vsel %vm301, %v4755, 0.0
    %v5024 = vadd.f32 %v5022, %v5023
    %v5025 = vrot.slane %v5024, 4
    %v5026 = vadd.f32 %v5024, %v5025
    %v5027 = vrot.slane %v5026, 2
    %v5028 = vadd.f32 %v5026, %v5027
    %v5029 = vrot.slane %v5028, 1
    %v5030 = vadd.f32 %v5028, %v5029
    %v5031 = vsel %vm301, %v4756, 0.0
    %v5032 = vsel %vm301, %v4757, 0.0
    %v5033 = vadd.f32 %v5031, %v5032
    %v5034 = vrot.slane %v5033, 4
    %v5035 = vadd.f32 %v5033, %v5034
    %v5036 = vrot.slane %v5035, 2
    %v5037 = vadd.f32 %v5035, %v5036
    %v5038 = vrot.slane %v5037, 1
    %v5039 = vadd.f32 %v5037, %v5038
    %v5040 = vsel %vm301, %v4758, 0.0
    %v5041 = vsel %vm301, %v4759, 0.0
    %v5042 = vadd.f32 %v5040, %v5041
    %v5043 = vrot.slane %v5042, 4
    %v5044 = vadd.f32 %v5042, %v5043
    %v5045 = vrot.slane %v5044, 2
    %v5046 = vadd.f32 %v5044, %v5045
    %v5047 = vrot.slane %v5046, 1
    %v5048 = vadd.f32 %v5046, %v5047
    %v5049 = vsel %vm301, %v4760, 0.0
    %v5050 = vsel %vm301, %v4761, 0.0
    %v5051 = vadd.f32 %v5049, %v5050
    %v5052 = vrot.slane %v5051, 4
    %v5053 = vadd.f32 %v5051, %v5052
    %v5054 = vrot.slane %v5053, 2
    %v5055 = vadd.f32 %v5053, %v5054
    %v5056 = vrot.slane %v5055, 1
    %v5057 = vadd.f32 %v5055, %v5056
    %v5058 = vsel %vm301, %v4762, 0.0
    %v5059 = vsel %vm301, %v4763, 0.0
    %v5060 = vadd.f32 %v5058, %v5059
    %v5061 = vrot.slane %v5060, 4
    %v5062 = vadd.f32 %v5060, %v5061
    %v5063 = vrot.slane %v5062, 2
    %v5064 = vadd.f32 %v5062, %v5063
    %v5065 = vrot.slane %v5064, 1
    %v5066 = vadd.f32 %v5064, %v5065
    %v5067 = vsel %vm301, %v4764, 0.0
    %v5068 = vsel %vm301, %v4765, 0.0
    %v5069 = vadd.f32 %v5067, %v5068
    %v5070 = vrot.slane %v5069, 4
    %v5071 = vadd.f32 %v5069, %v5070
    %v5072 = vrot.slane %v5071, 2
    %v5073 = vadd.f32 %v5071, %v5072
    %v5074 = vrot.slane %v5073, 1
    %v5075 = vadd.f32 %v5073, %v5074
    %v5076 = vsel %vm301, %v4766, 0.0
    %v5077 = vsel %vm301, %v4767, 0.0
    %v5078 = vadd.f32 %v5076, %v5077
    %v5079 = vrot.slane %v5078, 4
    %v5080 = vadd.f32 %v5078, %v5079
    %v5081 = vrot.slane %v5080, 2
    %v5082 = vadd.f32 %v5080, %v5081
    %v5083 = vrot.slane %v5082, 1
    %v5084 = vadd.f32 %v5082, %v5083
    %v5085 = vsel %vm301, %v4768, 0.0
    %v5086 = vsel %vm301, %v4769, 0.0
    %v5087 = vadd.f32 %v5085, %v5086
    %v5088 = vrot.slane %v5087, 4
    %v5089 = vadd.f32 %v5087, %v5088
    %v5090 = vrot.slane %v5089, 2
    %v5091 = vadd.f32 %v5089, %v5090
    %v5092 = vrot.slane %v5091, 1
    %v5093 = vadd.f32 %v5091, %v5092
    %v5094 = vsel %vm301, %v4770, 0.0
    %v5095 = vsel %vm301, %v4771, 0.0
    %v5096 = vadd.f32 %v5094, %v5095
    %v5097 = vrot.slane %v5096, 4
    %v5098 = vadd.f32 %v5096, %v5097
    %v5099 = vrot.slane %v5098, 2
    %v5100 = vadd.f32 %v5098, %v5099
    %v5101 = vrot.slane %v5100, 1
    %v5102 = vadd.f32 %v5100, %v5101
    %v5103 = vsel %vm301, %v4772, 0.0
    %v5104 = vsel %vm301, %v4773, 0.0
    %v5105 = vadd.f32 %v5103, %v5104
    %v5106 = vrot.slane %v5105, 4
    %v5107 = vadd.f32 %v5105, %v5106
    %v5108 = vrot.slane %v5107, 2
    %v5109 = vadd.f32 %v5107, %v5108
    %v5110 = vrot.slane %v5109, 1
    %v5111 = vadd.f32 %v5109, %v5110
    %v5112 = vsel %vm301, %v4774, 0.0
    %v5113 = vsel %vm301, %v4775, 0.0
    %v5114 = vadd.f32 %v5112, %v5113
    %v5115 = vrot.slane %v5114, 4
    %v5116 = vadd.f32 %v5114, %v5115
    %v5117 = vrot.slane %v5116, 2
    %v5118 = vadd.f32 %v5116, %v5117
    %v5119 = vrot.slane %v5118, 1
    %v5120 = vadd.f32 %v5118, %v5119
    %v5121 = vsel %vm301, %v4776, 0.0
    %v5122 = vsel %vm301, %v4777, 0.0
    %v5123 = vadd.f32 %v5121, %v5122
    %v5124 = vrot.slane %v5123, 4
    %v5125 = vadd.f32 %v5123, %v5124
    %v5126 = vrot.slane %v5125, 2
    %v5127 = vadd.f32 %v5125, %v5126
    %v5128 = vrot.slane %v5127, 1
    %v5129 = vadd.f32 %v5127, %v5128
    %v5130 = vsel %vm301, %v4778, 0.0
    %v5131 = vsel %vm301, %v4779, 0.0
    %v5132 = vadd.f32 %v5130, %v5131
    %v5133 = vrot.slane %v5132, 4
    %v5134 = vadd.f32 %v5132, %v5133
    %v5135 = vrot.slane %v5134, 2
    %v5136 = vadd.f32 %v5134, %v5135
    %v5137 = vrot.slane %v5136, 1
    %v5138 = vadd.f32 %v5136, %v5137
    %v5139 = vsel %vm301, %v4780, 0.0
    %v5140 = vsel %vm301, %v4781, 0.0
    %v5141 = vadd.f32 %v5139, %v5140
    %v5142 = vrot.slane %v5141, 4
    %v5143 = vadd.f32 %v5141, %v5142
    %v5144 = vrot.slane %v5143, 2
    %v5145 = vadd.f32 %v5143, %v5144
    %v5146 = vrot.slane %v5145, 1
    %v5147 = vadd.f32 %v5145, %v5146
    %v5148 = vsel %vm301, %v4782, 0.0
    %v5149 = vsel %vm301, %v4783, 0.0
    %v5150 = vadd.f32 %v5148, %v5149
    %v5151 = vrot.slane %v5150, 4
    %v5152 = vadd.f32 %v5150, %v5151
    %v5153 = vrot.slane %v5152, 2
    %v5154 = vadd.f32 %v5152, %v5153
    %v5155 = vrot.slane %v5154, 1
    %v5156 = vadd.f32 %v5154, %v5155
    %v5157 = vsel %vm301, %v4784, 0.0
    %v5158 = vsel %vm301, %v4785, 0.0
    %v5159 = vadd.f32 %v5157, %v5158
    %v5160 = vrot.slane %v5159, 4
    %v5161 = vadd.f32 %v5159, %v5160
    %v5162 = vrot.slane %v5161, 2
    %v5163 = vadd.f32 %v5161, %v5162
    %v5164 = vrot.slane %v5163, 1
    %v5165 = vadd.f32 %v5163, %v5164
    %v5166 = vsel %vm301, %v4786, 0.0
    %v5167 = vsel %vm301, %v4787, 0.0
    %v5168 = vadd.f32 %v5166, %v5167
    %v5169 = vrot.slane %v5168, 4
    %v5170 = vadd.f32 %v5168, %v5169
    %v5171 = vrot.slane %v5170, 2
    %v5172 = vadd.f32 %v5170, %v5171
    %v5173 = vrot.slane %v5172, 1
    %v5174 = vadd.f32 %v5172, %v5173
    %v5175 = vsel %vm301, %v4788, 0.0
    %v5176 = vsel %vm301, %v4789, 0.0
    %v5177 = vadd.f32 %v5175, %v5176
    %v5178 = vrot.slane %v5177, 4
    %v5179 = vadd.f32 %v5177, %v5178
    %v5180 = vrot.slane %v5179, 2
    %v5181 = vadd.f32 %v5179, %v5180
    %v5182 = vrot.slane %v5181, 1
    %v5183 = vadd.f32 %v5181, %v5182
    %v5184 = vsel %vm301, %v4790, 0.0
    %v5185 = vsel %vm301, %v4791, 0.0
    %v5186 = vadd.f32 %v5184, %v5185
    %v5187 = vrot.slane %v5186, 4
    %v5188 = vadd.f32 %v5186, %v5187
    %v5189 = vrot.slane %v5188, 2
    %v5190 = vadd.f32 %v5188, %v5189
    %v5191 = vrot.slane %v5190, 1
    %v5192 = vadd.f32 %v5190, %v5191
    %v5193 = vsel %vm301, %v4792, 0.0
    %v5194 = vsel %vm301, %v4793, 0.0
    %v5195 = vadd.f32 %v5193, %v5194
    %v5196 = vrot.slane %v5195, 4
    %v5197 = vadd.f32 %v5195, %v5196
    %v5198 = vrot.slane %v5197, 2
    %v5199 = vadd.f32 %v5197, %v5198
    %v5200 = vrot.slane %v5199, 1
    %v5201 = vadd.f32 %v5199, %v5200
    %v5202 = vsel %vm301, %v4794, 0.0
    %v5203 = vsel %vm301, %v4795, 0.0
    %v5204 = vadd.f32 %v5202, %v5203
    %v5205 = vrot.slane %v5204, 4
    %v5206 = vadd.f32 %v5204, %v5205
    %v5207 = vrot.slane %v5206, 2
    %v5208 = vadd.f32 %v5206, %v5207
    %v5209 = vrot.slane %v5208, 1
    %v5210 = vadd.f32 %v5208, %v5209
    %v5211 = vsel %vm301, %v4796, 0.0
    %v5212 = vsel %vm301, %v4797, 0.0
    %v5213 = vadd.f32 %v5211, %v5212
    %v5214 = vrot.slane %v5213, 4
    %v5215 = vadd.f32 %v5213, %v5214
    %v5216 = vrot.slane %v5215, 2
    %v5217 = vadd.f32 %v5215, %v5216
    %v5218 = vrot.slane %v5217, 1
    %v5219 = vadd.f32 %v5217, %v5218
    %v5220 = vsel %vm301, %v4798, 0.0
    %v5221 = vsel %vm301, %v4799, 0.0
    %v5222 = vadd.f32 %v5220, %v5221
    %v5223 = vrot.slane %v5222, 4
    %v5224 = vadd.f32 %v5222, %v5223
    %v5225 = vrot.slane %v5224, 2
    %v5226 = vadd.f32 %v5224, %v5225
    %v5227 = vrot.slane %v5226, 1
    %v5228 = vadd.f32 %v5226, %v5227
    %v5229 = vsel %vm301, %v4800, 0.0
    %v5230 = vsel %vm301, %v4801, 0.0
    %v5231 = vadd.f32 %v5229, %v5230
    %v5232 = vrot.slane %v5231, 4
    %v5233 = vadd.f32 %v5231, %v5232
    %v5234 = vrot.slane %v5233, 2
    %v5235 = vadd.f32 %v5233, %v5234
    %v5236 = vrot.slane %v5235, 1
    %v5237 = vadd.f32 %v5235, %v5236
    %v5238 = vsel %vm301, %v4802, 0.0
    %v5239 = vsel %vm301, %v4803, 0.0
    %v5240 = vadd.f32 %v5238, %v5239
    %v5241 = vrot.slane %v5240, 4
    %v5242 = vadd.f32 %v5240, %v5241
    %v5243 = vrot.slane %v5242, 2
    %v5244 = vadd.f32 %v5242, %v5243
    %v5245 = vrot.slane %v5244, 1
    %v5246 = vadd.f32 %v5244, %v5245
    %v5247 = vsel %vm301, %v4804, 0.0
    %v5248 = vsel %vm301, %v4805, 0.0
    %v5249 = vadd.f32 %v5247, %v5248
    %v5250 = vrot.slane %v5249, 4
    %v5251 = vadd.f32 %v5249, %v5250
    %v5252 = vrot.slane %v5251, 2
    %v5253 = vadd.f32 %v5251, %v5252
    %v5254 = vrot.slane %v5253, 1
    %v5255 = vadd.f32 %v5253, %v5254
    %v5256 = vsel %vm301, %v4806, 0.0
    %v5257 = vsel %vm301, %v4807, 0.0
    %v5258 = vadd.f32 %v5256, %v5257
    %v5259 = vrot.slane %v5258, 4
    %v5260 = vadd.f32 %v5258, %v5259
    %v5261 = vrot.slane %v5260, 2
    %v5262 = vadd.f32 %v5260, %v5261
    %v5263 = vrot.slane %v5262, 1
    %v5264 = vadd.f32 %v5262, %v5263
    %v5265 = vsel %vm301, %v4808, 0.0
    %v5266 = vsel %vm301, %v4809, 0.0
    %v5267 = vadd.f32 %v5265, %v5266
    %v5268 = vrot.slane %v5267, 4
    %v5269 = vadd.f32 %v5267, %v5268
    %v5270 = vrot.slane %v5269, 2
    %v5271 = vadd.f32 %v5269, %v5270
    %v5272 = vrot.slane %v5271, 1
    %v5273 = vadd.f32 %v5271, %v5272
    %v5274 = vsel %vm301, %v4810, 0.0
    %v5275 = vsel %vm301, %v4811, 0.0
    %v5276 = vadd.f32 %v5274, %v5275
    %v5277 = vrot.slane %v5276, 4
    %v5278 = vadd.f32 %v5276, %v5277
    %v5279 = vrot.slane %v5278, 2
    %v5280 = vadd.f32 %v5278, %v5279
    %v5281 = vrot.slane %v5280, 1
    %v5282 = vadd.f32 %v5280, %v5281
    %v5283 = vsel %vm301, %v4812, 0.0
    %v5284 = vsel %vm301, %v4813, 0.0
    %v5285 = vadd.f32 %v5283, %v5284
    %v5286 = vrot.slane %v5285, 4
    %v5287 = vadd.f32 %v5285, %v5286
    %v5288 = vrot.slane %v5287, 2
    %v5289 = vadd.f32 %v5287, %v5288
    %v5290 = vrot.slane %v5289, 1
    %v5291 = vadd.f32 %v5289, %v5290
    %v5292 = vsel %vm301, %v4814, 0.0
    %v5293 = vsel %vm301, %v4815, 0.0
    %v5294 = vadd.f32 %v5292, %v5293
    %v5295 = vrot.slane %v5294, 4
    %v5296 = vadd.f32 %v5294, %v5295
    %v5297 = vrot.slane %v5296, 2
    %v5298 = vadd.f32 %v5296, %v5297
    %v5299 = vrot.slane %v5298, 1
    %v5300 = vadd.f32 %v5298, %v5299
    %v5301 = vsel %vm301, %v4816, 0.0
    %v5302 = vsel %vm301, %v4817, 0.0
    %v5303 = vadd.f32 %v5301, %v5302
    %v5304 = vrot.slane %v5303, 4
    %v5305 = vadd.f32 %v5303, %v5304
    %v5306 = vrot.slane %v5305, 2
    %v5307 = vadd.f32 %v5305, %v5306
    %v5308 = vrot.slane %v5307, 1
    %v5309 = vadd.f32 %v5307, %v5308
    %v5310 = vsel %vm301, %v4818, 0.0
    %v5311 = vsel %vm301, %v4819, 0.0
    %v5312 = vadd.f32 %v5310, %v5311
    %v5313 = vrot.slane %v5312, 4
    %v5314 = vadd.f32 %v5312, %v5313
    %v5315 = vrot.slane %v5314, 2
    %v5316 = vadd.f32 %v5314, %v5315
    %v5317 = vrot.slane %v5316, 1
    %v5318 = vadd.f32 %v5316, %v5317
    %v5319 = vsel %vm301, %v4820, 0.0
    %v5320 = vsel %vm301, %v4821, 0.0
    %v5321 = vadd.f32 %v5319, %v5320
    %v5322 = vrot.slane %v5321, 4
    %v5323 = vadd.f32 %v5321, %v5322
    %v5324 = vrot.slane %v5323, 2
    %v5325 = vadd.f32 %v5323, %v5324
    %v5326 = vrot.slane %v5325, 1
    %v5327 = vadd.f32 %v5325, %v5326
    %v5328 = vsel %vm301, %v4822, 0.0
    %v5329 = vsel %vm301, %v4823, 0.0
    %v5330 = vadd.f32 %v5328, %v5329
    %v5331 = vrot.slane %v5330, 4
    %v5332 = vadd.f32 %v5330, %v5331
    %v5333 = vrot.slane %v5332, 2
    %v5334 = vadd.f32 %v5332, %v5333
    %v5335 = vrot.slane %v5334, 1
    %v5336 = vadd.f32 %v5334, %v5335
    %v5337 = vsel %vm301, %v4824, 0.0
    %v5338 = vsel %vm301, %v4825, 0.0
    %v5339 = vadd.f32 %v5337, %v5338
    %v5340 = vrot.slane %v5339, 4
    %v5341 = vadd.f32 %v5339, %v5340
    %v5342 = vrot.slane %v5341, 2
    %v5343 = vadd.f32 %v5341, %v5342
    %v5344 = vrot.slane %v5343, 1
    %v5345 = vadd.f32 %v5343, %v5344
    %v5346 = vsel %vm301, %v4826, 0.0
    %v5347 = vsel %vm301, %v4827, 0.0
    %v5348 = vadd.f32 %v5346, %v5347
    %v5349 = vrot.slane %v5348, 4
    %v5350 = vadd.f32 %v5348, %v5349
    %v5351 = vrot.slane %v5350, 2
    %v5352 = vadd.f32 %v5350, %v5351
    %v5353 = vrot.slane %v5352, 1
    %v5354 = vadd.f32 %v5352, %v5353
    %v5355 = vsel %vm301, %v4828, 0.0
    %v5356 = vsel %vm301, %v4829, 0.0
    %v5357 = vadd.f32 %v5355, %v5356
    %v5358 = vrot.slane %v5357, 4
    %v5359 = vadd.f32 %v5357, %v5358
    %v5360 = vrot.slane %v5359, 2
    %v5361 = vadd.f32 %v5359, %v5360
    %v5362 = vrot.slane %v5361, 1
    %v5363 = vadd.f32 %v5361, %v5362
    %v5364 = vsel %vm301, %v4830, 0.0
    %v5365 = vsel %vm301, %v4831, 0.0
    %v5366 = vadd.f32 %v5364, %v5365
    %v5367 = vrot.slane %v5366, 4
    %v5368 = vadd.f32 %v5366, %v5367
    %v5369 = vrot.slane %v5368, 2
    %v5370 = vadd.f32 %v5368, %v5369
    %v5371 = vrot.slane %v5370, 1
    %v5372 = vadd.f32 %v5370, %v5371
    %v5373 = vsel %vm301, %v4832, 0.0
    %v5374 = vsel %vm301, %v4833, 0.0
    %v5375 = vadd.f32 %v5373, %v5374
    %v5376 = vrot.slane %v5375, 4
    %v5377 = vadd.f32 %v5375, %v5376
    %v5378 = vrot.slane %v5377, 2
    %v5379 = vadd.f32 %v5377, %v5378
    %v5380 = vrot.slane %v5379, 1
    %v5381 = vadd.f32 %v5379, %v5380
    %v5382 = vsel %vm301, %v4834, 0.0
    %v5383 = vsel %vm301, %v4835, 0.0
    %v5384 = vadd.f32 %v5382, %v5383
    %v5385 = vrot.slane %v5384, 4
    %v5386 = vadd.f32 %v5384, %v5385
    %v5387 = vrot.slane %v5386, 2
    %v5388 = vadd.f32 %v5386, %v5387
    %v5389 = vrot.slane %v5388, 1
    %v5390 = vadd.f32 %v5388, %v5389
    %v5391 = vsel %vm301, %v4836, 0.0
    %v5392 = vsel %vm301, %v4837, 0.0
    %v5393 = vadd.f32 %v5391, %v5392
    %v5394 = vrot.slane %v5393, 4
    %v5395 = vadd.f32 %v5393, %v5394
    %v5396 = vrot.slane %v5395, 2
    %v5397 = vadd.f32 %v5395, %v5396
    %v5398 = vrot.slane %v5397, 1
    %v5399 = vadd.f32 %v5397, %v5398
    %v5400 = vsel %vm301, %v4838, 0.0
    %v5401 = vsel %vm301, %v4839, 0.0
    %v5402 = vadd.f32 %v5400, %v5401
    %v5403 = vrot.slane %v5402, 4
    %v5404 = vadd.f32 %v5402, %v5403
    %v5405 = vrot.slane %v5404, 2
    %v5406 = vadd.f32 %v5404, %v5405
    %v5407 = vrot.slane %v5406, 1
    %v5408 = vadd.f32 %v5406, %v5407
    %v5409 = vsel %vm301, %v4840, 0.0
    %v5410 = vsel %vm301, %v4841, 0.0
    %v5411 = vadd.f32 %v5409, %v5410
    %v5412 = vrot.slane %v5411, 4
    %v5413 = vadd.f32 %v5411, %v5412
    %v5414 = vrot.slane %v5413, 2
    %v5415 = vadd.f32 %v5413, %v5414
    %v5416 = vrot.slane %v5415, 1
    %v5417 = vadd.f32 %v5415, %v5416
    %v5418 = vlaneseq
    %v5419 = vshrl.u32 %v5418, 7
    %v5420 = vsub.s32 2, %v5419
    %v5421 = vrot.slane %v300, %v5420
    %v5422 = vmul.f32 %v5421, %v767
    %v5423 = vmul.f32 %v5421, %v768
    %v5424 = vmul.f32 %v5421, %v769
    %v5425 = vmul.f32 %v5421, %v770
    %v5426 = vmul.f32 %v5421, %v771
    %v5427 = vmul.f32 %v5421, %v772
    %v5428 = vmul.f32 %v5421, %v773
    %v5429 = vmul.f32 %v5421, %v774
    %v5438 = vrot.slane %v5422, 1
    %v5439 = vrot.slane %v5422, 2
    %v5440 = vrot.slane %v5422, 3
    %v5441 = vrot.slane %v5422, 4
    %v5442 = vrot.slane %v5422, 5
    %v5443 = vrot.slane %v5422, 6
    %v5444 = vrot.slane %v5422, 7
    %v5445 = vrot.slane %v5423, 1
    %v5446 = vrot.slane %v5423, 2
    %v5447 = vrot.slane %v5423, 3
    %v5448 = vrot.slane %v5423, 4
    %v5449 = vrot.slane %v5423, 5
    %v5450 = vrot.slane %v5423, 6
    %v5451 = vrot.slane %v5423, 7
    %v5452 = vrot.slane %v5424, 1
    %v5453 = vrot.slane %v5424, 2
    %v5454 = vrot.slane %v5424, 3
    %v5455 = vrot.slane %v5424, 4
    %v5456 = vrot.slane %v5424, 5
    %v5457 = vrot.slane %v5424, 6
    %v5458 = vrot.slane %v5424, 7
    %v5459 = vrot.slane %v5425, 1
    %v5460 = vrot.slane %v5425, 2
    %v5461 = vrot.slane %v5425, 3
    %v5462 = vrot.slane %v5425, 4
    %v5463 = vrot.slane %v5425, 5
    %v5464 = vrot.slane %v5425, 6
    %v5465 = vrot.slane %v5425, 7
    %v5466 = vrot.slane %v5426, 1
    %v5467 = vrot.slane %v5426, 2
    %v5468 = vrot.slane %v5426, 3
    %v5469 = vrot.slane %v5426, 4
    %v5470 = vrot.slane %v5426, 5
    %v5471 = vrot.slane %v5426, 6
    %v5472 = vrot.slane %v5426, 7
    %v5473 = vrot.slane %v5427, 1
    %v5474 = vrot.slane %v5427, 2
    %v5475 = vrot.slane %v5427, 3
    %v5476 = vrot.slane %v5427, 4
    %v5477 = vrot.slane %v5427, 5
    %v5478 = vrot.slane %v5427, 6
    %v5479 = vrot.slane %v5427, 7
    %v5480 = vrot.slane %v5428, 1
    %v5481 = vrot.slane %v5428, 2
    %v5482 = vrot.slane %v5428, 3
    %v5483 = vrot.slane %v5428, 4
    %v5484 = vrot.slane %v5428, 5
    %v5485 = vrot.slane %v5428, 6
    %v5486 = vrot.slane %v5428, 7
    %v5487 = vrot.slane %v5429, 1
    %v5488 = vrot.slane %v5429, 2
    %v5489 = vrot.slane %v5429, 3
    %v5490 = vrot.slane %v5429, 4
    %v5491 = vrot.slane %v5429, 5
    %v5492 = vrot.slane %v5429, 6
    %v5493 = vrot.slane %v5429, 7
    %v5558 = vadd.f32 %v4850, %v5422
    %v5559 = vadd.f32 %v4859, %v5438
    %v5560 = vadd.f32 %v4868, %v5439
    %v5561 = vadd.f32 %v4877, %v5440
    %v5562 = vadd.f32 %v4886, %v5441
    %v5563 = vadd.f32 %v4895, %v5442
    %v5564 = vadd.f32 %v4904, %v5443
    %v5565 = vadd.f32 %v4913, %v5444
    %v5566 = vadd.f32 %v4922, %v5423
    %v5567 = vadd.f32 %v4931, %v5445
    %v5568 = vadd.f32 %v4940, %v5446
    %v5569 = vadd.f32 %v4949, %v5447
    %v5570 = vadd.f32 %v4958, %v5448
    %v5571 = vadd.f32 %v4967, %v5449
    %v5572 = vadd.f32 %v4976, %v5450
    %v5573 = vadd.f32 %v4985, %v5451
    %v5574 = vadd.f32 %v4994, %v5424
    %v5575 = vadd.f32 %v5003, %v5452
    %v5576 = vadd.f32 %v5012, %v5453
    %v5577 = vadd.f32 %v5021, %v5454
    %v5578 = vadd.f32 %v5030, %v5455
    %v5579 = vadd.f32 %v5039, %v5456
    %v5580 = vadd.f32 %v5048, %v5457
    %v5581 = vadd.f32 %v5057, %v5458
    %v5582 = vadd.f32 %v5066, %v5425
    %v5583 = vadd.f32 %v5075, %v5459
    %v5584 = vadd.f32 %v5084, %v5460
    %v5585 = vadd.f32 %v5093, %v5461
    %v5586 = vadd.f32 %v5102, %v5462
    %v5587 = vadd.f32 %v5111, %v5463
    %v5588 = vadd.f32 %v5120, %v5464
    %v5589 = vadd.f32 %v5129, %v5465
    %v5590 = vadd.f32 %v5138, %v5426
    %v5591 = vadd.f32 %v5147, %v5466
    %v5592 = vadd.f32 %v5156, %v5467
    %v5593 = vadd.f32 %v5165, %v5468
    %v5594 = vadd.f32 %v5174, %v5469
    %v5595 = vadd.f32 %v5183, %v5470
    %v5596 = vadd.f32 %v5192, %v5471
    %v5597 = vadd.f32 %v5201, %v5472
    %v5598 = vadd.f32 %v5210, %v5427
    %v5599 = vadd.f32 %v5219, %v5473
    %v5600 = vadd.f32 %v5228, %v5474
    %v5601 = vadd.f32 %v5237, %v5475
    %v5602 = vadd.f32 %v5246, %v5476
    %v5603 = vadd.f32 %v5255, %v5477
    %v5604 = vadd.f32 %v5264, %v5478
    %v5605 = vadd.f32 %v5273, %v5479
    %v5606 = vadd.f32 %v5282, %v5428
    %v5607 = vadd.f32 %v5291, %v5480
    %v5608 = vadd.f32 %v5300, %v5481
    %v5609 = vadd.f32 %v5309, %v5482
    %v5610 = vadd.f32 %v5318, %v5483
    %v5611 = vadd.f32 %v5327, %v5484
    %v5612 = vadd.f32 %v5336, %v5485
    %v5613 = vadd.f32 %v5345, %v5486
    %v5614 = vadd.f32 %v5354, %v5429
    %v5615 = vadd.f32 %v5363, %v5487
    %v5616 = vadd.f32 %v5372, %v5488
    %v5617 = vadd.f32 %v5381, %v5489
    %v5618 = vadd.f32 %v5390, %v5490
    %v5619 = vadd.f32 %v5399, %v5491
    %v5620 = vadd.f32 %v5408, %v5492
    %v5621 = vadd.f32 %v5417, %v5493
    %v5622 = vxor.u32 %v393, 2147483648
    %v5623 = vxor.u32 %v398, 2147483648
    %v5624 = vxor.u32 %v403, 2147483648
    %v5625 = vxor.u32 %v408, 2147483648
    %v5626 = vxor.u32 %v413, 2147483648
    %v5627 = vxor.u32 %v418, 2147483648
    %v5628 = vxor.u32 %v423, 2147483648
    %v5629 = vxor.u32 %v428, 2147483648
    %v5630 = vmul.f32 %v5622, 1.442695
    %v5631 = vpow.pop %v5630
    %v5632 = vmul.f32 %v5623, 1.442695
    %v5633 = vpow.pop %v5632
    %v5634 = vmul.f32 %v5624, 1.442695
    %v5635 = vpow.pop %v5634
    %v5636 = vmul.f32 %v5625, 1.442695
    %v5637 = vpow.pop %v5636
    %v5638 = vmul.f32 %v5626, 1.442695
    %v5639 = vpow.pop %v5638
    %v5640 = vmul.f32 %v5627, 1.442695
    %v5641 = vpow.pop %v5640
    %v5642 = vmul.f32 %v5628, 1.442695
    %v5643 = vpow.pop %v5642
    %v5644 = vmul.f32 %v5629, 1.442695
    %v5645 = vpow.pop %v5644
    %v5646 = vadd.f32 %v5631, 1.0
    %v5647 = vadd.f32 %v5633, 1.0
    %v5648 = vadd.f32 %v5635, 1.0
    %v5649 = vadd.f32 %v5637, 1.0
    %v5650 = vadd.f32 %v5639, 1.0
    %v5651 = vadd.f32 %v5641, 1.0
    %v5652 = vadd.f32 %v5643, 1.0
    %v5653 = vadd.f32 %v5645, 1.0
    %v5654 = vrcp.pop %v5646
    %v5655 = vmul.f32 1.0, %v5654
    %v5656 = vrcp.pop %v5647
    %v5657 = vmul.f32 1.0, %v5656
    %v5658 = vrcp.pop %v5648
    %v5659 = vmul.f32 1.0, %v5658
    %v5660 = vrcp.pop %v5649
    %v5661 = vmul.f32 1.0, %v5660
    %v5662 = vrcp.pop %v5650
    %v5663 = vmul.f32 1.0, %v5662
    %v5664 = vrcp.pop %v5651
    %v5665 = vmul.f32 1.0, %v5664
    %v5666 = vrcp.pop %v5652
    %v5667 = vmul.f32 1.0, %v5666
    %v5668 = vrcp.pop %v5653
    %v5669 = vmul.f32 1.0, %v5668
    %v5670 = vmul.f32 %v393, %v5655
    %v5671 = vmul.f32 %v398, %v5657
    %v5672 = vmul.f32 %v403, %v5659
    %v5673 = vmul.f32 %v408, %v5661
    %v5674 = vmul.f32 %v413, %v5663
    %v5675 = vmul.f32 %v418, %v5665
    %v5676 = vmul.f32 %v423, %v5667
    %v5677 = vmul.f32 %v428, %v5669
    %v5686 = vrot.slane %v5670, 1
    %v5687 = vrot.slane %v5670, 2
    %v5688 = vrot.slane %v5670, 3
    %v5689 = vrot.slane %v5670, 4
    %v5690 = vrot.slane %v5670, 5
    %v5691 = vrot.slane %v5670, 6
    %v5692 = vrot.slane %v5670, 7
    %v5693 = vrot.slane %v5671, 1
    %v5694 = vrot.slane %v5671, 2
    %v5695 = vrot.slane %v5671, 3
    %v5696 = vrot.slane %v5671, 4
    %v5697 = vrot.slane %v5671, 5
    %v5698 = vrot.slane %v5671, 6
    %v5699 = vrot.slane %v5671, 7
    %v5700 = vrot.slane %v5672, 1
    %v5701 = vrot.slane %v5672, 2
    %v5702 = vrot.slane %v5672, 3
    %v5703 = vrot.slane %v5672, 4
    %v5704 = vrot.slane %v5672, 5
    %v5705 = vrot.slane %v5672, 6
    %v5706 = vrot.slane %v5672, 7
    %v5707 = vrot.slane %v5673, 1
    %v5708 = vrot.slane %v5673, 2
    %v5709 = vrot.slane %v5673, 3
    %v5710 = vrot.slane %v5673, 4
    %v5711 = vrot.slane %v5673, 5
    %v5712 = vrot.slane %v5673, 6
    %v5713 = vrot.slane %v5673, 7
    %v5714 = vrot.slane %v5674, 1
    %v5715 = vrot.slane %v5674, 2
    %v5716 = vrot.slane %v5674, 3
    %v5717 = vrot.slane %v5674, 4
    %v5718 = vrot.slane %v5674, 5
    %v5719 = vrot.slane %v5674, 6
    %v5720 = vrot.slane %v5674, 7
    %v5721 = vrot.slane %v5675, 1
    %v5722 = vrot.slane %v5675, 2
    %v5723 = vrot.slane %v5675, 3
    %v5724 = vrot.slane %v5675, 4
    %v5725 = vrot.slane %v5675, 5
    %v5726 = vrot.slane %v5675, 6
    %v5727 = vrot.slane %v5675, 7
    %v5728 = vrot.slane %v5676, 1
    %v5729 = vrot.slane %v5676, 2
    %v5730 = vrot.slane %v5676, 3
    %v5731 = vrot.slane %v5676, 4
    %v5732 = vrot.slane %v5676, 5
    %v5733 = vrot.slane %v5676, 6
    %v5734 = vrot.slane %v5676, 7
    %v5735 = vrot.slane %v5677, 1
    %v5736 = vrot.slane %v5677, 2
    %v5737 = vrot.slane %v5677, 3
    %v5738 = vrot.slane %v5677, 4
    %v5739 = vrot.slane %v5677, 5
    %v5740 = vrot.slane %v5677, 6
    %v5741 = vrot.slane %v5677, 7
    %5742 = vrot.lane.b32.xlu0 %v5670, 96
    %v5743 = vpop.permute.xlu0 %5742
    %5744 = vrot.lane.b32.xlu0 %v5686, 96
    %v5745 = vpop.permute.xlu0 %5744
    %5746 = vrot.lane.b32.xlu0 %v5687, 96
    %v5747 = vpop.permute.xlu0 %5746
    %5748 = vrot.lane.b32.xlu0 %v5688, 96
    %v5749 = vpop.permute.xlu0 %5748
    %5750 = vrot.lane.b32.xlu0 %v5689, 96
    %v5751 = vpop.permute.xlu0 %5750
    %5752 = vrot.lane.b32.xlu0 %v5690, 96
    %v5753 = vpop.permute.xlu0 %5752
    %5754 = vrot.lane.b32.xlu0 %v5691, 96
    %v5755 = vpop.permute.xlu0 %5754
    %5756 = vrot.lane.b32.xlu0 %v5692, 96
    %v5757 = vpop.permute.xlu0 %5756
    %5758 = vrot.lane.b32.xlu0 %v5671, 96
    %v5759 = vpop.permute.xlu0 %5758
    %5760 = vrot.lane.b32.xlu0 %v5693, 96
    %v5761 = vpop.permute.xlu0 %5760
    %5762 = vrot.lane.b32.xlu0 %v5694, 96
    %v5763 = vpop.permute.xlu0 %5762
    %5764 = vrot.lane.b32.xlu0 %v5695, 96
    %v5765 = vpop.permute.xlu0 %5764
    %5766 = vrot.lane.b32.xlu0 %v5696, 96
    %v5767 = vpop.permute.xlu0 %5766
    %5768 = vrot.lane.b32.xlu0 %v5697, 96
    %v5769 = vpop.permute.xlu0 %5768
    %5770 = vrot.lane.b32.xlu0 %v5698, 96
    %v5771 = vpop.permute.xlu0 %5770
    %5772 = vrot.lane.b32.xlu0 %v5699, 96
    %v5773 = vpop.permute.xlu0 %5772
    %5774 = vrot.lane.b32.xlu0 %v5672, 96
    %v5775 = vpop.permute.xlu0 %5774
    %5776 = vrot.lane.b32.xlu0 %v5700, 96
    %v5777 = vpop.permute.xlu0 %5776
    %5778 = vrot.lane.b32.xlu0 %v5701, 96
    %v5779 = vpop.permute.xlu0 %5778
    %5780 = vrot.lane.b32.xlu0 %v5702, 96
    %v5781 = vpop.permute.xlu0 %5780
    %5782 = vrot.lane.b32.xlu0 %v5703, 96
    %v5783 = vpop.permute.xlu0 %5782
    %5784 = vrot.lane.b32.xlu0 %v5704, 96
    %v5785 = vpop.permute.xlu0 %5784
    %5786 = vrot.lane.b32.xlu0 %v5705, 96
    %v5787 = vpop.permute.xlu0 %5786
    %5788 = vrot.lane.b32.xlu0 %v5706, 96
    %v5789 = vpop.permute.xlu0 %5788
    %5790 = vrot.lane.b32.xlu0 %v5673, 96
    %v5791 = vpop.permute.xlu0 %5790
    %5792 = vrot.lane.b32.xlu0 %v5707, 96
    %v5793 = vpop.permute.xlu0 %5792
    %5794 = vrot.lane.b32.xlu0 %v5708, 96
    %v5795 = vpop.permute.xlu0 %5794
    %5796 = vrot.lane.b32.xlu0 %v5709, 96
    %v5797 = vpop.permute.xlu0 %5796
    %5798 = vrot.lane.b32.xlu0 %v5710, 96
    %v5799 = vpop.permute.xlu0 %5798
    %5800 = vrot.lane.b32.xlu0 %v5711, 96
    %v5801 = vpop.permute.xlu0 %5800
    %5802 = vrot.lane.b32.xlu0 %v5712, 96
    %v5803 = vpop.permute.xlu0 %5802
    %5804 = vrot.lane.b32.xlu0 %v5713, 96
    %v5805 = vpop.permute.xlu0 %5804
    %5806 = vrot.lane.b32.xlu0 %v5674, 96
    %v5807 = vpop.permute.xlu0 %5806
    %5808 = vrot.lane.b32.xlu0 %v5714, 96
    %v5809 = vpop.permute.xlu0 %5808
    %5810 = vrot.lane.b32.xlu0 %v5715, 96
    %v5811 = vpop.permute.xlu0 %5810
    %5812 = vrot.lane.b32.xlu0 %v5716, 96
    %v5813 = vpop.permute.xlu0 %5812
    %5814 = vrot.lane.b32.xlu0 %v5717, 96
    %v5815 = vpop.permute.xlu0 %5814
    %5816 = vrot.lane.b32.xlu0 %v5718, 96
    %v5817 = vpop.permute.xlu0 %5816
    %5818 = vrot.lane.b32.xlu0 %v5719, 96
    %v5819 = vpop.permute.xlu0 %5818
    %5820 = vrot.lane.b32.xlu0 %v5720, 96
    %v5821 = vpop.permute.xlu0 %5820
    %5822 = vrot.lane.b32.xlu0 %v5675, 96
    %v5823 = vpop.permute.xlu0 %5822
    %5824 = vrot.lane.b32.xlu0 %v5721, 96
    %v5825 = vpop.permute.xlu0 %5824
    %5826 = vrot.lane.b32.xlu0 %v5722, 96
    %v5827 = vpop.permute.xlu0 %5826
    %5828 = vrot.lane.b32.xlu0 %v5723, 96
    %v5829 = vpop.permute.xlu0 %5828
    %5830 = vrot.lane.b32.xlu0 %v5724, 96
    %v5831 = vpop.permute.xlu0 %5830
    %5832 = vrot.lane.b32.xlu0 %v5725, 96
    %v5833 = vpop.permute.xlu0 %5832
    %5834 = vrot.lane.b32.xlu0 %v5726, 96
    %v5835 = vpop.permute.xlu0 %5834
    %5836 = vrot.lane.b32.xlu0 %v5727, 96
    %v5837 = vpop.permute.xlu0 %5836
    %5838 = vrot.lane.b32.xlu0 %v5676, 96
    %v5839 = vpop.permute.xlu0 %5838
    %5840 = vrot.lane.b32.xlu0 %v5728, 96
    %v5841 = vpop.permute.xlu0 %5840
    %5842 = vrot.lane.b32.xlu0 %v5729, 96
    %v5843 = vpop.permute.xlu0 %5842
    %5844 = vrot.lane.b32.xlu0 %v5730, 96
    %v5845 = vpop.permute.xlu0 %5844
    %5846 = vrot.lane.b32.xlu0 %v5731, 96
    %v5847 = vpop.permute.xlu0 %5846
    %5848 = vrot.lane.b32.xlu0 %v5732, 96
    %v5849 = vpop.permute.xlu0 %5848
    %5850 = vrot.lane.b32.xlu0 %v5733, 96
    %v5851 = vpop.permute.xlu0 %5850
    %5852 = vrot.lane.b32.xlu0 %v5734, 96
    %v5853 = vpop.permute.xlu0 %5852
    %5854 = vrot.lane.b32.xlu0 %v5677, 96
    %v5855 = vpop.permute.xlu0 %5854
    %5856 = vrot.lane.b32.xlu0 %v5735, 96
    %v5857 = vpop.permute.xlu0 %5856
    %5858 = vrot.lane.b32.xlu0 %v5736, 96
    %v5859 = vpop.permute.xlu0 %5858
    %5860 = vrot.lane.b32.xlu0 %v5737, 96
    %v5861 = vpop.permute.xlu0 %5860
    %5862 = vrot.lane.b32.xlu0 %v5738, 96
    %v5863 = vpop.permute.xlu0 %5862
    %5864 = vrot.lane.b32.xlu0 %v5739, 96
    %v5865 = vpop.permute.xlu0 %5864
    %5866 = vrot.lane.b32.xlu0 %v5740, 96
    %v5867 = vpop.permute.xlu0 %5866
    %5868 = vrot.lane.b32.xlu0 %v5741, 96
    %v5869 = vpop.permute.xlu0 %5868
    %v5934 = vmul.f32 %v5558, %v5743
    %v5935 = vmul.f32 %v5559, %v5745
    %v5936 = vmul.f32 %v5560, %v5747
    %v5937 = vmul.f32 %v5561, %v5749
    %v5938 = vmul.f32 %v5562, %v5751
    %v5939 = vmul.f32 %v5563, %v5753
    %v5940 = vmul.f32 %v5564, %v5755
    %v5941 = vmul.f32 %v5565, %v5757
    %v5942 = vmul.f32 %v5566, %v5759
    %v5943 = vmul.f32 %v5567, %v5761
    %v5944 = vmul.f32 %v5568, %v5763
    %v5945 = vmul.f32 %v5569, %v5765
    %v5946 = vmul.f32 %v5570, %v5767
    %v5947 = vmul.f32 %v5571, %v5769
    %v5948 = vmul.f32 %v5572, %v5771
    %v5949 = vmul.f32 %v5573, %v5773
    %v5950 = vmul.f32 %v5574, %v5775
    %v5951 = vmul.f32 %v5575, %v5777
    %v5952 = vmul.f32 %v5576, %v5779
    %v5953 = vmul.f32 %v5577, %v5781
    %v5954 = vmul.f32 %v5578, %v5783
    %v5955 = vmul.f32 %v5579, %v5785
    %v5956 = vmul.f32 %v5580, %v5787
    %v5957 = vmul.f32 %v5581, %v5789
    %v5958 = vmul.f32 %v5582, %v5791
    %v5959 = vmul.f32 %v5583, %v5793
    %v5960 = vmul.f32 %v5584, %v5795
    %v5961 = vmul.f32 %v5585, %v5797
    %v5962 = vmul.f32 %v5586, %v5799
    %v5963 = vmul.f32 %v5587, %v5801
    %v5964 = vmul.f32 %v5588, %v5803
    %v5965 = vmul.f32 %v5589, %v5805
    %v5966 = vmul.f32 %v5590, %v5807
    %v5967 = vmul.f32 %v5591, %v5809
    %v5968 = vmul.f32 %v5592, %v5811
    %v5969 = vmul.f32 %v5593, %v5813
    %v5970 = vmul.f32 %v5594, %v5815
    %v5971 = vmul.f32 %v5595, %v5817
    %v5972 = vmul.f32 %v5596, %v5819
    %v5973 = vmul.f32 %v5597, %v5821
    %v5974 = vmul.f32 %v5598, %v5823
    %v5975 = vmul.f32 %v5599, %v5825
    %v5976 = vmul.f32 %v5600, %v5827
    %v5977 = vmul.f32 %v5601, %v5829
    %v5978 = vmul.f32 %v5602, %v5831
    %v5979 = vmul.f32 %v5603, %v5833
    %v5980 = vmul.f32 %v5604, %v5835
    %v5981 = vmul.f32 %v5605, %v5837
    %v5982 = vmul.f32 %v5606, %v5839
    %v5983 = vmul.f32 %v5607, %v5841
    %v5984 = vmul.f32 %v5608, %v5843
    %v5985 = vmul.f32 %v5609, %v5845
    %v5986 = vmul.f32 %v5610, %v5847
    %v5987 = vmul.f32 %v5611, %v5849
    %v5988 = vmul.f32 %v5612, %v5851
    %v5989 = vmul.f32 %v5613, %v5853
    %v5990 = vmul.f32 %v5614, %v5855
    %v5991 = vmul.f32 %v5615, %v5857
    %v5992 = vmul.f32 %v5616, %v5859
    %v5993 = vmul.f32 %v5617, %v5861
    %v5994 = vmul.f32 %v5618, %v5863
    %v5995 = vmul.f32 %v5619, %v5865
    %v5996 = vmul.f32 %v5620, %v5867
    %v5997 = vmul.f32 %v5621, %v5869
    %v6062 = vrot.slane %v5935, 7
    %vm6063 = vcmask 1041409
    %v6064 = vsel %vm6063, %v6062, %v5934
    %v6065 = vrot.slane %v5936, 6
    %vm6066 = vcmask 1042434
    %v6067 = vsel %vm6066, %v6065, %v6064
    %v6068 = vrot.slane %v5937, 5
    %vm6069 = vcmask 1043459
    %v6070 = vsel %vm6069, %v6068, %v6067
    %v6071 = vrot.slane %v5938, 4
    %vm6072 = vcmask 1044484
    %v6073 = vsel %vm6072, %v6071, %v6070
    %v6074 = vrot.slane %v5939, 3
    %vm6075 = vcmask 1045509
    %v6076 = vsel %vm6075, %v6074, %v6073
    %v6077 = vrot.slane %v5940, 2
    %vm6078 = vcmask 1046534
    %v6079 = vsel %vm6078, %v6077, %v6076
    %v6080 = vrot.slane %v5941, 1
    %vm6081 = vcmask 1047559
    %v6082 = vsel %vm6081, %v6080, %v6079
    %v6083 = vrot.slane %v5943, 7
    %v6084 = vsel %vm6063, %v6083, %v5942
    %v6085 = vrot.slane %v5944, 6
    %v6086 = vsel %vm6066, %v6085, %v6084
    %v6087 = vrot.slane %v5945, 5
    %v6088 = vsel %vm6069, %v6087, %v6086
    %v6089 = vrot.slane %v5946, 4
    %v6090 = vsel %vm6072, %v6089, %v6088
    %v6091 = vrot.slane %v5947, 3
    %v6092 = vsel %vm6075, %v6091, %v6090
    %v6093 = vrot.slane %v5948, 2
    %v6094 = vsel %vm6078, %v6093, %v6092
    %v6095 = vrot.slane %v5949, 1
    %v6096 = vsel %vm6081, %v6095, %v6094
    %v6097 = vrot.slane %v5951, 7
    %v6098 = vsel %vm6063, %v6097, %v5950
    %v6099 = vrot.slane %v5952, 6
    %v6100 = vsel %vm6066, %v6099, %v6098
    %v6101 = vrot.slane %v5953, 5
    %v6102 = vsel %vm6069, %v6101, %v6100
    %v6103 = vrot.slane %v5954, 4
    %v6104 = vsel %vm6072, %v6103, %v6102
    %v6105 = vrot.slane %v5955, 3
    %v6106 = vsel %vm6075, %v6105, %v6104
    %v6107 = vrot.slane %v5956, 2
    %v6108 = vsel %vm6078, %v6107, %v6106
    %v6109 = vrot.slane %v5957, 1
    %v6110 = vsel %vm6081, %v6109, %v6108
    %v6111 = vrot.slane %v5959, 7
    %v6112 = vsel %vm6063, %v6111, %v5958
    %v6113 = vrot.slane %v5960, 6
    %v6114 = vsel %vm6066, %v6113, %v6112
    %v6115 = vrot.slane %v5961, 5
    %v6116 = vsel %vm6069, %v6115, %v6114
    %v6117 = vrot.slane %v5962, 4
    %v6118 = vsel %vm6072, %v6117, %v6116
    %v6119 = vrot.slane %v5963, 3
    %v6120 = vsel %vm6075, %v6119, %v6118
    %v6121 = vrot.slane %v5964, 2
    %v6122 = vsel %vm6078, %v6121, %v6120
    %v6123 = vrot.slane %v5965, 1
    %v6124 = vsel %vm6081, %v6123, %v6122
    %v6125 = vrot.slane %v5967, 7
    %v6126 = vsel %vm6063, %v6125, %v5966
    %v6127 = vrot.slane %v5968, 6
    %v6128 = vsel %vm6066, %v6127, %v6126
    %v6129 = vrot.slane %v5969, 5
    %v6130 = vsel %vm6069, %v6129, %v6128
    %v6131 = vrot.slane %v5970, 4
    %v6132 = vsel %vm6072, %v6131, %v6130
    %v6133 = vrot.slane %v5971, 3
    %v6134 = vsel %vm6075, %v6133, %v6132
    %v6135 = vrot.slane %v5972, 2
    %v6136 = vsel %vm6078, %v6135, %v6134
    %v6137 = vrot.slane %v5973, 1
    %v6138 = vsel %vm6081, %v6137, %v6136
    %v6139 = vrot.slane %v5975, 7
    %v6140 = vsel %vm6063, %v6139, %v5974
    %v6141 = vrot.slane %v5976, 6
    %v6142 = vsel %vm6066, %v6141, %v6140
    %v6143 = vrot.slane %v5977, 5
    %v6144 = vsel %vm6069, %v6143, %v6142
    %v6145 = vrot.slane %v5978, 4
    %v6146 = vsel %vm6072, %v6145, %v6144
    %v6147 = vrot.slane %v5979, 3
    %v6148 = vsel %vm6075, %v6147, %v6146
    %v6149 = vrot.slane %v5980, 2
    %v6150 = vsel %vm6078, %v6149, %v6148
    %v6151 = vrot.slane %v5981, 1
    %v6152 = vsel %vm6081, %v6151, %v6150
    %v6153 = vrot.slane %v5983, 7
    %v6154 = vsel %vm6063, %v6153, %v5982
    %v6155 = vrot.slane %v5984, 6
    %v6156 = vsel %vm6066, %v6155, %v6154
    %v6157 = vrot.slane %v5985, 5
    %v6158 = vsel %vm6069, %v6157, %v6156
    %v6159 = vrot.slane %v5986, 4
    %v6160 = vsel %vm6072, %v6159, %v6158
    %v6161 = vrot.slane %v5987, 3
    %v6162 = vsel %vm6075, %v6161, %v6160
    %v6163 = vrot.slane %v5988, 2
    %v6164 = vsel %vm6078, %v6163, %v6162
    %v6165 = vrot.slane %v5989, 1
    %v6166 = vsel %vm6081, %v6165, %v6164
    %v6167 = vrot.slane %v5991, 7
    %v6168 = vsel %vm6063, %v6167, %v5990
    %v6169 = vrot.slane %v5992, 6
    %v6170 = vsel %vm6066, %v6169, %v6168
    %v6171 = vrot.slane %v5993, 5
    %v6172 = vsel %vm6069, %v6171, %v6170
    %v6173 = vrot.slane %v5994, 4
    %v6174 = vsel %vm6072, %v6173, %v6172
    %v6175 = vrot.slane %v5995, 3
    %v6176 = vsel %vm6075, %v6175, %v6174
    %v6177 = vrot.slane %v5996, 2
    %v6178 = vsel %vm6078, %v6177, %v6176
    %v6179 = vrot.slane %v5997, 1
    %v6180 = vsel %vm6081, %v6179, %v6178
    %v6181 = vsel %vm301, %v6082, 0
    %v6183 = vsel %vm301, %v6096, 0
    %v6185 = vsel %vm301, %v6110, 0
    %v6187 = vsel %vm301, %v6124, 0
    %v6189 = vsel %vm301, %v6138, 0
    %v6191 = vsel %vm301, %v6152, 0
    %v6193 = vsel %vm301, %v6166, 0
    %v6195 = vsel %vm301, %v6180, 0
    %6197 = vmatprep.subr.mxu0 0.0
    %6198 = vmatpush1.msra.mxu0 %v296
    %6199 = vmatprep.subr.mxu0 0.0
    %6200 = vmatpush1.msra.mxu0 %v297
    %6201 = vmatprep.subr.mxu0 0.0
    %6202 = vmatpush1.msra.mxu0 %v298
    %6203 = vmatprep.subr.mxu0 0.0
    %6204 = vmatpush1.msra.mxu0 %v299
    %6205 = vmatprep.subr.mxu0 0.0
    %6206 = vmatpush1.msra.mxu0 0.0
    %6207 = vmatprep.subr.mxu0 0.0
    %6208 = vmatpush1.msra.mxu0 0.0
    %6209 = vmatprep.subr.mxu0 0.0
    %6210 = vmatpush1.msra.mxu0 0.0
    %6211 = vmatprep.subr.mxu0 0.0
    %6212 = vmatpush1.msra.mxu0 0.0
    %6213 = vmatprep.subr.mxu0 0.0
    %6214 = vmatpush1.msra.mxu0 0.0
    %6215 = vmatprep.subr.mxu0 0.0
    %6216 = vmatpush1.msra.mxu0 0.0
    %6217 = vmatprep.subr.mxu0 0.0
    %6218 = vmatpush1.msra.mxu0 0.0
    %6219 = vmatprep.subr.mxu0 0.0
    %6220 = vmatpush1.msra.mxu0 0.0
    %6221 = vmatprep.subr.mxu0 0.0
    %6222 = vmatpush1.msra.mxu0 0.0
    %6223 = vmatprep.subr.mxu0 0.0
    %6224 = vmatpush1.msra.mxu0 0.0
    %6225 = vmatprep.subr.mxu0 0.0
    %6226 = vmatpush1.msra.mxu0 0.0
    %6227 = vmatprep.subr.mxu0 0.0
    %6228 = vmatpush1.msra.mxu0 0.0
    %6229 = vmatprep.subr.mxu0 0.0
    %6230 = vmatpush1.msra.mxu0 0.0
    %6231 = vmatprep.subr.mxu0 0.0
    %6232 = vmatpush1.msra.mxu0 0.0
    %6233 = vmatprep.subr.mxu0 0.0
    %6234 = vmatpush1.msra.mxu0 0.0
    %6235 = vmatprep.subr.mxu0 0.0
    %6236 = vmatpush1.msra.mxu0 0.0
    %6237 = vmatprep.subr.mxu0 0.0
    %6238 = vmatpush1.msra.mxu0 0.0
    %6239 = vmatprep.subr.mxu0 0.0
    %6240 = vmatpush1.msra.mxu0 0.0
    %6241 = vmatprep.subr.mxu0 0.0
    %6242 = vmatpush1.msra.mxu0 0.0
    %6243 = vmatprep.subr.mxu0 0.0
    %6244 = vmatpush1.msra.mxu0 0.0
    %6245 = vmatprep.subr.mxu0 0.0
    %6246 = vmatpush1.msra.mxu0 0.0
    %6247 = vmatprep.subr.mxu0 0.0
    %6248 = vmatpush1.msra.mxu0 0.0
    %6249 = vmatprep.subr.mxu0 0.0
    %6250 = vmatpush1.msra.mxu0 0.0
    %6251 = vmatprep.subr.mxu0 0.0
    %6252 = vmatpush1.msra.mxu0 0.0
    %6253 = vmatprep.subr.mxu0 0.0
    %6254 = vmatpush1.msra.mxu0 0.0
    %6255 = vmatprep.subr.mxu0 0.0
    %6256 = vmatpush1.msra.mxu0 0.0
    %6257 = vmatprep.subr.mxu0 0.0
    %6258 = vmatpush1.msra.mxu0 0.0
    %6259 = vmatprep.subr.mxu0 0.0
    %6260 = vmatpush1.msra.mxu0 0.0
    %6261 = vmatprep.mubr.f32.mxu0 0.0
    %6262 = vmatmul.mubr.f32.gmra.mrb[0].mxu0 %v6181
    %v6263 = vpop.f32.mrb[0].mxu0
    %v6264 = vadd.f32 0.0, %v6263
    %v6265 = vpop.f32.mrb[0].mxu0
    %6266 = vmatprep.mubr.f32.mxu0 0.0
    %6267 = vmatmul.mubr.f32.gmra.mrb[0].mxu0 %v6183
    %v6268 = vpop.f32.mrb[0].mxu0
    %v6269 = vadd.f32 0.0, %v6268
    %v6270 = vpop.f32.mrb[0].mxu0
    %6271 = vmatprep.mubr.f32.mxu0 0.0
    %6272 = vmatmul.mubr.f32.gmra.mrb[0].mxu0 %v6185
    %v6273 = vpop.f32.mrb[0].mxu0
    %v6274 = vadd.f32 0.0, %v6273
    %v6275 = vpop.f32.mrb[0].mxu0
    %6276 = vmatprep.mubr.f32.mxu0 0.0
    %6277 = vmatmul.mubr.f32.gmra.mrb[0].mxu0 %v6187
    %v6278 = vpop.f32.mrb[0].mxu0
    %v6279 = vadd.f32 0.0, %v6278
    %v6280 = vpop.f32.mrb[0].mxu0
    %6281 = vmatprep.mubr.f32.mxu0 0.0
    %6282 = vmatmul.mubr.f32.gmra.mrb[0].mxu0 %v6189
    %v6283 = vpop.f32.mrb[0].mxu0
    %v6284 = vadd.f32 0.0, %v6283
    %v6285 = vpop.f32.mrb[0].mxu0
    %6286 = vmatprep.mubr.f32.mxu0 0.0
    %6287 = vmatmul.mubr.f32.gmra.mrb[0].mxu0 %v6191
    %v6288 = vpop.f32.mrb[0].mxu0
    %v6289 = vadd.f32 0.0, %v6288
    %v6290 = vpop.f32.mrb[0].mxu0
    %6291 = vmatprep.mubr.f32.mxu0 0.0
    %6292 = vmatmul.mubr.f32.gmra.mrb[0].mxu0 %v6193
    %v6293 = vpop.f32.mrb[0].mxu0
    %v6294 = vadd.f32 0.0, %v6293
    %v6295 = vpop.f32.mrb[0].mxu0
    %6296 = vmatprep.mubr.f32.mxu0 0.0
    %6297 = vmatmul.mubr.f32.gmra.mrb[0].mxu0 %v6195
    %v6298 = vpop.f32.mrb[0].mxu0
    %v6299 = vadd.f32 0.0, %v6298
    %v6300 = vpop.f32.mrb[0].mxu0
    %6301 = vdwg.mxu0
    %v6302 = vadd.f32 %v270, %v6264
    %v6303 = vadd.f32 %v271, %v6269
    %v6304 = vadd.f32 %v272, %v6274
    %v6305 = vadd.f32 %v273, %v6279
    %v6306 = vadd.f32 %v274, %v6284
    %v6307 = vadd.f32 %v275, %v6289
    %v6308 = vadd.f32 %v276, %v6294
    %v6309 = vadd.f32 %v277, %v6299
    %v6310 = vadd.f32 %v300, 1e-05
    %v6311 = vrsqrt.pop %v6310
    %v6313 = vrot.slane %v6311, 3
    %v6315 = vmul.f32 %v300, %v6313
    %v6317 = vrot.slane %v300, 6
    %v6319 = vmul.f32 %v300, %v6317
    %v6320 = vrot.slane %v6311, 1
    %v6322 = vmul.f32 %v6319, %v6320
    %v6324 = vrot.slane %v6322, 1
    %v6326 = vsub.f32 %v300, %v6324
    %v6327 = vlaneseq
    %v6328 = vshrl.u32 %v6327, 7
    %v6329 = vsub.s32 3, %v6328
    %v6330 = vrot.slane %v6315, %v6329
    %v6331 = vmul.f32 %v6302, %v6330
    %v6332 = vmul.f32 %v6303, %v6330
    %v6333 = vmul.f32 %v6304, %v6330
    %v6334 = vmul.f32 %v6305, %v6330
    %v6335 = vmul.f32 %v6306, %v6330
    %v6336 = vmul.f32 %v6307, %v6330
    %v6337 = vmul.f32 %v6308, %v6330
    %v6338 = vmul.f32 %v6309, %v6330
    %v6339 = vlaneseq
    %v6340 = vshrl.u32 %v6339, 7
    %v6341 = vsub.s32 4, %v6340
    %v6342 = vrot.slane %v6326, %v6341
    %v6343 = vadd.f32 %v6331, %v6342
    %v6344 = vadd.f32 %v6332, %v6342
    %v6345 = vadd.f32 %v6333, %v6342
    %v6346 = vadd.f32 %v6334, %v6342
    %v6347 = vadd.f32 %v6335, %v6342
    %v6348 = vadd.f32 %v6336, %v6342
    %v6349 = vadd.f32 %v6337, %v6342
    %v6350 = vadd.f32 %v6338, %v6342
    %s6351 = scalar_lea.vmem [#allocation8], 32
    %v6352 = vld [vmem:[%s6351] sm:$0xff]
    %v6353 = vld [vmem:[%s6351 + $0x8] sm:$0xff]
    %v6354 = vld [vmem:[%s6351 + $0x10] sm:$0xff]
    %v6355 = vld [vmem:[%s6351 + $0x18] sm:$0xff]
    %s6356 = scalar_lea.vmem %s4, 4
    %v6357 = vld [vmem:[%s6356] sm:$0xf]
    %s6358 = scalar_lea.vmem [#allocation10], 32
    %v6359 = vld [vmem:[%s6358] sm:$0xff]
    %v6360 = vld [vmem:[%s6358 + $0x8] sm:$0xff]
    %v6361 = vld [vmem:[%s6358 + $0x10] sm:$0xff]
    %v6362 = vld [vmem:[%s6358 + $0x18] sm:$0xff]
    %s6363 = scalar_lea.vmem %s6, 2
    %v6364 = vld [vmem:[%s6363] sm:$0x3]
    %s6365 = scalar_lea.vmem [#allocation11], 16
    %v6366 = vld [vmem:[%s6365] sm:$0xff]
    %v6367 = vld [vmem:[%s6365 + $0x8] sm:$0xff]
    %v6368 = vmul.f32 %v6366, 1.442695
    %v6369 = vpow.pop %v6368
    %v6370 = vmul.f32 %v6367, 1.442695
    %v6371 = vpow.pop %v6370
    %v6372 = vsub.f32 0.0, %v6369
    %v6373 = vsub.f32 0.0, %v6371
    %s6374 = scalar_lea.vmem [#allocation13], 32
    %v6375 = vld [vmem:[%s6374] sm:$0xff]
    %v6376 = vld [vmem:[%s6374 + $0x8] sm:$0xff]
    %v6377 = vld [vmem:[%s6374 + $0x10] sm:$0xff]
    %v6378 = vld [vmem:[%s6374 + $0x18] sm:$0xff]
    %s6379 = scalar_lea.vmem %s9, 8
    %v6380 = vld [vmem:[%s6379] sm:$0xff]
    %v6382 = vsel %vm301, %v6343, 0
    %v6385 = vsel %vm301, %v6344, 0
    %v6388 = vsel %vm301, %v6345, 0
    %v6391 = vsel %vm301, %v6346, 0
    %v6394 = vsel %vm301, %v6347, 0
    %v6397 = vsel %vm301, %v6348, 0
    %v6400 = vsel %vm301, %v6349, 0
    %v6403 = vsel %vm301, %v6350, 0
    %6405 = vmatprep.subr.mxu0 0.0
    %6406 = vmatpush1.msra.mxu0 %v6352
    %6407 = vmatprep.subr.mxu0 0.0
    %6408 = vmatpush1.msra.mxu0 %v6353
    %6409 = vmatprep.subr.mxu0 0.0
    %6410 = vmatpush1.msra.mxu0 %v6354
    %6411 = vmatprep.subr.mxu0 0.0
    %6412 = vmatpush1.msra.mxu0 %v6355
    %6413 = vmatprep.subr.mxu0 0.0
    %6414 = vmatpush1.msra.mxu0 0.0
    %6415 = vmatprep.subr.mxu0 0.0
    %6416 = vmatpush1.msra.mxu0 0.0
    %6417 = vmatprep.subr.mxu0 0.0
    %6418 = vmatpush1.msra.mxu0 0.0
    %6419 = vmatprep.subr.mxu0 0.0
    %6420 = vmatpush1.msra.mxu0 0.0
    %6421 = vmatprep.subr.mxu0 0.0
    %6422 = vmatpush1.msra.mxu0 0.0
    %6423 = vmatprep.subr.mxu0 0.0
    %6424 = vmatpush1.msra.mxu0 0.0
    %6425 = vmatprep.subr.mxu0 0.0
    %6426 = vmatpush1.msra.mxu0 0.0
    %6427 = vmatprep.subr.mxu0 0.0
    %6428 = vmatpush1.msra.mxu0 0.0
    %6429 = vmatprep.subr.mxu0 0.0
    %6430 = vmatpush1.msra.mxu0 0.0
    %6431 = vmatprep.subr.mxu0 0.0
    %6432 = vmatpush1.msra.mxu0 0.0
    %6433 = vmatprep.subr.mxu0 0.0
    %6434 = vmatpush1.msra.mxu0 0.0
    %6435 = vmatprep.subr.mxu0 0.0
    %6436 = vmatpush1.msra.mxu0 0.0
    %6437 = vmatprep.subr.mxu0 0.0
    %6438 = vmatpush1.msra.mxu0 0.0
    %6439 = vmatprep.subr.mxu0 0.0
    %6440 = vmatpush1.msra.mxu0 0.0
    %6441 = vmatprep.subr.mxu0 0.0
    %6442 = vmatpush1.msra.mxu0 0.0
    %6443 = vmatprep.subr.mxu0 0.0
    %6444 = vmatpush1.msra.mxu0 0.0
    %6445 = vmatprep.subr.mxu0 0.0
    %6446 = vmatpush1.msra.mxu0 0.0
    %6447 = vmatprep.subr.mxu0 0.0
    %6448 = vmatpush1.msra.mxu0 0.0
    %6449 = vmatprep.subr.mxu0 0.0
    %6450 = vmatpush1.msra.mxu0 0.0
    %6451 = vmatprep.subr.mxu0 0.0
    %6452 = vmatpush1.msra.mxu0 0.0
    %6453 = vmatprep.subr.mxu0 0.0
    %6454 = vmatpush1.msra.mxu0 0.0
    %6455 = vmatprep.subr.mxu0 0.0
    %6456 = vmatpush1.msra.mxu0 0.0
    %6457 = vmatprep.subr.mxu0 0.0
    %6458 = vmatpush1.msra.mxu0 0.0
    %6459 = vmatprep.subr.mxu0 0.0
    %6460 = vmatpush1.msra.mxu0 0.0
    %6461 = vmatprep.subr.mxu0 0.0
    %6462 = vmatpush1.msra.mxu0 0.0
    %6463 = vmatprep.subr.mxu0 0.0
    %6464 = vmatpush1.msra.mxu0 0.0
    %6465 = vmatprep.subr.mxu0 0.0
    %6466 = vmatpush1.msra.mxu0 0.0
    %6467 = vmatprep.subr.mxu0 0.0
    %6468 = vmatpush1.msra.mxu0 0.0
    %6469 = vmatprep.mubr.f32.mxu0 0.0
    %6470 = vmatmul.mubr.f32.gmra.mrb[0].mxu0 %v6382
    %v6471 = vpop.f32.mrb[0].mxu0
    %v6472 = vadd.f32 0.0, %v6471
    %v6473 = vpop.f32.mrb[0].mxu0
    %6474 = vmatprep.mubr.f32.mxu0 0.0
    %6475 = vmatmul.mubr.f32.gmra.mrb[0].mxu0 %v6385
    %v6476 = vpop.f32.mrb[0].mxu0
    %v6477 = vadd.f32 0.0, %v6476
    %v6478 = vpop.f32.mrb[0].mxu0
    %6479 = vmatprep.mubr.f32.mxu0 0.0
    %6480 = vmatmul.mubr.f32.gmra.mrb[0].mxu0 %v6388
    %v6481 = vpop.f32.mrb[0].mxu0
    %v6482 = vadd.f32 0.0, %v6481
    %v6483 = vpop.f32.mrb[0].mxu0
    %6484 = vmatprep.mubr.f32.mxu0 0.0
    %6485 = vmatmul.mubr.f32.gmra.mrb[0].mxu0 %v6391
    %v6486 = vpop.f32.mrb[0].mxu0
    %v6487 = vadd.f32 0.0, %v6486
    %v6488 = vpop.f32.mrb[0].mxu0
    %6489 = vmatprep.mubr.f32.mxu0 0.0
    %6490 = vmatmul.mubr.f32.gmra.mrb[0].mxu0 %v6394
    %v6491 = vpop.f32.mrb[0].mxu0
    %v6492 = vadd.f32 0.0, %v6491
    %v6493 = vpop.f32.mrb[0].mxu0
    %6494 = vmatprep.mubr.f32.mxu0 0.0
    %6495 = vmatmul.mubr.f32.gmra.mrb[0].mxu0 %v6397
    %v6496 = vpop.f32.mrb[0].mxu0
    %v6497 = vadd.f32 0.0, %v6496
    %v6498 = vpop.f32.mrb[0].mxu0
    %6499 = vmatprep.mubr.f32.mxu0 0.0
    %6500 = vmatmul.mubr.f32.gmra.mrb[0].mxu0 %v6400
    %v6501 = vpop.f32.mrb[0].mxu0
    %v6502 = vadd.f32 0.0, %v6501
    %v6503 = vpop.f32.mrb[0].mxu0
    %6504 = vmatprep.mubr.f32.mxu0 0.0
    %6505 = vmatmul.mubr.f32.gmra.mrb[0].mxu0 %v6403
    %v6506 = vpop.f32.mrb[0].mxu0
    %v6507 = vadd.f32 0.0, %v6506
    %v6508 = vpop.f32.mrb[0].mxu0
    %6509 = vdwg.mxu0
    %v6518 = vrot.slane %v6472, 5
    %v6519 = vrot.slane %v6477, 5
    %v6520 = vrot.slane %v6482, 5
    %v6521 = vrot.slane %v6487, 5
    %v6522 = vrot.slane %v6492, 5
    %v6523 = vrot.slane %v6497, 5
    %v6524 = vrot.slane %v6502, 5
    %v6525 = vrot.slane %v6507, 5
    %v6534 = vsel %vm455, 0.0, %v6518
    %v6535 = vsel %vm455, 0.0, %v6519
    %v6536 = vsel %vm455, 0.0, %v6520
    %v6537 = vsel %vm455, 0.0, %v6521
    %v6538 = vsel %vm455, 0.0, %v6522
    %v6539 = vsel %vm455, 0.0, %v6523
    %v6540 = vsel %vm455, 0.0, %v6524
    %v6541 = vsel %vm455, 0.0, %v6525
    %v6542 = vlaneseq
    %v6543 = vshrl.u32 %v6542, 7
    %v6544 = vsub.s32 0, %v6543
    %v6545 = vrot.slane %v6380, %v6544
    %v6546 = vlaneseq
    %v6547 = vshrl.u32 %v6546, 7
    %v6548 = vsub.s32 0, %v6547
    %v6549 = vrot.slane %v6357, %v6548
    %v6550 = vmul.f32 %v6549, %v6534
    %v6551 = vmul.f32 %v6549, %v6535
    %v6552 = vmul.f32 %v6549, %v6536
    %v6553 = vmul.f32 %v6549, %v6537
    %v6554 = vmul.f32 %v6549, %v6538
    %v6555 = vmul.f32 %v6549, %v6539
    %v6556 = vmul.f32 %v6549, %v6540
    %v6557 = vmul.f32 %v6549, %v6541
    %v6558 = vadd.f32 %v6545, %v6550
    %v6559 = vadd.f32 %v6545, %v6551
    %v6560 = vadd.f32 %v6545, %v6552
    %v6561 = vadd.f32 %v6545, %v6553
    %v6562 = vadd.f32 %v6545, %v6554
    %v6563 = vadd.f32 %v6545, %v6555
    %v6564 = vadd.f32 %v6545, %v6556
    %v6565 = vadd.f32 %v6545, %v6557
    %v6566 = vlaneseq
    %v6567 = vshrl.u32 %v6566, 7
    %v6568 = vsub.s32 1, %v6567
    %v6569 = vrot.slane %v6357, %v6568
    %v6570 = vmul.f32 %v6569, %v6534
    %v6571 = vmul.f32 %v6569, %v6518
    %v6572 = vmul.f32 %v6569, %v6535
    %v6573 = vmul.f32 %v6569, %v6519
    %v6574 = vmul.f32 %v6569, %v6536
    %v6575 = vmul.f32 %v6569, %v6520
    %v6576 = vmul.f32 %v6569, %v6537
    %v6577 = vmul.f32 %v6569, %v6521
    %v6578 = vmul.f32 %v6569, %v6538
    %v6579 = vmul.f32 %v6569, %v6522
    %v6580 = vmul.f32 %v6569, %v6539
    %v6581 = vmul.f32 %v6569, %v6523
    %v6582 = vmul.f32 %v6569, %v6540
    %v6583 = vmul.f32 %v6569, %v6524
    %v6584 = vmul.f32 %v6569, %v6541
    %v6585 = vmul.f32 %v6569, %v6525
    %v6602 = vrot.slane %v6570, 1
    %v6603 = vrot.slane %v6571, 1
    %v6604 = vsel %vm524, %v6602, %v6603
    %v6605 = vrot.slane %v6572, 1
    %v6606 = vrot.slane %v6573, 1
    %v6607 = vsel %vm524, %v6605, %v6606
    %v6608 = vrot.slane %v6574, 1
    %v6609 = vrot.slane %v6575, 1
    %v6610 = vsel %vm524, %v6608, %v6609
    %v6611 = vrot.slane %v6576, 1
    %v6612 = vrot.slane %v6577, 1
    %v6613 = vsel %vm524, %v6611, %v6612
    %v6614 = vrot.slane %v6578, 1
    %v6615 = vrot.slane %v6579, 1
    %v6616 = vsel %vm524, %v6614, %v6615
    %v6617 = vrot.slane %v6580, 1
    %v6618 = vrot.slane %v6581, 1
    %v6619 = vsel %vm524, %v6617, %v6618
    %v6620 = vrot.slane %v6582, 1
    %v6621 = vrot.slane %v6583, 1
    %v6622 = vsel %vm524, %v6620, %v6621
    %v6623 = vrot.slane %v6584, 1
    %v6624 = vrot.slane %v6585, 1
    %v6625 = vsel %vm524, %v6623, %v6624
    %v6634 = vadd.f32 %v6558, %v6604
    %v6635 = vadd.f32 %v6559, %v6607
    %v6636 = vadd.f32 %v6560, %v6610
    %v6637 = vadd.f32 %v6561, %v6613
    %v6638 = vadd.f32 %v6562, %v6616
    %v6639 = vadd.f32 %v6563, %v6619
    %v6640 = vadd.f32 %v6564, %v6622
    %v6641 = vadd.f32 %v6565, %v6625
    %v6642 = vlaneseq
    %v6643 = vshrl.u32 %v6642, 7
    %v6644 = vsub.s32 2, %v6643
    %v6645 = vrot.slane %v6357, %v6644
    %v6646 = vmul.f32 %v6645, %v6534
    %v6647 = vmul.f32 %v6645, %v6518
    %v6648 = vmul.f32 %v6645, %v6535
    %v6649 = vmul.f32 %v6645, %v6519
    %v6650 = vmul.f32 %v6645, %v6536
    %v6651 = vmul.f32 %v6645, %v6520
    %v6652 = vmul.f32 %v6645, %v6537
    %v6653 = vmul.f32 %v6645, %v6521
    %v6654 = vmul.f32 %v6645, %v6538
    %v6655 = vmul.f32 %v6645, %v6522
    %v6656 = vmul.f32 %v6645, %v6539
    %v6657 = vmul.f32 %v6645, %v6523
    %v6658 = vmul.f32 %v6645, %v6540
    %v6659 = vmul.f32 %v6645, %v6524
    %v6660 = vmul.f32 %v6645, %v6541
    %v6661 = vmul.f32 %v6645, %v6525
    %v6678 = vrot.slane %v6646, 2
    %v6679 = vrot.slane %v6647, 2
    %v6680 = vsel %vm601, %v6678, %v6679
    %v6681 = vrot.slane %v6648, 2
    %v6682 = vrot.slane %v6649, 2
    %v6683 = vsel %vm601, %v6681, %v6682
    %v6684 = vrot.slane %v6650, 2
    %v6685 = vrot.slane %v6651, 2
    %v6686 = vsel %vm601, %v6684, %v6685
    %v6687 = vrot.slane %v6652, 2
    %v6688 = vrot.slane %v6653, 2
    %v6689 = vsel %vm601, %v6687, %v6688
    %v6690 = vrot.slane %v6654, 2
    %v6691 = vrot.slane %v6655, 2
    %v6692 = vsel %vm601, %v6690, %v6691
    %v6693 = vrot.slane %v6656, 2
    %v6694 = vrot.slane %v6657, 2
    %v6695 = vsel %vm601, %v6693, %v6694
    %v6696 = vrot.slane %v6658, 2
    %v6697 = vrot.slane %v6659, 2
    %v6698 = vsel %vm601, %v6696, %v6697
    %v6699 = vrot.slane %v6660, 2
    %v6700 = vrot.slane %v6661, 2
    %v6701 = vsel %vm601, %v6699, %v6700
    %v6710 = vadd.f32 %v6634, %v6680
    %v6711 = vadd.f32 %v6635, %v6683
    %v6712 = vadd.f32 %v6636, %v6686
    %v6713 = vadd.f32 %v6637, %v6689
    %v6714 = vadd.f32 %v6638, %v6692
    %v6715 = vadd.f32 %v6639, %v6695
    %v6716 = vadd.f32 %v6640, %v6698
    %v6717 = vadd.f32 %v6641, %v6701
    %v6718 = vlaneseq
    %v6719 = vshrl.u32 %v6718, 7
    %v6720 = vsub.s32 3, %v6719
    %v6721 = vrot.slane %v6357, %v6720
    %v6722 = vmul.f32 %v6721, %v6534
    %v6723 = vmul.f32 %v6721, %v6518
    %v6724 = vmul.f32 %v6721, %v6535
    %v6725 = vmul.f32 %v6721, %v6519
    %v6726 = vmul.f32 %v6721, %v6536
    %v6727 = vmul.f32 %v6721, %v6520
    %v6728 = vmul.f32 %v6721, %v6537
    %v6729 = vmul.f32 %v6721, %v6521
    %v6730 = vmul.f32 %v6721, %v6538
    %v6731 = vmul.f32 %v6721, %v6522
    %v6732 = vmul.f32 %v6721, %v6539
    %v6733 = vmul.f32 %v6721, %v6523
    %v6734 = vmul.f32 %v6721, %v6540
    %v6735 = vmul.f32 %v6721, %v6524
    %v6736 = vmul.f32 %v6721, %v6541
    %v6737 = vmul.f32 %v6721, %v6525
    %v6754 = vrot.slane %v6722, 3
    %v6755 = vrot.slane %v6723, 3
    %v6756 = vsel %vm678, %v6754, %v6755
    %v6757 = vrot.slane %v6724, 3
    %v6758 = vrot.slane %v6725, 3
    %v6759 = vsel %vm678, %v6757, %v6758
    %v6760 = vrot.slane %v6726, 3
    %v6761 = vrot.slane %v6727, 3
    %v6762 = vsel %vm678, %v6760, %v6761
    %v6763 = vrot.slane %v6728, 3
    %v6764 = vrot.slane %v6729, 3
    %v6765 = vsel %vm678, %v6763, %v6764
    %v6766 = vrot.slane %v6730, 3
    %v6767 = vrot.slane %v6731, 3
    %v6768 = vsel %vm678, %v6766, %v6767
    %v6769 = vrot.slane %v6732, 3
    %v6770 = vrot.slane %v6733, 3
    %v6771 = vsel %vm678, %v6769, %v6770
    %v6772 = vrot.slane %v6734, 3
    %v6773 = vrot.slane %v6735, 3
    %v6774 = vsel %vm678, %v6772, %v6773
    %v6775 = vrot.slane %v6736, 3
    %v6776 = vrot.slane %v6737, 3
    %v6777 = vsel %vm678, %v6775, %v6776
    %v6786 = vadd.f32 %v6710, %v6756
    %v6787 = vadd.f32 %v6711, %v6759
    %v6788 = vadd.f32 %v6712, %v6762
    %v6789 = vadd.f32 %v6713, %v6765
    %v6790 = vadd.f32 %v6714, %v6768
    %v6791 = vadd.f32 %v6715, %v6771
    %v6792 = vadd.f32 %v6716, %v6774
    %v6793 = vadd.f32 %v6717, %v6777
    %v6794 = vxor.u32 %v6786, 2147483648
    %v6795 = vxor.u32 %v6787, 2147483648
    %v6796 = vxor.u32 %v6788, 2147483648
    %v6797 = vxor.u32 %v6789, 2147483648
    %v6798 = vxor.u32 %v6790, 2147483648
    %v6799 = vxor.u32 %v6791, 2147483648
    %v6800 = vxor.u32 %v6792, 2147483648
    %v6801 = vxor.u32 %v6793, 2147483648
    %v6802 = vmul.f32 %v6794, 1.442695
    %v6803 = vpow.pop %v6802
    %v6804 = vmul.f32 %v6795, 1.442695
    %v6805 = vpow.pop %v6804
    %v6806 = vmul.f32 %v6796, 1.442695
    %v6807 = vpow.pop %v6806
    %v6808 = vmul.f32 %v6797, 1.442695
    %v6809 = vpow.pop %v6808
    %v6810 = vmul.f32 %v6798, 1.442695
    %v6811 = vpow.pop %v6810
    %v6812 = vmul.f32 %v6799, 1.442695
    %v6813 = vpow.pop %v6812
    %v6814 = vmul.f32 %v6800, 1.442695
    %v6815 = vpow.pop %v6814
    %v6816 = vmul.f32 %v6801, 1.442695
    %v6817 = vpow.pop %v6816
    %v6818 = vadd.f32 %v6803, 1.0
    %v6819 = vadd.f32 %v6805, 1.0
    %v6820 = vadd.f32 %v6807, 1.0
    %v6821 = vadd.f32 %v6809, 1.0
    %v6822 = vadd.f32 %v6811, 1.0
    %v6823 = vadd.f32 %v6813, 1.0
    %v6824 = vadd.f32 %v6815, 1.0
    %v6825 = vadd.f32 %v6817, 1.0
    %v6826 = vrcp.pop %v6818
    %v6827 = vmul.f32 1.0, %v6826
    %v6828 = vrcp.pop %v6819
    %v6829 = vmul.f32 1.0, %v6828
    %v6830 = vrcp.pop %v6820
    %v6831 = vmul.f32 1.0, %v6830
    %v6832 = vrcp.pop %v6821
    %v6833 = vmul.f32 1.0, %v6832
    %v6834 = vrcp.pop %v6822
    %v6835 = vmul.f32 1.0, %v6834
    %v6836 = vrcp.pop %v6823
    %v6837 = vmul.f32 1.0, %v6836
    %v6838 = vrcp.pop %v6824
    %v6839 = vmul.f32 1.0, %v6838
    %v6840 = vrcp.pop %v6825
    %v6841 = vmul.f32 1.0, %v6840
    %v6842 = vmul.f32 %v6786, %v6827
    %v6843 = vmul.f32 %v6787, %v6829
    %v6844 = vmul.f32 %v6788, %v6831
    %v6845 = vmul.f32 %v6789, %v6833
    %v6846 = vmul.f32 %v6790, %v6835
    %v6847 = vmul.f32 %v6791, %v6837
    %v6848 = vmul.f32 %v6792, %v6839
    %v6849 = vmul.f32 %v6793, %v6841
    %v6851 = vsel %vm301, %v6842, 0
    %v6854 = vsel %vm301, %v6843, 0
    %v6857 = vsel %vm301, %v6844, 0
    %v6860 = vsel %vm301, %v6845, 0
    %v6863 = vsel %vm301, %v6846, 0
    %v6866 = vsel %vm301, %v6847, 0
    %v6869 = vsel %vm301, %v6848, 0
    %v6872 = vsel %vm301, %v6849, 0
    %6874 = vmatprep.subr.mxu0 0.0
    %6875 = vmatpush1.msra.mxu0 %v6359
    %6876 = vmatprep.subr.mxu0 0.0
    %6877 = vmatpush1.msra.mxu0 %v6360
    %6878 = vmatprep.subr.mxu0 0.0
    %6879 = vmatpush1.msra.mxu0 %v6361
    %6880 = vmatprep.subr.mxu0 0.0
    %6881 = vmatpush1.msra.mxu0 %v6362
    %6882 = vmatprep.subr.mxu0 0.0
    %6883 = vmatpush1.msra.mxu0 0.0
    %6884 = vmatprep.subr.mxu0 0.0
    %6885 = vmatpush1.msra.mxu0 0.0
    %6886 = vmatprep.subr.mxu0 0.0
    %6887 = vmatpush1.msra.mxu0 0.0
    %6888 = vmatprep.subr.mxu0 0.0
    %6889 = vmatpush1.msra.mxu0 0.0
    %6890 = vmatprep.subr.mxu0 0.0
    %6891 = vmatpush1.msra.mxu0 0.0
    %6892 = vmatprep.subr.mxu0 0.0
    %6893 = vmatpush1.msra.mxu0 0.0
    %6894 = vmatprep.subr.mxu0 0.0
    %6895 = vmatpush1.msra.mxu0 0.0
    %6896 = vmatprep.subr.mxu0 0.0
    %6897 = vmatpush1.msra.mxu0 0.0
    %6898 = vmatprep.subr.mxu0 0.0
    %6899 = vmatpush1.msra.mxu0 0.0
    %6900 = vmatprep.subr.mxu0 0.0
    %6901 = vmatpush1.msra.mxu0 0.0
    %6902 = vmatprep.subr.mxu0 0.0
    %6903 = vmatpush1.msra.mxu0 0.0
    %6904 = vmatprep.subr.mxu0 0.0
    %6905 = vmatpush1.msra.mxu0 0.0
    %6906 = vmatprep.subr.mxu0 0.0
    %6907 = vmatpush1.msra.mxu0 0.0
    %6908 = vmatprep.subr.mxu0 0.0
    %6909 = vmatpush1.msra.mxu0 0.0
    %6910 = vmatprep.subr.mxu0 0.0
    %6911 = vmatpush1.msra.mxu0 0.0
    %6912 = vmatprep.subr.mxu0 0.0
    %6913 = vmatpush1.msra.mxu0 0.0
    %6914 = vmatprep.subr.mxu0 0.0
    %6915 = vmatpush1.msra.mxu0 0.0
    %6916 = vmatprep.subr.mxu0 0.0
    %6917 = vmatpush1.msra.mxu0 0.0
    %6918 = vmatprep.subr.mxu0 0.0
    %6919 = vmatpush1.msra.mxu0 0.0
    %6920 = vmatprep.subr.mxu0 0.0
    %6921 = vmatpush1.msra.mxu0 0.0
    %6922 = vmatprep.subr.mxu0 0.0
    %6923 = vmatpush1.msra.mxu0 0.0
    %6924 = vmatprep.subr.mxu0 0.0
    %6925 = vmatpush1.msra.mxu0 0.0
    %6926 = vmatprep.subr.mxu0 0.0
    %6927 = vmatpush1.msra.mxu0 0.0
    %6928 = vmatprep.subr.mxu0 0.0
    %6929 = vmatpush1.msra.mxu0 0.0
    %6930 = vmatprep.subr.mxu0 0.0
    %6931 = vmatpush1.msra.mxu0 0.0
    %6932 = vmatprep.subr.mxu0 0.0
    %6933 = vmatpush1.msra.mxu0 0.0
    %6934 = vmatprep.subr.mxu0 0.0
    %6935 = vmatpush1.msra.mxu0 0.0
    %6936 = vmatprep.subr.mxu0 0.0
    %6937 = vmatpush1.msra.mxu0 0.0
    %6938 = vmatprep.mubr.f32.mxu0 0.0
    %6939 = vmatmul.mubr.f32.gmra.mrb[0].mxu0 %v6851
    %v6940 = vpop.f32.mrb[0].mxu0
    %v6941 = vadd.f32 0.0, %v6940
    %v6942 = vpop.f32.mrb[0].mxu0
    %6943 = vmatprep.mubr.f32.mxu0 0.0
    %6944 = vmatmul.mubr.f32.gmra.mrb[0].mxu0 %v6854
    %v6945 = vpop.f32.mrb[0].mxu0
    %v6946 = vadd.f32 0.0, %v6945
    %v6947 = vpop.f32.mrb[0].mxu0
    %6948 = vmatprep.mubr.f32.mxu0 0.0
    %6949 = vmatmul.mubr.f32.gmra.mrb[0].mxu0 %v6857
    %v6950 = vpop.f32.mrb[0].mxu0
    %v6951 = vadd.f32 0.0, %v6950
    %v6952 = vpop.f32.mrb[0].mxu0
    %6953 = vmatprep.mubr.f32.mxu0 0.0
    %6954 = vmatmul.mubr.f32.gmra.mrb[0].mxu0 %v6860
    %v6955 = vpop.f32.mrb[0].mxu0
    %v6956 = vadd.f32 0.0, %v6955
    %v6957 = vpop.f32.mrb[0].mxu0
    %6958 = vmatprep.mubr.f32.mxu0 0.0
    %6959 = vmatmul.mubr.f32.gmra.mrb[0].mxu0 %v6863
    %v6960 = vpop.f32.mrb[0].mxu0
    %v6961 = vadd.f32 0.0, %v6960
    %v6962 = vpop.f32.mrb[0].mxu0
    %6963 = vmatprep.mubr.f32.mxu0 0.0
    %6964 = vmatmul.mubr.f32.gmra.mrb[0].mxu0 %v6866
    %v6965 = vpop.f32.mrb[0].mxu0
    %v6966 = vadd.f32 0.0, %v6965
    %v6967 = vpop.f32.mrb[0].mxu0
    %6968 = vmatprep.mubr.f32.mxu0 0.0
    %6969 = vmatmul.mubr.f32.gmra.mrb[0].mxu0 %v6869
    %v6970 = vpop.f32.mrb[0].mxu0
    %v6971 = vadd.f32 0.0, %v6970
    %v6972 = vpop.f32.mrb[0].mxu0
    %6973 = vmatprep.mubr.f32.mxu0 0.0
    %6974 = vmatmul.mubr.f32.gmra.mrb[0].mxu0 %v6872
    %v6975 = vpop.f32.mrb[0].mxu0
    %v6976 = vadd.f32 0.0, %v6975
    %v6977 = vpop.f32.mrb[0].mxu0
    %6978 = vdwg.mxu0
    %v6979 = vlaneseq
    %v6980 = vshrl.u32 %v6979, 7
    %v6981 = vsub.s32 1, %v6980
    %v6982 = vrot.slane %v6380, %v6981
    %v6984 = vsel %vm908, %v6941, 0
    %v6987 = vsel %vm908, %v6946, 0
    %v6990 = vsel %vm908, %v6951, 0
    %v6993 = vsel %vm908, %v6956, 0
    %v6996 = vsel %vm908, %v6961, 0
    %v6999 = vsel %vm908, %v6966, 0
    %v7002 = vsel %vm908, %v6971, 0
    %v7005 = vsel %vm908, %v6976, 0
    %v7008 = vsel %vm933, %v6364, 0
    %7010 = vmatprep.subr.mxu0 0.0
    %7011 = vmatpush1.msra.mxu0 %v7008
    %7012 = vmatprep.subr.mxu0 0.0
    %7013 = vmatpush1.msra.mxu0 0.0
    %7014 = vmatprep.subr.mxu0 0.0
    %7015 = vmatpush1.msra.mxu0 0.0
    %7016 = vmatprep.subr.mxu0 0.0
    %7017 = vmatpush1.msra.mxu0 0.0
    %7018 = vmatprep.subr.mxu0 0.0
    %7019 = vmatpush1.msra.mxu0 0.0
    %7020 = vmatprep.subr.mxu0 0.0
    %7021 = vmatpush1.msra.mxu0 0.0
    %7022 = vmatprep.subr.mxu0 0.0
    %7023 = vmatpush1.msra.mxu0 0.0
    %7024 = vmatprep.subr.mxu0 0.0
    %7025 = vmatpush1.msra.mxu0 0.0
    %7026 = vmatprep.subr.mxu0 0.0
    %7027 = vmatpush1.msra.mxu0 0.0
    %7028 = vmatprep.subr.mxu0 0.0
    %7029 = vmatpush1.msra.mxu0 0.0
    %7030 = vmatprep.subr.mxu0 0.0
    %7031 = vmatpush1.msra.mxu0 0.0
    %7032 = vmatprep.subr.mxu0 0.0
    %7033 = vmatpush1.msra.mxu0 0.0
    %7034 = vmatprep.subr.mxu0 0.0
    %7035 = vmatpush1.msra.mxu0 0.0
    %7036 = vmatprep.subr.mxu0 0.0
    %7037 = vmatpush1.msra.mxu0 0.0
    %7038 = vmatprep.subr.mxu0 0.0
    %7039 = vmatpush1.msra.mxu0 0.0
    %7040 = vmatprep.subr.mxu0 0.0
    %7041 = vmatpush1.msra.mxu0 0.0
    %7042 = vmatprep.subr.mxu0 0.0
    %7043 = vmatpush1.msra.mxu0 0.0
    %7044 = vmatprep.subr.mxu0 0.0
    %7045 = vmatpush1.msra.mxu0 0.0
    %7046 = vmatprep.subr.mxu0 0.0
    %7047 = vmatpush1.msra.mxu0 0.0
    %7048 = vmatprep.subr.mxu0 0.0
    %7049 = vmatpush1.msra.mxu0 0.0
    %7050 = vmatprep.subr.mxu0 0.0
    %7051 = vmatpush1.msra.mxu0 0.0
    %7052 = vmatprep.subr.mxu0 0.0
    %7053 = vmatpush1.msra.mxu0 0.0
    %7054 = vmatprep.subr.mxu0 0.0
    %7055 = vmatpush1.msra.mxu0 0.0
    %7056 = vmatprep.subr.mxu0 0.0
    %7057 = vmatpush1.msra.mxu0 0.0
    %7058 = vmatprep.subr.mxu0 0.0
    %7059 = vmatpush1.msra.mxu0 0.0
    %7060 = vmatprep.subr.mxu0 0.0
    %7061 = vmatpush1.msra.mxu0 0.0
    %7062 = vmatprep.subr.mxu0 0.0
    %7063 = vmatpush1.msra.mxu0 0.0
    %7064 = vmatprep.subr.mxu0 0.0
    %7065 = vmatpush1.msra.mxu0 0.0
    %7066 = vmatprep.subr.mxu0 0.0
    %7067 = vmatpush1.msra.mxu0 0.0
    %7068 = vmatprep.subr.mxu0 0.0
    %7069 = vmatpush1.msra.mxu0 0.0
    %7070 = vmatprep.subr.mxu0 0.0
    %7071 = vmatpush1.msra.mxu0 0.0
    %7072 = vmatprep.subr.mxu0 0.0
    %7073 = vmatpush1.msra.mxu0 0.0
    %7074 = vmatprep.mubr.f32.mxu0 0.0
    %7075 = vmatmul.mubr.f32.gmra.mrb[0].mxu0 %v6984
    %v7076 = vpop.f32.mrb[0].mxu0
    %v7077 = vadd.f32 %v6982, %v7076
    %v7078 = vpop.f32.mrb[0].mxu0
    %7079 = vmatprep.mubr.f32.mxu0 0.0
    %7080 = vmatmul.mubr.f32.gmra.mrb[0].mxu0 %v6987
    %v7081 = vpop.f32.mrb[0].mxu0
    %v7082 = vadd.f32 %v6982, %v7081
    %v7083 = vpop.f32.mrb[0].mxu0
    %7084 = vmatprep.mubr.f32.mxu0 0.0
    %7085 = vmatmul.mubr.f32.gmra.mrb[0].mxu0 %v6990
    %v7086 = vpop.f32.mrb[0].mxu0
    %v7087 = vadd.f32 %v6982, %v7086
    %v7088 = vpop.f32.mrb[0].mxu0
    %7089 = vmatprep.mubr.f32.mxu0 0.0
    %7090 = vmatmul.mubr.f32.gmra.mrb[0].mxu0 %v6993
    %v7091 = vpop.f32.mrb[0].mxu0
    %v7092 = vadd.f32 %v6982, %v7091
    %v7093 = vpop.f32.mrb[0].mxu0
    %7094 = vmatprep.mubr.f32.mxu0 0.0
    %7095 = vmatmul.mubr.f32.gmra.mrb[0].mxu0 %v6996
    %v7096 = vpop.f32.mrb[0].mxu0
    %v7097 = vadd.f32 %v6982, %v7096
    %v7098 = vpop.f32.mrb[0].mxu0
    %7099 = vmatprep.mubr.f32.mxu0 0.0
    %7100 = vmatmul.mubr.f32.gmra.mrb[0].mxu0 %v6999
    %v7101 = vpop.f32.mrb[0].mxu0
    %v7102 = vadd.f32 %v6982, %v7101
    %v7103 = vpop.f32.mrb[0].mxu0
    %7104 = vmatprep.mubr.f32.mxu0 0.0
    %7105 = vmatmul.mubr.f32.gmra.mrb[0].mxu0 %v7002
    %v7106 = vpop.f32.mrb[0].mxu0
    %v7107 = vadd.f32 %v6982, %v7106
    %v7108 = vpop.f32.mrb[0].mxu0
    %7109 = vmatprep.mubr.f32.mxu0 0.0
    %7110 = vmatmul.mubr.f32.gmra.mrb[0].mxu0 %v7005
    %v7111 = vpop.f32.mrb[0].mxu0
    %v7112 = vadd.f32 %v6982, %v7111
    %v7113 = vpop.f32.mrb[0].mxu0
    %7114 = vdwg.mxu0
    %vm7115 = vcmp.gt.f32.partialorder %v7077, 20.0
    %vm7116 = vcmp.gt.f32.partialorder %v7082, 20.0
    %vm7117 = vcmp.gt.f32.partialorder %v7087, 20.0
    %vm7118 = vcmp.gt.f32.partialorder %v7092, 20.0
    %vm7119 = vcmp.gt.f32.partialorder %v7097, 20.0
    %vm7120 = vcmp.gt.f32.partialorder %v7102, 20.0
    %vm7121 = vcmp.gt.f32.partialorder %v7107, 20.0
    %vm7122 = vcmp.gt.f32.partialorder %v7112, 20.0
    %v7123 = vmin.f32 %v7077, 20.0
    %v7124 = vmin.f32 %v7082, 20.0
    %v7125 = vmin.f32 %v7087, 20.0
    %v7126 = vmin.f32 %v7092, 20.0
    %v7127 = vmin.f32 %v7097, 20.0
    %v7128 = vmin.f32 %v7102, 20.0
    %v7129 = vmin.f32 %v7107, 20.0
    %v7130 = vmin.f32 %v7112, 20.0
    %v7131 = vmul.f32 %v7123, 1.442695
    %v7132 = vpow.pop %v7131
    %v7133 = vmul.f32 %v7124, 1.442695
    %v7134 = vpow.pop %v7133
    %v7135 = vmul.f32 %v7125, 1.442695
    %v7136 = vpow.pop %v7135
    %v7137 = vmul.f32 %v7126, 1.442695
    %v7138 = vpow.pop %v7137
    %v7139 = vmul.f32 %v7127, 1.442695
    %v7140 = vpow.pop %v7139
    %v7141 = vmul.f32 %v7128, 1.442695
    %v7142 = vpow.pop %v7141
    %v7143 = vmul.f32 %v7129, 1.442695
    %v7144 = vpow.pop %v7143
    %v7145 = vmul.f32 %v7130, 1.442695
    %v7146 = vpow.pop %v7145
    %v7147 = vadd.f32 %v7132, 1.0
    %v7148 = vadd.f32 %v7134, 1.0
    %v7149 = vadd.f32 %v7136, 1.0
    %v7150 = vadd.f32 %v7138, 1.0
    %v7151 = vadd.f32 %v7140, 1.0
    %v7152 = vadd.f32 %v7142, 1.0
    %v7153 = vadd.f32 %v7144, 1.0
    %v7154 = vadd.f32 %v7146, 1.0
    %v7155 = vlog2.pop %v7147
    %v7156 = vmul.f32 %v7155, 0.6931472
    %v7157 = vlog2.pop %v7148
    %v7158 = vmul.f32 %v7157, 0.6931472
    %v7159 = vlog2.pop %v7149
    %v7160 = vmul.f32 %v7159, 0.6931472
    %v7161 = vlog2.pop %v7150
    %v7162 = vmul.f32 %v7161, 0.6931472
    %v7163 = vlog2.pop %v7151
    %v7164 = vmul.f32 %v7163, 0.6931472
    %v7165 = vlog2.pop %v7152
    %v7166 = vmul.f32 %v7165, 0.6931472
    %v7167 = vlog2.pop %v7153
    %v7168 = vmul.f32 %v7167, 0.6931472
    %v7169 = vlog2.pop %v7154
    %v7170 = vmul.f32 %v7169, 0.6931472
    %v7171 = vsel %vm7115, %v7077, %v7156
    %v7172 = vsel %vm7116, %v7082, %v7158
    %v7173 = vsel %vm7117, %v7087, %v7160
    %v7174 = vsel %vm7118, %v7092, %v7162
    %v7175 = vsel %vm7119, %v7097, %v7164
    %v7176 = vsel %vm7120, %v7102, %v7166
    %v7177 = vsel %vm7121, %v7107, %v7168
    %v7178 = vsel %vm7122, %v7112, %v7170
    %v7187 = vcombine.high %v7171, %v7171
    %v7189 = vunpack.c.l.s4 1966171168
    %v7190 = vunpack.c.0.s8 %v7189
    %v7191 = vlaneseq
    %v7192 = vshrl.u32 %v7191, 7
    %v7193 = vsub.s32 %v7190, %v7192
    %v7194 = vrot.slane %v7171, %v7193
    %v7196 = vunpack.c.l.s4 1966171168
    %v7197 = vunpack.c.0.s8 %v7196
    %v7198 = vlaneseq
    %v7199 = vshrl.u32 %v7198, 7
    %v7200 = vsub.s32 %v7197, %v7199
    %v7201 = vrot.slane %v7187, %v7200
    %v7202 = vcombine.high %v7194, %v7194
    %v7203 = vcombine.high %v7201, %v7201
    %v7205 = vunpack.c.l.s4 1966171168
    %v7206 = vunpack.c.0.s8 %v7205
    %v7207 = vlaneseq
    %v7208 = vshrl.u32 %v7207, 7
    %v7209 = vsub.s32 %v7206, %v7208
    %v7210 = vrot.slane %v7194, %v7209
    %v7212 = vunpack.c.l.s4 1966171168
    %v7213 = vunpack.c.0.s8 %v7212
    %v7214 = vlaneseq
    %v7215 = vshrl.u32 %v7214, 7
    %v7216 = vsub.s32 %v7213, %v7215
    %v7217 = vrot.slane %v7201, %v7216
    %v7219 = vunpack.c.l.s4 1966171168
    %v7220 = vunpack.c.0.s8 %v7219
    %v7221 = vlaneseq
    %v7222 = vshrl.u32 %v7221, 7
    %v7223 = vsub.s32 %v7220, %v7222
    %v7224 = vrot.slane %v7202, %v7223
    %v7226 = vunpack.c.l.s4 1966171168
    %v7227 = vunpack.c.0.s8 %v7226
    %v7228 = vlaneseq
    %v7229 = vshrl.u32 %v7228, 7
    %v7230 = vsub.s32 %v7227, %v7229
    %v7231 = vrot.slane %v7203, %v7230
    %v7232 = vcombine.high %v7210, %v7210
    %v7233 = vcombine.high %v7217, %v7217
    %v7234 = vcombine.high %v7224, %v7224
    %v7235 = vcombine.high %v7231, %v7231
    %v7236 = vcombine.high %v7172, %v7172
    %v7238 = vunpack.c.l.s4 1966171168
    %v7239 = vunpack.c.0.s8 %v7238
    %v7240 = vlaneseq
    %v7241 = vshrl.u32 %v7240, 7
    %v7242 = vsub.s32 %v7239, %v7241
    %v7243 = vrot.slane %v7172, %v7242
    %v7245 = vunpack.c.l.s4 1966171168
    %v7246 = vunpack.c.0.s8 %v7245
    %v7247 = vlaneseq
    %v7248 = vshrl.u32 %v7247, 7
    %v7249 = vsub.s32 %v7246, %v7248
    %v7250 = vrot.slane %v7236, %v7249
    %v7251 = vcombine.high %v7243, %v7243
    %v7252 = vcombine.high %v7250, %v7250
    %v7254 = vunpack.c.l.s4 1966171168
    %v7255 = vunpack.c.0.s8 %v7254
    %v7256 = vlaneseq
    %v7257 = vshrl.u32 %v7256, 7
    %v7258 = vsub.s32 %v7255, %v7257
    %v7259 = vrot.slane %v7243, %v7258
    %v7261 = vunpack.c.l.s4 1966171168
    %v7262 = vunpack.c.0.s8 %v7261
    %v7263 = vlaneseq
    %v7264 = vshrl.u32 %v7263, 7
    %v7265 = vsub.s32 %v7262, %v7264
    %v7266 = vrot.slane %v7250, %v7265
    %v7268 = vunpack.c.l.s4 1966171168
    %v7269 = vunpack.c.0.s8 %v7268
    %v7270 = vlaneseq
    %v7271 = vshrl.u32 %v7270, 7
    %v7272 = vsub.s32 %v7269, %v7271
    %v7273 = vrot.slane %v7251, %v7272
    %v7275 = vunpack.c.l.s4 1966171168
    %v7276 = vunpack.c.0.s8 %v7275
    %v7277 = vlaneseq
    %v7278 = vshrl.u32 %v7277, 7
    %v7279 = vsub.s32 %v7276, %v7278
    %v7280 = vrot.slane %v7252, %v7279
    %v7281 = vcombine.high %v7259, %v7259
    %v7282 = vcombine.high %v7266, %v7266
    %v7283 = vcombine.high %v7273, %v7273
    %v7284 = vcombine.high %v7280, %v7280
    %v7285 = vcombine.high %v7173, %v7173
    %v7287 = vunpack.c.l.s4 1966171168
    %v7288 = vunpack.c.0.s8 %v7287
    %v7289 = vlaneseq
    %v7290 = vshrl.u32 %v7289, 7
    %v7291 = vsub.s32 %v7288, %v7290
    %v7292 = vrot.slane %v7173, %v7291
    %v7294 = vunpack.c.l.s4 1966171168
    %v7295 = vunpack.c.0.s8 %v7294
    %v7296 = vlaneseq
    %v7297 = vshrl.u32 %v7296, 7
    %v7298 = vsub.s32 %v7295, %v7297
    %v7299 = vrot.slane %v7285, %v7298
    %v7300 = vcombine.high %v7292, %v7292
    %v7301 = vcombine.high %v7299, %v7299
    %v7303 = vunpack.c.l.s4 1966171168
    %v7304 = vunpack.c.0.s8 %v7303
    %v7305 = vlaneseq
    %v7306 = vshrl.u32 %v7305, 7
    %v7307 = vsub.s32 %v7304, %v7306
    %v7308 = vrot.slane %v7292, %v7307
    %v7310 = vunpack.c.l.s4 1966171168
    %v7311 = vunpack.c.0.s8 %v7310
    %v7312 = vlaneseq
    %v7313 = vshrl.u32 %v7312, 7
    %v7314 = vsub.s32 %v7311, %v7313
    %v7315 = vrot.slane %v7299, %v7314
    %v7317 = vunpack.c.l.s4 1966171168
    %v7318 = vunpack.c.0.s8 %v7317
    %v7319 = vlaneseq
    %v7320 = vshrl.u32 %v7319, 7
    %v7321 = vsub.s32 %v7318, %v7320
    %v7322 = vrot.slane %v7300, %v7321
    %v7324 = vunpack.c.l.s4 1966171168
    %v7325 = vunpack.c.0.s8 %v7324
    %v7326 = vlaneseq
    %v7327 = vshrl.u32 %v7326, 7
    %v7328 = vsub.s32 %v7325, %v7327
    %v7329 = vrot.slane %v7301, %v7328
    %v7330 = vcombine.high %v7308, %v7308
    %v7331 = vcombine.high %v7315, %v7315
    %v7332 = vcombine.high %v7322, %v7322
    %v7333 = vcombine.high %v7329, %v7329
    %v7334 = vcombine.high %v7174, %v7174
    %v7336 = vunpack.c.l.s4 1966171168
    %v7337 = vunpack.c.0.s8 %v7336
    %v7338 = vlaneseq
    %v7339 = vshrl.u32 %v7338, 7
    %v7340 = vsub.s32 %v7337, %v7339
    %v7341 = vrot.slane %v7174, %v7340
    %v7343 = vunpack.c.l.s4 1966171168
    %v7344 = vunpack.c.0.s8 %v7343
    %v7345 = vlaneseq
    %v7346 = vshrl.u32 %v7345, 7
    %v7347 = vsub.s32 %v7344, %v7346
    %v7348 = vrot.slane %v7334, %v7347
    %v7349 = vcombine.high %v7341, %v7341
    %v7350 = vcombine.high %v7348, %v7348
    %v7352 = vunpack.c.l.s4 1966171168
    %v7353 = vunpack.c.0.s8 %v7352
    %v7354 = vlaneseq
    %v7355 = vshrl.u32 %v7354, 7
    %v7356 = vsub.s32 %v7353, %v7355
    %v7357 = vrot.slane %v7341, %v7356
    %v7359 = vunpack.c.l.s4 1966171168
    %v7360 = vunpack.c.0.s8 %v7359
    %v7361 = vlaneseq
    %v7362 = vshrl.u32 %v7361, 7
    %v7363 = vsub.s32 %v7360, %v7362
    %v7364 = vrot.slane %v7348, %v7363
    %v7366 = vunpack.c.l.s4 1966171168
    %v7367 = vunpack.c.0.s8 %v7366
    %v7368 = vlaneseq
    %v7369 = vshrl.u32 %v7368, 7
    %v7370 = vsub.s32 %v7367, %v7369
    %v7371 = vrot.slane %v7349, %v7370
    %v7373 = vunpack.c.l.s4 1966171168
    %v7374 = vunpack.c.0.s8 %v7373
    %v7375 = vlaneseq
    %v7376 = vshrl.u32 %v7375, 7
    %v7377 = vsub.s32 %v7374, %v7376
    %v7378 = vrot.slane %v7350, %v7377
    %v7379 = vcombine.high %v7357, %v7357
    %v7380 = vcombine.high %v7364, %v7364
    %v7381 = vcombine.high %v7371, %v7371
    %v7382 = vcombine.high %v7378, %v7378
    %v7383 = vcombine.high %v7175, %v7175
    %v7385 = vunpack.c.l.s4 1966171168
    %v7386 = vunpack.c.0.s8 %v7385
    %v7387 = vlaneseq
    %v7388 = vshrl.u32 %v7387, 7
    %v7389 = vsub.s32 %v7386, %v7388
    %v7390 = vrot.slane %v7175, %v7389
    %v7392 = vunpack.c.l.s4 1966171168
    %v7393 = vunpack.c.0.s8 %v7392
    %v7394 = vlaneseq
    %v7395 = vshrl.u32 %v7394, 7
    %v7396 = vsub.s32 %v7393, %v7395
    %v7397 = vrot.slane %v7383, %v7396
    %v7398 = vcombine.high %v7390, %v7390
    %v7399 = vcombine.high %v7397, %v7397
    %v7401 = vunpack.c.l.s4 1966171168
    %v7402 = vunpack.c.0.s8 %v7401
    %v7403 = vlaneseq
    %v7404 = vshrl.u32 %v7403, 7
    %v7405 = vsub.s32 %v7402, %v7404
    %v7406 = vrot.slane %v7390, %v7405
    %v7408 = vunpack.c.l.s4 1966171168
    %v7409 = vunpack.c.0.s8 %v7408
    %v7410 = vlaneseq
    %v7411 = vshrl.u32 %v7410, 7
    %v7412 = vsub.s32 %v7409, %v7411
    %v7413 = vrot.slane %v7397, %v7412
    %v7415 = vunpack.c.l.s4 1966171168
    %v7416 = vunpack.c.0.s8 %v7415
    %v7417 = vlaneseq
    %v7418 = vshrl.u32 %v7417, 7
    %v7419 = vsub.s32 %v7416, %v7418
    %v7420 = vrot.slane %v7398, %v7419
    %v7422 = vunpack.c.l.s4 1966171168
    %v7423 = vunpack.c.0.s8 %v7422
    %v7424 = vlaneseq
    %v7425 = vshrl.u32 %v7424, 7
    %v7426 = vsub.s32 %v7423, %v7425
    %v7427 = vrot.slane %v7399, %v7426
    %v7428 = vcombine.high %v7406, %v7406
    %v7429 = vcombine.high %v7413, %v7413
    %v7430 = vcombine.high %v7420, %v7420
    %v7431 = vcombine.high %v7427, %v7427
    %v7432 = vcombine.high %v7176, %v7176
    %v7434 = vunpack.c.l.s4 1966171168
    %v7435 = vunpack.c.0.s8 %v7434
    %v7436 = vlaneseq
    %v7437 = vshrl.u32 %v7436, 7
    %v7438 = vsub.s32 %v7435, %v7437
    %v7439 = vrot.slane %v7176, %v7438
    %v7441 = vunpack.c.l.s4 1966171168
    %v7442 = vunpack.c.0.s8 %v7441
    %v7443 = vlaneseq
    %v7444 = vshrl.u32 %v7443, 7
    %v7445 = vsub.s32 %v7442, %v7444
    %v7446 = vrot.slane %v7432, %v7445
    %v7447 = vcombine.high %v7439, %v7439
    %v7448 = vcombine.high %v7446, %v7446
    %v7450 = vunpack.c.l.s4 1966171168
    %v7451 = vunpack.c.0.s8 %v7450
    %v7452 = vlaneseq
    %v7453 = vshrl.u32 %v7452, 7
    %v7454 = vsub.s32 %v7451, %v7453
    %v7455 = vrot.slane %v7439, %v7454
    %v7457 = vunpack.c.l.s4 1966171168
    %v7458 = vunpack.c.0.s8 %v7457
    %v7459 = vlaneseq
    %v7460 = vshrl.u32 %v7459, 7
    %v7461 = vsub.s32 %v7458, %v7460
    %v7462 = vrot.slane %v7446, %v7461
    %v7464 = vunpack.c.l.s4 1966171168
    %v7465 = vunpack.c.0.s8 %v7464
    %v7466 = vlaneseq
    %v7467 = vshrl.u32 %v7466, 7
    %v7468 = vsub.s32 %v7465, %v7467
    %v7469 = vrot.slane %v7447, %v7468
    %v7471 = vunpack.c.l.s4 1966171168
    %v7472 = vunpack.c.0.s8 %v7471
    %v7473 = vlaneseq
    %v7474 = vshrl.u32 %v7473, 7
    %v7475 = vsub.s32 %v7472, %v7474
    %v7476 = vrot.slane %v7448, %v7475
    %v7477 = vcombine.high %v7455, %v7455
    %v7478 = vcombine.high %v7462, %v7462
    %v7479 = vcombine.high %v7469, %v7469
    %v7480 = vcombine.high %v7476, %v7476
    %v7481 = vcombine.high %v7177, %v7177
    %v7483 = vunpack.c.l.s4 1966171168
    %v7484 = vunpack.c.0.s8 %v7483
    %v7485 = vlaneseq
    %v7486 = vshrl.u32 %v7485, 7
    %v7487 = vsub.s32 %v7484, %v7486
    %v7488 = vrot.slane %v7177, %v7487
    %v7490 = vunpack.c.l.s4 1966171168
    %v7491 = vunpack.c.0.s8 %v7490
    %v7492 = vlaneseq
    %v7493 = vshrl.u32 %v7492, 7
    %v7494 = vsub.s32 %v7491, %v7493
    %v7495 = vrot.slane %v7481, %v7494
    %v7496 = vcombine.high %v7488, %v7488
    %v7497 = vcombine.high %v7495, %v7495
    %v7499 = vunpack.c.l.s4 1966171168
    %v7500 = vunpack.c.0.s8 %v7499
    %v7501 = vlaneseq
    %v7502 = vshrl.u32 %v7501, 7
    %v7503 = vsub.s32 %v7500, %v7502
    %v7504 = vrot.slane %v7488, %v7503
    %v7506 = vunpack.c.l.s4 1966171168
    %v7507 = vunpack.c.0.s8 %v7506
    %v7508 = vlaneseq
    %v7509 = vshrl.u32 %v7508, 7
    %v7510 = vsub.s32 %v7507, %v7509
    %v7511 = vrot.slane %v7495, %v7510
    %v7513 = vunpack.c.l.s4 1966171168
    %v7514 = vunpack.c.0.s8 %v7513
    %v7515 = vlaneseq
    %v7516 = vshrl.u32 %v7515, 7
    %v7517 = vsub.s32 %v7514, %v7516
    %v7518 = vrot.slane %v7496, %v7517
    %v7520 = vunpack.c.l.s4 1966171168
    %v7521 = vunpack.c.0.s8 %v7520
    %v7522 = vlaneseq
    %v7523 = vshrl.u32 %v7522, 7
    %v7524 = vsub.s32 %v7521, %v7523
    %v7525 = vrot.slane %v7497, %v7524
    %v7526 = vcombine.high %v7504, %v7504
    %v7527 = vcombine.high %v7511, %v7511
    %v7528 = vcombine.high %v7518, %v7518
    %v7529 = vcombine.high %v7525, %v7525
    %v7530 = vcombine.high %v7178, %v7178
    %v7532 = vunpack.c.l.s4 1966171168
    %v7533 = vunpack.c.0.s8 %v7532
    %v7534 = vlaneseq
    %v7535 = vshrl.u32 %v7534, 7
    %v7536 = vsub.s32 %v7533, %v7535
    %v7537 = vrot.slane %v7178, %v7536
    %v7539 = vunpack.c.l.s4 1966171168
    %v7540 = vunpack.c.0.s8 %v7539
    %v7541 = vlaneseq
    %v7542 = vshrl.u32 %v7541, 7
    %v7543 = vsub.s32 %v7540, %v7542
    %v7544 = vrot.slane %v7530, %v7543
    %v7545 = vcombine.high %v7537, %v7537
    %v7546 = vcombine.high %v7544, %v7544
    %v7548 = vunpack.c.l.s4 1966171168
    %v7549 = vunpack.c.0.s8 %v7548
    %v7550 = vlaneseq
    %v7551 = vshrl.u32 %v7550, 7
    %v7552 = vsub.s32 %v7549, %v7551
    %v7553 = vrot.slane %v7537, %v7552
    %v7555 = vunpack.c.l.s4 1966171168
    %v7556 = vunpack.c.0.s8 %v7555
    %v7557 = vlaneseq
    %v7558 = vshrl.u32 %v7557, 7
    %v7559 = vsub.s32 %v7556, %v7558
    %v7560 = vrot.slane %v7544, %v7559
    %v7562 = vunpack.c.l.s4 1966171168
    %v7563 = vunpack.c.0.s8 %v7562
    %v7564 = vlaneseq
    %v7565 = vshrl.u32 %v7564, 7
    %v7566 = vsub.s32 %v7563, %v7565
    %v7567 = vrot.slane %v7545, %v7566
    %v7569 = vunpack.c.l.s4 1966171168
    %v7570 = vunpack.c.0.s8 %v7569
    %v7571 = vlaneseq
    %v7572 = vshrl.u32 %v7571, 7
    %v7573 = vsub.s32 %v7570, %v7572
    %v7574 = vrot.slane %v7546, %v7573
    %v7575 = vcombine.high %v7553, %v7553
    %v7576 = vcombine.high %v7560, %v7560
    %v7577 = vcombine.high %v7567, %v7567
    %v7578 = vcombine.high %v7574, %v7574
    %v7579 = vlaneseq
    %v7580 = vshrl.u32 %v7579, 7
    %v7581 = vsub.s32 0, %v7580
    %v7582 = vrot.slane %v7210, %v7581
    %v7583 = vlaneseq
    %v7584 = vshrl.u32 %v7583, 7
    %v7585 = vsub.s32 0, %v7584
    %v7586 = vrot.slane %v7224, %v7585
    %v7587 = vlaneseq
    %v7588 = vshrl.u32 %v7587, 7
    %v7589 = vsub.s32 0, %v7588
    %v7590 = vrot.slane %v7232, %v7589
    %v7591 = vlaneseq
    %v7592 = vshrl.u32 %v7591, 7
    %v7593 = vsub.s32 0, %v7592
    %v7594 = vrot.slane %v7234, %v7593
    %v7595 = vlaneseq
    %v7596 = vshrl.u32 %v7595, 7
    %v7597 = vsub.s32 0, %v7596
    %v7598 = vrot.slane %v7217, %v7597
    %v7599 = vlaneseq
    %v7600 = vshrl.u32 %v7599, 7
    %v7601 = vsub.s32 0, %v7600
    %v7602 = vrot.slane %v7231, %v7601
    %v7603 = vlaneseq
    %v7604 = vshrl.u32 %v7603, 7
    %v7605 = vsub.s32 0, %v7604
    %v7606 = vrot.slane %v7233, %v7605
    %v7607 = vlaneseq
    %v7608 = vshrl.u32 %v7607, 7
    %v7609 = vsub.s32 0, %v7608
    %v7610 = vrot.slane %v7235, %v7609
    %v7611 = vlaneseq
    %v7612 = vshrl.u32 %v7611, 7
    %v7613 = vsub.s32 0, %v7612
    %v7614 = vrot.slane %v7259, %v7613
    %v7615 = vlaneseq
    %v7616 = vshrl.u32 %v7615, 7
    %v7617 = vsub.s32 0, %v7616
    %v7618 = vrot.slane %v7273, %v7617
    %v7619 = vlaneseq
    %v7620 = vshrl.u32 %v7619, 7
    %v7621 = vsub.s32 0, %v7620
    %v7622 = vrot.slane %v7281, %v7621
    %v7623 = vlaneseq
    %v7624 = vshrl.u32 %v7623, 7
    %v7625 = vsub.s32 0, %v7624
    %v7626 = vrot.slane %v7283, %v7625
    %v7627 = vlaneseq
    %v7628 = vshrl.u32 %v7627, 7
    %v7629 = vsub.s32 0, %v7628
    %v7630 = vrot.slane %v7266, %v7629
    %v7631 = vlaneseq
    %v7632 = vshrl.u32 %v7631, 7
    %v7633 = vsub.s32 0, %v7632
    %v7634 = vrot.slane %v7280, %v7633
    %v7635 = vlaneseq
    %v7636 = vshrl.u32 %v7635, 7
    %v7637 = vsub.s32 0, %v7636
    %v7638 = vrot.slane %v7282, %v7637
    %v7639 = vlaneseq
    %v7640 = vshrl.u32 %v7639, 7
    %v7641 = vsub.s32 0, %v7640
    %v7642 = vrot.slane %v7284, %v7641
    %v7643 = vlaneseq
    %v7644 = vshrl.u32 %v7643, 7
    %v7645 = vsub.s32 0, %v7644
    %v7646 = vrot.slane %v7308, %v7645
    %v7647 = vlaneseq
    %v7648 = vshrl.u32 %v7647, 7
    %v7649 = vsub.s32 0, %v7648
    %v7650 = vrot.slane %v7322, %v7649
    %v7651 = vlaneseq
    %v7652 = vshrl.u32 %v7651, 7
    %v7653 = vsub.s32 0, %v7652
    %v7654 = vrot.slane %v7330, %v7653
    %v7655 = vlaneseq
    %v7656 = vshrl.u32 %v7655, 7
    %v7657 = vsub.s32 0, %v7656
    %v7658 = vrot.slane %v7332, %v7657
    %v7659 = vlaneseq
    %v7660 = vshrl.u32 %v7659, 7
    %v7661 = vsub.s32 0, %v7660
    %v7662 = vrot.slane %v7315, %v7661
    %v7663 = vlaneseq
    %v7664 = vshrl.u32 %v7663, 7
    %v7665 = vsub.s32 0, %v7664
    %v7666 = vrot.slane %v7329, %v7665
    %v7667 = vlaneseq
    %v7668 = vshrl.u32 %v7667, 7
    %v7669 = vsub.s32 0, %v7668
    %v7670 = vrot.slane %v7331, %v7669
    %v7671 = vlaneseq
    %v7672 = vshrl.u32 %v7671, 7
    %v7673 = vsub.s32 0, %v7672
    %v7674 = vrot.slane %v7333, %v7673
    %v7675 = vlaneseq
    %v7676 = vshrl.u32 %v7675, 7
    %v7677 = vsub.s32 0, %v7676
    %v7678 = vrot.slane %v7357, %v7677
    %v7679 = vlaneseq
    %v7680 = vshrl.u32 %v7679, 7
    %v7681 = vsub.s32 0, %v7680
    %v7682 = vrot.slane %v7371, %v7681
    %v7683 = vlaneseq
    %v7684 = vshrl.u32 %v7683, 7
    %v7685 = vsub.s32 0, %v7684
    %v7686 = vrot.slane %v7379, %v7685
    %v7687 = vlaneseq
    %v7688 = vshrl.u32 %v7687, 7
    %v7689 = vsub.s32 0, %v7688
    %v7690 = vrot.slane %v7381, %v7689
    %v7691 = vlaneseq
    %v7692 = vshrl.u32 %v7691, 7
    %v7693 = vsub.s32 0, %v7692
    %v7694 = vrot.slane %v7364, %v7693
    %v7695 = vlaneseq
    %v7696 = vshrl.u32 %v7695, 7
    %v7697 = vsub.s32 0, %v7696
    %v7698 = vrot.slane %v7378, %v7697
    %v7699 = vlaneseq
    %v7700 = vshrl.u32 %v7699, 7
    %v7701 = vsub.s32 0, %v7700
    %v7702 = vrot.slane %v7380, %v7701
    %v7703 = vlaneseq
    %v7704 = vshrl.u32 %v7703, 7
    %v7705 = vsub.s32 0, %v7704
    %v7706 = vrot.slane %v7382, %v7705
    %v7707 = vlaneseq
    %v7708 = vshrl.u32 %v7707, 7
    %v7709 = vsub.s32 0, %v7708
    %v7710 = vrot.slane %v7406, %v7709
    %v7711 = vlaneseq
    %v7712 = vshrl.u32 %v7711, 7
    %v7713 = vsub.s32 0, %v7712
    %v7714 = vrot.slane %v7420, %v7713
    %v7715 = vlaneseq
    %v7716 = vshrl.u32 %v7715, 7
    %v7717 = vsub.s32 0, %v7716
    %v7718 = vrot.slane %v7428, %v7717
    %v7719 = vlaneseq
    %v7720 = vshrl.u32 %v7719, 7
    %v7721 = vsub.s32 0, %v7720
    %v7722 = vrot.slane %v7430, %v7721
    %v7723 = vlaneseq
    %v7724 = vshrl.u32 %v7723, 7
    %v7725 = vsub.s32 0, %v7724
    %v7726 = vrot.slane %v7413, %v7725
    %v7727 = vlaneseq
    %v7728 = vshrl.u32 %v7727, 7
    %v7729 = vsub.s32 0, %v7728
    %v7730 = vrot.slane %v7427, %v7729
    %v7731 = vlaneseq
    %v7732 = vshrl.u32 %v7731, 7
    %v7733 = vsub.s32 0, %v7732
    %v7734 = vrot.slane %v7429, %v7733
    %v7735 = vlaneseq
    %v7736 = vshrl.u32 %v7735, 7
    %v7737 = vsub.s32 0, %v7736
    %v7738 = vrot.slane %v7431, %v7737
    %v7739 = vlaneseq
    %v7740 = vshrl.u32 %v7739, 7
    %v7741 = vsub.s32 0, %v7740
    %v7742 = vrot.slane %v7455, %v7741
    %v7743 = vlaneseq
    %v7744 = vshrl.u32 %v7743, 7
    %v7745 = vsub.s32 0, %v7744
    %v7746 = vrot.slane %v7469, %v7745
    %v7747 = vlaneseq
    %v7748 = vshrl.u32 %v7747, 7
    %v7749 = vsub.s32 0, %v7748
    %v7750 = vrot.slane %v7477, %v7749
    %v7751 = vlaneseq
    %v7752 = vshrl.u32 %v7751, 7
    %v7753 = vsub.s32 0, %v7752
    %v7754 = vrot.slane %v7479, %v7753
    %v7755 = vlaneseq
    %v7756 = vshrl.u32 %v7755, 7
    %v7757 = vsub.s32 0, %v7756
    %v7758 = vrot.slane %v7462, %v7757
    %v7759 = vlaneseq
    %v7760 = vshrl.u32 %v7759, 7
    %v7761 = vsub.s32 0, %v7760
    %v7762 = vrot.slane %v7476, %v7761
    %v7763 = vlaneseq
    %v7764 = vshrl.u32 %v7763, 7
    %v7765 = vsub.s32 0, %v7764
    %v7766 = vrot.slane %v7478, %v7765
    %v7767 = vlaneseq
    %v7768 = vshrl.u32 %v7767, 7
    %v7769 = vsub.s32 0, %v7768
    %v7770 = vrot.slane %v7480, %v7769
    %v7771 = vlaneseq
    %v7772 = vshrl.u32 %v7771, 7
    %v7773 = vsub.s32 0, %v7772
    %v7774 = vrot.slane %v7504, %v7773
    %v7775 = vlaneseq
    %v7776 = vshrl.u32 %v7775, 7
    %v7777 = vsub.s32 0, %v7776
    %v7778 = vrot.slane %v7518, %v7777
    %v7779 = vlaneseq
    %v7780 = vshrl.u32 %v7779, 7
    %v7781 = vsub.s32 0, %v7780
    %v7782 = vrot.slane %v7526, %v7781
    %v7783 = vlaneseq
    %v7784 = vshrl.u32 %v7783, 7
    %v7785 = vsub.s32 0, %v7784
    %v7786 = vrot.slane %v7528, %v7785
    %v7787 = vlaneseq
    %v7788 = vshrl.u32 %v7787, 7
    %v7789 = vsub.s32 0, %v7788
    %v7790 = vrot.slane %v7511, %v7789
    %v7791 = vlaneseq
    %v7792 = vshrl.u32 %v7791, 7
    %v7793 = vsub.s32 0, %v7792
    %v7794 = vrot.slane %v7525, %v7793
    %v7795 = vlaneseq
    %v7796 = vshrl.u32 %v7795, 7
    %v7797 = vsub.s32 0, %v7796
    %v7798 = vrot.slane %v7527, %v7797
    %v7799 = vlaneseq
    %v7800 = vshrl.u32 %v7799, 7
    %v7801 = vsub.s32 0, %v7800
    %v7802 = vrot.slane %v7529, %v7801
    %v7803 = vlaneseq
    %v7804 = vshrl.u32 %v7803, 7
    %v7805 = vsub.s32 0, %v7804
    %v7806 = vrot.slane %v7553, %v7805
    %v7807 = vlaneseq
    %v7808 = vshrl.u32 %v7807, 7
    %v7809 = vsub.s32 0, %v7808
    %v7810 = vrot.slane %v7567, %v7809
    %v7811 = vlaneseq
    %v7812 = vshrl.u32 %v7811, 7
    %v7813 = vsub.s32 0, %v7812
    %v7814 = vrot.slane %v7575, %v7813
    %v7815 = vlaneseq
    %v7816 = vshrl.u32 %v7815, 7
    %v7817 = vsub.s32 0, %v7816
    %v7818 = vrot.slane %v7577, %v7817
    %v7819 = vlaneseq
    %v7820 = vshrl.u32 %v7819, 7
    %v7821 = vsub.s32 0, %v7820
    %v7822 = vrot.slane %v7560, %v7821
    %v7823 = vlaneseq
    %v7824 = vshrl.u32 %v7823, 7
    %v7825 = vsub.s32 0, %v7824
    %v7826 = vrot.slane %v7574, %v7825
    %v7827 = vlaneseq
    %v7828 = vshrl.u32 %v7827, 7
    %v7829 = vsub.s32 0, %v7828
    %v7830 = vrot.slane %v7576, %v7829
    %v7831 = vlaneseq
    %v7832 = vshrl.u32 %v7831, 7
    %v7833 = vsub.s32 0, %v7832
    %v7834 = vrot.slane %v7578, %v7833
    %v7899 = vmul.f32 %v7582, %v6372
    %v7900 = vmul.f32 %v7582, %v6373
    %v7901 = vmul.f32 %v7586, %v6372
    %v7902 = vmul.f32 %v7586, %v6373
    %v7903 = vmul.f32 %v7590, %v6372
    %v7904 = vmul.f32 %v7590, %v6373
    %v7905 = vmul.f32 %v7594, %v6372
    %v7906 = vmul.f32 %v7594, %v6373
    %v7907 = vmul.f32 %v7598, %v6372
    %v7908 = vmul.f32 %v7598, %v6373
    %v7909 = vmul.f32 %v7602, %v6372
    %v7910 = vmul.f32 %v7602, %v6373
    %v7911 = vmul.f32 %v7606, %v6372
    %v7912 = vmul.f32 %v7606, %v6373
    %v7913 = vmul.f32 %v7610, %v6372
    %v7914 = vmul.f32 %v7610, %v6373
    %v7915 = vmul.f32 %v7614, %v6372
    %v7916 = vmul.f32 %v7614, %v6373
    %v7917 = vmul.f32 %v7618, %v6372
    %v7918 = vmul.f32 %v7618, %v6373
    %v7919 = vmul.f32 %v7622, %v6372
    %v7920 = vmul.f32 %v7622, %v6373
    %v7921 = vmul.f32 %v7626, %v6372
    %v7922 = vmul.f32 %v7626, %v6373
    %v7923 = vmul.f32 %v7630, %v6372
    %v7924 = vmul.f32 %v7630, %v6373
    %v7925 = vmul.f32 %v7634, %v6372
    %v7926 = vmul.f32 %v7634, %v6373
    %v7927 = vmul.f32 %v7638, %v6372
    %v7928 = vmul.f32 %v7638, %v6373
    %v7929 = vmul.f32 %v7642, %v6372
    %v7930 = vmul.f32 %v7642, %v6373
    %v7931 = vmul.f32 %v7646, %v6372
    %v7932 = vmul.f32 %v7646, %v6373
    %v7933 = vmul.f32 %v7650, %v6372
    %v7934 = vmul.f32 %v7650, %v6373
    %v7935 = vmul.f32 %v7654, %v6372
    %v7936 = vmul.f32 %v7654, %v6373
    %v7937 = vmul.f32 %v7658, %v6372
    %v7938 = vmul.f32 %v7658, %v6373
    %v7939 = vmul.f32 %v7662, %v6372
    %v7940 = vmul.f32 %v7662, %v6373
    %v7941 = vmul.f32 %v7666, %v6372
    %v7942 = vmul.f32 %v7666, %v6373
    %v7943 = vmul.f32 %v7670, %v6372
    %v7944 = vmul.f32 %v7670, %v6373
    %v7945 = vmul.f32 %v7674, %v6372
    %v7946 = vmul.f32 %v7674, %v6373
    %v7947 = vmul.f32 %v7678, %v6372
    %v7948 = vmul.f32 %v7678, %v6373
    %v7949 = vmul.f32 %v7682, %v6372
    %v7950 = vmul.f32 %v7682, %v6373
    %v7951 = vmul.f32 %v7686, %v6372
    %v7952 = vmul.f32 %v7686, %v6373
    %v7953 = vmul.f32 %v7690, %v6372
    %v7954 = vmul.f32 %v7690, %v6373
    %v7955 = vmul.f32 %v7694, %v6372
    %v7956 = vmul.f32 %v7694, %v6373
    %v7957 = vmul.f32 %v7698, %v6372
    %v7958 = vmul.f32 %v7698, %v6373
    %v7959 = vmul.f32 %v7702, %v6372
    %v7960 = vmul.f32 %v7702, %v6373
    %v7961 = vmul.f32 %v7706, %v6372
    %v7962 = vmul.f32 %v7706, %v6373
    %v7963 = vmul.f32 %v7710, %v6372
    %v7964 = vmul.f32 %v7710, %v6373
    %v7965 = vmul.f32 %v7714, %v6372
    %v7966 = vmul.f32 %v7714, %v6373
    %v7967 = vmul.f32 %v7718, %v6372
    %v7968 = vmul.f32 %v7718, %v6373
    %v7969 = vmul.f32 %v7722, %v6372
    %v7970 = vmul.f32 %v7722, %v6373
    %v7971 = vmul.f32 %v7726, %v6372
    %v7972 = vmul.f32 %v7726, %v6373
    %v7973 = vmul.f32 %v7730, %v6372
    %v7974 = vmul.f32 %v7730, %v6373
    %v7975 = vmul.f32 %v7734, %v6372
    %v7976 = vmul.f32 %v7734, %v6373
    %v7977 = vmul.f32 %v7738, %v6372
    %v7978 = vmul.f32 %v7738, %v6373
    %v7979 = vmul.f32 %v7742, %v6372
    %v7980 = vmul.f32 %v7742, %v6373
    %v7981 = vmul.f32 %v7746, %v6372
    %v7982 = vmul.f32 %v7746, %v6373
    %v7983 = vmul.f32 %v7750, %v6372
    %v7984 = vmul.f32 %v7750, %v6373
    %v7985 = vmul.f32 %v7754, %v6372
    %v7986 = vmul.f32 %v7754, %v6373
    %v7987 = vmul.f32 %v7758, %v6372
    %v7988 = vmul.f32 %v7758, %v6373
    %v7989 = vmul.f32 %v7762, %v6372
    %v7990 = vmul.f32 %v7762, %v6373
    %v7991 = vmul.f32 %v7766, %v6372
    %v7992 = vmul.f32 %v7766, %v6373
    %v7993 = vmul.f32 %v7770, %v6372
    %v7994 = vmul.f32 %v7770, %v6373
    %v7995 = vmul.f32 %v7774, %v6372
    %v7996 = vmul.f32 %v7774, %v6373
    %v7997 = vmul.f32 %v7778, %v6372
    %v7998 = vmul.f32 %v7778, %v6373
    %v7999 = vmul.f32 %v7782, %v6372
    %v8000 = vmul.f32 %v7782, %v6373
    %v8001 = vmul.f32 %v7786, %v6372
    %v8002 = vmul.f32 %v7786, %v6373
    %v8003 = vmul.f32 %v7790, %v6372
    %v8004 = vmul.f32 %v7790, %v6373
    %v8005 = vmul.f32 %v7794, %v6372
    %v8006 = vmul.f32 %v7794, %v6373
    %v8007 = vmul.f32 %v7798, %v6372
    %v8008 = vmul.f32 %v7798, %v6373
    %v8009 = vmul.f32 %v7802, %v6372
    %v8010 = vmul.f32 %v7802, %v6373
    %v8011 = vmul.f32 %v7806, %v6372
    %v8012 = vmul.f32 %v7806, %v6373
    %v8013 = vmul.f32 %v7810, %v6372
    %v8014 = vmul.f32 %v7810, %v6373
    %v8015 = vmul.f32 %v7814, %v6372
    %v8016 = vmul.f32 %v7814, %v6373
    %v8017 = vmul.f32 %v7818, %v6372
    %v8018 = vmul.f32 %v7818, %v6373
    %v8019 = vmul.f32 %v7822, %v6372
    %v8020 = vmul.f32 %v7822, %v6373
    %v8021 = vmul.f32 %v7826, %v6372
    %v8022 = vmul.f32 %v7826, %v6373
    %v8023 = vmul.f32 %v7830, %v6372
    %v8024 = vmul.f32 %v7830, %v6373
    %v8025 = vmul.f32 %v7834, %v6372
    %v8026 = vmul.f32 %v7834, %v6373
    %v8027 = vmul.f32 %v7899, 1.442695
    %v8028 = vpow.pop %v8027
    %v8029 = vmul.f32 %v7900, 1.442695
    %v8030 = vpow.pop %v8029
    %v8031 = vmul.f32 %v7901, 1.442695
    %v8032 = vpow.pop %v8031
    %v8033 = vmul.f32 %v7902, 1.442695
    %v8034 = vpow.pop %v8033
    %v8035 = vmul.f32 %v7903, 1.442695
    %v8036 = vpow.pop %v8035
    %v8037 = vmul.f32 %v7904, 1.442695
    %v8038 = vpow.pop %v8037
    %v8039 = vmul.f32 %v7905, 1.442695
    %v8040 = vpow.pop %v8039
    %v8041 = vmul.f32 %v7906, 1.442695
    %v8042 = vpow.pop %v8041
    %v8043 = vmul.f32 %v7907, 1.442695
    %v8044 = vpow.pop %v8043
    %v8045 = vmul.f32 %v7908, 1.442695
    %v8046 = vpow.pop %v8045
    %v8047 = vmul.f32 %v7909, 1.442695
    %v8048 = vpow.pop %v8047
    %v8049 = vmul.f32 %v7910, 1.442695
    %v8050 = vpow.pop %v8049
    %v8051 = vmul.f32 %v7911, 1.442695
    %v8052 = vpow.pop %v8051
    %v8053 = vmul.f32 %v7912, 1.442695
    %v8054 = vpow.pop %v8053
    %v8055 = vmul.f32 %v7913, 1.442695
    %v8056 = vpow.pop %v8055
    %v8057 = vmul.f32 %v7914, 1.442695
    %v8058 = vpow.pop %v8057
    %v8059 = vmul.f32 %v7915, 1.442695
    %v8060 = vpow.pop %v8059
    %v8061 = vmul.f32 %v7916, 1.442695
    %v8062 = vpow.pop %v8061
    %v8063 = vmul.f32 %v7917, 1.442695
    %v8064 = vpow.pop %v8063
    %v8065 = vmul.f32 %v7918, 1.442695
    %v8066 = vpow.pop %v8065
    %v8067 = vmul.f32 %v7919, 1.442695
    %v8068 = vpow.pop %v8067
    %v8069 = vmul.f32 %v7920, 1.442695
    %v8070 = vpow.pop %v8069
    %v8071 = vmul.f32 %v7921, 1.442695
    %v8072 = vpow.pop %v8071
    %v8073 = vmul.f32 %v7922, 1.442695
    %v8074 = vpow.pop %v8073
    %v8075 = vmul.f32 %v7923, 1.442695
    %v8076 = vpow.pop %v8075
    %v8077 = vmul.f32 %v7924, 1.442695
    %v8078 = vpow.pop %v8077
    %v8079 = vmul.f32 %v7925, 1.442695
    %v8080 = vpow.pop %v8079
    %v8081 = vmul.f32 %v7926, 1.442695
    %v8082 = vpow.pop %v8081
    %v8083 = vmul.f32 %v7927, 1.442695
    %v8084 = vpow.pop %v8083
    %v8085 = vmul.f32 %v7928, 1.442695
    %v8086 = vpow.pop %v8085
    %v8087 = vmul.f32 %v7929, 1.442695
    %v8088 = vpow.pop %v8087
    %v8089 = vmul.f32 %v7930, 1.442695
    %v8090 = vpow.pop %v8089
    %v8091 = vmul.f32 %v7931, 1.442695
    %v8092 = vpow.pop %v8091
    %v8093 = vmul.f32 %v7932, 1.442695
    %v8094 = vpow.pop %v8093
    %v8095 = vmul.f32 %v7933, 1.442695
    %v8096 = vpow.pop %v8095
    %v8097 = vmul.f32 %v7934, 1.442695
    %v8098 = vpow.pop %v8097
    %v8099 = vmul.f32 %v7935, 1.442695
    %v8100 = vpow.pop %v8099
    %v8101 = vmul.f32 %v7936, 1.442695
    %v8102 = vpow.pop %v8101
    %v8103 = vmul.f32 %v7937, 1.442695
    %v8104 = vpow.pop %v8103
    %v8105 = vmul.f32 %v7938, 1.442695
    %v8106 = vpow.pop %v8105
    %v8107 = vmul.f32 %v7939, 1.442695
    %v8108 = vpow.pop %v8107
    %v8109 = vmul.f32 %v7940, 1.442695
    %v8110 = vpow.pop %v8109
    %v8111 = vmul.f32 %v7941, 1.442695
    %v8112 = vpow.pop %v8111
    %v8113 = vmul.f32 %v7942, 1.442695
    %v8114 = vpow.pop %v8113
    %v8115 = vmul.f32 %v7943, 1.442695
    %v8116 = vpow.pop %v8115
    %v8117 = vmul.f32 %v7944, 1.442695
    %v8118 = vpow.pop %v8117
    %v8119 = vmul.f32 %v7945, 1.442695
    %v8120 = vpow.pop %v8119
    %v8121 = vmul.f32 %v7946, 1.442695
    %v8122 = vpow.pop %v8121
    %v8123 = vmul.f32 %v7947, 1.442695
    %v8124 = vpow.pop %v8123
    %v8125 = vmul.f32 %v7948, 1.442695
    %v8126 = vpow.pop %v8125
    %v8127 = vmul.f32 %v7949, 1.442695
    %v8128 = vpow.pop %v8127
    %v8129 = vmul.f32 %v7950, 1.442695
    %v8130 = vpow.pop %v8129
    %v8131 = vmul.f32 %v7951, 1.442695
    %v8132 = vpow.pop %v8131
    %v8133 = vmul.f32 %v7952, 1.442695
    %v8134 = vpow.pop %v8133
    %v8135 = vmul.f32 %v7953, 1.442695
    %v8136 = vpow.pop %v8135
    %v8137 = vmul.f32 %v7954, 1.442695
    %v8138 = vpow.pop %v8137
    %v8139 = vmul.f32 %v7955, 1.442695
    %v8140 = vpow.pop %v8139
    %v8141 = vmul.f32 %v7956, 1.442695
    %v8142 = vpow.pop %v8141
    %v8143 = vmul.f32 %v7957, 1.442695
    %v8144 = vpow.pop %v8143
    %v8145 = vmul.f32 %v7958, 1.442695
    %v8146 = vpow.pop %v8145
    %v8147 = vmul.f32 %v7959, 1.442695
    %v8148 = vpow.pop %v8147
    %v8149 = vmul.f32 %v7960, 1.442695
    %v8150 = vpow.pop %v8149
    %v8151 = vmul.f32 %v7961, 1.442695
    %v8152 = vpow.pop %v8151
    %v8153 = vmul.f32 %v7962, 1.442695
    %v8154 = vpow.pop %v8153
    %v8155 = vmul.f32 %v7963, 1.442695
    %v8156 = vpow.pop %v8155
    %v8157 = vmul.f32 %v7964, 1.442695
    %v8158 = vpow.pop %v8157
    %v8159 = vmul.f32 %v7965, 1.442695
    %v8160 = vpow.pop %v8159
    %v8161 = vmul.f32 %v7966, 1.442695
    %v8162 = vpow.pop %v8161
    %v8163 = vmul.f32 %v7967, 1.442695
    %v8164 = vpow.pop %v8163
    %v8165 = vmul.f32 %v7968, 1.442695
    %v8166 = vpow.pop %v8165
    %v8167 = vmul.f32 %v7969, 1.442695
    %v8168 = vpow.pop %v8167
    %v8169 = vmul.f32 %v7970, 1.442695
    %v8170 = vpow.pop %v8169
    %v8171 = vmul.f32 %v7971, 1.442695
    %v8172 = vpow.pop %v8171
    %v8173 = vmul.f32 %v7972, 1.442695
    %v8174 = vpow.pop %v8173
    %v8175 = vmul.f32 %v7973, 1.442695
    %v8176 = vpow.pop %v8175
    %v8177 = vmul.f32 %v7974, 1.442695
    %v8178 = vpow.pop %v8177
    %v8179 = vmul.f32 %v7975, 1.442695
    %v8180 = vpow.pop %v8179
    %v8181 = vmul.f32 %v7976, 1.442695
    %v8182 = vpow.pop %v8181
    %v8183 = vmul.f32 %v7977, 1.442695
    %v8184 = vpow.pop %v8183
    %v8185 = vmul.f32 %v7978, 1.442695
    %v8186 = vpow.pop %v8185
    %v8187 = vmul.f32 %v7979, 1.442695
    %v8188 = vpow.pop %v8187
    %v8189 = vmul.f32 %v7980, 1.442695
    %v8190 = vpow.pop %v8189
    %v8191 = vmul.f32 %v7981, 1.442695
    %v8192 = vpow.pop %v8191
    %v8193 = vmul.f32 %v7982, 1.442695
    %v8194 = vpow.pop %v8193
    %v8195 = vmul.f32 %v7983, 1.442695
    %v8196 = vpow.pop %v8195
    %v8197 = vmul.f32 %v7984, 1.442695
    %v8198 = vpow.pop %v8197
    %v8199 = vmul.f32 %v7985, 1.442695
    %v8200 = vpow.pop %v8199
    %v8201 = vmul.f32 %v7986, 1.442695
    %v8202 = vpow.pop %v8201
    %v8203 = vmul.f32 %v7987, 1.442695
    %v8204 = vpow.pop %v8203
    %v8205 = vmul.f32 %v7988, 1.442695
    %v8206 = vpow.pop %v8205
    %v8207 = vmul.f32 %v7989, 1.442695
    %v8208 = vpow.pop %v8207
    %v8209 = vmul.f32 %v7990, 1.442695
    %v8210 = vpow.pop %v8209
    %v8211 = vmul.f32 %v7991, 1.442695
    %v8212 = vpow.pop %v8211
    %v8213 = vmul.f32 %v7992, 1.442695
    %v8214 = vpow.pop %v8213
    %v8215 = vmul.f32 %v7993, 1.442695
    %v8216 = vpow.pop %v8215
    %v8217 = vmul.f32 %v7994, 1.442695
    %v8218 = vpow.pop %v8217
    %v8219 = vmul.f32 %v7995, 1.442695
    %v8220 = vpow.pop %v8219
    %v8221 = vmul.f32 %v7996, 1.442695
    %v8222 = vpow.pop %v8221
    %v8223 = vmul.f32 %v7997, 1.442695
    %v8224 = vpow.pop %v8223
    %v8225 = vmul.f32 %v7998, 1.442695
    %v8226 = vpow.pop %v8225
    %v8227 = vmul.f32 %v7999, 1.442695
    %v8228 = vpow.pop %v8227
    %v8229 = vmul.f32 %v8000, 1.442695
    %v8230 = vpow.pop %v8229
    %v8231 = vmul.f32 %v8001, 1.442695
    %v8232 = vpow.pop %v8231
    %v8233 = vmul.f32 %v8002, 1.442695
    %v8234 = vpow.pop %v8233
    %v8235 = vmul.f32 %v8003, 1.442695
    %v8236 = vpow.pop %v8235
    %v8237 = vmul.f32 %v8004, 1.442695
    %v8238 = vpow.pop %v8237
    %v8239 = vmul.f32 %v8005, 1.442695
    %v8240 = vpow.pop %v8239
    %v8241 = vmul.f32 %v8006, 1.442695
    %v8242 = vpow.pop %v8241
    %v8243 = vmul.f32 %v8007, 1.442695
    %v8244 = vpow.pop %v8243
    %v8245 = vmul.f32 %v8008, 1.442695
    %v8246 = vpow.pop %v8245
    %v8247 = vmul.f32 %v8009, 1.442695
    %v8248 = vpow.pop %v8247
    %v8249 = vmul.f32 %v8010, 1.442695
    %v8250 = vpow.pop %v8249
    %v8251 = vmul.f32 %v8011, 1.442695
    %v8252 = vpow.pop %v8251
    %v8253 = vmul.f32 %v8012, 1.442695
    %v8254 = vpow.pop %v8253
    %v8255 = vmul.f32 %v8013, 1.442695
    %v8256 = vpow.pop %v8255
    %v8257 = vmul.f32 %v8014, 1.442695
    %v8258 = vpow.pop %v8257
    %v8259 = vmul.f32 %v8015, 1.442695
    %v8260 = vpow.pop %v8259
    %v8261 = vmul.f32 %v8016, 1.442695
    %v8262 = vpow.pop %v8261
    %v8263 = vmul.f32 %v8017, 1.442695
    %v8264 = vpow.pop %v8263
    %v8265 = vmul.f32 %v8018, 1.442695
    %v8266 = vpow.pop %v8265
    %v8267 = vmul.f32 %v8019, 1.442695
    %v8268 = vpow.pop %v8267
    %v8269 = vmul.f32 %v8020, 1.442695
    %v8270 = vpow.pop %v8269
    %v8271 = vmul.f32 %v8021, 1.442695
    %v8272 = vpow.pop %v8271
    %v8273 = vmul.f32 %v8022, 1.442695
    %v8274 = vpow.pop %v8273
    %v8275 = vmul.f32 %v8023, 1.442695
    %v8276 = vpow.pop %v8275
    %v8277 = vmul.f32 %v8024, 1.442695
    %v8278 = vpow.pop %v8277
    %v8279 = vmul.f32 %v8025, 1.442695
    %v8280 = vpow.pop %v8279
    %v8281 = vmul.f32 %v8026, 1.442695
    %v8282 = vpow.pop %v8281
    %v8283 = vlaneseq
    %v8284 = vshrl.u32 %v8283, 7
    %v8285 = vsub.s32 0, %v8284
    %v8286 = vrot.slane %v6941, %v8285
    %s8288 = sor.u32 256, 2
    %8289 = vbcast.lane.b32.xlu0 %v8286, %s8288
    %v8290 = vpop.permute.xlu0 %8289
    %s8292 = sor.u32 256, 10
    %8293 = vbcast.lane.b32.xlu0 %v8286, %s8292
    %v8294 = vpop.permute.xlu0 %8293
    %v8295 = vlaneseq
    %v8296 = vshrl.u32 %v8295, 7
    %v8297 = vsub.s32 1, %v8296
    %v8298 = vrot.slane %v6941, %v8297
    %s8300 = sor.u32 256, 2
    %8301 = vbcast.lane.b32.xlu0 %v8298, %s8300
    %v8302 = vpop.permute.xlu0 %8301
    %s8304 = sor.u32 256, 10
    %8305 = vbcast.lane.b32.xlu0 %v8298, %s8304
    %v8306 = vpop.permute.xlu0 %8305
    %v8307 = vlaneseq
    %v8308 = vshrl.u32 %v8307, 7
    %v8309 = vsub.s32 2, %v8308
    %v8310 = vrot.slane %v6941, %v8309
    %s8312 = sor.u32 256, 2
    %8313 = vbcast.lane.b32.xlu0 %v8310, %s8312
    %v8314 = vpop.permute.xlu0 %8313
    %s8316 = sor.u32 256, 10
    %8317 = vbcast.lane.b32.xlu0 %v8310, %s8316
    %v8318 = vpop.permute.xlu0 %8317
    %v8319 = vlaneseq
    %v8320 = vshrl.u32 %v8319, 7
    %v8321 = vsub.s32 3, %v8320
    %v8322 = vrot.slane %v6941, %v8321
    %s8324 = sor.u32 256, 2
    %8325 = vbcast.lane.b32.xlu0 %v8322, %s8324
    %v8326 = vpop.permute.xlu0 %8325
    %s8328 = sor.u32 256, 10
    %8329 = vbcast.lane.b32.xlu0 %v8322, %s8328
    %v8330 = vpop.permute.xlu0 %8329
    %v8331 = vlaneseq
    %v8332 = vshrl.u32 %v8331, 7
    %v8333 = vsub.s32 4, %v8332
    %v8334 = vrot.slane %v6941, %v8333
    %s8336 = sor.u32 256, 2
    %8337 = vbcast.lane.b32.xlu0 %v8334, %s8336
    %v8338 = vpop.permute.xlu0 %8337
    %s8340 = sor.u32 256, 10
    %8341 = vbcast.lane.b32.xlu0 %v8334, %s8340
    %v8342 = vpop.permute.xlu0 %8341
    %v8343 = vlaneseq
    %v8344 = vshrl.u32 %v8343, 7
    %v8345 = vsub.s32 5, %v8344
    %v8346 = vrot.slane %v6941, %v8345
    %s8348 = sor.u32 256, 2
    %8349 = vbcast.lane.b32.xlu0 %v8346, %s8348
    %v8350 = vpop.permute.xlu0 %8349
    %s8352 = sor.u32 256, 10
    %8353 = vbcast.lane.b32.xlu0 %v8346, %s8352
    %v8354 = vpop.permute.xlu0 %8353
    %v8355 = vlaneseq
    %v8356 = vshrl.u32 %v8355, 7
    %v8357 = vsub.s32 6, %v8356
    %v8358 = vrot.slane %v6941, %v8357
    %s8360 = sor.u32 256, 2
    %8361 = vbcast.lane.b32.xlu0 %v8358, %s8360
    %v8362 = vpop.permute.xlu0 %8361
    %s8364 = sor.u32 256, 10
    %8365 = vbcast.lane.b32.xlu0 %v8358, %s8364
    %v8366 = vpop.permute.xlu0 %8365
    %v8367 = vlaneseq
    %v8368 = vshrl.u32 %v8367, 7
    %v8369 = vsub.s32 7, %v8368
    %v8370 = vrot.slane %v6941, %v8369
    %s8372 = sor.u32 256, 2
    %8373 = vbcast.lane.b32.xlu0 %v8370, %s8372
    %v8374 = vpop.permute.xlu0 %8373
    %s8376 = sor.u32 256, 10
    %8377 = vbcast.lane.b32.xlu0 %v8370, %s8376
    %v8378 = vpop.permute.xlu0 %8377
    %v8379 = vlaneseq
    %v8380 = vshrl.u32 %v8379, 7
    %v8381 = vsub.s32 0, %v8380
    %v8382 = vrot.slane %v6946, %v8381
    %s8384 = sor.u32 256, 2
    %8385 = vbcast.lane.b32.xlu0 %v8382, %s8384
    %v8386 = vpop.permute.xlu0 %8385
    %s8388 = sor.u32 256, 10
    %8389 = vbcast.lane.b32.xlu0 %v8382, %s8388
    %v8390 = vpop.permute.xlu0 %8389
    %v8391 = vlaneseq
    %v8392 = vshrl.u32 %v8391, 7
    %v8393 = vsub.s32 1, %v8392
    %v8394 = vrot.slane %v6946, %v8393
    %s8396 = sor.u32 256, 2
    %8397 = vbcast.lane.b32.xlu0 %v8394, %s8396
    %v8398 = vpop.permute.xlu0 %8397
    %s8400 = sor.u32 256, 10
    %8401 = vbcast.lane.b32.xlu0 %v8394, %s8400
    %v8402 = vpop.permute.xlu0 %8401
    %v8403 = vlaneseq
    %v8404 = vshrl.u32 %v8403, 7
    %v8405 = vsub.s32 2, %v8404
    %v8406 = vrot.slane %v6946, %v8405
    %s8408 = sor.u32 256, 2
    %8409 = vbcast.lane.b32.xlu0 %v8406, %s8408
    %v8410 = vpop.permute.xlu0 %8409
    %s8412 = sor.u32 256, 10
    %8413 = vbcast.lane.b32.xlu0 %v8406, %s8412
    %v8414 = vpop.permute.xlu0 %8413
    %v8415 = vlaneseq
    %v8416 = vshrl.u32 %v8415, 7
    %v8417 = vsub.s32 3, %v8416
    %v8418 = vrot.slane %v6946, %v8417
    %s8420 = sor.u32 256, 2
    %8421 = vbcast.lane.b32.xlu0 %v8418, %s8420
    %v8422 = vpop.permute.xlu0 %8421
    %s8424 = sor.u32 256, 10
    %8425 = vbcast.lane.b32.xlu0 %v8418, %s8424
    %v8426 = vpop.permute.xlu0 %8425
    %v8427 = vlaneseq
    %v8428 = vshrl.u32 %v8427, 7
    %v8429 = vsub.s32 4, %v8428
    %v8430 = vrot.slane %v6946, %v8429
    %s8432 = sor.u32 256, 2
    %8433 = vbcast.lane.b32.xlu0 %v8430, %s8432
    %v8434 = vpop.permute.xlu0 %8433
    %s8436 = sor.u32 256, 10
    %8437 = vbcast.lane.b32.xlu0 %v8430, %s8436
    %v8438 = vpop.permute.xlu0 %8437
    %v8439 = vlaneseq
    %v8440 = vshrl.u32 %v8439, 7
    %v8441 = vsub.s32 5, %v8440
    %v8442 = vrot.slane %v6946, %v8441
    %s8444 = sor.u32 256, 2
    %8445 = vbcast.lane.b32.xlu0 %v8442, %s8444
    %v8446 = vpop.permute.xlu0 %8445
    %s8448 = sor.u32 256, 10
    %8449 = vbcast.lane.b32.xlu0 %v8442, %s8448
    %v8450 = vpop.permute.xlu0 %8449
    %v8451 = vlaneseq
    %v8452 = vshrl.u32 %v8451, 7
    %v8453 = vsub.s32 6, %v8452
    %v8454 = vrot.slane %v6946, %v8453
    %s8456 = sor.u32 256, 2
    %8457 = vbcast.lane.b32.xlu0 %v8454, %s8456
    %v8458 = vpop.permute.xlu0 %8457
    %s8460 = sor.u32 256, 10
    %8461 = vbcast.lane.b32.xlu0 %v8454, %s8460
    %v8462 = vpop.permute.xlu0 %8461
    %v8463 = vlaneseq
    %v8464 = vshrl.u32 %v8463, 7
    %v8465 = vsub.s32 7, %v8464
    %v8466 = vrot.slane %v6946, %v8465
    %s8468 = sor.u32 256, 2
    %8469 = vbcast.lane.b32.xlu0 %v8466, %s8468
    %v8470 = vpop.permute.xlu0 %8469
    %s8472 = sor.u32 256, 10
    %8473 = vbcast.lane.b32.xlu0 %v8466, %s8472
    %v8474 = vpop.permute.xlu0 %8473
    %v8475 = vlaneseq
    %v8476 = vshrl.u32 %v8475, 7
    %v8477 = vsub.s32 0, %v8476
    %v8478 = vrot.slane %v6951, %v8477
    %s8480 = sor.u32 256, 2
    %8481 = vbcast.lane.b32.xlu0 %v8478, %s8480
    %v8482 = vpop.permute.xlu0 %8481
    %s8484 = sor.u32 256, 10
    %8485 = vbcast.lane.b32.xlu0 %v8478, %s8484
    %v8486 = vpop.permute.xlu0 %8485
    %v8487 = vlaneseq
    %v8488 = vshrl.u32 %v8487, 7
    %v8489 = vsub.s32 1, %v8488
    %v8490 = vrot.slane %v6951, %v8489
    %s8492 = sor.u32 256, 2
    %8493 = vbcast.lane.b32.xlu0 %v8490, %s8492
    %v8494 = vpop.permute.xlu0 %8493
    %s8496 = sor.u32 256, 10
    %8497 = vbcast.lane.b32.xlu0 %v8490, %s8496
    %v8498 = vpop.permute.xlu0 %8497
    %v8499 = vlaneseq
    %v8500 = vshrl.u32 %v8499, 7
    %v8501 = vsub.s32 2, %v8500
    %v8502 = vrot.slane %v6951, %v8501
    %s8504 = sor.u32 256, 2
    %8505 = vbcast.lane.b32.xlu0 %v8502, %s8504
    %v8506 = vpop.permute.xlu0 %8505
    %s8508 = sor.u32 256, 10
    %8509 = vbcast.lane.b32.xlu0 %v8502, %s8508
    %v8510 = vpop.permute.xlu0 %8509
    %v8511 = vlaneseq
    %v8512 = vshrl.u32 %v8511, 7
    %v8513 = vsub.s32 3, %v8512
    %v8514 = vrot.slane %v6951, %v8513
    %s8516 = sor.u32 256, 2
    %8517 = vbcast.lane.b32.xlu0 %v8514, %s8516
    %v8518 = vpop.permute.xlu0 %8517
    %s8520 = sor.u32 256, 10
    %8521 = vbcast.lane.b32.xlu0 %v8514, %s8520
    %v8522 = vpop.permute.xlu0 %8521
    %v8523 = vlaneseq
    %v8524 = vshrl.u32 %v8523, 7
    %v8525 = vsub.s32 4, %v8524
    %v8526 = vrot.slane %v6951, %v8525
    %s8528 = sor.u32 256, 2
    %8529 = vbcast.lane.b32.xlu0 %v8526, %s8528
    %v8530 = vpop.permute.xlu0 %8529
    %s8532 = sor.u32 256, 10
    %8533 = vbcast.lane.b32.xlu0 %v8526, %s8532
    %v8534 = vpop.permute.xlu0 %8533
    %v8535 = vlaneseq
    %v8536 = vshrl.u32 %v8535, 7
    %v8537 = vsub.s32 5, %v8536
    %v8538 = vrot.slane %v6951, %v8537
    %s8540 = sor.u32 256, 2
    %8541 = vbcast.lane.b32.xlu0 %v8538, %s8540
    %v8542 = vpop.permute.xlu0 %8541
    %s8544 = sor.u32 256, 10
    %8545 = vbcast.lane.b32.xlu0 %v8538, %s8544
    %v8546 = vpop.permute.xlu0 %8545
    %v8547 = vlaneseq
    %v8548 = vshrl.u32 %v8547, 7
    %v8549 = vsub.s32 6, %v8548
    %v8550 = vrot.slane %v6951, %v8549
    %s8552 = sor.u32 256, 2
    %8553 = vbcast.lane.b32.xlu0 %v8550, %s8552
    %v8554 = vpop.permute.xlu0 %8553
    %s8556 = sor.u32 256, 10
    %8557 = vbcast.lane.b32.xlu0 %v8550, %s8556
    %v8558 = vpop.permute.xlu0 %8557
    %v8559 = vlaneseq
    %v8560 = vshrl.u32 %v8559, 7
    %v8561 = vsub.s32 7, %v8560
    %v8562 = vrot.slane %v6951, %v8561
    %s8564 = sor.u32 256, 2
    %8565 = vbcast.lane.b32.xlu0 %v8562, %s8564
    %v8566 = vpop.permute.xlu0 %8565
    %s8568 = sor.u32 256, 10
    %8569 = vbcast.lane.b32.xlu0 %v8562, %s8568
    %v8570 = vpop.permute.xlu0 %8569
    %v8571 = vlaneseq
    %v8572 = vshrl.u32 %v8571, 7
    %v8573 = vsub.s32 0, %v8572
    %v8574 = vrot.slane %v6956, %v8573
    %s8576 = sor.u32 256, 2
    %8577 = vbcast.lane.b32.xlu0 %v8574, %s8576
    %v8578 = vpop.permute.xlu0 %8577
    %s8580 = sor.u32 256, 10
    %8581 = vbcast.lane.b32.xlu0 %v8574, %s8580
    %v8582 = vpop.permute.xlu0 %8581
    %v8583 = vlaneseq
    %v8584 = vshrl.u32 %v8583, 7
    %v8585 = vsub.s32 1, %v8584
    %v8586 = vrot.slane %v6956, %v8585
    %s8588 = sor.u32 256, 2
    %8589 = vbcast.lane.b32.xlu0 %v8586, %s8588
    %v8590 = vpop.permute.xlu0 %8589
    %s8592 = sor.u32 256, 10
    %8593 = vbcast.lane.b32.xlu0 %v8586, %s8592
    %v8594 = vpop.permute.xlu0 %8593
    %v8595 = vlaneseq
    %v8596 = vshrl.u32 %v8595, 7
    %v8597 = vsub.s32 2, %v8596
    %v8598 = vrot.slane %v6956, %v8597
    %s8600 = sor.u32 256, 2
    %8601 = vbcast.lane.b32.xlu0 %v8598, %s8600
    %v8602 = vpop.permute.xlu0 %8601
    %s8604 = sor.u32 256, 10
    %8605 = vbcast.lane.b32.xlu0 %v8598, %s8604
    %v8606 = vpop.permute.xlu0 %8605
    %v8607 = vlaneseq
    %v8608 = vshrl.u32 %v8607, 7
    %v8609 = vsub.s32 3, %v8608
    %v8610 = vrot.slane %v6956, %v8609
    %s8612 = sor.u32 256, 2
    %8613 = vbcast.lane.b32.xlu0 %v8610, %s8612
    %v8614 = vpop.permute.xlu0 %8613
    %s8616 = sor.u32 256, 10
    %8617 = vbcast.lane.b32.xlu0 %v8610, %s8616
    %v8618 = vpop.permute.xlu0 %8617
    %v8619 = vlaneseq
    %v8620 = vshrl.u32 %v8619, 7
    %v8621 = vsub.s32 4, %v8620
    %v8622 = vrot.slane %v6956, %v8621
    %s8624 = sor.u32 256, 2
    %8625 = vbcast.lane.b32.xlu0 %v8622, %s8624
    %v8626 = vpop.permute.xlu0 %8625
    %s8628 = sor.u32 256, 10
    %8629 = vbcast.lane.b32.xlu0 %v8622, %s8628
    %v8630 = vpop.permute.xlu0 %8629
    %v8631 = vlaneseq
    %v8632 = vshrl.u32 %v8631, 7
    %v8633 = vsub.s32 5, %v8632
    %v8634 = vrot.slane %v6956, %v8633
    %s8636 = sor.u32 256, 2
    %8637 = vbcast.lane.b32.xlu0 %v8634, %s8636
    %v8638 = vpop.permute.xlu0 %8637
    %s8640 = sor.u32 256, 10
    %8641 = vbcast.lane.b32.xlu0 %v8634, %s8640
    %v8642 = vpop.permute.xlu0 %8641
    %v8643 = vlaneseq
    %v8644 = vshrl.u32 %v8643, 7
    %v8645 = vsub.s32 6, %v8644
    %v8646 = vrot.slane %v6956, %v8645
    %s8648 = sor.u32 256, 2
    %8649 = vbcast.lane.b32.xlu0 %v8646, %s8648
    %v8650 = vpop.permute.xlu0 %8649
    %s8652 = sor.u32 256, 10
    %8653 = vbcast.lane.b32.xlu0 %v8646, %s8652
    %v8654 = vpop.permute.xlu0 %8653
    %v8655 = vlaneseq
    %v8656 = vshrl.u32 %v8655, 7
    %v8657 = vsub.s32 7, %v8656
    %v8658 = vrot.slane %v6956, %v8657
    %s8660 = sor.u32 256, 2
    %8661 = vbcast.lane.b32.xlu0 %v8658, %s8660
    %v8662 = vpop.permute.xlu0 %8661
    %s8664 = sor.u32 256, 10
    %8665 = vbcast.lane.b32.xlu0 %v8658, %s8664
    %v8666 = vpop.permute.xlu0 %8665
    %v8667 = vlaneseq
    %v8668 = vshrl.u32 %v8667, 7
    %v8669 = vsub.s32 0, %v8668
    %v8670 = vrot.slane %v6961, %v8669
    %s8672 = sor.u32 256, 2
    %8673 = vbcast.lane.b32.xlu0 %v8670, %s8672
    %v8674 = vpop.permute.xlu0 %8673
    %s8676 = sor.u32 256, 10
    %8677 = vbcast.lane.b32.xlu0 %v8670, %s8676
    %v8678 = vpop.permute.xlu0 %8677
    %v8679 = vlaneseq
    %v8680 = vshrl.u32 %v8679, 7
    %v8681 = vsub.s32 1, %v8680
    %v8682 = vrot.slane %v6961, %v8681
    %s8684 = sor.u32 256, 2
    %8685 = vbcast.lane.b32.xlu0 %v8682, %s8684
    %v8686 = vpop.permute.xlu0 %8685
    %s8688 = sor.u32 256, 10
    %8689 = vbcast.lane.b32.xlu0 %v8682, %s8688
    %v8690 = vpop.permute.xlu0 %8689
    %v8691 = vlaneseq
    %v8692 = vshrl.u32 %v8691, 7
    %v8693 = vsub.s32 2, %v8692
    %v8694 = vrot.slane %v6961, %v8693
    %s8696 = sor.u32 256, 2
    %8697 = vbcast.lane.b32.xlu0 %v8694, %s8696
    %v8698 = vpop.permute.xlu0 %8697
    %s8700 = sor.u32 256, 10
    %8701 = vbcast.lane.b32.xlu0 %v8694, %s8700
    %v8702 = vpop.permute.xlu0 %8701
    %v8703 = vlaneseq
    %v8704 = vshrl.u32 %v8703, 7
    %v8705 = vsub.s32 3, %v8704
    %v8706 = vrot.slane %v6961, %v8705
    %s8708 = sor.u32 256, 2
    %8709 = vbcast.lane.b32.xlu0 %v8706, %s8708
    %v8710 = vpop.permute.xlu0 %8709
    %s8712 = sor.u32 256, 10
    %8713 = vbcast.lane.b32.xlu0 %v8706, %s8712
    %v8714 = vpop.permute.xlu0 %8713
    %v8715 = vlaneseq
    %v8716 = vshrl.u32 %v8715, 7
    %v8717 = vsub.s32 4, %v8716
    %v8718 = vrot.slane %v6961, %v8717
    %s8720 = sor.u32 256, 2
    %8721 = vbcast.lane.b32.xlu0 %v8718, %s8720
    %v8722 = vpop.permute.xlu0 %8721
    %s8724 = sor.u32 256, 10
    %8725 = vbcast.lane.b32.xlu0 %v8718, %s8724
    %v8726 = vpop.permute.xlu0 %8725
    %v8727 = vlaneseq
    %v8728 = vshrl.u32 %v8727, 7
    %v8729 = vsub.s32 5, %v8728
    %v8730 = vrot.slane %v6961, %v8729
    %s8732 = sor.u32 256, 2
    %8733 = vbcast.lane.b32.xlu0 %v8730, %s8732
    %v8734 = vpop.permute.xlu0 %8733
    %s8736 = sor.u32 256, 10
    %8737 = vbcast.lane.b32.xlu0 %v8730, %s8736
    %v8738 = vpop.permute.xlu0 %8737
    %v8739 = vlaneseq
    %v8740 = vshrl.u32 %v8739, 7
    %v8741 = vsub.s32 6, %v8740
    %v8742 = vrot.slane %v6961, %v8741
    %s8744 = sor.u32 256, 2
    %8745 = vbcast.lane.b32.xlu0 %v8742, %s8744
    %v8746 = vpop.permute.xlu0 %8745
    %s8748 = sor.u32 256, 10
    %8749 = vbcast.lane.b32.xlu0 %v8742, %s8748
    %v8750 = vpop.permute.xlu0 %8749
    %v8751 = vlaneseq
    %v8752 = vshrl.u32 %v8751, 7
    %v8753 = vsub.s32 7, %v8752
    %v8754 = vrot.slane %v6961, %v8753
    %s8756 = sor.u32 256, 2
    %8757 = vbcast.lane.b32.xlu0 %v8754, %s8756
    %v8758 = vpop.permute.xlu0 %8757
    %s8760 = sor.u32 256, 10
    %8761 = vbcast.lane.b32.xlu0 %v8754, %s8760
    %v8762 = vpop.permute.xlu0 %8761
    %v8763 = vlaneseq
    %v8764 = vshrl.u32 %v8763, 7
    %v8765 = vsub.s32 0, %v8764
    %v8766 = vrot.slane %v6966, %v8765
    %s8768 = sor.u32 256, 2
    %8769 = vbcast.lane.b32.xlu0 %v8766, %s8768
    %v8770 = vpop.permute.xlu0 %8769
    %s8772 = sor.u32 256, 10
    %8773 = vbcast.lane.b32.xlu0 %v8766, %s8772
    %v8774 = vpop.permute.xlu0 %8773
    %v8775 = vlaneseq
    %v8776 = vshrl.u32 %v8775, 7
    %v8777 = vsub.s32 1, %v8776
    %v8778 = vrot.slane %v6966, %v8777
    %s8780 = sor.u32 256, 2
    %8781 = vbcast.lane.b32.xlu0 %v8778, %s8780
    %v8782 = vpop.permute.xlu0 %8781
    %s8784 = sor.u32 256, 10
    %8785 = vbcast.lane.b32.xlu0 %v8778, %s8784
    %v8786 = vpop.permute.xlu0 %8785
    %v8787 = vlaneseq
    %v8788 = vshrl.u32 %v8787, 7
    %v8789 = vsub.s32 2, %v8788
    %v8790 = vrot.slane %v6966, %v8789
    %s8792 = sor.u32 256, 2
    %8793 = vbcast.lane.b32.xlu0 %v8790, %s8792
    %v8794 = vpop.permute.xlu0 %8793
    %s8796 = sor.u32 256, 10
    %8797 = vbcast.lane.b32.xlu0 %v8790, %s8796
    %v8798 = vpop.permute.xlu0 %8797
    %v8799 = vlaneseq
    %v8800 = vshrl.u32 %v8799, 7
    %v8801 = vsub.s32 3, %v8800
    %v8802 = vrot.slane %v6966, %v8801
    %s8804 = sor.u32 256, 2
    %8805 = vbcast.lane.b32.xlu0 %v8802, %s8804
    %v8806 = vpop.permute.xlu0 %8805
    %s8808 = sor.u32 256, 10
    %8809 = vbcast.lane.b32.xlu0 %v8802, %s8808
    %v8810 = vpop.permute.xlu0 %8809
    %v8811 = vlaneseq
    %v8812 = vshrl.u32 %v8811, 7
    %v8813 = vsub.s32 4, %v8812
    %v8814 = vrot.slane %v6966, %v8813
    %s8816 = sor.u32 256, 2
    %8817 = vbcast.lane.b32.xlu0 %v8814, %s8816
    %v8818 = vpop.permute.xlu0 %8817
    %s8820 = sor.u32 256, 10
    %8821 = vbcast.lane.b32.xlu0 %v8814, %s8820
    %v8822 = vpop.permute.xlu0 %8821
    %v8823 = vlaneseq
    %v8824 = vshrl.u32 %v8823, 7
    %v8825 = vsub.s32 5, %v8824
    %v8826 = vrot.slane %v6966, %v8825
    %s8828 = sor.u32 256, 2
    %8829 = vbcast.lane.b32.xlu0 %v8826, %s8828
    %v8830 = vpop.permute.xlu0 %8829
    %s8832 = sor.u32 256, 10
    %8833 = vbcast.lane.b32.xlu0 %v8826, %s8832
    %v8834 = vpop.permute.xlu0 %8833
    %v8835 = vlaneseq
    %v8836 = vshrl.u32 %v8835, 7
    %v8837 = vsub.s32 6, %v8836
    %v8838 = vrot.slane %v6966, %v8837
    %s8840 = sor.u32 256, 2
    %8841 = vbcast.lane.b32.xlu0 %v8838, %s8840
    %v8842 = vpop.permute.xlu0 %8841
    %s8844 = sor.u32 256, 10
    %8845 = vbcast.lane.b32.xlu0 %v8838, %s8844
    %v8846 = vpop.permute.xlu0 %8845
    %v8847 = vlaneseq
    %v8848 = vshrl.u32 %v8847, 7
    %v8849 = vsub.s32 7, %v8848
    %v8850 = vrot.slane %v6966, %v8849
    %s8852 = sor.u32 256, 2
    %8853 = vbcast.lane.b32.xlu0 %v8850, %s8852
    %v8854 = vpop.permute.xlu0 %8853
    %s8856 = sor.u32 256, 10
    %8857 = vbcast.lane.b32.xlu0 %v8850, %s8856
    %v8858 = vpop.permute.xlu0 %8857
    %v8859 = vlaneseq
    %v8860 = vshrl.u32 %v8859, 7
    %v8861 = vsub.s32 0, %v8860
    %v8862 = vrot.slane %v6971, %v8861
    %s8864 = sor.u32 256, 2
    %8865 = vbcast.lane.b32.xlu0 %v8862, %s8864
    %v8866 = vpop.permute.xlu0 %8865
    %s8868 = sor.u32 256, 10
    %8869 = vbcast.lane.b32.xlu0 %v8862, %s8868
    %v8870 = vpop.permute.xlu0 %8869
    %v8871 = vlaneseq
    %v8872 = vshrl.u32 %v8871, 7
    %v8873 = vsub.s32 1, %v8872
    %v8874 = vrot.slane %v6971, %v8873
    %s8876 = sor.u32 256, 2
    %8877 = vbcast.lane.b32.xlu0 %v8874, %s8876
    %v8878 = vpop.permute.xlu0 %8877
    %s8880 = sor.u32 256, 10
    %8881 = vbcast.lane.b32.xlu0 %v8874, %s8880
    %v8882 = vpop.permute.xlu0 %8881
    %v8883 = vlaneseq
    %v8884 = vshrl.u32 %v8883, 7
    %v8885 = vsub.s32 2, %v8884
    %v8886 = vrot.slane %v6971, %v8885
    %s8888 = sor.u32 256, 2
    %8889 = vbcast.lane.b32.xlu0 %v8886, %s8888
    %v8890 = vpop.permute.xlu0 %8889
    %s8892 = sor.u32 256, 10
    %8893 = vbcast.lane.b32.xlu0 %v8886, %s8892
    %v8894 = vpop.permute.xlu0 %8893
    %v8895 = vlaneseq
    %v8896 = vshrl.u32 %v8895, 7
    %v8897 = vsub.s32 3, %v8896
    %v8898 = vrot.slane %v6971, %v8897
    %s8900 = sor.u32 256, 2
    %8901 = vbcast.lane.b32.xlu0 %v8898, %s8900
    %v8902 = vpop.permute.xlu0 %8901
    %s8904 = sor.u32 256, 10
    %8905 = vbcast.lane.b32.xlu0 %v8898, %s8904
    %v8906 = vpop.permute.xlu0 %8905
    %v8907 = vlaneseq
    %v8908 = vshrl.u32 %v8907, 7
    %v8909 = vsub.s32 4, %v8908
    %v8910 = vrot.slane %v6971, %v8909
    %s8912 = sor.u32 256, 2
    %8913 = vbcast.lane.b32.xlu0 %v8910, %s8912
    %v8914 = vpop.permute.xlu0 %8913
    %s8916 = sor.u32 256, 10
    %8917 = vbcast.lane.b32.xlu0 %v8910, %s8916
    %v8918 = vpop.permute.xlu0 %8917
    %v8919 = vlaneseq
    %v8920 = vshrl.u32 %v8919, 7
    %v8921 = vsub.s32 5, %v8920
    %v8922 = vrot.slane %v6971, %v8921
    %s8924 = sor.u32 256, 2
    %8925 = vbcast.lane.b32.xlu0 %v8922, %s8924
    %v8926 = vpop.permute.xlu0 %8925
    %s8928 = sor.u32 256, 10
    %8929 = vbcast.lane.b32.xlu0 %v8922, %s8928
    %v8930 = vpop.permute.xlu0 %8929
    %v8931 = vlaneseq
    %v8932 = vshrl.u32 %v8931, 7
    %v8933 = vsub.s32 6, %v8932
    %v8934 = vrot.slane %v6971, %v8933
    %s8936 = sor.u32 256, 2
    %8937 = vbcast.lane.b32.xlu0 %v8934, %s8936
    %v8938 = vpop.permute.xlu0 %8937
    %s8940 = sor.u32 256, 10
    %8941 = vbcast.lane.b32.xlu0 %v8934, %s8940
    %v8942 = vpop.permute.xlu0 %8941
    %v8943 = vlaneseq
    %v8944 = vshrl.u32 %v8943, 7
    %v8945 = vsub.s32 7, %v8944
    %v8946 = vrot.slane %v6971, %v8945
    %s8948 = sor.u32 256, 2
    %8949 = vbcast.lane.b32.xlu0 %v8946, %s8948
    %v8950 = vpop.permute.xlu0 %8949
    %s8952 = sor.u32 256, 10
    %8953 = vbcast.lane.b32.xlu0 %v8946, %s8952
    %v8954 = vpop.permute.xlu0 %8953
    %v8955 = vlaneseq
    %v8956 = vshrl.u32 %v8955, 7
    %v8957 = vsub.s32 0, %v8956
    %v8958 = vrot.slane %v6976, %v8957
    %s8960 = sor.u32 256, 2
    %8961 = vbcast.lane.b32.xlu0 %v8958, %s8960
    %v8962 = vpop.permute.xlu0 %8961
    %s8964 = sor.u32 256, 10
    %8965 = vbcast.lane.b32.xlu0 %v8958, %s8964
    %v8966 = vpop.permute.xlu0 %8965
    %v8967 = vlaneseq
    %v8968 = vshrl.u32 %v8967, 7
    %v8969 = vsub.s32 1, %v8968
    %v8970 = vrot.slane %v6976, %v8969
    %s8972 = sor.u32 256, 2
    %8973 = vbcast.lane.b32.xlu0 %v8970, %s8972
    %v8974 = vpop.permute.xlu0 %8973
    %s8976 = sor.u32 256, 10
    %8977 = vbcast.lane.b32.xlu0 %v8970, %s8976
    %v8978 = vpop.permute.xlu0 %8977
    %v8979 = vlaneseq
    %v8980 = vshrl.u32 %v8979, 7
    %v8981 = vsub.s32 2, %v8980
    %v8982 = vrot.slane %v6976, %v8981
    %s8984 = sor.u32 256, 2
    %8985 = vbcast.lane.b32.xlu0 %v8982, %s8984
    %v8986 = vpop.permute.xlu0 %8985
    %s8988 = sor.u32 256, 10
    %8989 = vbcast.lane.b32.xlu0 %v8982, %s8988
    %v8990 = vpop.permute.xlu0 %8989
    %v8991 = vlaneseq
    %v8992 = vshrl.u32 %v8991, 7
    %v8993 = vsub.s32 3, %v8992
    %v8994 = vrot.slane %v6976, %v8993
    %s8996 = sor.u32 256, 2
    %8997 = vbcast.lane.b32.xlu0 %v8994, %s8996
    %v8998 = vpop.permute.xlu0 %8997
    %s9000 = sor.u32 256, 10
    %9001 = vbcast.lane.b32.xlu0 %v8994, %s9000
    %v9002 = vpop.permute.xlu0 %9001
    %v9003 = vlaneseq
    %v9004 = vshrl.u32 %v9003, 7
    %v9005 = vsub.s32 4, %v9004
    %v9006 = vrot.slane %v6976, %v9005
    %s9008 = sor.u32 256, 2
    %9009 = vbcast.lane.b32.xlu0 %v9006, %s9008
    %v9010 = vpop.permute.xlu0 %9009
    %s9012 = sor.u32 256, 10
    %9013 = vbcast.lane.b32.xlu0 %v9006, %s9012
    %v9014 = vpop.permute.xlu0 %9013
    %v9015 = vlaneseq
    %v9016 = vshrl.u32 %v9015, 7
    %v9017 = vsub.s32 5, %v9016
    %v9018 = vrot.slane %v6976, %v9017
    %s9020 = sor.u32 256, 2
    %9021 = vbcast.lane.b32.xlu0 %v9018, %s9020
    %v9022 = vpop.permute.xlu0 %9021
    %s9024 = sor.u32 256, 10
    %9025 = vbcast.lane.b32.xlu0 %v9018, %s9024
    %v9026 = vpop.permute.xlu0 %9025
    %v9027 = vlaneseq
    %v9028 = vshrl.u32 %v9027, 7
    %v9029 = vsub.s32 6, %v9028
    %v9030 = vrot.slane %v6976, %v9029
    %s9032 = sor.u32 256, 2
    %9033 = vbcast.lane.b32.xlu0 %v9030, %s9032
    %v9034 = vpop.permute.xlu0 %9033
    %s9036 = sor.u32 256, 10
    %9037 = vbcast.lane.b32.xlu0 %v9030, %s9036
    %v9038 = vpop.permute.xlu0 %9037
    %v9039 = vlaneseq
    %v9040 = vshrl.u32 %v9039, 7
    %v9041 = vsub.s32 7, %v9040
    %v9042 = vrot.slane %v6976, %v9041
    %s9044 = sor.u32 256, 2
    %9045 = vbcast.lane.b32.xlu0 %v9042, %s9044
    %v9046 = vpop.permute.xlu0 %9045
    %s9048 = sor.u32 256, 10
    %9049 = vbcast.lane.b32.xlu0 %v9042, %s9048
    %v9050 = vpop.permute.xlu0 %9049
    %v9051 = vmul.f32 %v7582, %v8290
    %v9052 = vmul.f32 %v7582, %v8294
    %v9053 = vmul.f32 %v7586, %v8302
    %v9054 = vmul.f32 %v7586, %v8306
    %v9055 = vmul.f32 %v7590, %v8314
    %v9056 = vmul.f32 %v7590, %v8318
    %v9057 = vmul.f32 %v7594, %v8326
    %v9058 = vmul.f32 %v7594, %v8330
    %v9059 = vmul.f32 %v7598, %v8338
    %v9060 = vmul.f32 %v7598, %v8342
    %v9061 = vmul.f32 %v7602, %v8350
    %v9062 = vmul.f32 %v7602, %v8354
    %v9063 = vmul.f32 %v7606, %v8362
    %v9064 = vmul.f32 %v7606, %v8366
    %v9065 = vmul.f32 %v7610, %v8374
    %v9066 = vmul.f32 %v7610, %v8378
    %v9067 = vmul.f32 %v7614, %v8386
    %v9068 = vmul.f32 %v7614, %v8390
    %v9069 = vmul.f32 %v7618, %v8398
    %v9070 = vmul.f32 %v7618, %v8402
    %v9071 = vmul.f32 %v7622, %v8410
    %v9072 = vmul.f32 %v7622, %v8414
    %v9073 = vmul.f32 %v7626, %v8422
    %v9074 = vmul.f32 %v7626, %v8426
    %v9075 = vmul.f32 %v7630, %v8434
    %v9076 = vmul.f32 %v7630, %v8438
    %v9077 = vmul.f32 %v7634, %v8446
    %v9078 = vmul.f32 %v7634, %v8450
    %v9079 = vmul.f32 %v7638, %v8458
    %v9080 = vmul.f32 %v7638, %v8462
    %v9081 = vmul.f32 %v7642, %v8470
    %v9082 = vmul.f32 %v7642, %v8474
    %v9083 = vmul.f32 %v7646, %v8482
    %v9084 = vmul.f32 %v7646, %v8486
    %v9085 = vmul.f32 %v7650, %v8494
    %v9086 = vmul.f32 %v7650, %v8498
    %v9087 = vmul.f32 %v7654, %v8506
    %v9088 = vmul.f32 %v7654, %v8510
    %v9089 = vmul.f32 %v7658, %v8518
    %v9090 = vmul.f32 %v7658, %v8522
    %v9091 = vmul.f32 %v7662, %v8530
    %v9092 = vmul.f32 %v7662, %v8534
    %v9093 = vmul.f32 %v7666, %v8542
    %v9094 = vmul.f32 %v7666, %v8546
    %v9095 = vmul.f32 %v7670, %v8554
    %v9096 = vmul.f32 %v7670, %v8558
    %v9097 = vmul.f32 %v7674, %v8566
    %v9098 = vmul.f32 %v7674, %v8570
    %v9099 = vmul.f32 %v7678, %v8578
    %v9100 = vmul.f32 %v7678, %v8582
    %v9101 = vmul.f32 %v7682, %v8590
    %v9102 = vmul.f32 %v7682, %v8594
    %v9103 = vmul.f32 %v7686, %v8602
    %v9104 = vmul.f32 %v7686, %v8606
    %v9105 = vmul.f32 %v7690, %v8614
    %v9106 = vmul.f32 %v7690, %v8618
    %v9107 = vmul.f32 %v7694, %v8626
    %v9108 = vmul.f32 %v7694, %v8630
    %v9109 = vmul.f32 %v7698, %v8638
    %v9110 = vmul.f32 %v7698, %v8642
    %v9111 = vmul.f32 %v7702, %v8650
    %v9112 = vmul.f32 %v7702, %v8654
    %v9113 = vmul.f32 %v7706, %v8662
    %v9114 = vmul.f32 %v7706, %v8666
    %v9115 = vmul.f32 %v7710, %v8674
    %v9116 = vmul.f32 %v7710, %v8678
    %v9117 = vmul.f32 %v7714, %v8686
    %v9118 = vmul.f32 %v7714, %v8690
    %v9119 = vmul.f32 %v7718, %v8698
    %v9120 = vmul.f32 %v7718, %v8702
    %v9121 = vmul.f32 %v7722, %v8710
    %v9122 = vmul.f32 %v7722, %v8714
    %v9123 = vmul.f32 %v7726, %v8722
    %v9124 = vmul.f32 %v7726, %v8726
    %v9125 = vmul.f32 %v7730, %v8734
    %v9126 = vmul.f32 %v7730, %v8738
    %v9127 = vmul.f32 %v7734, %v8746
    %v9128 = vmul.f32 %v7734, %v8750
    %v9129 = vmul.f32 %v7738, %v8758
    %v9130 = vmul.f32 %v7738, %v8762
    %v9131 = vmul.f32 %v7742, %v8770
    %v9132 = vmul.f32 %v7742, %v8774
    %v9133 = vmul.f32 %v7746, %v8782
    %v9134 = vmul.f32 %v7746, %v8786
    %v9135 = vmul.f32 %v7750, %v8794
    %v9136 = vmul.f32 %v7750, %v8798
    %v9137 = vmul.f32 %v7754, %v8806
    %v9138 = vmul.f32 %v7754, %v8810
    %v9139 = vmul.f32 %v7758, %v8818
    %v9140 = vmul.f32 %v7758, %v8822
    %v9141 = vmul.f32 %v7762, %v8830
    %v9142 = vmul.f32 %v7762, %v8834
    %v9143 = vmul.f32 %v7766, %v8842
    %v9144 = vmul.f32 %v7766, %v8846
    %v9145 = vmul.f32 %v7770, %v8854
    %v9146 = vmul.f32 %v7770, %v8858
    %v9147 = vmul.f32 %v7774, %v8866
    %v9148 = vmul.f32 %v7774, %v8870
    %v9149 = vmul.f32 %v7778, %v8878
    %v9150 = vmul.f32 %v7778, %v8882
    %v9151 = vmul.f32 %v7782, %v8890
    %v9152 = vmul.f32 %v7782, %v8894
    %v9153 = vmul.f32 %v7786, %v8902
    %v9154 = vmul.f32 %v7786, %v8906
    %v9155 = vmul.f32 %v7790, %v8914
    %v9156 = vmul.f32 %v7790, %v8918
    %v9157 = vmul.f32 %v7794, %v8926
    %v9158 = vmul.f32 %v7794, %v8930
    %v9159 = vmul.f32 %v7798, %v8938
    %v9160 = vmul.f32 %v7798, %v8942
    %v9161 = vmul.f32 %v7802, %v8950
    %v9162 = vmul.f32 %v7802, %v8954
    %v9163 = vmul.f32 %v7806, %v8962
    %v9164 = vmul.f32 %v7806, %v8966
    %v9165 = vmul.f32 %v7810, %v8974
    %v9166 = vmul.f32 %v7810, %v8978
    %v9167 = vmul.f32 %v7814, %v8986
    %v9168 = vmul.f32 %v7814, %v8990
    %v9169 = vmul.f32 %v7818, %v8998
    %v9170 = vmul.f32 %v7818, %v9002
    %v9171 = vmul.f32 %v7822, %v9010
    %v9172 = vmul.f32 %v7822, %v9014
    %v9173 = vmul.f32 %v7826, %v9022
    %v9174 = vmul.f32 %v7826, %v9026
    %v9175 = vmul.f32 %v7830, %v9034
    %v9176 = vmul.f32 %v7830, %v9038
    %v9177 = vmul.f32 %v7834, %v9046
    %v9178 = vmul.f32 %v7834, %v9050
    %v9179 = vcombine.high %v6842, %v6842
    %v9181 = vunpack.c.l.s4 1966171168
    %v9182 = vunpack.c.0.s8 %v9181
    %v9183 = vlaneseq
    %v9184 = vshrl.u32 %v9183, 7
    %v9185 = vsub.s32 %v9182, %v9184
    %v9186 = vrot.slane %v6842, %v9185
    %v9188 = vunpack.c.l.s4 1966171168
    %v9189 = vunpack.c.0.s8 %v9188
    %v9190 = vlaneseq
    %v9191 = vshrl.u32 %v9190, 7
    %v9192 = vsub.s32 %v9189, %v9191
    %v9193 = vrot.slane %v9179, %v9192
    %v9194 = vcombine.high %v9186, %v9186
    %v9195 = vcombine.high %v9193, %v9193
    %v9197 = vunpack.c.l.s4 1966171168
    %v9198 = vunpack.c.0.s8 %v9197
    %v9199 = vlaneseq
    %v9200 = vshrl.u32 %v9199, 7
    %v9201 = vsub.s32 %v9198, %v9200
    %v9202 = vrot.slane %v9186, %v9201
    %v9204 = vunpack.c.l.s4 1966171168
    %v9205 = vunpack.c.0.s8 %v9204
    %v9206 = vlaneseq
    %v9207 = vshrl.u32 %v9206, 7
    %v9208 = vsub.s32 %v9205, %v9207
    %v9209 = vrot.slane %v9193, %v9208
    %v9211 = vunpack.c.l.s4 1966171168
    %v9212 = vunpack.c.0.s8 %v9211
    %v9213 = vlaneseq
    %v9214 = vshrl.u32 %v9213, 7
    %v9215 = vsub.s32 %v9212, %v9214
    %v9216 = vrot.slane %v9194, %v9215
    %v9218 = vunpack.c.l.s4 1966171168
    %v9219 = vunpack.c.0.s8 %v9218
    %v9220 = vlaneseq
    %v9221 = vshrl.u32 %v9220, 7
    %v9222 = vsub.s32 %v9219, %v9221
    %v9223 = vrot.slane %v9195, %v9222
    %v9224 = vcombine.high %v9202, %v9202
    %v9225 = vcombine.high %v9209, %v9209
    %v9226 = vcombine.high %v9216, %v9216
    %v9227 = vcombine.high %v9223, %v9223
    %v9228 = vcombine.high %v6843, %v6843
    %v9230 = vunpack.c.l.s4 1966171168
    %v9231 = vunpack.c.0.s8 %v9230
    %v9232 = vlaneseq
    %v9233 = vshrl.u32 %v9232, 7
    %v9234 = vsub.s32 %v9231, %v9233
    %v9235 = vrot.slane %v6843, %v9234
    %v9237 = vunpack.c.l.s4 1966171168
    %v9238 = vunpack.c.0.s8 %v9237
    %v9239 = vlaneseq
    %v9240 = vshrl.u32 %v9239, 7
    %v9241 = vsub.s32 %v9238, %v9240
    %v9242 = vrot.slane %v9228, %v9241
    %v9243 = vcombine.high %v9235, %v9235
    %v9244 = vcombine.high %v9242, %v9242
    %v9246 = vunpack.c.l.s4 1966171168
    %v9247 = vunpack.c.0.s8 %v9246
    %v9248 = vlaneseq
    %v9249 = vshrl.u32 %v9248, 7
    %v9250 = vsub.s32 %v9247, %v9249
    %v9251 = vrot.slane %v9235, %v9250
    %v9253 = vunpack.c.l.s4 1966171168
    %v9254 = vunpack.c.0.s8 %v9253
    %v9255 = vlaneseq
    %v9256 = vshrl.u32 %v9255, 7
    %v9257 = vsub.s32 %v9254, %v9256
    %v9258 = vrot.slane %v9242, %v9257
    %v9260 = vunpack.c.l.s4 1966171168
    %v9261 = vunpack.c.0.s8 %v9260
    %v9262 = vlaneseq
    %v9263 = vshrl.u32 %v9262, 7
    %v9264 = vsub.s32 %v9261, %v9263
    %v9265 = vrot.slane %v9243, %v9264
    %v9267 = vunpack.c.l.s4 1966171168
    %v9268 = vunpack.c.0.s8 %v9267
    %v9269 = vlaneseq
    %v9270 = vshrl.u32 %v9269, 7
    %v9271 = vsub.s32 %v9268, %v9270
    %v9272 = vrot.slane %v9244, %v9271
    %v9273 = vcombine.high %v9251, %v9251
    %v9274 = vcombine.high %v9258, %v9258
    %v9275 = vcombine.high %v9265, %v9265
    %v9276 = vcombine.high %v9272, %v9272
    %v9277 = vcombine.high %v6844, %v6844
    %v9279 = vunpack.c.l.s4 1966171168
    %v9280 = vunpack.c.0.s8 %v9279
    %v9281 = vlaneseq
    %v9282 = vshrl.u32 %v9281, 7
    %v9283 = vsub.s32 %v9280, %v9282
    %v9284 = vrot.slane %v6844, %v9283
    %v9286 = vunpack.c.l.s4 1966171168
    %v9287 = vunpack.c.0.s8 %v9286
    %v9288 = vlaneseq
    %v9289 = vshrl.u32 %v9288, 7
    %v9290 = vsub.s32 %v9287, %v9289
    %v9291 = vrot.slane %v9277, %v9290
    %v9292 = vcombine.high %v9284, %v9284
    %v9293 = vcombine.high %v9291, %v9291
    %v9295 = vunpack.c.l.s4 1966171168
    %v9296 = vunpack.c.0.s8 %v9295
    %v9297 = vlaneseq
    %v9298 = vshrl.u32 %v9297, 7
    %v9299 = vsub.s32 %v9296, %v9298
    %v9300 = vrot.slane %v9284, %v9299
    %v9302 = vunpack.c.l.s4 1966171168
    %v9303 = vunpack.c.0.s8 %v9302
    %v9304 = vlaneseq
    %v9305 = vshrl.u32 %v9304, 7
    %v9306 = vsub.s32 %v9303, %v9305
    %v9307 = vrot.slane %v9291, %v9306
    %v9309 = vunpack.c.l.s4 1966171168
    %v9310 = vunpack.c.0.s8 %v9309
    %v9311 = vlaneseq
    %v9312 = vshrl.u32 %v9311, 7
    %v9313 = vsub.s32 %v9310, %v9312
    %v9314 = vrot.slane %v9292, %v9313
    %v9316 = vunpack.c.l.s4 1966171168
    %v9317 = vunpack.c.0.s8 %v9316
    %v9318 = vlaneseq
    %v9319 = vshrl.u32 %v9318, 7
    %v9320 = vsub.s32 %v9317, %v9319
    %v9321 = vrot.slane %v9293, %v9320
    %v9322 = vcombine.high %v9300, %v9300
    %v9323 = vcombine.high %v9307, %v9307
    %v9324 = vcombine.high %v9314, %v9314
    %v9325 = vcombine.high %v9321, %v9321
    %v9326 = vcombine.high %v6845, %v6845
    %v9328 = vunpack.c.l.s4 1966171168
    %v9329 = vunpack.c.0.s8 %v9328
    %v9330 = vlaneseq
    %v9331 = vshrl.u32 %v9330, 7
    %v9332 = vsub.s32 %v9329, %v9331
    %v9333 = vrot.slane %v6845, %v9332
    %v9335 = vunpack.c.l.s4 1966171168
    %v9336 = vunpack.c.0.s8 %v9335
    %v9337 = vlaneseq
    %v9338 = vshrl.u32 %v9337, 7
    %v9339 = vsub.s32 %v9336, %v9338
    %v9340 = vrot.slane %v9326, %v9339
    %v9341 = vcombine.high %v9333, %v9333
    %v9342 = vcombine.high %v9340, %v9340
    %v9344 = vunpack.c.l.s4 1966171168
    %v9345 = vunpack.c.0.s8 %v9344
    %v9346 = vlaneseq
    %v9347 = vshrl.u32 %v9346, 7
    %v9348 = vsub.s32 %v9345, %v9347
    %v9349 = vrot.slane %v9333, %v9348
    %v9351 = vunpack.c.l.s4 1966171168
    %v9352 = vunpack.c.0.s8 %v9351
    %v9353 = vlaneseq
    %v9354 = vshrl.u32 %v9353, 7
    %v9355 = vsub.s32 %v9352, %v9354
    %v9356 = vrot.slane %v9340, %v9355
    %v9358 = vunpack.c.l.s4 1966171168
    %v9359 = vunpack.c.0.s8 %v9358
    %v9360 = vlaneseq
    %v9361 = vshrl.u32 %v9360, 7
    %v9362 = vsub.s32 %v9359, %v9361
    %v9363 = vrot.slane %v9341, %v9362
    %v9365 = vunpack.c.l.s4 1966171168
    %v9366 = vunpack.c.0.s8 %v9365
    %v9367 = vlaneseq
    %v9368 = vshrl.u32 %v9367, 7
    %v9369 = vsub.s32 %v9366, %v9368
    %v9370 = vrot.slane %v9342, %v9369
    %v9371 = vcombine.high %v9349, %v9349
    %v9372 = vcombine.high %v9356, %v9356
    %v9373 = vcombine.high %v9363, %v9363
    %v9374 = vcombine.high %v9370, %v9370
    %v9375 = vcombine.high %v6846, %v6846
    %v9377 = vunpack.c.l.s4 1966171168
    %v9378 = vunpack.c.0.s8 %v9377
    %v9379 = vlaneseq
    %v9380 = vshrl.u32 %v9379, 7
    %v9381 = vsub.s32 %v9378, %v9380
    %v9382 = vrot.slane %v6846, %v9381
    %v9384 = vunpack.c.l.s4 1966171168
    %v9385 = vunpack.c.0.s8 %v9384
    %v9386 = vlaneseq
    %v9387 = vshrl.u32 %v9386, 7
    %v9388 = vsub.s32 %v9385, %v9387
    %v9389 = vrot.slane %v9375, %v9388
    %v9390 = vcombine.high %v9382, %v9382
    %v9391 = vcombine.high %v9389, %v9389
    %v9393 = vunpack.c.l.s4 1966171168
    %v9394 = vunpack.c.0.s8 %v9393
    %v9395 = vlaneseq
    %v9396 = vshrl.u32 %v9395, 7
    %v9397 = vsub.s32 %v9394, %v9396
    %v9398 = vrot.slane %v9382, %v9397
    %v9400 = vunpack.c.l.s4 1966171168
    %v9401 = vunpack.c.0.s8 %v9400
    %v9402 = vlaneseq
    %v9403 = vshrl.u32 %v9402, 7
    %v9404 = vsub.s32 %v9401, %v9403
    %v9405 = vrot.slane %v9389, %v9404
    %v9407 = vunpack.c.l.s4 1966171168
    %v9408 = vunpack.c.0.s8 %v9407
    %v9409 = vlaneseq
    %v9410 = vshrl.u32 %v9409, 7
    %v9411 = vsub.s32 %v9408, %v9410
    %v9412 = vrot.slane %v9390, %v9411
    %v9414 = vunpack.c.l.s4 1966171168
    %v9415 = vunpack.c.0.s8 %v9414
    %v9416 = vlaneseq
    %v9417 = vshrl.u32 %v9416, 7
    %v9418 = vsub.s32 %v9415, %v9417
    %v9419 = vrot.slane %v9391, %v9418
    %v9420 = vcombine.high %v9398, %v9398
    %v9421 = vcombine.high %v9405, %v9405
    %v9422 = vcombine.high %v9412, %v9412
    %v9423 = vcombine.high %v9419, %v9419
    %v9424 = vcombine.high %v6847, %v6847
    %v9426 = vunpack.c.l.s4 1966171168
    %v9427 = vunpack.c.0.s8 %v9426
    %v9428 = vlaneseq
    %v9429 = vshrl.u32 %v9428, 7
    %v9430 = vsub.s32 %v9427, %v9429
    %v9431 = vrot.slane %v6847, %v9430
    %v9433 = vunpack.c.l.s4 1966171168
    %v9434 = vunpack.c.0.s8 %v9433
    %v9435 = vlaneseq
    %v9436 = vshrl.u32 %v9435, 7
    %v9437 = vsub.s32 %v9434, %v9436
    %v9438 = vrot.slane %v9424, %v9437
    %v9439 = vcombine.high %v9431, %v9431
    %v9440 = vcombine.high %v9438, %v9438
    %v9442 = vunpack.c.l.s4 1966171168
    %v9443 = vunpack.c.0.s8 %v9442
    %v9444 = vlaneseq
    %v9445 = vshrl.u32 %v9444, 7
    %v9446 = vsub.s32 %v9443, %v9445
    %v9447 = vrot.slane %v9431, %v9446
    %v9449 = vunpack.c.l.s4 1966171168
    %v9450 = vunpack.c.0.s8 %v9449
    %v9451 = vlaneseq
    %v9452 = vshrl.u32 %v9451, 7
    %v9453 = vsub.s32 %v9450, %v9452
    %v9454 = vrot.slane %v9438, %v9453
    %v9456 = vunpack.c.l.s4 1966171168
    %v9457 = vunpack.c.0.s8 %v9456
    %v9458 = vlaneseq
    %v9459 = vshrl.u32 %v9458, 7
    %v9460 = vsub.s32 %v9457, %v9459
    %v9461 = vrot.slane %v9439, %v9460
    %v9463 = vunpack.c.l.s4 1966171168
    %v9464 = vunpack.c.0.s8 %v9463
    %v9465 = vlaneseq
    %v9466 = vshrl.u32 %v9465, 7
    %v9467 = vsub.s32 %v9464, %v9466
    %v9468 = vrot.slane %v9440, %v9467
    %v9469 = vcombine.high %v9447, %v9447
    %v9470 = vcombine.high %v9454, %v9454
    %v9471 = vcombine.high %v9461, %v9461
    %v9472 = vcombine.high %v9468, %v9468
    %v9473 = vcombine.high %v6848, %v6848
    %v9475 = vunpack.c.l.s4 1966171168
    %v9476 = vunpack.c.0.s8 %v9475
    %v9477 = vlaneseq
    %v9478 = vshrl.u32 %v9477, 7
    %v9479 = vsub.s32 %v9476, %v9478
    %v9480 = vrot.slane %v6848, %v9479
    %v9482 = vunpack.c.l.s4 1966171168
    %v9483 = vunpack.c.0.s8 %v9482
    %v9484 = vlaneseq
    %v9485 = vshrl.u32 %v9484, 7
    %v9486 = vsub.s32 %v9483, %v9485
    %v9487 = vrot.slane %v9473, %v9486
    %v9488 = vcombine.high %v9480, %v9480
    %v9489 = vcombine.high %v9487, %v9487
    %v9491 = vunpack.c.l.s4 1966171168
    %v9492 = vunpack.c.0.s8 %v9491
    %v9493 = vlaneseq
    %v9494 = vshrl.u32 %v9493, 7
    %v9495 = vsub.s32 %v9492, %v9494
    %v9496 = vrot.slane %v9480, %v9495
    %v9498 = vunpack.c.l.s4 1966171168
    %v9499 = vunpack.c.0.s8 %v9498
    %v9500 = vlaneseq
    %v9501 = vshrl.u32 %v9500, 7
    %v9502 = vsub.s32 %v9499, %v9501
    %v9503 = vrot.slane %v9487, %v9502
    %v9505 = vunpack.c.l.s4 1966171168
    %v9506 = vunpack.c.0.s8 %v9505
    %v9507 = vlaneseq
    %v9508 = vshrl.u32 %v9507, 7
    %v9509 = vsub.s32 %v9506, %v9508
    %v9510 = vrot.slane %v9488, %v9509
    %v9512 = vunpack.c.l.s4 1966171168
    %v9513 = vunpack.c.0.s8 %v9512
    %v9514 = vlaneseq
    %v9515 = vshrl.u32 %v9514, 7
    %v9516 = vsub.s32 %v9513, %v9515
    %v9517 = vrot.slane %v9489, %v9516
    %v9518 = vcombine.high %v9496, %v9496
    %v9519 = vcombine.high %v9503, %v9503
    %v9520 = vcombine.high %v9510, %v9510
    %v9521 = vcombine.high %v9517, %v9517
    %v9522 = vcombine.high %v6849, %v6849
    %v9524 = vunpack.c.l.s4 1966171168
    %v9525 = vunpack.c.0.s8 %v9524
    %v9526 = vlaneseq
    %v9527 = vshrl.u32 %v9526, 7
    %v9528 = vsub.s32 %v9525, %v9527
    %v9529 = vrot.slane %v6849, %v9528
    %v9531 = vunpack.c.l.s4 1966171168
    %v9532 = vunpack.c.0.s8 %v9531
    %v9533 = vlaneseq
    %v9534 = vshrl.u32 %v9533, 7
    %v9535 = vsub.s32 %v9532, %v9534
    %v9536 = vrot.slane %v9522, %v9535
    %v9537 = vcombine.high %v9529, %v9529
    %v9538 = vcombine.high %v9536, %v9536
    %v9540 = vunpack.c.l.s4 1966171168
    %v9541 = vunpack.c.0.s8 %v9540
    %v9542 = vlaneseq
    %v9543 = vshrl.u32 %v9542, 7
    %v9544 = vsub.s32 %v9541, %v9543
    %v9545 = vrot.slane %v9529, %v9544
    %v9547 = vunpack.c.l.s4 1966171168
    %v9548 = vunpack.c.0.s8 %v9547
    %v9549 = vlaneseq
    %v9550 = vshrl.u32 %v9549, 7
    %v9551 = vsub.s32 %v9548, %v9550
    %v9552 = vrot.slane %v9536, %v9551
    %v9554 = vunpack.c.l.s4 1966171168
    %v9555 = vunpack.c.0.s8 %v9554
    %v9556 = vlaneseq
    %v9557 = vshrl.u32 %v9556, 7
    %v9558 = vsub.s32 %v9555, %v9557
    %v9559 = vrot.slane %v9537, %v9558
    %v9561 = vunpack.c.l.s4 1966171168
    %v9562 = vunpack.c.0.s8 %v9561
    %v9563 = vlaneseq
    %v9564 = vshrl.u32 %v9563, 7
    %v9565 = vsub.s32 %v9562, %v9564
    %v9566 = vrot.slane %v9538, %v9565
    %v9567 = vcombine.high %v9545, %v9545
    %v9568 = vcombine.high %v9552, %v9552
    %v9569 = vcombine.high %v9559, %v9559
    %v9570 = vcombine.high %v9566, %v9566
    %v9571 = vlaneseq
    %v9572 = vshrl.u32 %v9571, 7
    %v9573 = vsub.s32 0, %v9572
    %v9574 = vrot.slane %v9202, %v9573
    %v9575 = vlaneseq
    %v9576 = vshrl.u32 %v9575, 7
    %v9577 = vsub.s32 0, %v9576
    %v9578 = vrot.slane %v9216, %v9577
    %v9579 = vlaneseq
    %v9580 = vshrl.u32 %v9579, 7
    %v9581 = vsub.s32 0, %v9580
    %v9582 = vrot.slane %v9224, %v9581
    %v9583 = vlaneseq
    %v9584 = vshrl.u32 %v9583, 7
    %v9585 = vsub.s32 0, %v9584
    %v9586 = vrot.slane %v9226, %v9585
    %v9587 = vlaneseq
    %v9588 = vshrl.u32 %v9587, 7
    %v9589 = vsub.s32 0, %v9588
    %v9590 = vrot.slane %v9209, %v9589
    %v9591 = vlaneseq
    %v9592 = vshrl.u32 %v9591, 7
    %v9593 = vsub.s32 0, %v9592
    %v9594 = vrot.slane %v9223, %v9593
    %v9595 = vlaneseq
    %v9596 = vshrl.u32 %v9595, 7
    %v9597 = vsub.s32 0, %v9596
    %v9598 = vrot.slane %v9225, %v9597
    %v9599 = vlaneseq
    %v9600 = vshrl.u32 %v9599, 7
    %v9601 = vsub.s32 0, %v9600
    %v9602 = vrot.slane %v9227, %v9601
    %v9603 = vlaneseq
    %v9604 = vshrl.u32 %v9603, 7
    %v9605 = vsub.s32 0, %v9604
    %v9606 = vrot.slane %v9251, %v9605
    %v9607 = vlaneseq
    %v9608 = vshrl.u32 %v9607, 7
    %v9609 = vsub.s32 0, %v9608
    %v9610 = vrot.slane %v9265, %v9609
    %v9611 = vlaneseq
    %v9612 = vshrl.u32 %v9611, 7
    %v9613 = vsub.s32 0, %v9612
    %v9614 = vrot.slane %v9273, %v9613
    %v9615 = vlaneseq
    %v9616 = vshrl.u32 %v9615, 7
    %v9617 = vsub.s32 0, %v9616
    %v9618 = vrot.slane %v9275, %v9617
    %v9619 = vlaneseq
    %v9620 = vshrl.u32 %v9619, 7
    %v9621 = vsub.s32 0, %v9620
    %v9622 = vrot.slane %v9258, %v9621
    %v9623 = vlaneseq
    %v9624 = vshrl.u32 %v9623, 7
    %v9625 = vsub.s32 0, %v9624
    %v9626 = vrot.slane %v9272, %v9625
    %v9627 = vlaneseq
    %v9628 = vshrl.u32 %v9627, 7
    %v9629 = vsub.s32 0, %v9628
    %v9630 = vrot.slane %v9274, %v9629
    %v9631 = vlaneseq
    %v9632 = vshrl.u32 %v9631, 7
    %v9633 = vsub.s32 0, %v9632
    %v9634 = vrot.slane %v9276, %v9633
    %v9635 = vlaneseq
    %v9636 = vshrl.u32 %v9635, 7
    %v9637 = vsub.s32 0, %v9636
    %v9638 = vrot.slane %v9300, %v9637
    %v9639 = vlaneseq
    %v9640 = vshrl.u32 %v9639, 7
    %v9641 = vsub.s32 0, %v9640
    %v9642 = vrot.slane %v9314, %v9641
    %v9643 = vlaneseq
    %v9644 = vshrl.u32 %v9643, 7
    %v9645 = vsub.s32 0, %v9644
    %v9646 = vrot.slane %v9322, %v9645
    %v9647 = vlaneseq
    %v9648 = vshrl.u32 %v9647, 7
    %v9649 = vsub.s32 0, %v9648
    %v9650 = vrot.slane %v9324, %v9649
    %v9651 = vlaneseq
    %v9652 = vshrl.u32 %v9651, 7
    %v9653 = vsub.s32 0, %v9652
    %v9654 = vrot.slane %v9307, %v9653
    %v9655 = vlaneseq
    %v9656 = vshrl.u32 %v9655, 7
    %v9657 = vsub.s32 0, %v9656
    %v9658 = vrot.slane %v9321, %v9657
    %v9659 = vlaneseq
    %v9660 = vshrl.u32 %v9659, 7
    %v9661 = vsub.s32 0, %v9660
    %v9662 = vrot.slane %v9323, %v9661
    %v9663 = vlaneseq
    %v9664 = vshrl.u32 %v9663, 7
    %v9665 = vsub.s32 0, %v9664
    %v9666 = vrot.slane %v9325, %v9665
    %v9667 = vlaneseq
    %v9668 = vshrl.u32 %v9667, 7
    %v9669 = vsub.s32 0, %v9668
    %v9670 = vrot.slane %v9349, %v9669
    %v9671 = vlaneseq
    %v9672 = vshrl.u32 %v9671, 7
    %v9673 = vsub.s32 0, %v9672
    %v9674 = vrot.slane %v9363, %v9673
    %v9675 = vlaneseq
    %v9676 = vshrl.u32 %v9675, 7
    %v9677 = vsub.s32 0, %v9676
    %v9678 = vrot.slane %v9371, %v9677
    %v9679 = vlaneseq
    %v9680 = vshrl.u32 %v9679, 7
    %v9681 = vsub.s32 0, %v9680
    %v9682 = vrot.slane %v9373, %v9681
    %v9683 = vlaneseq
    %v9684 = vshrl.u32 %v9683, 7
    %v9685 = vsub.s32 0, %v9684
    %v9686 = vrot.slane %v9356, %v9685
    %v9687 = vlaneseq
    %v9688 = vshrl.u32 %v9687, 7
    %v9689 = vsub.s32 0, %v9688
    %v9690 = vrot.slane %v9370, %v9689
    %v9691 = vlaneseq
    %v9692 = vshrl.u32 %v9691, 7
    %v9693 = vsub.s32 0, %v9692
    %v9694 = vrot.slane %v9372, %v9693
    %v9695 = vlaneseq
    %v9696 = vshrl.u32 %v9695, 7
    %v9697 = vsub.s32 0, %v9696
    %v9698 = vrot.slane %v9374, %v9697
    %v9699 = vlaneseq
    %v9700 = vshrl.u32 %v9699, 7
    %v9701 = vsub.s32 0, %v9700
    %v9702 = vrot.slane %v9398, %v9701
    %v9703 = vlaneseq
    %v9704 = vshrl.u32 %v9703, 7
    %v9705 = vsub.s32 0, %v9704
    %v9706 = vrot.slane %v9412, %v9705
    %v9707 = vlaneseq
    %v9708 = vshrl.u32 %v9707, 7
    %v9709 = vsub.s32 0, %v9708
    %v9710 = vrot.slane %v9420, %v9709
    %v9711 = vlaneseq
    %v9712 = vshrl.u32 %v9711, 7
    %v9713 = vsub.s32 0, %v9712
    %v9714 = vrot.slane %v9422, %v9713
    %v9715 = vlaneseq
    %v9716 = vshrl.u32 %v9715, 7
    %v9717 = vsub.s32 0, %v9716
    %v9718 = vrot.slane %v9405, %v9717
    %v9719 = vlaneseq
    %v9720 = vshrl.u32 %v9719, 7
    %v9721 = vsub.s32 0, %v9720
    %v9722 = vrot.slane %v9419, %v9721
    %v9723 = vlaneseq
    %v9724 = vshrl.u32 %v9723, 7
    %v9725 = vsub.s32 0, %v9724
    %v9726 = vrot.slane %v9421, %v9725
    %v9727 = vlaneseq
    %v9728 = vshrl.u32 %v9727, 7
    %v9729 = vsub.s32 0, %v9728
    %v9730 = vrot.slane %v9423, %v9729
    %v9731 = vlaneseq
    %v9732 = vshrl.u32 %v9731, 7
    %v9733 = vsub.s32 0, %v9732
    %v9734 = vrot.slane %v9447, %v9733
    %v9735 = vlaneseq
    %v9736 = vshrl.u32 %v9735, 7
    %v9737 = vsub.s32 0, %v9736
    %v9738 = vrot.slane %v9461, %v9737
    %v9739 = vlaneseq
    %v9740 = vshrl.u32 %v9739, 7
    %v9741 = vsub.s32 0, %v9740
    %v9742 = vrot.slane %v9469, %v9741
    %v9743 = vlaneseq
    %v9744 = vshrl.u32 %v9743, 7
    %v9745 = vsub.s32 0, %v9744
    %v9746 = vrot.slane %v9471, %v9745
    %v9747 = vlaneseq
    %v9748 = vshrl.u32 %v9747, 7
    %v9749 = vsub.s32 0, %v9748
    %v9750 = vrot.slane %v9454, %v9749
    %v9751 = vlaneseq
    %v9752 = vshrl.u32 %v9751, 7
    %v9753 = vsub.s32 0, %v9752
    %v9754 = vrot.slane %v9468, %v9753
    %v9755 = vlaneseq
    %v9756 = vshrl.u32 %v9755, 7
    %v9757 = vsub.s32 0, %v9756
    %v9758 = vrot.slane %v9470, %v9757
    %v9759 = vlaneseq
    %v9760 = vshrl.u32 %v9759, 7
    %v9761 = vsub.s32 0, %v9760
    %v9762 = vrot.slane %v9472, %v9761
    %v9763 = vlaneseq
    %v9764 = vshrl.u32 %v9763, 7
    %v9765 = vsub.s32 0, %v9764
    %v9766 = vrot.slane %v9496, %v9765
    %v9767 = vlaneseq
    %v9768 = vshrl.u32 %v9767, 7
    %v9769 = vsub.s32 0, %v9768
    %v9770 = vrot.slane %v9510, %v9769
    %v9771 = vlaneseq
    %v9772 = vshrl.u32 %v9771, 7
    %v9773 = vsub.s32 0, %v9772
    %v9774 = vrot.slane %v9518, %v9773
    %v9775 = vlaneseq
    %v9776 = vshrl.u32 %v9775, 7
    %v9777 = vsub.s32 0, %v9776
    %v9778 = vrot.slane %v9520, %v9777
    %v9779 = vlaneseq
    %v9780 = vshrl.u32 %v9779, 7
    %v9781 = vsub.s32 0, %v9780
    %v9782 = vrot.slane %v9503, %v9781
    %v9783 = vlaneseq
    %v9784 = vshrl.u32 %v9783, 7
    %v9785 = vsub.s32 0, %v9784
    %v9786 = vrot.slane %v9517, %v9785
    %v9787 = vlaneseq
    %v9788 = vshrl.u32 %v9787, 7
    %v9789 = vsub.s32 0, %v9788
    %v9790 = vrot.slane %v9519, %v9789
    %v9791 = vlaneseq
    %v9792 = vshrl.u32 %v9791, 7
    %v9793 = vsub.s32 0, %v9792
    %v9794 = vrot.slane %v9521, %v9793
    %v9795 = vlaneseq
    %v9796 = vshrl.u32 %v9795, 7
    %v9797 = vsub.s32 0, %v9796
    %v9798 = vrot.slane %v9545, %v9797
    %v9799 = vlaneseq
    %v9800 = vshrl.u32 %v9799, 7
    %v9801 = vsub.s32 0, %v9800
    %v9802 = vrot.slane %v9559, %v9801
    %v9803 = vlaneseq
    %v9804 = vshrl.u32 %v9803, 7
    %v9805 = vsub.s32 0, %v9804
    %v9806 = vrot.slane %v9567, %v9805
    %v9807 = vlaneseq
    %v9808 = vshrl.u32 %v9807, 7
    %v9809 = vsub.s32 0, %v9808
    %v9810 = vrot.slane %v9569, %v9809
    %v9811 = vlaneseq
    %v9812 = vshrl.u32 %v9811, 7
    %v9813 = vsub.s32 0, %v9812
    %v9814 = vrot.slane %v9552, %v9813
    %v9815 = vlaneseq
    %v9816 = vshrl.u32 %v9815, 7
    %v9817 = vsub.s32 0, %v9816
    %v9818 = vrot.slane %v9566, %v9817
    %v9819 = vlaneseq
    %v9820 = vshrl.u32 %v9819, 7
    %v9821 = vsub.s32 0, %v9820
    %v9822 = vrot.slane %v9568, %v9821
    %v9823 = vlaneseq
    %v9824 = vshrl.u32 %v9823, 7
    %v9825 = vsub.s32 0, %v9824
    %v9826 = vrot.slane %v9570, %v9825
    %v9891 = vmul.f32 %v9051, %v9574
    %v9892 = vmul.f32 %v9052, %v9574
    %v9893 = vmul.f32 %v9053, %v9578
    %v9894 = vmul.f32 %v9054, %v9578
    %v9895 = vmul.f32 %v9055, %v9582
    %v9896 = vmul.f32 %v9056, %v9582
    %v9897 = vmul.f32 %v9057, %v9586
    %v9898 = vmul.f32 %v9058, %v9586
    %v9899 = vmul.f32 %v9059, %v9590
    %v9900 = vmul.f32 %v9060, %v9590
    %v9901 = vmul.f32 %v9061, %v9594
    %v9902 = vmul.f32 %v9062, %v9594
    %v9903 = vmul.f32 %v9063, %v9598
    %v9904 = vmul.f32 %v9064, %v9598
    %v9905 = vmul.f32 %v9065, %v9602
    %v9906 = vmul.f32 %v9066, %v9602
    %v9907 = vmul.f32 %v9067, %v9606
    %v9908 = vmul.f32 %v9068, %v9606
    %v9909 = vmul.f32 %v9069, %v9610
    %v9910 = vmul.f32 %v9070, %v9610
    %v9911 = vmul.f32 %v9071, %v9614
    %v9912 = vmul.f32 %v9072, %v9614
    %v9913 = vmul.f32 %v9073, %v9618
    %v9914 = vmul.f32 %v9074, %v9618
    %v9915 = vmul.f32 %v9075, %v9622
    %v9916 = vmul.f32 %v9076, %v9622
    %v9917 = vmul.f32 %v9077, %v9626
    %v9918 = vmul.f32 %v9078, %v9626
    %v9919 = vmul.f32 %v9079, %v9630
    %v9920 = vmul.f32 %v9080, %v9630
    %v9921 = vmul.f32 %v9081, %v9634
    %v9922 = vmul.f32 %v9082, %v9634
    %v9923 = vmul.f32 %v9083, %v9638
    %v9924 = vmul.f32 %v9084, %v9638
    %v9925 = vmul.f32 %v9085, %v9642
    %v9926 = vmul.f32 %v9086, %v9642
    %v9927 = vmul.f32 %v9087, %v9646
    %v9928 = vmul.f32 %v9088, %v9646
    %v9929 = vmul.f32 %v9089, %v9650
    %v9930 = vmul.f32 %v9090, %v9650
    %v9931 = vmul.f32 %v9091, %v9654
    %v9932 = vmul.f32 %v9092, %v9654
    %v9933 = vmul.f32 %v9093, %v9658
    %v9934 = vmul.f32 %v9094, %v9658
    %v9935 = vmul.f32 %v9095, %v9662
    %v9936 = vmul.f32 %v9096, %v9662
    %v9937 = vmul.f32 %v9097, %v9666
    %v9938 = vmul.f32 %v9098, %v9666
    %v9939 = vmul.f32 %v9099, %v9670
    %v9940 = vmul.f32 %v9100, %v9670
    %v9941 = vmul.f32 %v9101, %v9674
    %v9942 = vmul.f32 %v9102, %v9674
    %v9943 = vmul.f32 %v9103, %v9678
    %v9944 = vmul.f32 %v9104, %v9678
    %v9945 = vmul.f32 %v9105, %v9682
    %v9946 = vmul.f32 %v9106, %v9682
    %v9947 = vmul.f32 %v9107, %v9686
    %v9948 = vmul.f32 %v9108, %v9686
    %v9949 = vmul.f32 %v9109, %v9690
    %v9950 = vmul.f32 %v9110, %v9690
    %v9951 = vmul.f32 %v9111, %v9694
    %v9952 = vmul.f32 %v9112, %v9694
    %v9953 = vmul.f32 %v9113, %v9698
    %v9954 = vmul.f32 %v9114, %v9698
    %v9955 = vmul.f32 %v9115, %v9702
    %v9956 = vmul.f32 %v9116, %v9702
    %v9957 = vmul.f32 %v9117, %v9706
    %v9958 = vmul.f32 %v9118, %v9706
    %v9959 = vmul.f32 %v9119, %v9710
    %v9960 = vmul.f32 %v9120, %v9710
    %v9961 = vmul.f32 %v9121, %v9714
    %v9962 = vmul.f32 %v9122, %v9714
    %v9963 = vmul.f32 %v9123, %v9718
    %v9964 = vmul.f32 %v9124, %v9718
    %v9965 = vmul.f32 %v9125, %v9722
    %v9966 = vmul.f32 %v9126, %v9722
    %v9967 = vmul.f32 %v9127, %v9726
    %v9968 = vmul.f32 %v9128, %v9726
    %v9969 = vmul.f32 %v9129, %v9730
    %v9970 = vmul.f32 %v9130, %v9730
    %v9971 = vmul.f32 %v9131, %v9734
    %v9972 = vmul.f32 %v9132, %v9734
    %v9973 = vmul.f32 %v9133, %v9738
    %v9974 = vmul.f32 %v9134, %v9738
    %v9975 = vmul.f32 %v9135, %v9742
    %v9976 = vmul.f32 %v9136, %v9742
    %v9977 = vmul.f32 %v9137, %v9746
    %v9978 = vmul.f32 %v9138, %v9746
    %v9979 = vmul.f32 %v9139, %v9750
    %v9980 = vmul.f32 %v9140, %v9750
    %v9981 = vmul.f32 %v9141, %v9754
    %v9982 = vmul.f32 %v9142, %v9754
    %v9983 = vmul.f32 %v9143, %v9758
    %v9984 = vmul.f32 %v9144, %v9758
    %v9985 = vmul.f32 %v9145, %v9762
    %v9986 = vmul.f32 %v9146, %v9762
    %v9987 = vmul.f32 %v9147, %v9766
    %v9988 = vmul.f32 %v9148, %v9766
    %v9989 = vmul.f32 %v9149, %v9770
    %v9990 = vmul.f32 %v9150, %v9770
    %v9991 = vmul.f32 %v9151, %v9774
    %v9992 = vmul.f32 %v9152, %v9774
    %v9993 = vmul.f32 %v9153, %v9778
    %v9994 = vmul.f32 %v9154, %v9778
    %v9995 = vmul.f32 %v9155, %v9782
    %v9996 = vmul.f32 %v9156, %v9782
    %v9997 = vmul.f32 %v9157, %v9786
    %v9998 = vmul.f32 %v9158, %v9786
    %v9999 = vmul.f32 %v9159, %v9790
    %v10000 = vmul.f32 %v9160, %v9790
    %v10001 = vmul.f32 %v9161, %v9794
    %v10002 = vmul.f32 %v9162, %v9794
    %v10003 = vmul.f32 %v9163, %v9798
    %v10004 = vmul.f32 %v9164, %v9798
    %v10005 = vmul.f32 %v9165, %v9802
    %v10006 = vmul.f32 %v9166, %v9802
    %v10007 = vmul.f32 %v9167, %v9806
    %v10008 = vmul.f32 %v9168, %v9806
    %v10009 = vmul.f32 %v9169, %v9810
    %v10010 = vmul.f32 %v9170, %v9810
    %v10011 = vmul.f32 %v9171, %v9814
    %v10012 = vmul.f32 %v9172, %v9814
    %v10013 = vmul.f32 %v9173, %v9818
    %v10014 = vmul.f32 %v9174, %v9818
    %v10015 = vmul.f32 %v9175, %v9822
    %v10016 = vmul.f32 %v9176, %v9822
    %v10017 = vmul.f32 %v9177, %v9826
    %v10018 = vmul.f32 %v9178, %v9826
    %v10019 = vmul.f32 %v8028, 0.0
    %v10020 = vmul.f32 %v8030, 0.0
    %v10021 = vmul.f32 %v8060, 0.0
    %v10022 = vmul.f32 %v8062, 0.0
    %v10023 = vmul.f32 %v8092, 0.0
    %v10024 = vmul.f32 %v8094, 0.0
    %v10025 = vmul.f32 %v8124, 0.0
    %v10026 = vmul.f32 %v8126, 0.0
    %v10027 = vmul.f32 %v8156, 0.0
    %v10028 = vmul.f32 %v8158, 0.0
    %v10029 = vmul.f32 %v8188, 0.0
    %v10030 = vmul.f32 %v8190, 0.0
    %v10031 = vmul.f32 %v8220, 0.0
    %v10032 = vmul.f32 %v8222, 0.0
    %v10033 = vmul.f32 %v8252, 0.0
    %v10034 = vmul.f32 %v8254, 0.0
    %v10035 = vadd.f32 %v10019, %v9891
    %v10036 = vadd.f32 %v10020, %v9892
    %v10037 = vadd.f32 %v10021, %v9907
    %v10038 = vadd.f32 %v10022, %v9908
    %v10039 = vadd.f32 %v10023, %v9923
    %v10040 = vadd.f32 %v10024, %v9924
    %v10041 = vadd.f32 %v10025, %v9939
    %v10042 = vadd.f32 %v10026, %v9940
    %v10043 = vadd.f32 %v10027, %v9955
    %v10044 = vadd.f32 %v10028, %v9956
    %v10045 = vadd.f32 %v10029, %v9971
    %v10046 = vadd.f32 %v10030, %v9972
    %v10047 = vadd.f32 %v10031, %v9987
    %v10048 = vadd.f32 %v10032, %v9988
    %v10049 = vadd.f32 %v10033, %v10003
    %v10050 = vadd.f32 %v10034, %v10004
    %v10051 = vmul.f32 %v8032, %v10035
    %v10052 = vmul.f32 %v8034, %v10036
    %v10053 = vmul.f32 %v8064, %v10037
    %v10054 = vmul.f32 %v8066, %v10038
    %v10055 = vmul.f32 %v8096, %v10039
    %v10056 = vmul.f32 %v8098, %v10040
    %v10057 = vmul.f32 %v8128, %v10041
    %v10058 = vmul.f32 %v8130, %v10042
    %v10059 = vmul.f32 %v8160, %v10043
    %v10060 = vmul.f32 %v8162, %v10044
    %v10061 = vmul.f32 %v8192, %v10045
    %v10062 = vmul.f32 %v8194, %v10046
    %v10063 = vmul.f32 %v8224, %v10047
    %v10064 = vmul.f32 %v8226, %v10048
    %v10065 = vmul.f32 %v8256, %v10049
    %v10066 = vmul.f32 %v8258, %v10050
    %v10067 = vadd.f32 %v10051, %v9893
    %v10068 = vadd.f32 %v10052, %v9894
    %v10069 = vadd.f32 %v10053, %v9909
    %v10070 = vadd.f32 %v10054, %v9910
    %v10071 = vadd.f32 %v10055, %v9925
    %v10072 = vadd.f32 %v10056, %v9926
    %v10073 = vadd.f32 %v10057, %v9941
    %v10074 = vadd.f32 %v10058, %v9942
    %v10075 = vadd.f32 %v10059, %v9957
    %v10076 = vadd.f32 %v10060, %v9958
    %v10077 = vadd.f32 %v10061, %v9973
    %v10078 = vadd.f32 %v10062, %v9974
    %v10079 = vadd.f32 %v10063, %v9989
    %v10080 = vadd.f32 %v10064, %v9990
    %v10081 = vadd.f32 %v10065, %v10005
    %v10082 = vadd.f32 %v10066, %v10006
    %v10083 = vmul.f32 %v8036, %v10067
    %v10084 = vmul.f32 %v8038, %v10068
    %v10085 = vmul.f32 %v8068, %v10069
    %v10086 = vmul.f32 %v8070, %v10070
    %v10087 = vmul.f32 %v8100, %v10071
    %v10088 = vmul.f32 %v8102, %v10072
    %v10089 = vmul.f32 %v8132, %v10073
    %v10090 = vmul.f32 %v8134, %v10074
    %v10091 = vmul.f32 %v8164, %v10075
    %v10092 = vmul.f32 %v8166, %v10076
    %v10093 = vmul.f32 %v8196, %v10077
    %v10094 = vmul.f32 %v8198, %v10078
    %v10095 = vmul.f32 %v8228, %v10079
    %v10096 = vmul.f32 %v8230, %v10080
    %v10097 = vmul.f32 %v8260, %v10081
    %v10098 = vmul.f32 %v8262, %v10082
    %v10099 = vadd.f32 %v10083, %v9895
    %v10100 = vadd.f32 %v10084, %v9896
    %v10101 = vadd.f32 %v10085, %v9911
    %v10102 = vadd.f32 %v10086, %v9912
    %v10103 = vadd.f32 %v10087, %v9927
    %v10104 = vadd.f32 %v10088, %v9928
    %v10105 = vadd.f32 %v10089, %v9943
    %v10106 = vadd.f32 %v10090, %v9944
    %v10107 = vadd.f32 %v10091, %v9959
    %v10108 = vadd.f32 %v10092, %v9960
    %v10109 = vadd.f32 %v10093, %v9975
    %v10110 = vadd.f32 %v10094, %v9976
    %v10111 = vadd.f32 %v10095, %v9991
    %v10112 = vadd.f32 %v10096, %v9992
    %v10113 = vadd.f32 %v10097, %v10007
    %v10114 = vadd.f32 %v10098, %v10008
    %v10115 = vmul.f32 %v8040, %v10099
    %v10116 = vmul.f32 %v8042, %v10100
    %v10117 = vmul.f32 %v8072, %v10101
    %v10118 = vmul.f32 %v8074, %v10102
    %v10119 = vmul.f32 %v8104, %v10103
    %v10120 = vmul.f32 %v8106, %v10104
    %v10121 = vmul.f32 %v8136, %v10105
    %v10122 = vmul.f32 %v8138, %v10106
    %v10123 = vmul.f32 %v8168, %v10107
    %v10124 = vmul.f32 %v8170, %v10108
    %v10125 = vmul.f32 %v8200, %v10109
    %v10126 = vmul.f32 %v8202, %v10110
    %v10127 = vmul.f32 %v8232, %v10111
    %v10128 = vmul.f32 %v8234, %v10112
    %v10129 = vmul.f32 %v8264, %v10113
    %v10130 = vmul.f32 %v8266, %v10114
    %v10131 = vadd.f32 %v10115, %v9897
    %v10132 = vadd.f32 %v10116, %v9898
    %v10133 = vadd.f32 %v10117, %v9913
    %v10134 = vadd.f32 %v10118, %v9914
    %v10135 = vadd.f32 %v10119, %v9929
    %v10136 = vadd.f32 %v10120, %v9930
    %v10137 = vadd.f32 %v10121, %v9945
    %v10138 = vadd.f32 %v10122, %v9946
    %v10139 = vadd.f32 %v10123, %v9961
    %v10140 = vadd.f32 %v10124, %v9962
    %v10141 = vadd.f32 %v10125, %v9977
    %v10142 = vadd.f32 %v10126, %v9978
    %v10143 = vadd.f32 %v10127, %v9993
    %v10144 = vadd.f32 %v10128, %v9994
    %v10145 = vadd.f32 %v10129, %v10009
    %v10146 = vadd.f32 %v10130, %v10010
    %v10147 = vmul.f32 %v8044, %v10131
    %v10148 = vmul.f32 %v8046, %v10132
    %v10149 = vmul.f32 %v8076, %v10133
    %v10150 = vmul.f32 %v8078, %v10134
    %v10151 = vmul.f32 %v8108, %v10135
    %v10152 = vmul.f32 %v8110, %v10136
    %v10153 = vmul.f32 %v8140, %v10137
    %v10154 = vmul.f32 %v8142, %v10138
    %v10155 = vmul.f32 %v8172, %v10139
    %v10156 = vmul.f32 %v8174, %v10140
    %v10157 = vmul.f32 %v8204, %v10141
    %v10158 = vmul.f32 %v8206, %v10142
    %v10159 = vmul.f32 %v8236, %v10143
    %v10160 = vmul.f32 %v8238, %v10144
    %v10161 = vmul.f32 %v8268, %v10145
    %v10162 = vmul.f32 %v8270, %v10146
    %v10163 = vadd.f32 %v10147, %v9899
    %v10164 = vadd.f32 %v10148, %v9900
    %v10165 = vadd.f32 %v10149, %v9915
    %v10166 = vadd.f32 %v10150, %v9916
    %v10167 = vadd.f32 %v10151, %v9931
    %v10168 = vadd.f32 %v10152, %v9932
    %v10169 = vadd.f32 %v10153, %v9947
    %v10170 = vadd.f32 %v10154, %v9948
    %v10171 = vadd.f32 %v10155, %v9963
    %v10172 = vadd.f32 %v10156, %v9964
    %v10173 = vadd.f32 %v10157, %v9979
    %v10174 = vadd.f32 %v10158, %v9980
    %v10175 = vadd.f32 %v10159, %v9995
    %v10176 = vadd.f32 %v10160, %v9996
    %v10177 = vadd.f32 %v10161, %v10011
    %v10178 = vadd.f32 %v10162, %v10012
    %v10179 = vmul.f32 %v8048, %v10163
    %v10180 = vmul.f32 %v8050, %v10164
    %v10181 = vmul.f32 %v8080, %v10165
    %v10182 = vmul.f32 %v8082, %v10166
    %v10183 = vmul.f32 %v8112, %v10167
    %v10184 = vmul.f32 %v8114, %v10168
    %v10185 = vmul.f32 %v8144, %v10169
    %v10186 = vmul.f32 %v8146, %v10170
    %v10187 = vmul.f32 %v8176, %v10171
    %v10188 = vmul.f32 %v8178, %v10172
    %v10189 = vmul.f32 %v8208, %v10173
    %v10190 = vmul.f32 %v8210, %v10174
    %v10191 = vmul.f32 %v8240, %v10175
    %v10192 = vmul.f32 %v8242, %v10176
    %v10193 = vmul.f32 %v8272, %v10177
    %v10194 = vmul.f32 %v8274, %v10178
    %v10195 = vadd.f32 %v10179, %v9901
    %v10196 = vadd.f32 %v10180, %v9902
    %v10197 = vadd.f32 %v10181, %v9917
    %v10198 = vadd.f32 %v10182, %v9918
    %v10199 = vadd.f32 %v10183, %v9933
    %v10200 = vadd.f32 %v10184, %v9934
    %v10201 = vadd.f32 %v10185, %v9949
    %v10202 = vadd.f32 %v10186, %v9950
    %v10203 = vadd.f32 %v10187, %v9965
    %v10204 = vadd.f32 %v10188, %v9966
    %v10205 = vadd.f32 %v10189, %v9981
    %v10206 = vadd.f32 %v10190, %v9982
    %v10207 = vadd.f32 %v10191, %v9997
    %v10208 = vadd.f32 %v10192, %v9998
    %v10209 = vadd.f32 %v10193, %v10013
    %v10210 = vadd.f32 %v10194, %v10014
    %v10211 = vmul.f32 %v8052, %v10195
    %v10212 = vmul.f32 %v8054, %v10196
    %v10213 = vmul.f32 %v8084, %v10197
    %v10214 = vmul.f32 %v8086, %v10198
    %v10215 = vmul.f32 %v8116, %v10199
    %v10216 = vmul.f32 %v8118, %v10200
    %v10217 = vmul.f32 %v8148, %v10201
    %v10218 = vmul.f32 %v8150, %v10202
    %v10219 = vmul.f32 %v8180, %v10203
    %v10220 = vmul.f32 %v8182, %v10204
    %v10221 = vmul.f32 %v8212, %v10205
    %v10222 = vmul.f32 %v8214, %v10206
    %v10223 = vmul.f32 %v8244, %v10207
    %v10224 = vmul.f32 %v8246, %v10208
    %v10225 = vmul.f32 %v8276, %v10209
    %v10226 = vmul.f32 %v8278, %v10210
    %v10227 = vadd.f32 %v10211, %v9903
    %v10228 = vadd.f32 %v10212, %v9904
    %v10229 = vadd.f32 %v10213, %v9919
    %v10230 = vadd.f32 %v10214, %v9920
    %v10231 = vadd.f32 %v10215, %v9935
    %v10232 = vadd.f32 %v10216, %v9936
    %v10233 = vadd.f32 %v10217, %v9951
    %v10234 = vadd.f32 %v10218, %v9952
    %v10235 = vadd.f32 %v10219, %v9967
    %v10236 = vadd.f32 %v10220, %v9968
    %v10237 = vadd.f32 %v10221, %v9983
    %v10238 = vadd.f32 %v10222, %v9984
    %v10239 = vadd.f32 %v10223, %v9999
    %v10240 = vadd.f32 %v10224, %v10000
    %v10241 = vadd.f32 %v10225, %v10015
    %v10242 = vadd.f32 %v10226, %v10016
    %v10243 = vmul.f32 %v8056, %v10227
    %v10244 = vmul.f32 %v8058, %v10228
    %v10245 = vmul.f32 %v8088, %v10229
    %v10246 = vmul.f32 %v8090, %v10230
    %v10247 = vmul.f32 %v8120, %v10231
    %v10248 = vmul.f32 %v8122, %v10232
    %v10249 = vmul.f32 %v8152, %v10233
    %v10250 = vmul.f32 %v8154, %v10234
    %v10251 = vmul.f32 %v8184, %v10235
    %v10252 = vmul.f32 %v8186, %v10236
    %v10253 = vmul.f32 %v8216, %v10237
    %v10254 = vmul.f32 %v8218, %v10238
    %v10255 = vmul.f32 %v8248, %v10239
    %v10256 = vmul.f32 %v8250, %v10240
    %v10257 = vmul.f32 %v8280, %v10241
    %v10258 = vmul.f32 %v8282, %v10242
    %v10259 = vadd.f32 %v10243, %v9905
    %v10260 = vadd.f32 %v10244, %v9906
    %v10261 = vadd.f32 %v10245, %v9921
    %v10262 = vadd.f32 %v10246, %v9922
    %v10263 = vadd.f32 %v10247, %v9937
    %v10264 = vadd.f32 %v10248, %v9938
    %v10265 = vadd.f32 %v10249, %v9953
    %v10266 = vadd.f32 %v10250, %v9954
    %v10267 = vadd.f32 %v10251, %v9969
    %v10268 = vadd.f32 %v10252, %v9970
    %v10269 = vadd.f32 %v10253, %v9985
    %v10270 = vadd.f32 %v10254, %v9986
    %v10271 = vadd.f32 %v10255, %v10001
    %v10272 = vadd.f32 %v10256, %v10002
    %v10273 = vadd.f32 %v10257, %v10017
    %v10274 = vadd.f32 %v10258, %v10018
    %s10276 = sor.u32 256, 18
    %10277 = vbcast.lane.b32.xlu0 %v8286, %s10276
    %v10278 = vpop.permute.xlu0 %10277
    %s10280 = sor.u32 256, 26
    %10281 = vbcast.lane.b32.xlu0 %v8286, %s10280
    %v10282 = vpop.permute.xlu0 %10281
    %s10284 = sor.u32 256, 18
    %10285 = vbcast.lane.b32.xlu0 %v8298, %s10284
    %v10286 = vpop.permute.xlu0 %10285
    %s10288 = sor.u32 256, 26
    %10289 = vbcast.lane.b32.xlu0 %v8298, %s10288
    %v10290 = vpop.permute.xlu0 %10289
    %s10292 = sor.u32 256, 18
    %10293 = vbcast.lane.b32.xlu0 %v8310, %s10292
    %v10294 = vpop.permute.xlu0 %10293
    %s10296 = sor.u32 256, 26
    %10297 = vbcast.lane.b32.xlu0 %v8310, %s10296
    %v10298 = vpop.permute.xlu0 %10297
    %s10300 = sor.u32 256, 18
    %10301 = vbcast.lane.b32.xlu0 %v8322, %s10300
    %v10302 = vpop.permute.xlu0 %10301
    %s10304 = sor.u32 256, 26
    %10305 = vbcast.lane.b32.xlu0 %v8322, %s10304
    %v10306 = vpop.permute.xlu0 %10305
    %s10308 = sor.u32 256, 18
    %10309 = vbcast.lane.b32.xlu0 %v8334, %s10308
    %v10310 = vpop.permute.xlu0 %10309
    %s10312 = sor.u32 256, 26
    %10313 = vbcast.lane.b32.xlu0 %v8334, %s10312
    %v10314 = vpop.permute.xlu0 %10313
    %s10316 = sor.u32 256, 18
    %10317 = vbcast.lane.b32.xlu0 %v8346, %s10316
    %v10318 = vpop.permute.xlu0 %10317
    %s10320 = sor.u32 256, 26
    %10321 = vbcast.lane.b32.xlu0 %v8346, %s10320
    %v10322 = vpop.permute.xlu0 %10321
    %s10324 = sor.u32 256, 18
    %10325 = vbcast.lane.b32.xlu0 %v8358, %s10324
    %v10326 = vpop.permute.xlu0 %10325
    %s10328 = sor.u32 256, 26
    %10329 = vbcast.lane.b32.xlu0 %v8358, %s10328
    %v10330 = vpop.permute.xlu0 %10329
    %s10332 = sor.u32 256, 18
    %10333 = vbcast.lane.b32.xlu0 %v8370, %s10332
    %v10334 = vpop.permute.xlu0 %10333
    %s10336 = sor.u32 256, 26
    %10337 = vbcast.lane.b32.xlu0 %v8370, %s10336
    %v10338 = vpop.permute.xlu0 %10337
    %s10340 = sor.u32 256, 18
    %10341 = vbcast.lane.b32.xlu0 %v8382, %s10340
    %v10342 = vpop.permute.xlu0 %10341
    %s10344 = sor.u32 256, 26
    %10345 = vbcast.lane.b32.xlu0 %v8382, %s10344
    %v10346 = vpop.permute.xlu0 %10345
    %s10348 = sor.u32 256, 18
    %10349 = vbcast.lane.b32.xlu0 %v8394, %s10348
    %v10350 = vpop.permute.xlu0 %10349
    %s10352 = sor.u32 256, 26
    %10353 = vbcast.lane.b32.xlu0 %v8394, %s10352
    %v10354 = vpop.permute.xlu0 %10353
    %s10356 = sor.u32 256, 18
    %10357 = vbcast.lane.b32.xlu0 %v8406, %s10356
    %v10358 = vpop.permute.xlu0 %10357
    %s10360 = sor.u32 256, 26
    %10361 = vbcast.lane.b32.xlu0 %v8406, %s10360
    %v10362 = vpop.permute.xlu0 %10361
    %s10364 = sor.u32 256, 18
    %10365 = vbcast.lane.b32.xlu0 %v8418, %s10364
    %v10366 = vpop.permute.xlu0 %10365
    %s10368 = sor.u32 256, 26
    %10369 = vbcast.lane.b32.xlu0 %v8418, %s10368
    %v10370 = vpop.permute.xlu0 %10369
    %s10372 = sor.u32 256, 18
    %10373 = vbcast.lane.b32.xlu0 %v8430, %s10372
    %v10374 = vpop.permute.xlu0 %10373
    %s10376 = sor.u32 256, 26
    %10377 = vbcast.lane.b32.xlu0 %v8430, %s10376
    %v10378 = vpop.permute.xlu0 %10377
    %s10380 = sor.u32 256, 18
    %10381 = vbcast.lane.b32.xlu0 %v8442, %s10380
    %v10382 = vpop.permute.xlu0 %10381
    %s10384 = sor.u32 256, 26
    %10385 = vbcast.lane.b32.xlu0 %v8442, %s10384
    %v10386 = vpop.permute.xlu0 %10385
    %s10388 = sor.u32 256, 18
    %10389 = vbcast.lane.b32.xlu0 %v8454, %s10388
    %v10390 = vpop.permute.xlu0 %10389
    %s10392 = sor.u32 256, 26
    %10393 = vbcast.lane.b32.xlu0 %v8454, %s10392
    %v10394 = vpop.permute.xlu0 %10393
    %s10396 = sor.u32 256, 18
    %10397 = vbcast.lane.b32.xlu0 %v8466, %s10396
    %v10398 = vpop.permute.xlu0 %10397
    %s10400 = sor.u32 256, 26
    %10401 = vbcast.lane.b32.xlu0 %v8466, %s10400
    %v10402 = vpop.permute.xlu0 %10401
    %s10404 = sor.u32 256, 18
    %10405 = vbcast.lane.b32.xlu0 %v8478, %s10404
    %v10406 = vpop.permute.xlu0 %10405
    %s10408 = sor.u32 256, 26
    %10409 = vbcast.lane.b32.xlu0 %v8478, %s10408
    %v10410 = vpop.permute.xlu0 %10409
    %s10412 = sor.u32 256, 18
    %10413 = vbcast.lane.b32.xlu0 %v8490, %s10412
    %v10414 = vpop.permute.xlu0 %10413
    %s10416 = sor.u32 256, 26
    %10417 = vbcast.lane.b32.xlu0 %v8490, %s10416
    %v10418 = vpop.permute.xlu0 %10417
    %s10420 = sor.u32 256, 18
    %10421 = vbcast.lane.b32.xlu0 %v8502, %s10420
    %v10422 = vpop.permute.xlu0 %10421
    %s10424 = sor.u32 256, 26
    %10425 = vbcast.lane.b32.xlu0 %v8502, %s10424
    %v10426 = vpop.permute.xlu0 %10425
    %s10428 = sor.u32 256, 18
    %10429 = vbcast.lane.b32.xlu0 %v8514, %s10428
    %v10430 = vpop.permute.xlu0 %10429
    %s10432 = sor.u32 256, 26
    %10433 = vbcast.lane.b32.xlu0 %v8514, %s10432
    %v10434 = vpop.permute.xlu0 %10433
    %s10436 = sor.u32 256, 18
    %10437 = vbcast.lane.b32.xlu0 %v8526, %s10436
    %v10438 = vpop.permute.xlu0 %10437
    %s10440 = sor.u32 256, 26
    %10441 = vbcast.lane.b32.xlu0 %v8526, %s10440
    %v10442 = vpop.permute.xlu0 %10441
    %s10444 = sor.u32 256, 18
    %10445 = vbcast.lane.b32.xlu0 %v8538, %s10444
    %v10446 = vpop.permute.xlu0 %10445
    %s10448 = sor.u32 256, 26
    %10449 = vbcast.lane.b32.xlu0 %v8538, %s10448
    %v10450 = vpop.permute.xlu0 %10449
    %s10452 = sor.u32 256, 18
    %10453 = vbcast.lane.b32.xlu0 %v8550, %s10452
    %v10454 = vpop.permute.xlu0 %10453
    %s10456 = sor.u32 256, 26
    %10457 = vbcast.lane.b32.xlu0 %v8550, %s10456
    %v10458 = vpop.permute.xlu0 %10457
    %s10460 = sor.u32 256, 18
    %10461 = vbcast.lane.b32.xlu0 %v8562, %s10460
    %v10462 = vpop.permute.xlu0 %10461
    %s10464 = sor.u32 256, 26
    %10465 = vbcast.lane.b32.xlu0 %v8562, %s10464
    %v10466 = vpop.permute.xlu0 %10465
    %s10468 = sor.u32 256, 18
    %10469 = vbcast.lane.b32.xlu0 %v8574, %s10468
    %v10470 = vpop.permute.xlu0 %10469
    %s10472 = sor.u32 256, 26
    %10473 = vbcast.lane.b32.xlu0 %v8574, %s10472
    %v10474 = vpop.permute.xlu0 %10473
    %s10476 = sor.u32 256, 18
    %10477 = vbcast.lane.b32.xlu0 %v8586, %s10476
    %v10478 = vpop.permute.xlu0 %10477
    %s10480 = sor.u32 256, 26
    %10481 = vbcast.lane.b32.xlu0 %v8586, %s10480
    %v10482 = vpop.permute.xlu0 %10481
    %s10484 = sor.u32 256, 18
    %10485 = vbcast.lane.b32.xlu0 %v8598, %s10484
    %v10486 = vpop.permute.xlu0 %10485
    %s10488 = sor.u32 256, 26
    %10489 = vbcast.lane.b32.xlu0 %v8598, %s10488
    %v10490 = vpop.permute.xlu0 %10489
    %s10492 = sor.u32 256, 18
    %10493 = vbcast.lane.b32.xlu0 %v8610, %s10492
    %v10494 = vpop.permute.xlu0 %10493
    %s10496 = sor.u32 256, 26
    %10497 = vbcast.lane.b32.xlu0 %v8610, %s10496
    %v10498 = vpop.permute.xlu0 %10497
    %s10500 = sor.u32 256, 18
    %10501 = vbcast.lane.b32.xlu0 %v8622, %s10500
    %v10502 = vpop.permute.xlu0 %10501
    %s10504 = sor.u32 256, 26
    %10505 = vbcast.lane.b32.xlu0 %v8622, %s10504
    %v10506 = vpop.permute.xlu0 %10505
    %s10508 = sor.u32 256, 18
    %10509 = vbcast.lane.b32.xlu0 %v8634, %s10508
    %v10510 = vpop.permute.xlu0 %10509
    %s10512 = sor.u32 256, 26
    %10513 = vbcast.lane.b32.xlu0 %v8634, %s10512
    %v10514 = vpop.permute.xlu0 %10513
    %s10516 = sor.u32 256, 18
    %10517 = vbcast.lane.b32.xlu0 %v8646, %s10516
    %v10518 = vpop.permute.xlu0 %10517
    %s10520 = sor.u32 256, 26
    %10521 = vbcast.lane.b32.xlu0 %v8646, %s10520
    %v10522 = vpop.permute.xlu0 %10521
    %s10524 = sor.u32 256, 18
    %10525 = vbcast.lane.b32.xlu0 %v8658, %s10524
    %v10526 = vpop.permute.xlu0 %10525
    %s10528 = sor.u32 256, 26
    %10529 = vbcast.lane.b32.xlu0 %v8658, %s10528
    %v10530 = vpop.permute.xlu0 %10529
    %s10532 = sor.u32 256, 18
    %10533 = vbcast.lane.b32.xlu0 %v8670, %s10532
    %v10534 = vpop.permute.xlu0 %10533
    %s10536 = sor.u32 256, 26
    %10537 = vbcast.lane.b32.xlu0 %v8670, %s10536
    %v10538 = vpop.permute.xlu0 %10537
    %s10540 = sor.u32 256, 18
    %10541 = vbcast.lane.b32.xlu0 %v8682, %s10540
    %v10542 = vpop.permute.xlu0 %10541
    %s10544 = sor.u32 256, 26
    %10545 = vbcast.lane.b32.xlu0 %v8682, %s10544
    %v10546 = vpop.permute.xlu0 %10545
    %s10548 = sor.u32 256, 18
    %10549 = vbcast.lane.b32.xlu0 %v8694, %s10548
    %v10550 = vpop.permute.xlu0 %10549
    %s10552 = sor.u32 256, 26
    %10553 = vbcast.lane.b32.xlu0 %v8694, %s10552
    %v10554 = vpop.permute.xlu0 %10553
    %s10556 = sor.u32 256, 18
    %10557 = vbcast.lane.b32.xlu0 %v8706, %s10556
    %v10558 = vpop.permute.xlu0 %10557
    %s10560 = sor.u32 256, 26
    %10561 = vbcast.lane.b32.xlu0 %v8706, %s10560
    %v10562 = vpop.permute.xlu0 %10561
    %s10564 = sor.u32 256, 18
    %10565 = vbcast.lane.b32.xlu0 %v8718, %s10564
    %v10566 = vpop.permute.xlu0 %10565
    %s10568 = sor.u32 256, 26
    %10569 = vbcast.lane.b32.xlu0 %v8718, %s10568
    %v10570 = vpop.permute.xlu0 %10569
    %s10572 = sor.u32 256, 18
    %10573 = vbcast.lane.b32.xlu0 %v8730, %s10572
    %v10574 = vpop.permute.xlu0 %10573
    %s10576 = sor.u32 256, 26
    %10577 = vbcast.lane.b32.xlu0 %v8730, %s10576
    %v10578 = vpop.permute.xlu0 %10577
    %s10580 = sor.u32 256, 18
    %10581 = vbcast.lane.b32.xlu0 %v8742, %s10580
    %v10582 = vpop.permute.xlu0 %10581
    %s10584 = sor.u32 256, 26
    %10585 = vbcast.lane.b32.xlu0 %v8742, %s10584
    %v10586 = vpop.permute.xlu0 %10585
    %s10588 = sor.u32 256, 18
    %10589 = vbcast.lane.b32.xlu0 %v8754, %s10588
    %v10590 = vpop.permute.xlu0 %10589
    %s10592 = sor.u32 256, 26
    %10593 = vbcast.lane.b32.xlu0 %v8754, %s10592
    %v10594 = vpop.permute.xlu0 %10593
    %s10596 = sor.u32 256, 18
    %10597 = vbcast.lane.b32.xlu0 %v8766, %s10596
    %v10598 = vpop.permute.xlu0 %10597
    %s10600 = sor.u32 256, 26
    %10601 = vbcast.lane.b32.xlu0 %v8766, %s10600
    %v10602 = vpop.permute.xlu0 %10601
    %s10604 = sor.u32 256, 18
    %10605 = vbcast.lane.b32.xlu0 %v8778, %s10604
    %v10606 = vpop.permute.xlu0 %10605
    %s10608 = sor.u32 256, 26
    %10609 = vbcast.lane.b32.xlu0 %v8778, %s10608
    %v10610 = vpop.permute.xlu0 %10609
    %s10612 = sor.u32 256, 18
    %10613 = vbcast.lane.b32.xlu0 %v8790, %s10612
    %v10614 = vpop.permute.xlu0 %10613
    %s10616 = sor.u32 256, 26
    %10617 = vbcast.lane.b32.xlu0 %v8790, %s10616
    %v10618 = vpop.permute.xlu0 %10617
    %s10620 = sor.u32 256, 18
    %10621 = vbcast.lane.b32.xlu0 %v8802, %s10620
    %v10622 = vpop.permute.xlu0 %10621
    %s10624 = sor.u32 256, 26
    %10625 = vbcast.lane.b32.xlu0 %v8802, %s10624
    %v10626 = vpop.permute.xlu0 %10625
    %s10628 = sor.u32 256, 18
    %10629 = vbcast.lane.b32.xlu0 %v8814, %s10628
    %v10630 = vpop.permute.xlu0 %10629
    %s10632 = sor.u32 256, 26
    %10633 = vbcast.lane.b32.xlu0 %v8814, %s10632
    %v10634 = vpop.permute.xlu0 %10633
    %s10636 = sor.u32 256, 18
    %10637 = vbcast.lane.b32.xlu0 %v8826, %s10636
    %v10638 = vpop.permute.xlu0 %10637
    %s10640 = sor.u32 256, 26
    %10641 = vbcast.lane.b32.xlu0 %v8826, %s10640
    %v10642 = vpop.permute.xlu0 %10641
    %s10644 = sor.u32 256, 18
    %10645 = vbcast.lane.b32.xlu0 %v8838, %s10644
    %v10646 = vpop.permute.xlu0 %10645
    %s10648 = sor.u32 256, 26
    %10649 = vbcast.lane.b32.xlu0 %v8838, %s10648
    %v10650 = vpop.permute.xlu0 %10649
    %s10652 = sor.u32 256, 18
    %10653 = vbcast.lane.b32.xlu0 %v8850, %s10652
    %v10654 = vpop.permute.xlu0 %10653
    %s10656 = sor.u32 256, 26
    %10657 = vbcast.lane.b32.xlu0 %v8850, %s10656
    %v10658 = vpop.permute.xlu0 %10657
    %s10660 = sor.u32 256, 18
    %10661 = vbcast.lane.b32.xlu0 %v8862, %s10660
    %v10662 = vpop.permute.xlu0 %10661
    %s10664 = sor.u32 256, 26
    %10665 = vbcast.lane.b32.xlu0 %v8862, %s10664
    %v10666 = vpop.permute.xlu0 %10665
    %s10668 = sor.u32 256, 18
    %10669 = vbcast.lane.b32.xlu0 %v8874, %s10668
    %v10670 = vpop.permute.xlu0 %10669
    %s10672 = sor.u32 256, 26
    %10673 = vbcast.lane.b32.xlu0 %v8874, %s10672
    %v10674 = vpop.permute.xlu0 %10673
    %s10676 = sor.u32 256, 18
    %10677 = vbcast.lane.b32.xlu0 %v8886, %s10676
    %v10678 = vpop.permute.xlu0 %10677
    %s10680 = sor.u32 256, 26
    %10681 = vbcast.lane.b32.xlu0 %v8886, %s10680
    %v10682 = vpop.permute.xlu0 %10681
    %s10684 = sor.u32 256, 18
    %10685 = vbcast.lane.b32.xlu0 %v8898, %s10684
    %v10686 = vpop.permute.xlu0 %10685
    %s10688 = sor.u32 256, 26
    %10689 = vbcast.lane.b32.xlu0 %v8898, %s10688
    %v10690 = vpop.permute.xlu0 %10689
    %s10692 = sor.u32 256, 18
    %10693 = vbcast.lane.b32.xlu0 %v8910, %s10692
    %v10694 = vpop.permute.xlu0 %10693
    %s10696 = sor.u32 256, 26
    %10697 = vbcast.lane.b32.xlu0 %v8910, %s10696
    %v10698 = vpop.permute.xlu0 %10697
    %s10700 = sor.u32 256, 18
    %10701 = vbcast.lane.b32.xlu0 %v8922, %s10700
    %v10702 = vpop.permute.xlu0 %10701
    %s10704 = sor.u32 256, 26
    %10705 = vbcast.lane.b32.xlu0 %v8922, %s10704
    %v10706 = vpop.permute.xlu0 %10705
    %s10708 = sor.u32 256, 18
    %10709 = vbcast.lane.b32.xlu0 %v8934, %s10708
    %v10710 = vpop.permute.xlu0 %10709
    %s10712 = sor.u32 256, 26
    %10713 = vbcast.lane.b32.xlu0 %v8934, %s10712
    %v10714 = vpop.permute.xlu0 %10713
    %s10716 = sor.u32 256, 18
    %10717 = vbcast.lane.b32.xlu0 %v8946, %s10716
    %v10718 = vpop.permute.xlu0 %10717
    %s10720 = sor.u32 256, 26
    %10721 = vbcast.lane.b32.xlu0 %v8946, %s10720
    %v10722 = vpop.permute.xlu0 %10721
    %s10724 = sor.u32 256, 18
    %10725 = vbcast.lane.b32.xlu0 %v8958, %s10724
    %v10726 = vpop.permute.xlu0 %10725
    %s10728 = sor.u32 256, 26
    %10729 = vbcast.lane.b32.xlu0 %v8958, %s10728
    %v10730 = vpop.permute.xlu0 %10729
    %s10732 = sor.u32 256, 18
    %10733 = vbcast.lane.b32.xlu0 %v8970, %s10732
    %v10734 = vpop.permute.xlu0 %10733
    %s10736 = sor.u32 256, 26
    %10737 = vbcast.lane.b32.xlu0 %v8970, %s10736
    %v10738 = vpop.permute.xlu0 %10737
    %s10740 = sor.u32 256, 18
    %10741 = vbcast.lane.b32.xlu0 %v8982, %s10740
    %v10742 = vpop.permute.xlu0 %10741
    %s10744 = sor.u32 256, 26
    %10745 = vbcast.lane.b32.xlu0 %v8982, %s10744
    %v10746 = vpop.permute.xlu0 %10745
    %s10748 = sor.u32 256, 18
    %10749 = vbcast.lane.b32.xlu0 %v8994, %s10748
    %v10750 = vpop.permute.xlu0 %10749
    %s10752 = sor.u32 256, 26
    %10753 = vbcast.lane.b32.xlu0 %v8994, %s10752
    %v10754 = vpop.permute.xlu0 %10753
    %s10756 = sor.u32 256, 18
    %10757 = vbcast.lane.b32.xlu0 %v9006, %s10756
    %v10758 = vpop.permute.xlu0 %10757
    %s10760 = sor.u32 256, 26
    %10761 = vbcast.lane.b32.xlu0 %v9006, %s10760
    %v10762 = vpop.permute.xlu0 %10761
    %s10764 = sor.u32 256, 18
    %10765 = vbcast.lane.b32.xlu0 %v9018, %s10764
    %v10766 = vpop.permute.xlu0 %10765
    %s10768 = sor.u32 256, 26
    %10769 = vbcast.lane.b32.xlu0 %v9018, %s10768
    %v10770 = vpop.permute.xlu0 %10769
    %s10772 = sor.u32 256, 18
    %10773 = vbcast.lane.b32.xlu0 %v9030, %s10772
    %v10774 = vpop.permute.xlu0 %10773
    %s10776 = sor.u32 256, 26
    %10777 = vbcast.lane.b32.xlu0 %v9030, %s10776
    %v10778 = vpop.permute.xlu0 %10777
    %s10780 = sor.u32 256, 18
    %10781 = vbcast.lane.b32.xlu0 %v9042, %s10780
    %v10782 = vpop.permute.xlu0 %10781
    %s10784 = sor.u32 256, 26
    %10785 = vbcast.lane.b32.xlu0 %v9042, %s10784
    %v10786 = vpop.permute.xlu0 %10785
    %v10787 = vmul.f32 %v10035, %v10278
    %v10788 = vmul.f32 %v10036, %v10282
    %v10789 = vmul.f32 %v10067, %v10286
    %v10790 = vmul.f32 %v10068, %v10290
    %v10791 = vmul.f32 %v10099, %v10294
    %v10792 = vmul.f32 %v10100, %v10298
    %v10793 = vmul.f32 %v10131, %v10302
    %v10794 = vmul.f32 %v10132, %v10306
    %v10795 = vmul.f32 %v10163, %v10310
    %v10796 = vmul.f32 %v10164, %v10314
    %v10797 = vmul.f32 %v10195, %v10318
    %v10798 = vmul.f32 %v10196, %v10322
    %v10799 = vmul.f32 %v10227, %v10326
    %v10800 = vmul.f32 %v10228, %v10330
    %v10801 = vmul.f32 %v10259, %v10334
    %v10802 = vmul.f32 %v10260, %v10338
    %v10803 = vmul.f32 %v10037, %v10342
    %v10804 = vmul.f32 %v10038, %v10346
    %v10805 = vmul.f32 %v10069, %v10350
    %v10806 = vmul.f32 %v10070, %v10354
    %v10807 = vmul.f32 %v10101, %v10358
    %v10808 = vmul.f32 %v10102, %v10362
    %v10809 = vmul.f32 %v10133, %v10366
    %v10810 = vmul.f32 %v10134, %v10370
    %v10811 = vmul.f32 %v10165, %v10374
    %v10812 = vmul.f32 %v10166, %v10378
    %v10813 = vmul.f32 %v10197, %v10382
    %v10814 = vmul.f32 %v10198, %v10386
    %v10815 = vmul.f32 %v10229, %v10390
    %v10816 = vmul.f32 %v10230, %v10394
    %v10817 = vmul.f32 %v10261, %v10398
    %v10818 = vmul.f32 %v10262, %v10402
    %v10819 = vmul.f32 %v10039, %v10406
    %v10820 = vmul.f32 %v10040, %v10410
    %v10821 = vmul.f32 %v10071, %v10414
    %v10822 = vmul.f32 %v10072, %v10418
    %v10823 = vmul.f32 %v10103, %v10422
    %v10824 = vmul.f32 %v10104, %v10426
    %v10825 = vmul.f32 %v10135, %v10430
    %v10826 = vmul.f32 %v10136, %v10434
    %v10827 = vmul.f32 %v10167, %v10438
    %v10828 = vmul.f32 %v10168, %v10442
    %v10829 = vmul.f32 %v10199, %v10446
    %v10830 = vmul.f32 %v10200, %v10450
    %v10831 = vmul.f32 %v10231, %v10454
    %v10832 = vmul.f32 %v10232, %v10458
    %v10833 = vmul.f32 %v10263, %v10462
    %v10834 = vmul.f32 %v10264, %v10466
    %v10835 = vmul.f32 %v10041, %v10470
    %v10836 = vmul.f32 %v10042, %v10474
    %v10837 = vmul.f32 %v10073, %v10478
    %v10838 = vmul.f32 %v10074, %v10482
    %v10839 = vmul.f32 %v10105, %v10486
    %v10840 = vmul.f32 %v10106, %v10490
    %v10841 = vmul.f32 %v10137, %v10494
    %v10842 = vmul.f32 %v10138, %v10498
    %v10843 = vmul.f32 %v10169, %v10502
    %v10844 = vmul.f32 %v10170, %v10506
    %v10845 = vmul.f32 %v10201, %v10510
    %v10846 = vmul.f32 %v10202, %v10514
    %v10847 = vmul.f32 %v10233, %v10518
    %v10848 = vmul.f32 %v10234, %v10522
    %v10849 = vmul.f32 %v10265, %v10526
    %v10850 = vmul.f32 %v10266, %v10530
    %v10851 = vmul.f32 %v10043, %v10534
    %v10852 = vmul.f32 %v10044, %v10538
    %v10853 = vmul.f32 %v10075, %v10542
    %v10854 = vmul.f32 %v10076, %v10546
    %v10855 = vmul.f32 %v10107, %v10550
    %v10856 = vmul.f32 %v10108, %v10554
    %v10857 = vmul.f32 %v10139, %v10558
    %v10858 = vmul.f32 %v10140, %v10562
    %v10859 = vmul.f32 %v10171, %v10566
    %v10860 = vmul.f32 %v10172, %v10570
    %v10861 = vmul.f32 %v10203, %v10574
    %v10862 = vmul.f32 %v10204, %v10578
    %v10863 = vmul.f32 %v10235, %v10582
    %v10864 = vmul.f32 %v10236, %v10586
    %v10865 = vmul.f32 %v10267, %v10590
    %v10866 = vmul.f32 %v10268, %v10594
    %v10867 = vmul.f32 %v10045, %v10598
    %v10868 = vmul.f32 %v10046, %v10602
    %v10869 = vmul.f32 %v10077, %v10606
    %v10870 = vmul.f32 %v10078, %v10610
    %v10871 = vmul.f32 %v10109, %v10614
    %v10872 = vmul.f32 %v10110, %v10618
    %v10873 = vmul.f32 %v10141, %v10622
    %v10874 = vmul.f32 %v10142, %v10626
    %v10875 = vmul.f32 %v10173, %v10630
    %v10876 = vmul.f32 %v10174, %v10634
    %v10877 = vmul.f32 %v10205, %v10638
    %v10878 = vmul.f32 %v10206, %v10642
    %v10879 = vmul.f32 %v10237, %v10646
    %v10880 = vmul.f32 %v10238, %v10650
    %v10881 = vmul.f32 %v10269, %v10654
    %v10882 = vmul.f32 %v10270, %v10658
    %v10883 = vmul.f32 %v10047, %v10662
    %v10884 = vmul.f32 %v10048, %v10666
    %v10885 = vmul.f32 %v10079, %v10670
    %v10886 = vmul.f32 %v10080, %v10674
    %v10887 = vmul.f32 %v10111, %v10678
    %v10888 = vmul.f32 %v10112, %v10682
    %v10889 = vmul.f32 %v10143, %v10686
    %v10890 = vmul.f32 %v10144, %v10690
    %v10891 = vmul.f32 %v10175, %v10694
    %v10892 = vmul.f32 %v10176, %v10698
    %v10893 = vmul.f32 %v10207, %v10702
    %v10894 = vmul.f32 %v10208, %v10706
    %v10895 = vmul.f32 %v10239, %v10710
    %v10896 = vmul.f32 %v10240, %v10714
    %v10897 = vmul.f32 %v10271, %v10718
    %v10898 = vmul.f32 %v10272, %v10722
    %v10899 = vmul.f32 %v10049, %v10726
    %v10900 = vmul.f32 %v10050, %v10730
    %v10901 = vmul.f32 %v10081, %v10734
    %v10902 = vmul.f32 %v10082, %v10738
    %v10903 = vmul.f32 %v10113, %v10742
    %v10904 = vmul.f32 %v10114, %v10746
    %v10905 = vmul.f32 %v10145, %v10750
    %v10906 = vmul.f32 %v10146, %v10754
    %v10907 = vmul.f32 %v10177, %v10758
    %v10908 = vmul.f32 %v10178, %v10762
    %v10909 = vmul.f32 %v10209, %v10766
    %v10910 = vmul.f32 %v10210, %v10770
    %v10911 = vmul.f32 %v10241, %v10774
    %v10912 = vmul.f32 %v10242, %v10778
    %v10913 = vmul.f32 %v10273, %v10782
    %v10914 = vmul.f32 %v10274, %v10786
    %v10915 = vsel %vm301, %v10787, 0.0
    %v10916 = vsel %vm301, %v10788, 0.0
    %v10917 = vadd.f32 %v10915, %v10916
    %v10918 = vrot.slane %v10917, 4
    %v10919 = vadd.f32 %v10917, %v10918
    %v10920 = vrot.slane %v10919, 2
    %v10921 = vadd.f32 %v10919, %v10920
    %v10922 = vrot.slane %v10921, 1
    %v10923 = vadd.f32 %v10921, %v10922
    %v10924 = vsel %vm301, %v10789, 0.0
    %v10925 = vsel %vm301, %v10790, 0.0
    %v10926 = vadd.f32 %v10924, %v10925
    %v10927 = vrot.slane %v10926, 4
    %v10928 = vadd.f32 %v10926, %v10927
    %v10929 = vrot.slane %v10928, 2
    %v10930 = vadd.f32 %v10928, %v10929
    %v10931 = vrot.slane %v10930, 1
    %v10932 = vadd.f32 %v10930, %v10931
    %v10933 = vsel %vm301, %v10791, 0.0
    %v10934 = vsel %vm301, %v10792, 0.0
    %v10935 = vadd.f32 %v10933, %v10934
    %v10936 = vrot.slane %v10935, 4
    %v10937 = vadd.f32 %v10935, %v10936
    %v10938 = vrot.slane %v10937, 2
    %v10939 = vadd.f32 %v10937, %v10938
    %v10940 = vrot.slane %v10939, 1
    %v10941 = vadd.f32 %v10939, %v10940
    %v10942 = vsel %vm301, %v10793, 0.0
    %v10943 = vsel %vm301, %v10794, 0.0
    %v10944 = vadd.f32 %v10942, %v10943
    %v10945 = vrot.slane %v10944, 4
    %v10946 = vadd.f32 %v10944, %v10945
    %v10947 = vrot.slane %v10946, 2
    %v10948 = vadd.f32 %v10946, %v10947
    %v10949 = vrot.slane %v10948, 1
    %v10950 = vadd.f32 %v10948, %v10949
    %v10951 = vsel %vm301, %v10795, 0.0
    %v10952 = vsel %vm301, %v10796, 0.0
    %v10953 = vadd.f32 %v10951, %v10952
    %v10954 = vrot.slane %v10953, 4
    %v10955 = vadd.f32 %v10953, %v10954
    %v10956 = vrot.slane %v10955, 2
    %v10957 = vadd.f32 %v10955, %v10956
    %v10958 = vrot.slane %v10957, 1
    %v10959 = vadd.f32 %v10957, %v10958
    %v10960 = vsel %vm301, %v10797, 0.0
    %v10961 = vsel %vm301, %v10798, 0.0
    %v10962 = vadd.f32 %v10960, %v10961
    %v10963 = vrot.slane %v10962, 4
    %v10964 = vadd.f32 %v10962, %v10963
    %v10965 = vrot.slane %v10964, 2
    %v10966 = vadd.f32 %v10964, %v10965
    %v10967 = vrot.slane %v10966, 1
    %v10968 = vadd.f32 %v10966, %v10967
    %v10969 = vsel %vm301, %v10799, 0.0
    %v10970 = vsel %vm301, %v10800, 0.0
    %v10971 = vadd.f32 %v10969, %v10970
    %v10972 = vrot.slane %v10971, 4
    %v10973 = vadd.f32 %v10971, %v10972
    %v10974 = vrot.slane %v10973, 2
    %v10975 = vadd.f32 %v10973, %v10974
    %v10976 = vrot.slane %v10975, 1
    %v10977 = vadd.f32 %v10975, %v10976
    %v10978 = vsel %vm301, %v10801, 0.0
    %v10979 = vsel %vm301, %v10802, 0.0
    %v10980 = vadd.f32 %v10978, %v10979
    %v10981 = vrot.slane %v10980, 4
    %v10982 = vadd.f32 %v10980, %v10981
    %v10983 = vrot.slane %v10982, 2
    %v10984 = vadd.f32 %v10982, %v10983
    %v10985 = vrot.slane %v10984, 1
    %v10986 = vadd.f32 %v10984, %v10985
    %v10987 = vsel %vm301, %v10803, 0.0
    %v10988 = vsel %vm301, %v10804, 0.0
    %v10989 = vadd.f32 %v10987, %v10988
    %v10990 = vrot.slane %v10989, 4
    %v10991 = vadd.f32 %v10989, %v10990
    %v10992 = vrot.slane %v10991, 2
    %v10993 = vadd.f32 %v10991, %v10992
    %v10994 = vrot.slane %v10993, 1
    %v10995 = vadd.f32 %v10993, %v10994
    %v10996 = vsel %vm301, %v10805, 0.0
    %v10997 = vsel %vm301, %v10806, 0.0
    %v10998 = vadd.f32 %v10996, %v10997
    %v10999 = vrot.slane %v10998, 4
    %v11000 = vadd.f32 %v10998, %v10999
    %v11001 = vrot.slane %v11000, 2
    %v11002 = vadd.f32 %v11000, %v11001
    %v11003 = vrot.slane %v11002, 1
    %v11004 = vadd.f32 %v11002, %v11003
    %v11005 = vsel %vm301, %v10807, 0.0
    %v11006 = vsel %vm301, %v10808, 0.0
    %v11007 = vadd.f32 %v11005, %v11006
    %v11008 = vrot.slane %v11007, 4
    %v11009 = vadd.f32 %v11007, %v11008
    %v11010 = vrot.slane %v11009, 2
    %v11011 = vadd.f32 %v11009, %v11010
    %v11012 = vrot.slane %v11011, 1
    %v11013 = vadd.f32 %v11011, %v11012
    %v11014 = vsel %vm301, %v10809, 0.0
    %v11015 = vsel %vm301, %v10810, 0.0
    %v11016 = vadd.f32 %v11014, %v11015
    %v11017 = vrot.slane %v11016, 4
    %v11018 = vadd.f32 %v11016, %v11017
    %v11019 = vrot.slane %v11018, 2
    %v11020 = vadd.f32 %v11018, %v11019
    %v11021 = vrot.slane %v11020, 1
    %v11022 = vadd.f32 %v11020, %v11021
    %v11023 = vsel %vm301, %v10811, 0.0
    %v11024 = vsel %vm301, %v10812, 0.0
    %v11025 = vadd.f32 %v11023, %v11024
    %v11026 = vrot.slane %v11025, 4
    %v11027 = vadd.f32 %v11025, %v11026
    %v11028 = vrot.slane %v11027, 2
    %v11029 = vadd.f32 %v11027, %v11028
    %v11030 = vrot.slane %v11029, 1
    %v11031 = vadd.f32 %v11029, %v11030
    %v11032 = vsel %vm301, %v10813, 0.0
    %v11033 = vsel %vm301, %v10814, 0.0
    %v11034 = vadd.f32 %v11032, %v11033
    %v11035 = vrot.slane %v11034, 4
    %v11036 = vadd.f32 %v11034, %v11035
    %v11037 = vrot.slane %v11036, 2
    %v11038 = vadd.f32 %v11036, %v11037
    %v11039 = vrot.slane %v11038, 1
    %v11040 = vadd.f32 %v11038, %v11039
    %v11041 = vsel %vm301, %v10815, 0.0
    %v11042 = vsel %vm301, %v10816, 0.0
    %v11043 = vadd.f32 %v11041, %v11042
    %v11044 = vrot.slane %v11043, 4
    %v11045 = vadd.f32 %v11043, %v11044
    %v11046 = vrot.slane %v11045, 2
    %v11047 = vadd.f32 %v11045, %v11046
    %v11048 = vrot.slane %v11047, 1
    %v11049 = vadd.f32 %v11047, %v11048
    %v11050 = vsel %vm301, %v10817, 0.0
    %v11051 = vsel %vm301, %v10818, 0.0
    %v11052 = vadd.f32 %v11050, %v11051
    %v11053 = vrot.slane %v11052, 4
    %v11054 = vadd.f32 %v11052, %v11053
    %v11055 = vrot.slane %v11054, 2
    %v11056 = vadd.f32 %v11054, %v11055
    %v11057 = vrot.slane %v11056, 1
    %v11058 = vadd.f32 %v11056, %v11057
    %v11059 = vsel %vm301, %v10819, 0.0
    %v11060 = vsel %vm301, %v10820, 0.0
    %v11061 = vadd.f32 %v11059, %v11060
    %v11062 = vrot.slane %v11061, 4
    %v11063 = vadd.f32 %v11061, %v11062
    %v11064 = vrot.slane %v11063, 2
    %v11065 = vadd.f32 %v11063, %v11064
    %v11066 = vrot.slane %v11065, 1
    %v11067 = vadd.f32 %v11065, %v11066
    %v11068 = vsel %vm301, %v10821, 0.0
    %v11069 = vsel %vm301, %v10822, 0.0
    %v11070 = vadd.f32 %v11068, %v11069
    %v11071 = vrot.slane %v11070, 4
    %v11072 = vadd.f32 %v11070, %v11071
    %v11073 = vrot.slane %v11072, 2
    %v11074 = vadd.f32 %v11072, %v11073
    %v11075 = vrot.slane %v11074, 1
    %v11076 = vadd.f32 %v11074, %v11075
    %v11077 = vsel %vm301, %v10823, 0.0
    %v11078 = vsel %vm301, %v10824, 0.0
    %v11079 = vadd.f32 %v11077, %v11078
    %v11080 = vrot.slane %v11079, 4
    %v11081 = vadd.f32 %v11079, %v11080
    %v11082 = vrot.slane %v11081, 2
    %v11083 = vadd.f32 %v11081, %v11082
    %v11084 = vrot.slane %v11083, 1
    %v11085 = vadd.f32 %v11083, %v11084
    %v11086 = vsel %vm301, %v10825, 0.0
    %v11087 = vsel %vm301, %v10826, 0.0
    %v11088 = vadd.f32 %v11086, %v11087
    %v11089 = vrot.slane %v11088, 4
    %v11090 = vadd.f32 %v11088, %v11089
    %v11091 = vrot.slane %v11090, 2
    %v11092 = vadd.f32 %v11090, %v11091
    %v11093 = vrot.slane %v11092, 1
    %v11094 = vadd.f32 %v11092, %v11093
    %v11095 = vsel %vm301, %v10827, 0.0
    %v11096 = vsel %vm301, %v10828, 0.0
    %v11097 = vadd.f32 %v11095, %v11096
    %v11098 = vrot.slane %v11097, 4
    %v11099 = vadd.f32 %v11097, %v11098
    %v11100 = vrot.slane %v11099, 2
    %v11101 = vadd.f32 %v11099, %v11100
    %v11102 = vrot.slane %v11101, 1
    %v11103 = vadd.f32 %v11101, %v11102
    %v11104 = vsel %vm301, %v10829, 0.0
    %v11105 = vsel %vm301, %v10830, 0.0
    %v11106 = vadd.f32 %v11104, %v11105
    %v11107 = vrot.slane %v11106, 4
    %v11108 = vadd.f32 %v11106, %v11107
    %v11109 = vrot.slane %v11108, 2
    %v11110 = vadd.f32 %v11108, %v11109
    %v11111 = vrot.slane %v11110, 1
    %v11112 = vadd.f32 %v11110, %v11111
    %v11113 = vsel %vm301, %v10831, 0.0
    %v11114 = vsel %vm301, %v10832, 0.0
    %v11115 = vadd.f32 %v11113, %v11114
    %v11116 = vrot.slane %v11115, 4
    %v11117 = vadd.f32 %v11115, %v11116
    %v11118 = vrot.slane %v11117, 2
    %v11119 = vadd.f32 %v11117, %v11118
    %v11120 = vrot.slane %v11119, 1
    %v11121 = vadd.f32 %v11119, %v11120
    %v11122 = vsel %vm301, %v10833, 0.0
    %v11123 = vsel %vm301, %v10834, 0.0
    %v11124 = vadd.f32 %v11122, %v11123
    %v11125 = vrot.slane %v11124, 4
    %v11126 = vadd.f32 %v11124, %v11125
    %v11127 = vrot.slane %v11126, 2
    %v11128 = vadd.f32 %v11126, %v11127
    %v11129 = vrot.slane %v11128, 1
    %v11130 = vadd.f32 %v11128, %v11129
    %v11131 = vsel %vm301, %v10835, 0.0
    %v11132 = vsel %vm301, %v10836, 0.0
    %v11133 = vadd.f32 %v11131, %v11132
    %v11134 = vrot.slane %v11133, 4
    %v11135 = vadd.f32 %v11133, %v11134
    %v11136 = vrot.slane %v11135, 2
    %v11137 = vadd.f32 %v11135, %v11136
    %v11138 = vrot.slane %v11137, 1
    %v11139 = vadd.f32 %v11137, %v11138
    %v11140 = vsel %vm301, %v10837, 0.0
    %v11141 = vsel %vm301, %v10838, 0.0
    %v11142 = vadd.f32 %v11140, %v11141
    %v11143 = vrot.slane %v11142, 4
    %v11144 = vadd.f32 %v11142, %v11143
    %v11145 = vrot.slane %v11144, 2
    %v11146 = vadd.f32 %v11144, %v11145
    %v11147 = vrot.slane %v11146, 1
    %v11148 = vadd.f32 %v11146, %v11147
    %v11149 = vsel %vm301, %v10839, 0.0
    %v11150 = vsel %vm301, %v10840, 0.0
    %v11151 = vadd.f32 %v11149, %v11150
    %v11152 = vrot.slane %v11151, 4
    %v11153 = vadd.f32 %v11151, %v11152
    %v11154 = vrot.slane %v11153, 2
    %v11155 = vadd.f32 %v11153, %v11154
    %v11156 = vrot.slane %v11155, 1
    %v11157 = vadd.f32 %v11155, %v11156
    %v11158 = vsel %vm301, %v10841, 0.0
    %v11159 = vsel %vm301, %v10842, 0.0
    %v11160 = vadd.f32 %v11158, %v11159
    %v11161 = vrot.slane %v11160, 4
    %v11162 = vadd.f32 %v11160, %v11161
    %v11163 = vrot.slane %v11162, 2
    %v11164 = vadd.f32 %v11162, %v11163
    %v11165 = vrot.slane %v11164, 1
    %v11166 = vadd.f32 %v11164, %v11165
    %v11167 = vsel %vm301, %v10843, 0.0
    %v11168 = vsel %vm301, %v10844, 0.0
    %v11169 = vadd.f32 %v11167, %v11168
    %v11170 = vrot.slane %v11169, 4
    %v11171 = vadd.f32 %v11169, %v11170
    %v11172 = vrot.slane %v11171, 2
    %v11173 = vadd.f32 %v11171, %v11172
    %v11174 = vrot.slane %v11173, 1
    %v11175 = vadd.f32 %v11173, %v11174
    %v11176 = vsel %vm301, %v10845, 0.0
    %v11177 = vsel %vm301, %v10846, 0.0
    %v11178 = vadd.f32 %v11176, %v11177
    %v11179 = vrot.slane %v11178, 4
    %v11180 = vadd.f32 %v11178, %v11179
    %v11181 = vrot.slane %v11180, 2
    %v11182 = vadd.f32 %v11180, %v11181
    %v11183 = vrot.slane %v11182, 1
    %v11184 = vadd.f32 %v11182, %v11183
    %v11185 = vsel %vm301, %v10847, 0.0
    %v11186 = vsel %vm301, %v10848, 0.0
    %v11187 = vadd.f32 %v11185, %v11186
    %v11188 = vrot.slane %v11187, 4
    %v11189 = vadd.f32 %v11187, %v11188
    %v11190 = vrot.slane %v11189, 2
    %v11191 = vadd.f32 %v11189, %v11190
    %v11192 = vrot.slane %v11191, 1
    %v11193 = vadd.f32 %v11191, %v11192
    %v11194 = vsel %vm301, %v10849, 0.0
    %v11195 = vsel %vm301, %v10850, 0.0
    %v11196 = vadd.f32 %v11194, %v11195
    %v11197 = vrot.slane %v11196, 4
    %v11198 = vadd.f32 %v11196, %v11197
    %v11199 = vrot.slane %v11198, 2
    %v11200 = vadd.f32 %v11198, %v11199
    %v11201 = vrot.slane %v11200, 1
    %v11202 = vadd.f32 %v11200, %v11201
    %v11203 = vsel %vm301, %v10851, 0.0
    %v11204 = vsel %vm301, %v10852, 0.0
    %v11205 = vadd.f32 %v11203, %v11204
    %v11206 = vrot.slane %v11205, 4
    %v11207 = vadd.f32 %v11205, %v11206
    %v11208 = vrot.slane %v11207, 2
    %v11209 = vadd.f32 %v11207, %v11208
    %v11210 = vrot.slane %v11209, 1
    %v11211 = vadd.f32 %v11209, %v11210
    %v11212 = vsel %vm301, %v10853, 0.0
    %v11213 = vsel %vm301, %v10854, 0.0
    %v11214 = vadd.f32 %v11212, %v11213
    %v11215 = vrot.slane %v11214, 4
    %v11216 = vadd.f32 %v11214, %v11215
    %v11217 = vrot.slane %v11216, 2
    %v11218 = vadd.f32 %v11216, %v11217
    %v11219 = vrot.slane %v11218, 1
    %v11220 = vadd.f32 %v11218, %v11219
    %v11221 = vsel %vm301, %v10855, 0.0
    %v11222 = vsel %vm301, %v10856, 0.0
    %v11223 = vadd.f32 %v11221, %v11222
    %v11224 = vrot.slane %v11223, 4
    %v11225 = vadd.f32 %v11223, %v11224
    %v11226 = vrot.slane %v11225, 2
    %v11227 = vadd.f32 %v11225, %v11226
    %v11228 = vrot.slane %v11227, 1
    %v11229 = vadd.f32 %v11227, %v11228
    %v11230 = vsel %vm301, %v10857, 0.0
    %v11231 = vsel %vm301, %v10858, 0.0
    %v11232 = vadd.f32 %v11230, %v11231
    %v11233 = vrot.slane %v11232, 4
    %v11234 = vadd.f32 %v11232, %v11233
    %v11235 = vrot.slane %v11234, 2
    %v11236 = vadd.f32 %v11234, %v11235
    %v11237 = vrot.slane %v11236, 1
    %v11238 = vadd.f32 %v11236, %v11237
    %v11239 = vsel %vm301, %v10859, 0.0
    %v11240 = vsel %vm301, %v10860, 0.0
    %v11241 = vadd.f32 %v11239, %v11240
    %v11242 = vrot.slane %v11241, 4
    %v11243 = vadd.f32 %v11241, %v11242
    %v11244 = vrot.slane %v11243, 2
    %v11245 = vadd.f32 %v11243, %v11244
    %v11246 = vrot.slane %v11245, 1
    %v11247 = vadd.f32 %v11245, %v11246
    %v11248 = vsel %vm301, %v10861, 0.0
    %v11249 = vsel %vm301, %v10862, 0.0
    %v11250 = vadd.f32 %v11248, %v11249
    %v11251 = vrot.slane %v11250, 4
    %v11252 = vadd.f32 %v11250, %v11251
    %v11253 = vrot.slane %v11252, 2
    %v11254 = vadd.f32 %v11252, %v11253
    %v11255 = vrot.slane %v11254, 1
    %v11256 = vadd.f32 %v11254, %v11255
    %v11257 = vsel %vm301, %v10863, 0.0
    %v11258 = vsel %vm301, %v10864, 0.0
    %v11259 = vadd.f32 %v11257, %v11258
    %v11260 = vrot.slane %v11259, 4
    %v11261 = vadd.f32 %v11259, %v11260
    %v11262 = vrot.slane %v11261, 2
    %v11263 = vadd.f32 %v11261, %v11262
    %v11264 = vrot.slane %v11263, 1
    %v11265 = vadd.f32 %v11263, %v11264
    %v11266 = vsel %vm301, %v10865, 0.0
    %v11267 = vsel %vm301, %v10866, 0.0
    %v11268 = vadd.f32 %v11266, %v11267
    %v11269 = vrot.slane %v11268, 4
    %v11270 = vadd.f32 %v11268, %v11269
    %v11271 = vrot.slane %v11270, 2
    %v11272 = vadd.f32 %v11270, %v11271
    %v11273 = vrot.slane %v11272, 1
    %v11274 = vadd.f32 %v11272, %v11273
    %v11275 = vsel %vm301, %v10867, 0.0
    %v11276 = vsel %vm301, %v10868, 0.0
    %v11277 = vadd.f32 %v11275, %v11276
    %v11278 = vrot.slane %v11277, 4
    %v11279 = vadd.f32 %v11277, %v11278
    %v11280 = vrot.slane %v11279, 2
    %v11281 = vadd.f32 %v11279, %v11280
    %v11282 = vrot.slane %v11281, 1
    %v11283 = vadd.f32 %v11281, %v11282
    %v11284 = vsel %vm301, %v10869, 0.0
    %v11285 = vsel %vm301, %v10870, 0.0
    %v11286 = vadd.f32 %v11284, %v11285
    %v11287 = vrot.slane %v11286, 4
    %v11288 = vadd.f32 %v11286, %v11287
    %v11289 = vrot.slane %v11288, 2
    %v11290 = vadd.f32 %v11288, %v11289
    %v11291 = vrot.slane %v11290, 1
    %v11292 = vadd.f32 %v11290, %v11291
    %v11293 = vsel %vm301, %v10871, 0.0
    %v11294 = vsel %vm301, %v10872, 0.0
    %v11295 = vadd.f32 %v11293, %v11294
    %v11296 = vrot.slane %v11295, 4
    %v11297 = vadd.f32 %v11295, %v11296
    %v11298 = vrot.slane %v11297, 2
    %v11299 = vadd.f32 %v11297, %v11298
    %v11300 = vrot.slane %v11299, 1
    %v11301 = vadd.f32 %v11299, %v11300
    %v11302 = vsel %vm301, %v10873, 0.0
    %v11303 = vsel %vm301, %v10874, 0.0
    %v11304 = vadd.f32 %v11302, %v11303
    %v11305 = vrot.slane %v11304, 4
    %v11306 = vadd.f32 %v11304, %v11305
    %v11307 = vrot.slane %v11306, 2
    %v11308 = vadd.f32 %v11306, %v11307
    %v11309 = vrot.slane %v11308, 1
    %v11310 = vadd.f32 %v11308, %v11309
    %v11311 = vsel %vm301, %v10875, 0.0
    %v11312 = vsel %vm301, %v10876, 0.0
    %v11313 = vadd.f32 %v11311, %v11312
    %v11314 = vrot.slane %v11313, 4
    %v11315 = vadd.f32 %v11313, %v11314
    %v11316 = vrot.slane %v11315, 2
    %v11317 = vadd.f32 %v11315, %v11316
    %v11318 = vrot.slane %v11317, 1
    %v11319 = vadd.f32 %v11317, %v11318
    %v11320 = vsel %vm301, %v10877, 0.0
    %v11321 = vsel %vm301, %v10878, 0.0
    %v11322 = vadd.f32 %v11320, %v11321
    %v11323 = vrot.slane %v11322, 4
    %v11324 = vadd.f32 %v11322, %v11323
    %v11325 = vrot.slane %v11324, 2
    %v11326 = vadd.f32 %v11324, %v11325
    %v11327 = vrot.slane %v11326, 1
    %v11328 = vadd.f32 %v11326, %v11327
    %v11329 = vsel %vm301, %v10879, 0.0
    %v11330 = vsel %vm301, %v10880, 0.0
    %v11331 = vadd.f32 %v11329, %v11330
    %v11332 = vrot.slane %v11331, 4
    %v11333 = vadd.f32 %v11331, %v11332
    %v11334 = vrot.slane %v11333, 2
    %v11335 = vadd.f32 %v11333, %v11334
    %v11336 = vrot.slane %v11335, 1
    %v11337 = vadd.f32 %v11335, %v11336
    %v11338 = vsel %vm301, %v10881, 0.0
    %v11339 = vsel %vm301, %v10882, 0.0
    %v11340 = vadd.f32 %v11338, %v11339
    %v11341 = vrot.slane %v11340, 4
    %v11342 = vadd.f32 %v11340, %v11341
    %v11343 = vrot.slane %v11342, 2
    %v11344 = vadd.f32 %v11342, %v11343
    %v11345 = vrot.slane %v11344, 1
    %v11346 = vadd.f32 %v11344, %v11345
    %v11347 = vsel %vm301, %v10883, 0.0
    %v11348 = vsel %vm301, %v10884, 0.0
    %v11349 = vadd.f32 %v11347, %v11348
    %v11350 = vrot.slane %v11349, 4
    %v11351 = vadd.f32 %v11349, %v11350
    %v11352 = vrot.slane %v11351, 2
    %v11353 = vadd.f32 %v11351, %v11352
    %v11354 = vrot.slane %v11353, 1
    %v11355 = vadd.f32 %v11353, %v11354
    %v11356 = vsel %vm301, %v10885, 0.0
    %v11357 = vsel %vm301, %v10886, 0.0
    %v11358 = vadd.f32 %v11356, %v11357
    %v11359 = vrot.slane %v11358, 4
    %v11360 = vadd.f32 %v11358, %v11359
    %v11361 = vrot.slane %v11360, 2
    %v11362 = vadd.f32 %v11360, %v11361
    %v11363 = vrot.slane %v11362, 1
    %v11364 = vadd.f32 %v11362, %v11363
    %v11365 = vsel %vm301, %v10887, 0.0
    %v11366 = vsel %vm301, %v10888, 0.0
    %v11367 = vadd.f32 %v11365, %v11366
    %v11368 = vrot.slane %v11367, 4
    %v11369 = vadd.f32 %v11367, %v11368
    %v11370 = vrot.slane %v11369, 2
    %v11371 = vadd.f32 %v11369, %v11370
    %v11372 = vrot.slane %v11371, 1
    %v11373 = vadd.f32 %v11371, %v11372
    %v11374 = vsel %vm301, %v10889, 0.0
    %v11375 = vsel %vm301, %v10890, 0.0
    %v11376 = vadd.f32 %v11374, %v11375
    %v11377 = vrot.slane %v11376, 4
    %v11378 = vadd.f32 %v11376, %v11377
    %v11379 = vrot.slane %v11378, 2
    %v11380 = vadd.f32 %v11378, %v11379
    %v11381 = vrot.slane %v11380, 1
    %v11382 = vadd.f32 %v11380, %v11381
    %v11383 = vsel %vm301, %v10891, 0.0
    %v11384 = vsel %vm301, %v10892, 0.0
    %v11385 = vadd.f32 %v11383, %v11384
    %v11386 = vrot.slane %v11385, 4
    %v11387 = vadd.f32 %v11385, %v11386
    %v11388 = vrot.slane %v11387, 2
    %v11389 = vadd.f32 %v11387, %v11388
    %v11390 = vrot.slane %v11389, 1
    %v11391 = vadd.f32 %v11389, %v11390
    %v11392 = vsel %vm301, %v10893, 0.0
    %v11393 = vsel %vm301, %v10894, 0.0
    %v11394 = vadd.f32 %v11392, %v11393
    %v11395 = vrot.slane %v11394, 4
    %v11396 = vadd.f32 %v11394, %v11395
    %v11397 = vrot.slane %v11396, 2
    %v11398 = vadd.f32 %v11396, %v11397
    %v11399 = vrot.slane %v11398, 1
    %v11400 = vadd.f32 %v11398, %v11399
    %v11401 = vsel %vm301, %v10895, 0.0
    %v11402 = vsel %vm301, %v10896, 0.0
    %v11403 = vadd.f32 %v11401, %v11402
    %v11404 = vrot.slane %v11403, 4
    %v11405 = vadd.f32 %v11403, %v11404
    %v11406 = vrot.slane %v11405, 2
    %v11407 = vadd.f32 %v11405, %v11406
    %v11408 = vrot.slane %v11407, 1
    %v11409 = vadd.f32 %v11407, %v11408
    %v11410 = vsel %vm301, %v10897, 0.0
    %v11411 = vsel %vm301, %v10898, 0.0
    %v11412 = vadd.f32 %v11410, %v11411
    %v11413 = vrot.slane %v11412, 4
    %v11414 = vadd.f32 %v11412, %v11413
    %v11415 = vrot.slane %v11414, 2
    %v11416 = vadd.f32 %v11414, %v11415
    %v11417 = vrot.slane %v11416, 1
    %v11418 = vadd.f32 %v11416, %v11417
    %v11419 = vsel %vm301, %v10899, 0.0
    %v11420 = vsel %vm301, %v10900, 0.0
    %v11421 = vadd.f32 %v11419, %v11420
    %v11422 = vrot.slane %v11421, 4
    %v11423 = vadd.f32 %v11421, %v11422
    %v11424 = vrot.slane %v11423, 2
    %v11425 = vadd.f32 %v11423, %v11424
    %v11426 = vrot.slane %v11425, 1
    %v11427 = vadd.f32 %v11425, %v11426
    %v11428 = vsel %vm301, %v10901, 0.0
    %v11429 = vsel %vm301, %v10902, 0.0
    %v11430 = vadd.f32 %v11428, %v11429
    %v11431 = vrot.slane %v11430, 4
    %v11432 = vadd.f32 %v11430, %v11431
    %v11433 = vrot.slane %v11432, 2
    %v11434 = vadd.f32 %v11432, %v11433
    %v11435 = vrot.slane %v11434, 1
    %v11436 = vadd.f32 %v11434, %v11435
    %v11437 = vsel %vm301, %v10903, 0.0
    %v11438 = vsel %vm301, %v10904, 0.0
    %v11439 = vadd.f32 %v11437, %v11438
    %v11440 = vrot.slane %v11439, 4
    %v11441 = vadd.f32 %v11439, %v11440
    %v11442 = vrot.slane %v11441, 2
    %v11443 = vadd.f32 %v11441, %v11442
    %v11444 = vrot.slane %v11443, 1
    %v11445 = vadd.f32 %v11443, %v11444
    %v11446 = vsel %vm301, %v10905, 0.0
    %v11447 = vsel %vm301, %v10906, 0.0
    %v11448 = vadd.f32 %v11446, %v11447
    %v11449 = vrot.slane %v11448, 4
    %v11450 = vadd.f32 %v11448, %v11449
    %v11451 = vrot.slane %v11450, 2
    %v11452 = vadd.f32 %v11450, %v11451
    %v11453 = vrot.slane %v11452, 1
    %v11454 = vadd.f32 %v11452, %v11453
    %v11455 = vsel %vm301, %v10907, 0.0
    %v11456 = vsel %vm301, %v10908, 0.0
    %v11457 = vadd.f32 %v11455, %v11456
    %v11458 = vrot.slane %v11457, 4
    %v11459 = vadd.f32 %v11457, %v11458
    %v11460 = vrot.slane %v11459, 2
    %v11461 = vadd.f32 %v11459, %v11460
    %v11462 = vrot.slane %v11461, 1
    %v11463 = vadd.f32 %v11461, %v11462
    %v11464 = vsel %vm301, %v10909, 0.0
    %v11465 = vsel %vm301, %v10910, 0.0
    %v11466 = vadd.f32 %v11464, %v11465
    %v11467 = vrot.slane %v11466, 4
    %v11468 = vadd.f32 %v11466, %v11467
    %v11469 = vrot.slane %v11468, 2
    %v11470 = vadd.f32 %v11468, %v11469
    %v11471 = vrot.slane %v11470, 1
    %v11472 = vadd.f32 %v11470, %v11471
    %v11473 = vsel %vm301, %v10911, 0.0
    %v11474 = vsel %vm301, %v10912, 0.0
    %v11475 = vadd.f32 %v11473, %v11474
    %v11476 = vrot.slane %v11475, 4
    %v11477 = vadd.f32 %v11475, %v11476
    %v11478 = vrot.slane %v11477, 2
    %v11479 = vadd.f32 %v11477, %v11478
    %v11480 = vrot.slane %v11479, 1
    %v11481 = vadd.f32 %v11479, %v11480
    %v11482 = vsel %vm301, %v10913, 0.0
    %v11483 = vsel %vm301, %v10914, 0.0
    %v11484 = vadd.f32 %v11482, %v11483
    %v11485 = vrot.slane %v11484, 4
    %v11486 = vadd.f32 %v11484, %v11485
    %v11487 = vrot.slane %v11486, 2
    %v11488 = vadd.f32 %v11486, %v11487
    %v11489 = vrot.slane %v11488, 1
    %v11490 = vadd.f32 %v11488, %v11489
    %v11491 = vlaneseq
    %v11492 = vshrl.u32 %v11491, 7
    %v11493 = vsub.s32 2, %v11492
    %v11494 = vrot.slane %v6380, %v11493
    %v11495 = vmul.f32 %v11494, %v6842
    %v11496 = vmul.f32 %v11494, %v6843
    %v11497 = vmul.f32 %v11494, %v6844
    %v11498 = vmul.f32 %v11494, %v6845
    %v11499 = vmul.f32 %v11494, %v6846
    %v11500 = vmul.f32 %v11494, %v6847
    %v11501 = vmul.f32 %v11494, %v6848
    %v11502 = vmul.f32 %v11494, %v6849
    %v11511 = vrot.slane %v11495, 1
    %v11512 = vrot.slane %v11495, 2
    %v11513 = vrot.slane %v11495, 3
    %v11514 = vrot.slane %v11495, 4
    %v11515 = vrot.slane %v11495, 5
    %v11516 = vrot.slane %v11495, 6
    %v11517 = vrot.slane %v11495, 7
    %v11518 = vrot.slane %v11496, 1
    %v11519 = vrot.slane %v11496, 2
    %v11520 = vrot.slane %v11496, 3
    %v11521 = vrot.slane %v11496, 4
    %v11522 = vrot.slane %v11496, 5
    %v11523 = vrot.slane %v11496, 6
    %v11524 = vrot.slane %v11496, 7
    %v11525 = vrot.slane %v11497, 1
    %v11526 = vrot.slane %v11497, 2
    %v11527 = vrot.slane %v11497, 3
    %v11528 = vrot.slane %v11497, 4
    %v11529 = vrot.slane %v11497, 5
    %v11530 = vrot.slane %v11497, 6
    %v11531 = vrot.slane %v11497, 7
    %v11532 = vrot.slane %v11498, 1
    %v11533 = vrot.slane %v11498, 2
    %v11534 = vrot.slane %v11498, 3
    %v11535 = vrot.slane %v11498, 4
    %v11536 = vrot.slane %v11498, 5
    %v11537 = vrot.slane %v11498, 6
    %v11538 = vrot.slane %v11498, 7
    %v11539 = vrot.slane %v11499, 1
    %v11540 = vrot.slane %v11499, 2
    %v11541 = vrot.slane %v11499, 3
    %v11542 = vrot.slane %v11499, 4
    %v11543 = vrot.slane %v11499, 5
    %v11544 = vrot.slane %v11499, 6
    %v11545 = vrot.slane %v11499, 7
    %v11546 = vrot.slane %v11500, 1
    %v11547 = vrot.slane %v11500, 2
    %v11548 = vrot.slane %v11500, 3
    %v11549 = vrot.slane %v11500, 4
    %v11550 = vrot.slane %v11500, 5
    %v11551 = vrot.slane %v11500, 6
    %v11552 = vrot.slane %v11500, 7
    %v11553 = vrot.slane %v11501, 1
    %v11554 = vrot.slane %v11501, 2
    %v11555 = vrot.slane %v11501, 3
    %v11556 = vrot.slane %v11501, 4
    %v11557 = vrot.slane %v11501, 5
    %v11558 = vrot.slane %v11501, 6
    %v11559 = vrot.slane %v11501, 7
    %v11560 = vrot.slane %v11502, 1
    %v11561 = vrot.slane %v11502, 2
    %v11562 = vrot.slane %v11502, 3
    %v11563 = vrot.slane %v11502, 4
    %v11564 = vrot.slane %v11502, 5
    %v11565 = vrot.slane %v11502, 6
    %v11566 = vrot.slane %v11502, 7
    %v11631 = vadd.f32 %v10923, %v11495
    %v11632 = vadd.f32 %v10932, %v11511
    %v11633 = vadd.f32 %v10941, %v11512
    %v11634 = vadd.f32 %v10950, %v11513
    %v11635 = vadd.f32 %v10959, %v11514
    %v11636 = vadd.f32 %v10968, %v11515
    %v11637 = vadd.f32 %v10977, %v11516
    %v11638 = vadd.f32 %v10986, %v11517
    %v11639 = vadd.f32 %v10995, %v11496
    %v11640 = vadd.f32 %v11004, %v11518
    %v11641 = vadd.f32 %v11013, %v11519
    %v11642 = vadd.f32 %v11022, %v11520
    %v11643 = vadd.f32 %v11031, %v11521
    %v11644 = vadd.f32 %v11040, %v11522
    %v11645 = vadd.f32 %v11049, %v11523
    %v11646 = vadd.f32 %v11058, %v11524
    %v11647 = vadd.f32 %v11067, %v11497
    %v11648 = vadd.f32 %v11076, %v11525
    %v11649 = vadd.f32 %v11085, %v11526
    %v11650 = vadd.f32 %v11094, %v11527
    %v11651 = vadd.f32 %v11103, %v11528
    %v11652 = vadd.f32 %v11112, %v11529
    %v11653 = vadd.f32 %v11121, %v11530
    %v11654 = vadd.f32 %v11130, %v11531
    %v11655 = vadd.f32 %v11139, %v11498
    %v11656 = vadd.f32 %v11148, %v11532
    %v11657 = vadd.f32 %v11157, %v11533
    %v11658 = vadd.f32 %v11166, %v11534
    %v11659 = vadd.f32 %v11175, %v11535
    %v11660 = vadd.f32 %v11184, %v11536
    %v11661 = vadd.f32 %v11193, %v11537
    %v11662 = vadd.f32 %v11202, %v11538
    %v11663 = vadd.f32 %v11211, %v11499
    %v11664 = vadd.f32 %v11220, %v11539
    %v11665 = vadd.f32 %v11229, %v11540
    %v11666 = vadd.f32 %v11238, %v11541
    %v11667 = vadd.f32 %v11247, %v11542
    %v11668 = vadd.f32 %v11256, %v11543
    %v11669 = vadd.f32 %v11265, %v11544
    %v11670 = vadd.f32 %v11274, %v11545
    %v11671 = vadd.f32 %v11283, %v11500
    %v11672 = vadd.f32 %v11292, %v11546
    %v11673 = vadd.f32 %v11301, %v11547
    %v11674 = vadd.f32 %v11310, %v11548
    %v11675 = vadd.f32 %v11319, %v11549
    %v11676 = vadd.f32 %v11328, %v11550
    %v11677 = vadd.f32 %v11337, %v11551
    %v11678 = vadd.f32 %v11346, %v11552
    %v11679 = vadd.f32 %v11355, %v11501
    %v11680 = vadd.f32 %v11364, %v11553
    %v11681 = vadd.f32 %v11373, %v11554
    %v11682 = vadd.f32 %v11382, %v11555
    %v11683 = vadd.f32 %v11391, %v11556
    %v11684 = vadd.f32 %v11400, %v11557
    %v11685 = vadd.f32 %v11409, %v11558
    %v11686 = vadd.f32 %v11418, %v11559
    %v11687 = vadd.f32 %v11427, %v11502
    %v11688 = vadd.f32 %v11436, %v11560
    %v11689 = vadd.f32 %v11445, %v11561
    %v11690 = vadd.f32 %v11454, %v11562
    %v11691 = vadd.f32 %v11463, %v11563
    %v11692 = vadd.f32 %v11472, %v11564
    %v11693 = vadd.f32 %v11481, %v11565
    %v11694 = vadd.f32 %v11490, %v11566
    %v11695 = vxor.u32 %v6472, 2147483648
    %v11696 = vxor.u32 %v6477, 2147483648
    %v11697 = vxor.u32 %v6482, 2147483648
    %v11698 = vxor.u32 %v6487, 2147483648
    %v11699 = vxor.u32 %v6492, 2147483648
    %v11700 = vxor.u32 %v6497, 2147483648
    %v11701 = vxor.u32 %v6502, 2147483648
    %v11702 = vxor.u32 %v6507, 2147483648
    %v11703 = vmul.f32 %v11695, 1.442695
    %v11704 = vpow.pop %v11703
    %v11705 = vmul.f32 %v11696, 1.442695
    %v11706 = vpow.pop %v11705
    %v11707 = vmul.f32 %v11697, 1.442695
    %v11708 = vpow.pop %v11707
    %v11709 = vmul.f32 %v11698, 1.442695
    %v11710 = vpow.pop %v11709
    %v11711 = vmul.f32 %v11699, 1.442695
    %v11712 = vpow.pop %v11711
    %v11713 = vmul.f32 %v11700, 1.442695
    %v11714 = vpow.pop %v11713
    %v11715 = vmul.f32 %v11701, 1.442695
    %v11716 = vpow.pop %v11715
    %v11717 = vmul.f32 %v11702, 1.442695
    %v11718 = vpow.pop %v11717
    %v11719 = vadd.f32 %v11704, 1.0
    %v11720 = vadd.f32 %v11706, 1.0
    %v11721 = vadd.f32 %v11708, 1.0
    %v11722 = vadd.f32 %v11710, 1.0
    %v11723 = vadd.f32 %v11712, 1.0
    %v11724 = vadd.f32 %v11714, 1.0
    %v11725 = vadd.f32 %v11716, 1.0
    %v11726 = vadd.f32 %v11718, 1.0
    %v11727 = vrcp.pop %v11719
    %v11728 = vmul.f32 1.0, %v11727
    %v11729 = vrcp.pop %v11720
    %v11730 = vmul.f32 1.0, %v11729
    %v11731 = vrcp.pop %v11721
    %v11732 = vmul.f32 1.0, %v11731
    %v11733 = vrcp.pop %v11722
    %v11734 = vmul.f32 1.0, %v11733
    %v11735 = vrcp.pop %v11723
    %v11736 = vmul.f32 1.0, %v11735
    %v11737 = vrcp.pop %v11724
    %v11738 = vmul.f32 1.0, %v11737
    %v11739 = vrcp.pop %v11725
    %v11740 = vmul.f32 1.0, %v11739
    %v11741 = vrcp.pop %v11726
    %v11742 = vmul.f32 1.0, %v11741
    %v11743 = vmul.f32 %v6472, %v11728
    %v11744 = vmul.f32 %v6477, %v11730
    %v11745 = vmul.f32 %v6482, %v11732
    %v11746 = vmul.f32 %v6487, %v11734
    %v11747 = vmul.f32 %v6492, %v11736
    %v11748 = vmul.f32 %v6497, %v11738
    %v11749 = vmul.f32 %v6502, %v11740
    %v11750 = vmul.f32 %v6507, %v11742
    %v11759 = vrot.slane %v11743, 1
    %v11760 = vrot.slane %v11743, 2
    %v11761 = vrot.slane %v11743, 3
    %v11762 = vrot.slane %v11743, 4
    %v11763 = vrot.slane %v11743, 5
    %v11764 = vrot.slane %v11743, 6
    %v11765 = vrot.slane %v11743, 7
    %v11766 = vrot.slane %v11744, 1
    %v11767 = vrot.slane %v11744, 2
    %v11768 = vrot.slane %v11744, 3
    %v11769 = vrot.slane %v11744, 4
    %v11770 = vrot.slane %v11744, 5
    %v11771 = vrot.slane %v11744, 6
    %v11772 = vrot.slane %v11744, 7
    %v11773 = vrot.slane %v11745, 1
    %v11774 = vrot.slane %v11745, 2
    %v11775 = vrot.slane %v11745, 3
    %v11776 = vrot.slane %v11745, 4
    %v11777 = vrot.slane %v11745, 5
    %v11778 = vrot.slane %v11745, 6
    %v11779 = vrot.slane %v11745, 7
    %v11780 = vrot.slane %v11746, 1
    %v11781 = vrot.slane %v11746, 2
    %v11782 = vrot.slane %v11746, 3
    %v11783 = vrot.slane %v11746, 4
    %v11784 = vrot.slane %v11746, 5
    %v11785 = vrot.slane %v11746, 6
    %v11786 = vrot.slane %v11746, 7
    %v11787 = vrot.slane %v11747, 1
    %v11788 = vrot.slane %v11747, 2
    %v11789 = vrot.slane %v11747, 3
    %v11790 = vrot.slane %v11747, 4
    %v11791 = vrot.slane %v11747, 5
    %v11792 = vrot.slane %v11747, 6
    %v11793 = vrot.slane %v11747, 7
    %v11794 = vrot.slane %v11748, 1
    %v11795 = vrot.slane %v11748, 2
    %v11796 = vrot.slane %v11748, 3
    %v11797 = vrot.slane %v11748, 4
    %v11798 = vrot.slane %v11748, 5
    %v11799 = vrot.slane %v11748, 6
    %v11800 = vrot.slane %v11748, 7
    %v11801 = vrot.slane %v11749, 1
    %v11802 = vrot.slane %v11749, 2
    %v11803 = vrot.slane %v11749, 3
    %v11804 = vrot.slane %v11749, 4
    %v11805 = vrot.slane %v11749, 5
    %v11806 = vrot.slane %v11749, 6
    %v11807 = vrot.slane %v11749, 7
    %v11808 = vrot.slane %v11750, 1
    %v11809 = vrot.slane %v11750, 2
    %v11810 = vrot.slane %v11750, 3
    %v11811 = vrot.slane %v11750, 4
    %v11812 = vrot.slane %v11750, 5
    %v11813 = vrot.slane %v11750, 6
    %v11814 = vrot.slane %v11750, 7
    %11815 = vrot.lane.b32.xlu0 %v11743, 96
    %v11816 = vpop.permute.xlu0 %11815
    %11817 = vrot.lane.b32.xlu0 %v11759, 96
    %v11818 = vpop.permute.xlu0 %11817
    %11819 = vrot.lane.b32.xlu0 %v11760, 96
    %v11820 = vpop.permute.xlu0 %11819
    %11821 = vrot.lane.b32.xlu0 %v11761, 96
    %v11822 = vpop.permute.xlu0 %11821
    %11823 = vrot.lane.b32.xlu0 %v11762, 96
    %v11824 = vpop.permute.xlu0 %11823
    %11825 = vrot.lane.b32.xlu0 %v11763, 96
    %v11826 = vpop.permute.xlu0 %11825
    %11827 = vrot.lane.b32.xlu0 %v11764, 96
    %v11828 = vpop.permute.xlu0 %11827
    %11829 = vrot.lane.b32.xlu0 %v11765, 96
    %v11830 = vpop.permute.xlu0 %11829
    %11831 = vrot.lane.b32.xlu0 %v11744, 96
    %v11832 = vpop.permute.xlu0 %11831
    %11833 = vrot.lane.b32.xlu0 %v11766, 96
    %v11834 = vpop.permute.xlu0 %11833
    %11835 = vrot.lane.b32.xlu0 %v11767, 96
    %v11836 = vpop.permute.xlu0 %11835
    %11837 = vrot.lane.b32.xlu0 %v11768, 96
    %v11838 = vpop.permute.xlu0 %11837
    %11839 = vrot.lane.b32.xlu0 %v11769, 96
    %v11840 = vpop.permute.xlu0 %11839
    %11841 = vrot.lane.b32.xlu0 %v11770, 96
    %v11842 = vpop.permute.xlu0 %11841
    %11843 = vrot.lane.b32.xlu0 %v11771, 96
    %v11844 = vpop.permute.xlu0 %11843
    %11845 = vrot.lane.b32.xlu0 %v11772, 96
    %v11846 = vpop.permute.xlu0 %11845
    %11847 = vrot.lane.b32.xlu0 %v11745, 96
    %v11848 = vpop.permute.xlu0 %11847
    %11849 = vrot.lane.b32.xlu0 %v11773, 96
    %v11850 = vpop.permute.xlu0 %11849
    %11851 = vrot.lane.b32.xlu0 %v11774, 96
    %v11852 = vpop.permute.xlu0 %11851
    %11853 = vrot.lane.b32.xlu0 %v11775, 96
    %v11854 = vpop.permute.xlu0 %11853
    %11855 = vrot.lane.b32.xlu0 %v11776, 96
    %v11856 = vpop.permute.xlu0 %11855
    %11857 = vrot.lane.b32.xlu0 %v11777, 96
    %v11858 = vpop.permute.xlu0 %11857
    %11859 = vrot.lane.b32.xlu0 %v11778, 96
    %v11860 = vpop.permute.xlu0 %11859
    %11861 = vrot.lane.b32.xlu0 %v11779, 96
    %v11862 = vpop.permute.xlu0 %11861
    %11863 = vrot.lane.b32.xlu0 %v11746, 96
    %v11864 = vpop.permute.xlu0 %11863
    %11865 = vrot.lane.b32.xlu0 %v11780, 96
    %v11866 = vpop.permute.xlu0 %11865
    %11867 = vrot.lane.b32.xlu0 %v11781, 96
    %v11868 = vpop.permute.xlu0 %11867
    %11869 = vrot.lane.b32.xlu0 %v11782, 96
    %v11870 = vpop.permute.xlu0 %11869
    %11871 = vrot.lane.b32.xlu0 %v11783, 96
    %v11872 = vpop.permute.xlu0 %11871
    %11873 = vrot.lane.b32.xlu0 %v11784, 96
    %v11874 = vpop.permute.xlu0 %11873
    %11875 = vrot.lane.b32.xlu0 %v11785, 96
    %v11876 = vpop.permute.xlu0 %11875
    %11877 = vrot.lane.b32.xlu0 %v11786, 96
    %v11878 = vpop.permute.xlu0 %11877
    %11879 = vrot.lane.b32.xlu0 %v11747, 96
    %v11880 = vpop.permute.xlu0 %11879
    %11881 = vrot.lane.b32.xlu0 %v11787, 96
    %v11882 = vpop.permute.xlu0 %11881
    %11883 = vrot.lane.b32.xlu0 %v11788, 96
    %v11884 = vpop.permute.xlu0 %11883
    %11885 = vrot.lane.b32.xlu0 %v11789, 96
    %v11886 = vpop.permute.xlu0 %11885
    %11887 = vrot.lane.b32.xlu0 %v11790, 96
    %v11888 = vpop.permute.xlu0 %11887
    %11889 = vrot.lane.b32.xlu0 %v11791, 96
    %v11890 = vpop.permute.xlu0 %11889
    %11891 = vrot.lane.b32.xlu0 %v11792, 96
    %v11892 = vpop.permute.xlu0 %11891
    %11893 = vrot.lane.b32.xlu0 %v11793, 96
    %v11894 = vpop.permute.xlu0 %11893
    %11895 = vrot.lane.b32.xlu0 %v11748, 96
    %v11896 = vpop.permute.xlu0 %11895
    %11897 = vrot.lane.b32.xlu0 %v11794, 96
    %v11898 = vpop.permute.xlu0 %11897
    %11899 = vrot.lane.b32.xlu0 %v11795, 96
    %v11900 = vpop.permute.xlu0 %11899
    %11901 = vrot.lane.b32.xlu0 %v11796, 96
    %v11902 = vpop.permute.xlu0 %11901
    %11903 = vrot.lane.b32.xlu0 %v11797, 96
    %v11904 = vpop.permute.xlu0 %11903
    %11905 = vrot.lane.b32.xlu0 %v11798, 96
    %v11906 = vpop.permute.xlu0 %11905
    %11907 = vrot.lane.b32.xlu0 %v11799, 96
    %v11908 = vpop.permute.xlu0 %11907
    %11909 = vrot.lane.b32.xlu0 %v11800, 96
    %v11910 = vpop.permute.xlu0 %11909
    %11911 = vrot.lane.b32.xlu0 %v11749, 96
    %v11912 = vpop.permute.xlu0 %11911
    %11913 = vrot.lane.b32.xlu0 %v11801, 96
    %v11914 = vpop.permute.xlu0 %11913
    %11915 = vrot.lane.b32.xlu0 %v11802, 96
    %v11916 = vpop.permute.xlu0 %11915
    %11917 = vrot.lane.b32.xlu0 %v11803, 96
    %v11918 = vpop.permute.xlu0 %11917
    %11919 = vrot.lane.b32.xlu0 %v11804, 96
    %v11920 = vpop.permute.xlu0 %11919
    %11921 = vrot.lane.b32.xlu0 %v11805, 96
    %v11922 = vpop.permute.xlu0 %11921
    %11923 = vrot.lane.b32.xlu0 %v11806, 96
    %v11924 = vpop.permute.xlu0 %11923
    %11925 = vrot.lane.b32.xlu0 %v11807, 96
    %v11926 = vpop.permute.xlu0 %11925
    %11927 = vrot.lane.b32.xlu0 %v11750, 96
    %v11928 = vpop.permute.xlu0 %11927
    %11929 = vrot.lane.b32.xlu0 %v11808, 96
    %v11930 = vpop.permute.xlu0 %11929
    %11931 = vrot.lane.b32.xlu0 %v11809, 96
    %v11932 = vpop.permute.xlu0 %11931
    %11933 = vrot.lane.b32.xlu0 %v11810, 96
    %v11934 = vpop.permute.xlu0 %11933
    %11935 = vrot.lane.b32.xlu0 %v11811, 96
    %v11936 = vpop.permute.xlu0 %11935
    %11937 = vrot.lane.b32.xlu0 %v11812, 96
    %v11938 = vpop.permute.xlu0 %11937
    %11939 = vrot.lane.b32.xlu0 %v11813, 96
    %v11940 = vpop.permute.xlu0 %11939
    %11941 = vrot.lane.b32.xlu0 %v11814, 96
    %v11942 = vpop.permute.xlu0 %11941
    %v12007 = vmul.f32 %v11631, %v11816
    %v12008 = vmul.f32 %v11632, %v11818
    %v12009 = vmul.f32 %v11633, %v11820
    %v12010 = vmul.f32 %v11634, %v11822
    %v12011 = vmul.f32 %v11635, %v11824
    %v12012 = vmul.f32 %v11636, %v11826
    %v12013 = vmul.f32 %v11637, %v11828
    %v12014 = vmul.f32 %v11638, %v11830
    %v12015 = vmul.f32 %v11639, %v11832
    %v12016 = vmul.f32 %v11640, %v11834
    %v12017 = vmul.f32 %v11641, %v11836
    %v12018 = vmul.f32 %v11642, %v11838
    %v12019 = vmul.f32 %v11643, %v11840
    %v12020 = vmul.f32 %v11644, %v11842
    %v12021 = vmul.f32 %v11645, %v11844
    %v12022 = vmul.f32 %v11646, %v11846
    %v12023 = vmul.f32 %v11647, %v11848
    %v12024 = vmul.f32 %v11648, %v11850
    %v12025 = vmul.f32 %v11649, %v11852
    %v12026 = vmul.f32 %v11650, %v11854
    %v12027 = vmul.f32 %v11651, %v11856
    %v12028 = vmul.f32 %v11652, %v11858
    %v12029 = vmul.f32 %v11653, %v11860
    %v12030 = vmul.f32 %v11654, %v11862
    %v12031 = vmul.f32 %v11655, %v11864
    %v12032 = vmul.f32 %v11656, %v11866
    %v12033 = vmul.f32 %v11657, %v11868
    %v12034 = vmul.f32 %v11658, %v11870
    %v12035 = vmul.f32 %v11659, %v11872
    %v12036 = vmul.f32 %v11660, %v11874
    %v12037 = vmul.f32 %v11661, %v11876
    %v12038 = vmul.f32 %v11662, %v11878
    %v12039 = vmul.f32 %v11663, %v11880
    %v12040 = vmul.f32 %v11664, %v11882
    %v12041 = vmul.f32 %v11665, %v11884
    %v12042 = vmul.f32 %v11666, %v11886
    %v12043 = vmul.f32 %v11667, %v11888
    %v12044 = vmul.f32 %v11668, %v11890
    %v12045 = vmul.f32 %v11669, %v11892
    %v12046 = vmul.f32 %v11670, %v11894
    %v12047 = vmul.f32 %v11671, %v11896
    %v12048 = vmul.f32 %v11672, %v11898
    %v12049 = vmul.f32 %v11673, %v11900
    %v12050 = vmul.f32 %v11674, %v11902
    %v12051 = vmul.f32 %v11675, %v11904
    %v12052 = vmul.f32 %v11676, %v11906
    %v12053 = vmul.f32 %v11677, %v11908
    %v12054 = vmul.f32 %v11678, %v11910
    %v12055 = vmul.f32 %v11679, %v11912
    %v12056 = vmul.f32 %v11680, %v11914
    %v12057 = vmul.f32 %v11681, %v11916
    %v12058 = vmul.f32 %v11682, %v11918
    %v12059 = vmul.f32 %v11683, %v11920
    %v12060 = vmul.f32 %v11684, %v11922
    %v12061 = vmul.f32 %v11685, %v11924
    %v12062 = vmul.f32 %v11686, %v11926
    %v12063 = vmul.f32 %v11687, %v11928
    %v12064 = vmul.f32 %v11688, %v11930
    %v12065 = vmul.f32 %v11689, %v11932
    %v12066 = vmul.f32 %v11690, %v11934
    %v12067 = vmul.f32 %v11691, %v11936
    %v12068 = vmul.f32 %v11692, %v11938
    %v12069 = vmul.f32 %v11693, %v11940
    %v12070 = vmul.f32 %v11694, %v11942
    %v12135 = vrot.slane %v12008, 7
    %v12136 = vsel %vm6063, %v12135, %v12007
    %v12137 = vrot.slane %v12009, 6
    %v12138 = vsel %vm6066, %v12137, %v12136
    %v12139 = vrot.slane %v12010, 5
    %v12140 = vsel %vm6069, %v12139, %v12138
    %v12141 = vrot.slane %v12011, 4
    %v12142 = vsel %vm6072, %v12141, %v12140
    %v12143 = vrot.slane %v12012, 3
    %v12144 = vsel %vm6075, %v12143, %v12142
    %v12145 = vrot.slane %v12013, 2
    %v12146 = vsel %vm6078, %v12145, %v12144
    %v12147 = vrot.slane %v12014, 1
    %v12148 = vsel %vm6081, %v12147, %v12146
    %v12149 = vrot.slane %v12016, 7
    %v12150 = vsel %vm6063, %v12149, %v12015
    %v12151 = vrot.slane %v12017, 6
    %v12152 = vsel %vm6066, %v12151, %v12150
    %v12153 = vrot.slane %v12018, 5
    %v12154 = vsel %vm6069, %v12153, %v12152
    %v12155 = vrot.slane %v12019, 4
    %v12156 = vsel %vm6072, %v12155, %v12154
    %v12157 = vrot.slane %v12020, 3
    %v12158 = vsel %vm6075, %v12157, %v12156
    %v12159 = vrot.slane %v12021, 2
    %v12160 = vsel %vm6078, %v12159, %v12158
    %v12161 = vrot.slane %v12022, 1
    %v12162 = vsel %vm6081, %v12161, %v12160
    %v12163 = vrot.slane %v12024, 7
    %v12164 = vsel %vm6063, %v12163, %v12023
    %v12165 = vrot.slane %v12025, 6
    %v12166 = vsel %vm6066, %v12165, %v12164
    %v12167 = vrot.slane %v12026, 5
    %v12168 = vsel %vm6069, %v12167, %v12166
    %v12169 = vrot.slane %v12027, 4
    %v12170 = vsel %vm6072, %v12169, %v12168
    %v12171 = vrot.slane %v12028, 3
    %v12172 = vsel %vm6075, %v12171, %v12170
    %v12173 = vrot.slane %v12029, 2
    %v12174 = vsel %vm6078, %v12173, %v12172
    %v12175 = vrot.slane %v12030, 1
    %v12176 = vsel %vm6081, %v12175, %v12174
    %v12177 = vrot.slane %v12032, 7
    %v12178 = vsel %vm6063, %v12177, %v12031
    %v12179 = vrot.slane %v12033, 6
    %v12180 = vsel %vm6066, %v12179, %v12178
    %v12181 = vrot.slane %v12034, 5
    %v12182 = vsel %vm6069, %v12181, %v12180
    %v12183 = vrot.slane %v12035, 4
    %v12184 = vsel %vm6072, %v12183, %v12182
    %v12185 = vrot.slane %v12036, 3
    %v12186 = vsel %vm6075, %v12185, %v12184
    %v12187 = vrot.slane %v12037, 2
    %v12188 = vsel %vm6078, %v12187, %v12186
    %v12189 = vrot.slane %v12038, 1
    %v12190 = vsel %vm6081, %v12189, %v12188
    %v12191 = vrot.slane %v12040, 7
    %v12192 = vsel %vm6063, %v12191, %v12039
    %v12193 = vrot.slane %v12041, 6
    %v12194 = vsel %vm6066, %v12193, %v12192
    %v12195 = vrot.slane %v12042, 5
    %v12196 = vsel %vm6069, %v12195, %v12194
    %v12197 = vrot.slane %v12043, 4
    %v12198 = vsel %vm6072, %v12197, %v12196
    %v12199 = vrot.slane %v12044, 3
    %v12200 = vsel %vm6075, %v12199, %v12198
    %v12201 = vrot.slane %v12045, 2
    %v12202 = vsel %vm6078, %v12201, %v12200
    %v12203 = vrot.slane %v12046, 1
    %v12204 = vsel %vm6081, %v12203, %v12202
    %v12205 = vrot.slane %v12048, 7
    %v12206 = vsel %vm6063, %v12205, %v12047
    %v12207 = vrot.slane %v12049, 6
    %v12208 = vsel %vm6066, %v12207, %v12206
    %v12209 = vrot.slane %v12050, 5
    %v12210 = vsel %vm6069, %v12209, %v12208
    %v12211 = vrot.slane %v12051, 4
    %v12212 = vsel %vm6072, %v12211, %v12210
    %v12213 = vrot.slane %v12052, 3
    %v12214 = vsel %vm6075, %v12213, %v12212
    %v12215 = vrot.slane %v12053, 2
    %v12216 = vsel %vm6078, %v12215, %v12214
    %v12217 = vrot.slane %v12054, 1
    %v12218 = vsel %vm6081, %v12217, %v12216
    %v12219 = vrot.slane %v12056, 7
    %v12220 = vsel %vm6063, %v12219, %v12055
    %v12221 = vrot.slane %v12057, 6
    %v12222 = vsel %vm6066, %v12221, %v12220
    %v12223 = vrot.slane %v12058, 5
    %v12224 = vsel %vm6069, %v12223, %v12222
    %v12225 = vrot.slane %v12059, 4
    %v12226 = vsel %vm6072, %v12225, %v12224
    %v12227 = vrot.slane %v12060, 3
    %v12228 = vsel %vm6075, %v12227, %v12226
    %v12229 = vrot.slane %v12061, 2
    %v12230 = vsel %vm6078, %v12229, %v12228
    %v12231 = vrot.slane %v12062, 1
    %v12232 = vsel %vm6081, %v12231, %v12230
    %v12233 = vrot.slane %v12064, 7
    %v12234 = vsel %vm6063, %v12233, %v12063
    %v12235 = vrot.slane %v12065, 6
    %v12236 = vsel %vm6066, %v12235, %v12234
    %v12237 = vrot.slane %v12066, 5
    %v12238 = vsel %vm6069, %v12237, %v12236
    %v12239 = vrot.slane %v12067, 4
    %v12240 = vsel %vm6072, %v12239, %v12238
    %v12241 = vrot.slane %v12068, 3
    %v12242 = vsel %vm6075, %v12241, %v12240
    %v12243 = vrot.slane %v12069, 2
    %v12244 = vsel %vm6078, %v12243, %v12242
    %v12245 = vrot.slane %v12070, 1
    %v12246 = vsel %vm6081, %v12245, %v12244
    %v12247 = vsel %vm301, %v12148, 0
    %v12249 = vsel %vm301, %v12162, 0
    %v12251 = vsel %vm301, %v12176, 0
    %v12253 = vsel %vm301, %v12190, 0
    %v12255 = vsel %vm301, %v12204, 0
    %v12257 = vsel %vm301, %v12218, 0
    %v12259 = vsel %vm301, %v12232, 0
    %v12261 = vsel %vm301, %v12246, 0
    %12263 = vmatprep.subr.mxu0 0.0
    %12264 = vmatpush1.msra.mxu0 %v6375
    %12265 = vmatprep.subr.mxu0 0.0
    %12266 = vmatpush1.msra.mxu0 %v6376
    %12267 = vmatprep.subr.mxu0 0.0
    %12268 = vmatpush1.msra.mxu0 %v6377
    %12269 = vmatprep.subr.mxu0 0.0
    %12270 = vmatpush1.msra.mxu0 %v6378
    %12271 = vmatprep.subr.mxu0 0.0
    %12272 = vmatpush1.msra.mxu0 0.0
    %12273 = vmatprep.subr.mxu0 0.0
    %12274 = vmatpush1.msra.mxu0 0.0
    %12275 = vmatprep.subr.mxu0 0.0
    %12276 = vmatpush1.msra.mxu0 0.0
    %12277 = vmatprep.subr.mxu0 0.0
    %12278 = vmatpush1.msra.mxu0 0.0
    %12279 = vmatprep.subr.mxu0 0.0
    %12280 = vmatpush1.msra.mxu0 0.0
    %12281 = vmatprep.subr.mxu0 0.0
    %12282 = vmatpush1.msra.mxu0 0.0
    %12283 = vmatprep.subr.mxu0 0.0
    %12284 = vmatpush1.msra.mxu0 0.0
    %12285 = vmatprep.subr.mxu0 0.0
    %12286 = vmatpush1.msra.mxu0 0.0
    %12287 = vmatprep.subr.mxu0 0.0
    %12288 = vmatpush1.msra.mxu0 0.0
    %12289 = vmatprep.subr.mxu0 0.0
    %12290 = vmatpush1.msra.mxu0 0.0
    %12291 = vmatprep.subr.mxu0 0.0
    %12292 = vmatpush1.msra.mxu0 0.0
    %12293 = vmatprep.subr.mxu0 0.0
    %12294 = vmatpush1.msra.mxu0 0.0
    %12295 = vmatprep.subr.mxu0 0.0
    %12296 = vmatpush1.msra.mxu0 0.0
    %12297 = vmatprep.subr.mxu0 0.0
    %12298 = vmatpush1.msra.mxu0 0.0
    %12299 = vmatprep.subr.mxu0 0.0
    %12300 = vmatpush1.msra.mxu0 0.0
    %12301 = vmatprep.subr.mxu0 0.0
    %12302 = vmatpush1.msra.mxu0 0.0
    %12303 = vmatprep.subr.mxu0 0.0
    %12304 = vmatpush1.msra.mxu0 0.0
    %12305 = vmatprep.subr.mxu0 0.0
    %12306 = vmatpush1.msra.mxu0 0.0
    %12307 = vmatprep.subr.mxu0 0.0
    %12308 = vmatpush1.msra.mxu0 0.0
    %12309 = vmatprep.subr.mxu0 0.0
    %12310 = vmatpush1.msra.mxu0 0.0
    %12311 = vmatprep.subr.mxu0 0.0
    %12312 = vmatpush1.msra.mxu0 0.0
    %12313 = vmatprep.subr.mxu0 0.0
    %12314 = vmatpush1.msra.mxu0 0.0
    %12315 = vmatprep.subr.mxu0 0.0
    %12316 = vmatpush1.msra.mxu0 0.0
    %12317 = vmatprep.subr.mxu0 0.0
    %12318 = vmatpush1.msra.mxu0 0.0
    %12319 = vmatprep.subr.mxu0 0.0
    %12320 = vmatpush1.msra.mxu0 0.0
    %12321 = vmatprep.subr.mxu0 0.0
    %12322 = vmatpush1.msra.mxu0 0.0
    %12323 = vmatprep.subr.mxu0 0.0
    %12324 = vmatpush1.msra.mxu0 0.0
    %12325 = vmatprep.subr.mxu0 0.0
    %12326 = vmatpush1.msra.mxu0 0.0
    %12327 = vmatprep.mubr.f32.mxu0 0.0
    %12328 = vmatmul.mubr.f32.gmra.mrb[0].mxu0 %v12247
    %v12329 = vpop.f32.mrb[0].mxu0
    %v12330 = vadd.f32 0.0, %v12329
    %v12331 = vpop.f32.mrb[0].mxu0
    %12332 = vmatprep.mubr.f32.mxu0 0.0
    %12333 = vmatmul.mubr.f32.gmra.mrb[0].mxu0 %v12249
    %v12334 = vpop.f32.mrb[0].mxu0
    %v12335 = vadd.f32 0.0, %v12334
    %v12336 = vpop.f32.mrb[0].mxu0
    %12337 = vmatprep.mubr.f32.mxu0 0.0
    %12338 = vmatmul.mubr.f32.gmra.mrb[0].mxu0 %v12251
    %v12339 = vpop.f32.mrb[0].mxu0
    %v12340 = vadd.f32 0.0, %v12339
    %v12341 = vpop.f32.mrb[0].mxu0
    %12342 = vmatprep.mubr.f32.mxu0 0.0
    %12343 = vmatmul.mubr.f32.gmra.mrb[0].mxu0 %v12253
    %v12344 = vpop.f32.mrb[0].mxu0
    %v12345 = vadd.f32 0.0, %v12344
    %v12346 = vpop.f32.mrb[0].mxu0
    %12347 = vmatprep.mubr.f32.mxu0 0.0
    %12348 = vmatmul.mubr.f32.gmra.mrb[0].mxu0 %v12255
    %v12349 = vpop.f32.mrb[0].mxu0
    %v12350 = vadd.f32 0.0, %v12349
    %v12351 = vpop.f32.mrb[0].mxu0
    %12352 = vmatprep.mubr.f32.mxu0 0.0
    %12353 = vmatmul.mubr.f32.gmra.mrb[0].mxu0 %v12257
    %v12354 = vpop.f32.mrb[0].mxu0
    %v12355 = vadd.f32 0.0, %v12354
    %v12356 = vpop.f32.mrb[0].mxu0
    %12357 = vmatprep.mubr.f32.mxu0 0.0
    %12358 = vmatmul.mubr.f32.gmra.mrb[0].mxu0 %v12259
    %v12359 = vpop.f32.mrb[0].mxu0
    %v12360 = vadd.f32 0.0, %v12359
    %v12361 = vpop.f32.mrb[0].mxu0
    %12362 = vmatprep.mubr.f32.mxu0 0.0
    %12363 = vmatmul.mubr.f32.gmra.mrb[0].mxu0 %v12261
    %v12364 = vpop.f32.mrb[0].mxu0
    %v12365 = vadd.f32 0.0, %v12364
    %v12366 = vpop.f32.mrb[0].mxu0
    %12367 = vdwg.mxu0
    %v12368 = vadd.f32 %v6343, %v12330
    %v12369 = vadd.f32 %v6344, %v12335
    %v12370 = vadd.f32 %v6345, %v12340
    %v12371 = vadd.f32 %v6346, %v12345
    %v12372 = vadd.f32 %v6347, %v12350
    %v12373 = vadd.f32 %v6348, %v12355
    %v12374 = vadd.f32 %v6349, %v12360
    %v12375 = vadd.f32 %v6350, %v12365
    %v12376 = vadd.f32 %v6380, 1e-05
    %v12377 = vrsqrt.pop %v12376
    %v12379 = vrot.slane %v12377, 3
    %v12381 = vmul.f32 %v6380, %v12379
    %v12383 = vrot.slane %v6380, 6
    %v12385 = vmul.f32 %v6380, %v12383
    %v12386 = vrot.slane %v12377, 1
    %v12388 = vmul.f32 %v12385, %v12386
    %v12390 = vrot.slane %v12388, 1
    %v12392 = vsub.f32 %v6380, %v12390
    %v12393 = vlaneseq
    %v12394 = vshrl.u32 %v12393, 7
    %v12395 = vsub.s32 3, %v12394
    %v12396 = vrot.slane %v12381, %v12395
    %v12397 = vmul.f32 %v12368, %v12396
    %v12398 = vmul.f32 %v12369, %v12396
    %v12399 = vmul.f32 %v12370, %v12396
    %v12400 = vmul.f32 %v12371, %v12396
    %v12401 = vmul.f32 %v12372, %v12396
    %v12402 = vmul.f32 %v12373, %v12396
    %v12403 = vmul.f32 %v12374, %v12396
    %v12404 = vmul.f32 %v12375, %v12396
    %v12405 = vlaneseq
    %v12406 = vshrl.u32 %v12405, 7
    %v12407 = vsub.s32 4, %v12406
    %v12408 = vrot.slane %v12392, %v12407
    %v12409 = vadd.f32 %v12397, %v12408
    %v12410 = vadd.f32 %v12398, %v12408
    %v12411 = vadd.f32 %v12399, %v12408
    %v12412 = vadd.f32 %v12400, %v12408
    %v12413 = vadd.f32 %v12401, %v12408
    %v12414 = vadd.f32 %v12402, %v12408
    %v12415 = vadd.f32 %v12403, %v12408
    %v12416 = vadd.f32 %v12404, %v12408
    %12417 = vst.msk [vmem:[#allocation14] sm:$0xff] %vm301, %v12409
    %12418 = vst.msk [vmem:[#allocation14 + $0x8] sm:$0xff] %vm301, %v12410
    %12419 = vst.msk [vmem:[#allocation14 + $0x10] sm:$0xff] %vm301, %v12411
    %12420 = vst.msk [vmem:[#allocation14 + $0x18] sm:$0xff] %vm301, %v12412
    %12421 = vst.msk [vmem:[#allocation14 + $0x20] sm:$0xff] %vm301, %v12413
    %12422 = vst.msk [vmem:[#allocation14 + $0x28] sm:$0xff] %vm301, %v12414
    %12423 = vst.msk [vmem:[#allocation14 + $0x30] sm:$0xff] %vm301, %v12415
    %12424 = vst.msk [vmem:[#allocation14 + $0x38] sm:$0xff] %vm301, %v12416
    // Predicated region
    $region70: #{tpu_custom_call.1} parent=1 // pred_check
      _
    $region71: #{tpu_custom_call.1} parent=1 // pred_check_branch
      %12426 = sbr.rel (0) target = $region73
    $region72: #{tpu_custom_call.1} parent=1 // pred_region
      %s12428 = ssub.s32 1024, 1024
      %12429 = vsyncadd [#allocation4], %s12428
      %s12430 = sshll.u32 [#allocation14], 4
      %s12431 = int_to_ptr.vmem [resolvable:$true] %s12430
      %12436 = dma.vmem_to_hbm [thread:$0]  %s12431, 1024, %s10, [#allocation4], 128, 128, 8
    $region73: #{tpu_custom_call.1} parent=1 // pred_fallthru
      _
    // Predicated region
    $region74: #{tpu_custom_call.1} parent=1 // pred_check
      _
    $region75: #{tpu_custom_call.1} parent=1 // pred_check_branch
      %12438 = sbr.rel (0) target = $region77
    $region76: #{tpu_custom_call.1} parent=1 // pred_region
      %12439 = dma.done [#allocation4], 1024
    $region77: #{tpu_custom_call.1} parent=1 // pred_fallthru
      _
    %12440 = vsyncpa [#allocation3], 1
    %12441 = vsyncpa [#allocation6], 1
    %12442 = vsyncpa [#allocation9], 1
    %12443 = vsyncpa [#allocation12], 1
    %12444 = vsyncpa [#allocation4], 1

</llo_original>
